<compile_context>
chip_gen: v7x
topology: tpu7x:2x2x1
jax: 0.10.0
libtpu: 0.0.40
codegen_flags: <defaults>
</compile_context>

<pallas_src>
import functools

import numpy as np
import jax
import jax.numpy as jnp
from jax import lax
from jax.experimental import pallas as pl
from jax.experimental.pallas import tpu as pltpu


# ---------------------------------------------------------------------------
# One-time probe: pltpu.roll lane-rotation convention (and basic support).
# ---------------------------------------------------------------------------
@functools.lru_cache(maxsize=None)
def _probe_roll():
    """Returns "jnp" (roll(x, s)[l] == x[(l - s) % n]), "flip", or None."""
    try:
        def k(x_ref, o_ref):
            o_ref[...] = pltpu.roll(x_ref[...], shift=496, axis=-1)

        x = np.tile(np.arange(512, dtype=np.float32), (8, 1))
        y = np.asarray(
            pl.pallas_call(k, out_shape=jax.ShapeDtypeStruct((8, 512), jnp.float32))(
                jnp.asarray(x)))
        if np.array_equal(y, np.roll(x, 496, axis=-1)):
            return "jnp"
        if np.array_equal(y, np.roll(x, -496, axis=-1)):
            return "flip"
    except Exception:
        pass
    return None


# ---------------------------------------------------------------------------
# Packing choice: how many 2-row pools to fold onto the lane axis.
# ---------------------------------------------------------------------------
def _pick_pack(P, W, Wh):
    if Wh >= 128 or P <= 1:
        return 1
    target = -(-128 // Wh)                     # K*Wh >= 128 -> lane-dense output
    limit = min(P, 4 * target)
    divs = [k for k in range(1, limit + 1) if P % k == 0]
    aligned = [k for k in divs if (2 * k * W) % 128 == 0]   # roll-friendly widths
    for cand in (aligned, divs):
        dense = [k for k in cand if k * Wh >= 128]
        if dense:
            return min(dense)
    if aligned:
        return max(aligned)
    return max(divs) if divs else 1


# ---------------------------------------------------------------------------
# Selection matrices (0/1), built host-side once per shape.
# ---------------------------------------------------------------------------
def _sel_roll(K, W, Wh, cs_in, cs_out):
    sel = np.zeros((cs_in, cs_out), np.float32)
    if K == 1:
        j = np.arange(cs_out)
        sel[2 * j, j] = 1.0
    else:
        m = np.repeat(np.arange(K), Wh)
        j = np.tile(np.arange(Wh), K)
        sel[2 * m * W + 2 * j, m * Wh + j] = 1.0
    return jnp.asarray(sel)


def _sel_4tap(K, W, Wh):
    Cin, Cout = 2 * K * W, K * Wh
    sel = np.zeros((4, Cin, Cout), np.float32)
    m = np.repeat(np.arange(K), Wh)
    j = np.tile(np.arange(Wh), K)
    col = m * Wh + j
    for t, (r, c) in enumerate(((0, 0), (0, 1), (1, 0), (1, 1))):
        sel[t, 2 * m * W + r * W + 2 * j + c, col] = 1.0
    return jnp.asarray(sel)


# ---------------------------------------------------------------------------
# Kernels.
# ---------------------------------------------------------------------------
def _make_roll_kernel(W, K, n_chunks, cs_in, cs_out, roll_is_jnp):
    def left(v, s):
        # w[..., l] = v[..., (l + s) % n]
        n = v.shape[-1]
        s = s % n
        if s == 0:
            return v
        return pltpu.roll(v, shift=(n - s) if roll_is_jnp else s, axis=-1)

    def kernel(x_ref, sel_ref, o_ref):
        x = x_ref[...].astype(jnp.float32)
        h = jnp.maximum(x, left(x, W))          # H-pool: partner row is +W lanes
        if K == 1:
            h = h[:, :W]                        # one pair/row: first W lanes valid
        p = jnp.maximum(h, left(h, 1))          # W-pool: right-hand neighbour column
        sel = sel_ref[...]
        for c in range(n_chunks):
            seg = p if n_chunks == 1 else p[:, c * cs_in:(c + 1) * cs_in]
            res = jnp.dot(seg, sel, preferred_element_type=jnp.float32,
                          precision=lax.Precision.HIGHEST).astype(o_ref.dtype)
            if n_chunks == 1:
                o_ref[...] = res
            else:
                o_ref[:, c * cs_out:(c + 1) * cs_out] = res

    return kernel


def _select_kernel(x_ref, sel_ref, o_ref):
    # Roll-free fallback: max of four selection matmuls (one per 2x2 tap).
    x = x_ref[...].astype(jnp.float32)
    acc = jnp.dot(x, sel_ref[0], preferred_element_type=jnp.float32,
                  precision=lax.Precision.HIGHEST)
    for t in range(1, 4):
        acc = jnp.maximum(acc, jnp.dot(x, sel_ref[t],
                                       preferred_element_type=jnp.float32,
                                       precision=lax.Precision.HIGHEST))
    o_ref[...] = acc.astype(o_ref.dtype)


# ---------------------------------------------------------------------------
# Wrapper: DownSample.forward == MaxPool2d(kernel_size=2, stride=2), NCHW.
# ---------------------------------------------------------------------------
def downsample(x, *, block_bytes=4 << 20):
    N, C, H, W = x.shape
    assert H >= 2 and W >= 2, "MaxPool2d(2) needs H, W >= 2"
    Hh, Wh = H // 2, W // 2
    if H % 2:
        # TODO(synk): odd H makes this a real strided HBM copy before the kernel.
        x = x[:, :, : 2 * Hh, :]

    P = N * C * Hh                       # number of 2-row pools in the stream
    K = _pick_pack(P, W, Wh)             # pairs folded onto the lane axis
    Q = P // K
    Cin, Cout = 2 * K * W, K * Wh
    xf = x.reshape(Q, Cin)               # free row-major reshape

    # Roll path needs lane widths that are multiples of 128 (and a usable roll).
    use_roll = (Cin % 128 == 0) and (K > 1 or W % 128 == 0)
    roll_mode = _probe_roll() if use_roll else None
    use_roll = use_roll and roll_mode is not None

    if use_roll:
        if K == 1 and W > 256 and W % 256 == 0:
            cs_in, cs_out, n_chunks = 256, 128, W // 256   # cap MXU work per output
        elif K == 1:
            cs_in, cs_out, n_chunks = W, Wh, 1
        else:
            cs_in, cs_out, n_chunks = Cin, Cout, 1
        sel = _sel_roll(K, W, Wh, cs_in, cs_out)
        kernel = _make_roll_kernel(W, K, n_chunks, cs_in, cs_out, roll_mode == "jnp")
        sel_spec = pl.BlockSpec(sel.shape, lambda i: (0, 0))
        mm_flops = 2 * Q * cs_in * cs_out * n_chunks
    else:
        sel = _sel_4tap(K, W, Wh)
        kernel = _select_kernel
        sel_spec = pl.BlockSpec(sel.shape, lambda i: (0, 0, 0))
        mm_flops = 8 * Q * Cin * Cout

    itemsize = x.dtype.itemsize
    sub = max(8, 32 // itemsize)         # sublane multiple: 8 f32, 16 bf16, 32 int8
    row_bytes = Cin * itemsize
    rb = max(sub, (block_bytes // row_bytes) // sub * sub)
    if Q * row_bytes > (2 << 20):        # >= 2 blocks so both v7x TensorCores work
        half = pl.cdiv(pl.cdiv(Q, 2), sub) * sub
        if half < Q:
            rb = min(rb, half)
    if rb >= Q:
        rb = Q
    grid = (pl.cdiv(Q, rb),)

    vmem_need = 2 * rb * (Cin + Cout) * itemsize + 2 * sel.size * 4
    out2d = pl.pallas_call(
        kernel,
        out_shape=jax.ShapeDtypeStruct((Q, Cout), x.dtype),
        grid=grid,
        in_specs=[pl.BlockSpec((rb, Cin), lambda i: (i, 0)), sel_spec],
        out_specs=pl.BlockSpec((rb, Cout), lambda i: (i, 0)),
        compiler_params=pltpu.CompilerParams(
            dimension_semantics=("parallel",),
            vmem_limit_bytes=int(max(32 << 20, vmem_need + (4 << 20)))),
        cost_estimate=pl.CostEstimate(
            flops=int(2 * Q * Cin + mm_flops),
            transcendentals=0,
            bytes_accessed=int(Q * (Cin + Cout) * itemsize + sel.size * 4)),
    )(xf, sel)
    return out2d.reshape(N, C, Hh, Wh)


# ---------------------------------------------------------------------------
# Pure-JAX reference (identical semantics to nn.MaxPool2d(2), floor mode).
# ---------------------------------------------------------------------------
def _ref_maxpool2x2(x):
    N, C, H, W = x.shape
    Hh, Wh = H // 2, W // 2
    x = x[:, :, : 2 * Hh, : 2 * Wh]
    return x.reshape(N, C, Hh, 2, Wh, 2).max(axis=(3, 5))


def _check(name, out, ref):
    out = jax.block_until_ready(out)
    o = np.asarray(out).astype(np.float32)
    r = np.asarray(ref).astype(np.float32)
    assert o.shape == r.shape, (name, o.shape, r.shape)
    assert np.allclose(o, r, rtol=1e-6, atol=1e-6), f"mismatch: {name}"


if __name__ == "__main__":
    # DownSample has no learnable parameters (nn.MaxPool2d), so no weight init.
    key = jax.random.PRNGKey(0)
    x = jax.random.normal(key, (2, 4, 16, 16), dtype=jnp.float32)
    out = downsample(x)
    assert out.dtype == x.dtype
    _check("lane-folded small-W", out, _ref_maxpool2x2(x))

    # Multi-block grid (single block, then a padded final block).
    x2 = jax.random.normal(jax.random.PRNGKey(1), (2, 8, 32, 32), jnp.float32)
    r2 = _ref_maxpool2x2(x2)
    _check("single block", downsample(x2), r2)
    _check("padded final block", downsample(x2, block_bytes=50_000), r2)

    # Wide rows (Wh >= 128): K == 1 path.
    x3 = jax.random.normal(jax.random.PRNGKey(2), (1, 2, 4, 256), jnp.float32)
    _check("wide rows", downsample(x3), _ref_maxpool2x2(x3))

    # Very wide rows: chunked selection matmul.
    x4 = jax.random.normal(jax.random.PRNGKey(3), (1, 1, 8, 512), jnp.float32)
    _check("chunked wide rows", downsample(x4), _ref_maxpool2x2(x4))

    # Odd H (floor mode drops the trailing row); exercises the roll-free kernel.
    x5 = jax.random.normal(jax.random.PRNGKey(4), (1, 3, 7, 16), jnp.float32)
    _check("odd H / roll-free fallback", downsample(x5), _ref_maxpool2x2(x5))

    # bfloat16 input (dtype-aware tiling; exact through the f32 selection matmul).
    x6 = jax.random.normal(jax.random.PRNGKey(5), (2, 4, 16, 16), jnp.bfloat16)
    _check("bfloat16", downsample(x6), _ref_maxpool2x2(x6))

    print("KERNEL_OK")
</pallas_src>

<mosaic_0001>
module attributes {stable_mosaic.version = 11 : i64} {
  func.func @_select_kernel(%arg0: i32, %arg1: memref<4x512xf32, #tpu.memory_space<vmem>>, %arg2: memref<4x512x128xf32, #tpu.memory_space<vmem>>, %arg3: memref<4x128xf32, #tpu.memory_space<vmem>>) attributes {dimension_semantics = [#tpu.dimension_semantics<parallel>], iteration_bounds = array<i64: 1>, scalar_prefetch = 0 : i64, scratch_operands = 0 : i64, tpu.core_type = #tpu.core_type<tc>, window_params = [{transform_indices = @transform_0, window_bounds = array<i64: 4, 512>}, {pipeline_mode = #tpu.pipeline_mode<synchronous>, transform_indices = @transform_1, window_bounds = array<i64: 4, 512, 128>}, {transform_indices = @transform_2, window_bounds = array<i64: 4, 128>}]} {
    %c0 = arith.constant 0 : index
    %c0_0 = arith.constant 0 : index
    %0 = vector.load %arg1[%c0, %c0_0] : memref<4x512xf32, #tpu.memory_space<vmem>>, vector<4x512xf32>
    %c0_1 = arith.constant 0 : index
    %c0_2 = arith.constant 0 : index
    %c0_3 = arith.constant 0 : index
    %1 = vector.load %arg2[%c0_1, %c0_2, %c0_3] : memref<4x512x128xf32, #tpu.memory_space<vmem>>, vector<1x512x128xf32>
    %2 = vector.shape_cast %1 : vector<1x512x128xf32> to vector<512x128xf32>
    %cst = arith.constant dense<0.000000e+00> : vector<4x128xf32>
    %3 = tpu.matmul %0, %2, %cst {dimension_numbers = #tpu.dot_dimension_numbers<[1], [0], [0], [1], [0, 0, 1, 1], [], []>, precision = #tpu.contract_precision<fp32>} : vector<4x512xf32>, vector<512x128xf32>, vector<4x128xf32> -> vector<4x128xf32>
    %c1 = arith.constant 1 : index
    %c0_4 = arith.constant 0 : index
    %c0_5 = arith.constant 0 : index
    %4 = vector.load %arg2[%c1, %c0_4, %c0_5] : memref<4x512x128xf32, #tpu.memory_space<vmem>>, vector<1x512x128xf32>
    %5 = vector.shape_cast %4 : vector<1x512x128xf32> to vector<512x128xf32>
    %cst_6 = arith.constant dense<0.000000e+00> : vector<4x128xf32>
    %6 = tpu.matmul %0, %5, %cst_6 {dimension_numbers = #tpu.dot_dimension_numbers<[1], [0], [0], [1], [0, 0, 1, 1], [], []>, precision = #tpu.contract_precision<fp32>} : vector<4x512xf32>, vector<512x128xf32>, vector<4x128xf32> -> vector<4x128xf32>
    %7 = arith.maximumf %3, %6 : vector<4x128xf32>
    %c2 = arith.constant 2 : index
    %c0_7 = arith.constant 0 : index
    %c0_8 = arith.constant 0 : index
    %8 = vector.load %arg2[%c2, %c0_7, %c0_8] : memref<4x512x128xf32, #tpu.memory_space<vmem>>, vector<1x512x128xf32>
    %9 = vector.shape_cast %8 : vector<1x512x128xf32> to vector<512x128xf32>
    %cst_9 = arith.constant dense<0.000000e+00> : vector<4x128xf32>
    %10 = tpu.matmul %0, %9, %cst_9 {dimension_numbers = #tpu.dot_dimension_numbers<[1], [0], [0], [1], [0, 0, 1, 1], [], []>, precision = #tpu.contract_precision<fp32>} : vector<4x512xf32>, vector<512x128xf32>, vector<4x128xf32> -> vector<4x128xf32>
    %11 = arith.maximumf %7, %10 : vector<4x128xf32>
    %c3 = arith.constant 3 : index
    %c0_10 = arith.constant 0 : index
    %c0_11 = arith.constant 0 : index
    %12 = vector.load %arg2[%c3, %c0_10, %c0_11] : memref<4x512x128xf32, #tpu.memory_space<vmem>>, vector<1x512x128xf32>
    %13 = vector.shape_cast %12 : vector<1x512x128xf32> to vector<512x128xf32>
    %cst_12 = arith.constant dense<0.000000e+00> : vector<4x128xf32>
    %14 = tpu.matmul %0, %13, %cst_12 {dimension_numbers = #tpu.dot_dimension_numbers<[1], [0], [0], [1], [0, 0, 1, 1], [], []>, precision = #tpu.contract_precision<fp32>} : vector<4x512xf32>, vector<512x128xf32>, vector<4x128xf32> -> vector<4x128xf32>
    %15 = arith.maximumf %11, %14 : vector<4x128xf32>
    %c0_13 = arith.constant 0 : index
    %c0_14 = arith.constant 0 : index
    %16 = vector.load %arg3[%c0_13, %c0_14] : memref<4x128xf32, #tpu.memory_space<vmem>>, vector<4x128xf32>
    tpu.vector_store %arg3[%c0_13, %c0_14], %15 {strides = array<i32>} : memref<4x128xf32, #tpu.memory_space<vmem>>, vector<4x128xf32>,
    return
  }
  func.func @transform_0(%arg0: i32) -> (i32, i32) {
    %c0_i32 = arith.constant 0 : i32
    %c0_i32_0 = arith.constant 0 : i32
    return %arg0, %c0_i32 : i32, i32
  }
  func.func @transform_1(%arg0: i32) -> (i32, i32, i32) {
    %c0_i32 = arith.constant 0 : i32
    %c0_i32_0 = arith.constant 0 : i32
    %c0_i32_1 = arith.constant 0 : i32
    %c0_i32_2 = arith.constant 0 : i32
    return %c0_i32, %c0_i32_0, %c0_i32_1 : i32, i32, i32
  }
  func.func @transform_2(%arg0: i32) -> (i32, i32) {
    %c0_i32 = arith.constant 0 : i32
    %c0_i32_0 = arith.constant 0 : i32
    return %arg0, %c0_i32 : i32, i32
  }
}

</mosaic_0001>

<llo_original>
// kernel: tpu_custom_call.1
$region0: #{tpu_custom_call.1}
  #allocation0 [shape = 'u32[]', space=smem, size = 0x4, offset = 0x4, fixed_abs, tag = 'smem constant byte address 0x4 - core index']
  #allocation1 [shape = 'u32[144,128]{1,0:T(1,128)}', space=vmem, size = 0x12000, scoped, tag = 'internal scratch']
  %s0 = inlined_call_operand.hbm [shape: f32[4,512], index: 0, kind: input, shape index: {}]
  %s1 = inlined_call_operand.hbm [shape: f32[4,512,128], index: 1, kind: input, shape index: {}]
  %s2 = inlined_call_operand.hbm [shape: f32[4,128], index: 2, kind: output, shape index: {}]
  %s3 = sld [smem:[#allocation0]]
  $region26: #{tpu_custom_call.1} parent=0
    _
  %s5 = ssub.s32 1, %s3
  %s6 = scalar_select 0, %s5, %s3
  $region1: #{tpu_custom_call.1} parent=0
    #allocation2 [shape = 'u8[8192]{0}', space=vmem, size = 0x2000, scoped, tag = 'input window, operand 0, single buffered']
    #allocation3 [shape = 's32[1]{0}', space=sflag, size = 0x4, scoped, tag = 'scoped memory for tpu_custom_call.1']
    #allocation4 [shape = 's32[1]{0}', space=sflag, size = 0x4, scoped, tag = 'scoped memory for tpu_custom_call.1']
    #allocation5 [shape = 'u8[1048576]{0}', space=vmem, size = 0x100000, scoped, tag = 'input window, operand 1, single buffered']
    #allocation6 [shape = 's32[1]{0}', space=sflag, size = 0x4, scoped, tag = 'scoped memory for tpu_custom_call.1']
    #allocation7 [shape = 'u8[2048]{0}', space=vmem, size = 0x800, scoped, tag = 'output window, operand 0, single buffered']
    %7 = vsyncpa [#allocation3], 0
    %8 = vsyncpa [#allocation6], 0
    %9 = vsyncpa [#allocation4], 0
    // Predicated region
    $region2: #{tpu_custom_call.1} parent=1 // pred_check
      _
    $region3: #{tpu_custom_call.1} parent=1 // pred_check_branch
      %11 = sbr.rel (0) target = $region5
    $region4: #{tpu_custom_call.1} parent=1 // pred_region
      %s13 = ssub.s32 256, 256
      %14 = vsyncadd [#allocation3], %s13
      %s16 = sshll.u32 [#allocation2], 4
      %s17 = int_to_ptr.vmem [resolvable:$true] %s16
      %19 = dma.hbm_to_vmem [thread:$0]  %s0, 256, %s17, [#allocation3]
    $region5: #{tpu_custom_call.1} parent=1 // pred_fallthru
      _
    // Predicated region
    $region6: #{tpu_custom_call.1} parent=1 // pred_check
      _
    $region7: #{tpu_custom_call.1} parent=1 // pred_check_branch
      %21 = sbr.rel (0) target = $region9
    $region8: #{tpu_custom_call.1} parent=1 // pred_region
      %s23 = ssub.s32 32768, 32768
      %24 = vsyncadd [#allocation6], %s23
      %s25 = sshll.u32 [#allocation5], 4
      %s26 = int_to_ptr.vmem [resolvable:$true] %s25
      %31 = dma.hbm_to_vmem [thread:$0]  %s1, 32768, %s26, [#allocation6], 128, 128, 8
    $region9: #{tpu_custom_call.1} parent=1 // pred_fallthru
      _
    // Predicated region
    $region10: #{tpu_custom_call.1} parent=1 // pred_check
      _
    $region11: #{tpu_custom_call.1} parent=1 // pred_check_branch
      %33 = sbr.rel (0) target = $region13
    $region12: #{tpu_custom_call.1} parent=1 // pred_region
      %34 = dma.done [#allocation3], 256
    $region13: #{tpu_custom_call.1} parent=1 // pred_fallthru
      _
    // Predicated region
    $region14: #{tpu_custom_call.1} parent=1 // pred_check
      _
    $region15: #{tpu_custom_call.1} parent=1 // pred_check_branch
      %36 = sbr.rel (0) target = $region17
    $region16: #{tpu_custom_call.1} parent=1 // pred_region
      %37 = dma.done [#allocation6], 32768
    $region17: #{tpu_custom_call.1} parent=1 // pred_fallthru
      _
    %v38 = vld [vmem:[#allocation2] sm:$0xff]
    %v39 = vld [vmem:[#allocation2 + $0x8] sm:$0xff]
    %v40 = vld [vmem:[#allocation5] sm:$0xff]
    %v41 = vld [vmem:[#allocation5 + $0x8] sm:$0xff]
    %v42 = vld [vmem:[#allocation5 + $0x10] sm:$0xff]
    %v43 = vld [vmem:[#allocation5 + $0x18] sm:$0xff]
    %v44 = vld [vmem:[#allocation5 + $0x20] sm:$0xff]
    %v45 = vld [vmem:[#allocation5 + $0x28] sm:$0xff]
    %v46 = vld [vmem:[#allocation5 + $0x30] sm:$0xff]
    %v47 = vld [vmem:[#allocation5 + $0x38] sm:$0xff]
    %v48 = vld [vmem:[#allocation5 + $0x40] sm:$0xff]
    %v49 = vld [vmem:[#allocation5 + $0x48] sm:$0xff]
    %v50 = vld [vmem:[#allocation5 + $0x50] sm:$0xff]
    %v51 = vld [vmem:[#allocation5 + $0x58] sm:$0xff]
    %v52 = vld [vmem:[#allocation5 + $0x60] sm:$0xff]
    %v53 = vld [vmem:[#allocation5 + $0x68] sm:$0xff]
    %v54 = vld [vmem:[#allocation5 + $0x70] sm:$0xff]
    %v55 = vld [vmem:[#allocation5 + $0x78] sm:$0xff]
    %v56 = vld [vmem:[#allocation5 + $0x80] sm:$0xff]
    %v57 = vld [vmem:[#allocation5 + $0x88] sm:$0xff]
    %v58 = vld [vmem:[#allocation5 + $0x90] sm:$0xff]
    %v59 = vld [vmem:[#allocation5 + $0x98] sm:$0xff]
    %v60 = vld [vmem:[#allocation5 + $0xa0] sm:$0xff]
    %v61 = vld [vmem:[#allocation5 + $0xa8] sm:$0xff]
    %v62 = vld [vmem:[#allocation5 + $0xb0] sm:$0xff]
    %v63 = vld [vmem:[#allocation5 + $0xb8] sm:$0xff]
    %v64 = vld [vmem:[#allocation5 + $0xc0] sm:$0xff]
    %v65 = vld [vmem:[#allocation5 + $0xc8] sm:$0xff]
    %v66 = vld [vmem:[#allocation5 + $0xd0] sm:$0xff]
    %v67 = vld [vmem:[#allocation5 + $0xd8] sm:$0xff]
    %v68 = vld [vmem:[#allocation5 + $0xe0] sm:$0xff]
    %v69 = vld [vmem:[#allocation5 + $0xe8] sm:$0xff]
    %v70 = vld [vmem:[#allocation5 + $0xf0] sm:$0xff]
    %v71 = vld [vmem:[#allocation5 + $0xf8] sm:$0xff]
    %v72 = vld [vmem:[#allocation5 + $0x100] sm:$0xff]
    %v73 = vld [vmem:[#allocation5 + $0x108] sm:$0xff]
    %v74 = vld [vmem:[#allocation5 + $0x110] sm:$0xff]
    %v75 = vld [vmem:[#allocation5 + $0x118] sm:$0xff]
    %v76 = vld [vmem:[#allocation5 + $0x120] sm:$0xff]
    %v77 = vld [vmem:[#allocation5 + $0x128] sm:$0xff]
    %v78 = vld [vmem:[#allocation5 + $0x130] sm:$0xff]
    %v79 = vld [vmem:[#allocation5 + $0x138] sm:$0xff]
    %v80 = vld [vmem:[#allocation5 + $0x140] sm:$0xff]
    %v81 = vld [vmem:[#allocation5 + $0x148] sm:$0xff]
    %v82 = vld [vmem:[#allocation5 + $0x150] sm:$0xff]
    %v83 = vld [vmem:[#allocation5 + $0x158] sm:$0xff]
    %v84 = vld [vmem:[#allocation5 + $0x160] sm:$0xff]
    %v85 = vld [vmem:[#allocation5 + $0x168] sm:$0xff]
    %v86 = vld [vmem:[#allocation5 + $0x170] sm:$0xff]
    %v87 = vld [vmem:[#allocation5 + $0x178] sm:$0xff]
    %v88 = vld [vmem:[#allocation5 + $0x180] sm:$0xff]
    %v89 = vld [vmem:[#allocation5 + $0x188] sm:$0xff]
    %v90 = vld [vmem:[#allocation5 + $0x190] sm:$0xff]
    %v91 = vld [vmem:[#allocation5 + $0x198] sm:$0xff]
    %v92 = vld [vmem:[#allocation5 + $0x1a0] sm:$0xff]
    %v93 = vld [vmem:[#allocation5 + $0x1a8] sm:$0xff]
    %v94 = vld [vmem:[#allocation5 + $0x1b0] sm:$0xff]
    %v95 = vld [vmem:[#allocation5 + $0x1b8] sm:$0xff]
    %v96 = vld [vmem:[#allocation5 + $0x1c0] sm:$0xff]
    %v97 = vld [vmem:[#allocation5 + $0x1c8] sm:$0xff]
    %v98 = vld [vmem:[#allocation5 + $0x1d0] sm:$0xff]
    %v99 = vld [vmem:[#allocation5 + $0x1d8] sm:$0xff]
    %v100 = vld [vmem:[#allocation5 + $0x1e0] sm:$0xff]
    %v101 = vld [vmem:[#allocation5 + $0x1e8] sm:$0xff]
    %v102 = vld [vmem:[#allocation5 + $0x1f0] sm:$0xff]
    %v103 = vld [vmem:[#allocation5 + $0x1f8] sm:$0xff]
    %v106 = vcombine.high %v38, %v38
    %v107 = vcombine.high %v39, %v39
    %110 = vmatprep.subr.mxu0 0.0
    %v111 = vand.u32 %v40, 4294901760
    %112 = vmatpush1.msra.mxu0 %v111
    %113 = vmatprep.subr.mxu0 0.0
    %v114 = vand.u32 %v41, 4294901760
    %115 = vmatpush1.msra.mxu0 %v114
    %116 = vmatprep.subr.mxu0 0.0
    %v117 = vand.u32 %v42, 4294901760
    %118 = vmatpush1.msra.mxu0 %v117
    %119 = vmatprep.subr.mxu0 0.0
    %v120 = vand.u32 %v43, 4294901760
    %121 = vmatpush1.msra.mxu0 %v120
    %122 = vmatprep.subr.mxu0 0.0
    %v123 = vand.u32 %v44, 4294901760
    %124 = vmatpush1.msra.mxu0 %v123
    %125 = vmatprep.subr.mxu0 0.0
    %v126 = vand.u32 %v45, 4294901760
    %127 = vmatpush1.msra.mxu0 %v126
    %128 = vmatprep.subr.mxu0 0.0
    %v129 = vand.u32 %v46, 4294901760
    %130 = vmatpush1.msra.mxu0 %v129
    %131 = vmatprep.subr.mxu0 0.0
    %v132 = vand.u32 %v47, 4294901760
    %133 = vmatpush1.msra.mxu0 %v132
    %134 = vmatprep.subr.mxu0 0.0
    %v135 = vand.u32 %v48, 4294901760
    %136 = vmatpush1.msra.mxu0 %v135
    %137 = vmatprep.subr.mxu0 0.0
    %v138 = vand.u32 %v49, 4294901760
    %139 = vmatpush1.msra.mxu0 %v138
    %140 = vmatprep.subr.mxu0 0.0
    %v141 = vand.u32 %v50, 4294901760
    %142 = vmatpush1.msra.mxu0 %v141
    %143 = vmatprep.subr.mxu0 0.0
    %v144 = vand.u32 %v51, 4294901760
    %145 = vmatpush1.msra.mxu0 %v144
    %146 = vmatprep.subr.mxu0 0.0
    %v147 = vand.u32 %v52, 4294901760
    %148 = vmatpush1.msra.mxu0 %v147
    %149 = vmatprep.subr.mxu0 0.0
    %v150 = vand.u32 %v53, 4294901760
    %151 = vmatpush1.msra.mxu0 %v150
    %152 = vmatprep.subr.mxu0 0.0
    %v153 = vand.u32 %v54, 4294901760
    %154 = vmatpush1.msra.mxu0 %v153
    %155 = vmatprep.subr.mxu0 0.0
    %v156 = vand.u32 %v55, 4294901760
    %157 = vmatpush1.msra.mxu0 %v156
    %158 = vmatprep.subr.mxu0 0.0
    %v159 = vand.u32 %v56, 4294901760
    %160 = vmatpush1.msra.mxu0 %v159
    %161 = vmatprep.subr.mxu0 0.0
    %v162 = vand.u32 %v57, 4294901760
    %163 = vmatpush1.msra.mxu0 %v162
    %164 = vmatprep.subr.mxu0 0.0
    %v165 = vand.u32 %v58, 4294901760
    %166 = vmatpush1.msra.mxu0 %v165
    %167 = vmatprep.subr.mxu0 0.0
    %v168 = vand.u32 %v59, 4294901760
    %169 = vmatpush1.msra.mxu0 %v168
    %170 = vmatprep.subr.mxu0 0.0
    %v171 = vand.u32 %v60, 4294901760
    %172 = vmatpush1.msra.mxu0 %v171
    %173 = vmatprep.subr.mxu0 0.0
    %v174 = vand.u32 %v61, 4294901760
    %175 = vmatpush1.msra.mxu0 %v174
    %176 = vmatprep.subr.mxu0 0.0
    %v177 = vand.u32 %v62, 4294901760
    %178 = vmatpush1.msra.mxu0 %v177
    %179 = vmatprep.subr.mxu0 0.0
    %v180 = vand.u32 %v63, 4294901760
    %181 = vmatpush1.msra.mxu0 %v180
    %182 = vmatprep.subr.mxu0 0.0
    %v183 = vand.u32 %v64, 4294901760
    %184 = vmatpush1.msra.mxu0 %v183
    %185 = vmatprep.subr.mxu0 0.0
    %v186 = vand.u32 %v65, 4294901760
    %187 = vmatpush1.msra.mxu0 %v186
    %188 = vmatprep.subr.mxu0 0.0
    %v189 = vand.u32 %v66, 4294901760
    %190 = vmatpush1.msra.mxu0 %v189
    %191 = vmatprep.subr.mxu0 0.0
    %v192 = vand.u32 %v67, 4294901760
    %193 = vmatpush1.msra.mxu0 %v192
    %194 = vmatprep.subr.mxu0 0.0
    %v195 = vand.u32 %v68, 4294901760
    %196 = vmatpush1.msra.mxu0 %v195
    %197 = vmatprep.subr.mxu0 0.0
    %v198 = vand.u32 %v69, 4294901760
    %199 = vmatpush1.msra.mxu0 %v198
    %200 = vmatprep.subr.mxu0 0.0
    %v201 = vand.u32 %v70, 4294901760
    %202 = vmatpush1.msra.mxu0 %v201
    %203 = vmatprep.subr.mxu0 0.0
    %v204 = vand.u32 %v71, 4294901760
    %205 = vmatpush1.msra.mxu0 %v204
    %v206 = vand.u32 %v106, 4294901760
    %v207 = vsub.f32 %v106, %v206
    %v208 = vand.u32 %v207, 4294901760
    %v209 = vsub.f32 %v207, %v208
    %v210 = vand.u32 %v209, 4294901760
    %211 = vmatprep.mubr.f32.mxu0 %v210
    %v212 = vand.u32 %v38, 4294901760
    %v213 = vsub.f32 %v38, %v212
    %v214 = vand.u32 %v213, 4294901760
    %v215 = vsub.f32 %v213, %v214
    %v216 = vand.u32 %v215, 4294901760
    %217 = vmatmul.mubr.f32.gmra.mrb[0].mxu0 %v216
    %v218 = vpop.f32.mrb[0].mxu0
    %v219 = vadd.f32 0.0, %v218
    %v220 = vpop.f32.mrb[0].mxu0
    %221 = vdwg.mxu0
    %222 = vmatprep.subr.mxu0 0.0
    %v223 = vand.u32 %v40, 4294901760
    %v224 = vsub.f32 %v40, %v223
    %v225 = vand.u32 %v224, 4294901760
    %v226 = vsub.f32 %v224, %v225
    %v227 = vand.u32 %v226, 4294901760
    %228 = vmatpush1.msra.mxu0 %v227
    %229 = vmatprep.subr.mxu0 0.0
    %v230 = vand.u32 %v41, 4294901760
    %v231 = vsub.f32 %v41, %v230
    %v232 = vand.u32 %v231, 4294901760
    %v233 = vsub.f32 %v231, %v232
    %v234 = vand.u32 %v233, 4294901760
    %235 = vmatpush1.msra.mxu0 %v234
    %236 = vmatprep.subr.mxu0 0.0
    %v237 = vand.u32 %v42, 4294901760
    %v238 = vsub.f32 %v42, %v237
    %v239 = vand.u32 %v238, 4294901760
    %v240 = vsub.f32 %v238, %v239
    %v241 = vand.u32 %v240, 4294901760
    %242 = vmatpush1.msra.mxu0 %v241
    %243 = vmatprep.subr.mxu0 0.0
    %v244 = vand.u32 %v43, 4294901760
    %v245 = vsub.f32 %v43, %v244
    %v246 = vand.u32 %v245, 4294901760
    %v247 = vsub.f32 %v245, %v246
    %v248 = vand.u32 %v247, 4294901760
    %249 = vmatpush1.msra.mxu0 %v248
    %250 = vmatprep.subr.mxu0 0.0
    %v251 = vand.u32 %v44, 4294901760
    %v252 = vsub.f32 %v44, %v251
    %v253 = vand.u32 %v252, 4294901760
    %v254 = vsub.f32 %v252, %v253
    %v255 = vand.u32 %v254, 4294901760
    %256 = vmatpush1.msra.mxu0 %v255
    %257 = vmatprep.subr.mxu0 0.0
    %v258 = vand.u32 %v45, 4294901760
    %v259 = vsub.f32 %v45, %v258
    %v260 = vand.u32 %v259, 4294901760
    %v261 = vsub.f32 %v259, %v260
    %v262 = vand.u32 %v261, 4294901760
    %263 = vmatpush1.msra.mxu0 %v262
    %264 = vmatprep.subr.mxu0 0.0
    %v265 = vand.u32 %v46, 4294901760
    %v266 = vsub.f32 %v46, %v265
    %v267 = vand.u32 %v266, 4294901760
    %v268 = vsub.f32 %v266, %v267
    %v269 = vand.u32 %v268, 4294901760
    %270 = vmatpush1.msra.mxu0 %v269
    %271 = vmatprep.subr.mxu0 0.0
    %v272 = vand.u32 %v47, 4294901760
    %v273 = vsub.f32 %v47, %v272
    %v274 = vand.u32 %v273, 4294901760
    %v275 = vsub.f32 %v273, %v274
    %v276 = vand.u32 %v275, 4294901760
    %277 = vmatpush1.msra.mxu0 %v276
    %278 = vmatprep.subr.mxu0 0.0
    %v279 = vand.u32 %v48, 4294901760
    %v280 = vsub.f32 %v48, %v279
    %v281 = vand.u32 %v280, 4294901760
    %v282 = vsub.f32 %v280, %v281
    %v283 = vand.u32 %v282, 4294901760
    %284 = vmatpush1.msra.mxu0 %v283
    %285 = vmatprep.subr.mxu0 0.0
    %v286 = vand.u32 %v49, 4294901760
    %v287 = vsub.f32 %v49, %v286
    %v288 = vand.u32 %v287, 4294901760
    %v289 = vsub.f32 %v287, %v288
    %v290 = vand.u32 %v289, 4294901760
    %291 = vmatpush1.msra.mxu0 %v290
    %292 = vmatprep.subr.mxu0 0.0
    %v293 = vand.u32 %v50, 4294901760
    %v294 = vsub.f32 %v50, %v293
    %v295 = vand.u32 %v294, 4294901760
    %v296 = vsub.f32 %v294, %v295
    %v297 = vand.u32 %v296, 4294901760
    %298 = vmatpush1.msra.mxu0 %v297
    %299 = vmatprep.subr.mxu0 0.0
    %v300 = vand.u32 %v51, 4294901760
    %v301 = vsub.f32 %v51, %v300
    %v302 = vand.u32 %v301, 4294901760
    %v303 = vsub.f32 %v301, %v302
    %v304 = vand.u32 %v303, 4294901760
    %305 = vmatpush1.msra.mxu0 %v304
    %306 = vmatprep.subr.mxu0 0.0
    %v307 = vand.u32 %v52, 4294901760
    %v308 = vsub.f32 %v52, %v307
    %v309 = vand.u32 %v308, 4294901760
    %v310 = vsub.f32 %v308, %v309
    %v311 = vand.u32 %v310, 4294901760
    %312 = vmatpush1.msra.mxu0 %v311
    %313 = vmatprep.subr.mxu0 0.0
    %v314 = vand.u32 %v53, 4294901760
    %v315 = vsub.f32 %v53, %v314
    %v316 = vand.u32 %v315, 4294901760
    %v317 = vsub.f32 %v315, %v316
    %v318 = vand.u32 %v317, 4294901760
    %319 = vmatpush1.msra.mxu0 %v318
    %320 = vmatprep.subr.mxu0 0.0
    %v321 = vand.u32 %v54, 4294901760
    %v322 = vsub.f32 %v54, %v321
    %v323 = vand.u32 %v322, 4294901760
    %v324 = vsub.f32 %v322, %v323
    %v325 = vand.u32 %v324, 4294901760
    %326 = vmatpush1.msra.mxu0 %v325
    %327 = vmatprep.subr.mxu0 0.0
    %v328 = vand.u32 %v55, 4294901760
    %v329 = vsub.f32 %v55, %v328
    %v330 = vand.u32 %v329, 4294901760
    %v331 = vsub.f32 %v329, %v330
    %v332 = vand.u32 %v331, 4294901760
    %333 = vmatpush1.msra.mxu0 %v332
    %334 = vmatprep.subr.mxu0 0.0
    %v335 = vand.u32 %v56, 4294901760
    %v336 = vsub.f32 %v56, %v335
    %v337 = vand.u32 %v336, 4294901760
    %v338 = vsub.f32 %v336, %v337
    %v339 = vand.u32 %v338, 4294901760
    %340 = vmatpush1.msra.mxu0 %v339
    %341 = vmatprep.subr.mxu0 0.0
    %v342 = vand.u32 %v57, 4294901760
    %v343 = vsub.f32 %v57, %v342
    %v344 = vand.u32 %v343, 4294901760
    %v345 = vsub.f32 %v343, %v344
    %v346 = vand.u32 %v345, 4294901760
    %347 = vmatpush1.msra.mxu0 %v346
    %348 = vmatprep.subr.mxu0 0.0
    %v349 = vand.u32 %v58, 4294901760
    %v350 = vsub.f32 %v58, %v349
    %v351 = vand.u32 %v350, 4294901760
    %v352 = vsub.f32 %v350, %v351
    %v353 = vand.u32 %v352, 4294901760
    %354 = vmatpush1.msra.mxu0 %v353
    %355 = vmatprep.subr.mxu0 0.0
    %v356 = vand.u32 %v59, 4294901760
    %v357 = vsub.f32 %v59, %v356
    %v358 = vand.u32 %v357, 4294901760
    %v359 = vsub.f32 %v357, %v358
    %v360 = vand.u32 %v359, 4294901760
    %361 = vmatpush1.msra.mxu0 %v360
    %362 = vmatprep.subr.mxu0 0.0
    %v363 = vand.u32 %v60, 4294901760
    %v364 = vsub.f32 %v60, %v363
    %v365 = vand.u32 %v364, 4294901760
    %v366 = vsub.f32 %v364, %v365
    %v367 = vand.u32 %v366, 4294901760
    %368 = vmatpush1.msra.mxu0 %v367
    %369 = vmatprep.subr.mxu0 0.0
    %v370 = vand.u32 %v61, 4294901760
    %v371 = vsub.f32 %v61, %v370
    %v372 = vand.u32 %v371, 4294901760
    %v373 = vsub.f32 %v371, %v372
    %v374 = vand.u32 %v373, 4294901760
    %375 = vmatpush1.msra.mxu0 %v374
    %376 = vmatprep.subr.mxu0 0.0
    %v377 = vand.u32 %v62, 4294901760
    %v378 = vsub.f32 %v62, %v377
    %v379 = vand.u32 %v378, 4294901760
    %v380 = vsub.f32 %v378, %v379
    %v381 = vand.u32 %v380, 4294901760
    %382 = vmatpush1.msra.mxu0 %v381
    %383 = vmatprep.subr.mxu0 0.0
    %v384 = vand.u32 %v63, 4294901760
    %v385 = vsub.f32 %v63, %v384
    %v386 = vand.u32 %v385, 4294901760
    %v387 = vsub.f32 %v385, %v386
    %v388 = vand.u32 %v387, 4294901760
    %389 = vmatpush1.msra.mxu0 %v388
    %390 = vmatprep.subr.mxu0 0.0
    %v391 = vand.u32 %v64, 4294901760
    %v392 = vsub.f32 %v64, %v391
    %v393 = vand.u32 %v392, 4294901760
    %v394 = vsub.f32 %v392, %v393
    %v395 = vand.u32 %v394, 4294901760
    %396 = vmatpush1.msra.mxu0 %v395
    %397 = vmatprep.subr.mxu0 0.0
    %v398 = vand.u32 %v65, 4294901760
    %v399 = vsub.f32 %v65, %v398
    %v400 = vand.u32 %v399, 4294901760
    %v401 = vsub.f32 %v399, %v400
    %v402 = vand.u32 %v401, 4294901760
    %403 = vmatpush1.msra.mxu0 %v402
    %404 = vmatprep.subr.mxu0 0.0
    %v405 = vand.u32 %v66, 4294901760
    %v406 = vsub.f32 %v66, %v405
    %v407 = vand.u32 %v406, 4294901760
    %v408 = vsub.f32 %v406, %v407
    %v409 = vand.u32 %v408, 4294901760
    %410 = vmatpush1.msra.mxu0 %v409
    %411 = vmatprep.subr.mxu0 0.0
    %v412 = vand.u32 %v67, 4294901760
    %v413 = vsub.f32 %v67, %v412
    %v414 = vand.u32 %v413, 4294901760
    %v415 = vsub.f32 %v413, %v414
    %v416 = vand.u32 %v415, 4294901760
    %417 = vmatpush1.msra.mxu0 %v416
    %418 = vmatprep.subr.mxu0 0.0
    %v419 = vand.u32 %v68, 4294901760
    %v420 = vsub.f32 %v68, %v419
    %v421 = vand.u32 %v420, 4294901760
    %v422 = vsub.f32 %v420, %v421
    %v423 = vand.u32 %v422, 4294901760
    %424 = vmatpush1.msra.mxu0 %v423
    %425 = vmatprep.subr.mxu0 0.0
    %v426 = vand.u32 %v69, 4294901760
    %v427 = vsub.f32 %v69, %v426
    %v428 = vand.u32 %v427, 4294901760
    %v429 = vsub.f32 %v427, %v428
    %v430 = vand.u32 %v429, 4294901760
    %431 = vmatpush1.msra.mxu0 %v430
    %432 = vmatprep.subr.mxu0 0.0
    %v433 = vand.u32 %v70, 4294901760
    %v434 = vsub.f32 %v70, %v433
    %v435 = vand.u32 %v434, 4294901760
    %v436 = vsub.f32 %v434, %v435
    %v437 = vand.u32 %v436, 4294901760
    %438 = vmatpush1.msra.mxu0 %v437
    %439 = vmatprep.subr.mxu0 0.0
    %v440 = vand.u32 %v71, 4294901760
    %v441 = vsub.f32 %v71, %v440
    %v442 = vand.u32 %v441, 4294901760
    %v443 = vsub.f32 %v441, %v442
    %v444 = vand.u32 %v443, 4294901760
    %445 = vmatpush1.msra.mxu0 %v444
    %v446 = vand.u32 %v106, 4294901760
    %447 = vmatprep.mubr.f32.mxu0 %v446
    %v448 = vand.u32 %v38, 4294901760
    %449 = vmatmul.mubr.f32.gmra.mrb[0].mxu0 %v448
    %v450 = vpop.f32.mrb[0].mxu0
    %v451 = vadd.f32 %v219, %v450
    %v452 = vpop.f32.mrb[0].mxu0
    %453 = vdwg.mxu0
    %454 = vmatprep.subr.mxu0 0.0
    %v455 = vand.u32 %v40, 4294901760
    %v456 = vsub.f32 %v40, %v455
    %457 = vmatpush1.msra.mxu0 %v456
    %458 = vmatprep.subr.mxu0 0.0
    %v459 = vand.u32 %v41, 4294901760
    %v460 = vsub.f32 %v41, %v459
    %461 = vmatpush1.msra.mxu0 %v460
    %462 = vmatprep.subr.mxu0 0.0
    %v463 = vand.u32 %v42, 4294901760
    %v464 = vsub.f32 %v42, %v463
    %465 = vmatpush1.msra.mxu0 %v464
    %466 = vmatprep.subr.mxu0 0.0
    %v467 = vand.u32 %v43, 4294901760
    %v468 = vsub.f32 %v43, %v467
    %469 = vmatpush1.msra.mxu0 %v468
    %470 = vmatprep.subr.mxu0 0.0
    %v471 = vand.u32 %v44, 4294901760
    %v472 = vsub.f32 %v44, %v471
    %473 = vmatpush1.msra.mxu0 %v472
    %474 = vmatprep.subr.mxu0 0.0
    %v475 = vand.u32 %v45, 4294901760
    %v476 = vsub.f32 %v45, %v475
    %477 = vmatpush1.msra.mxu0 %v476
    %478 = vmatprep.subr.mxu0 0.0
    %v479 = vand.u32 %v46, 4294901760
    %v480 = vsub.f32 %v46, %v479
    %481 = vmatpush1.msra.mxu0 %v480
    %482 = vmatprep.subr.mxu0 0.0
    %v483 = vand.u32 %v47, 4294901760
    %v484 = vsub.f32 %v47, %v483
    %485 = vmatpush1.msra.mxu0 %v484
    %486 = vmatprep.subr.mxu0 0.0
    %v487 = vand.u32 %v48, 4294901760
    %v488 = vsub.f32 %v48, %v487
    %489 = vmatpush1.msra.mxu0 %v488
    %490 = vmatprep.subr.mxu0 0.0
    %v491 = vand.u32 %v49, 4294901760
    %v492 = vsub.f32 %v49, %v491
    %493 = vmatpush1.msra.mxu0 %v492
    %494 = vmatprep.subr.mxu0 0.0
    %v495 = vand.u32 %v50, 4294901760
    %v496 = vsub.f32 %v50, %v495
    %497 = vmatpush1.msra.mxu0 %v496
    %498 = vmatprep.subr.mxu0 0.0
    %v499 = vand.u32 %v51, 4294901760
    %v500 = vsub.f32 %v51, %v499
    %501 = vmatpush1.msra.mxu0 %v500
    %502 = vmatprep.subr.mxu0 0.0
    %v503 = vand.u32 %v52, 4294901760
    %v504 = vsub.f32 %v52, %v503
    %505 = vmatpush1.msra.mxu0 %v504
    %506 = vmatprep.subr.mxu0 0.0
    %v507 = vand.u32 %v53, 4294901760
    %v508 = vsub.f32 %v53, %v507
    %509 = vmatpush1.msra.mxu0 %v508
    %510 = vmatprep.subr.mxu0 0.0
    %v511 = vand.u32 %v54, 4294901760
    %v512 = vsub.f32 %v54, %v511
    %513 = vmatpush1.msra.mxu0 %v512
    %514 = vmatprep.subr.mxu0 0.0
    %v515 = vand.u32 %v55, 4294901760
    %v516 = vsub.f32 %v55, %v515
    %517 = vmatpush1.msra.mxu0 %v516
    %518 = vmatprep.subr.mxu0 0.0
    %v519 = vand.u32 %v56, 4294901760
    %v520 = vsub.f32 %v56, %v519
    %521 = vmatpush1.msra.mxu0 %v520
    %522 = vmatprep.subr.mxu0 0.0
    %v523 = vand.u32 %v57, 4294901760
    %v524 = vsub.f32 %v57, %v523
    %525 = vmatpush1.msra.mxu0 %v524
    %526 = vmatprep.subr.mxu0 0.0
    %v527 = vand.u32 %v58, 4294901760
    %v528 = vsub.f32 %v58, %v527
    %529 = vmatpush1.msra.mxu0 %v528
    %530 = vmatprep.subr.mxu0 0.0
    %v531 = vand.u32 %v59, 4294901760
    %v532 = vsub.f32 %v59, %v531
    %533 = vmatpush1.msra.mxu0 %v532
    %534 = vmatprep.subr.mxu0 0.0
    %v535 = vand.u32 %v60, 4294901760
    %v536 = vsub.f32 %v60, %v535
    %537 = vmatpush1.msra.mxu0 %v536
    %538 = vmatprep.subr.mxu0 0.0
    %v539 = vand.u32 %v61, 4294901760
    %v540 = vsub.f32 %v61, %v539
    %541 = vmatpush1.msra.mxu0 %v540
    %542 = vmatprep.subr.mxu0 0.0
    %v543 = vand.u32 %v62, 4294901760
    %v544 = vsub.f32 %v62, %v543
    %545 = vmatpush1.msra.mxu0 %v544
    %546 = vmatprep.subr.mxu0 0.0
    %v547 = vand.u32 %v63, 4294901760
    %v548 = vsub.f32 %v63, %v547
    %549 = vmatpush1.msra.mxu0 %v548
    %550 = vmatprep.subr.mxu0 0.0
    %v551 = vand.u32 %v64, 4294901760
    %v552 = vsub.f32 %v64, %v551
    %553 = vmatpush1.msra.mxu0 %v552
    %554 = vmatprep.subr.mxu0 0.0
    %v555 = vand.u32 %v65, 4294901760
    %v556 = vsub.f32 %v65, %v555
    %557 = vmatpush1.msra.mxu0 %v556
    %558 = vmatprep.subr.mxu0 0.0
    %v559 = vand.u32 %v66, 4294901760
    %v560 = vsub.f32 %v66, %v559
    %561 = vmatpush1.msra.mxu0 %v560
    %562 = vmatprep.subr.mxu0 0.0
    %v563 = vand.u32 %v67, 4294901760
    %v564 = vsub.f32 %v67, %v563
    %565 = vmatpush1.msra.mxu0 %v564
    %566 = vmatprep.subr.mxu0 0.0
    %v567 = vand.u32 %v68, 4294901760
    %v568 = vsub.f32 %v68, %v567
    %569 = vmatpush1.msra.mxu0 %v568
    %570 = vmatprep.subr.mxu0 0.0
    %v571 = vand.u32 %v69, 4294901760
    %v572 = vsub.f32 %v69, %v571
    %573 = vmatpush1.msra.mxu0 %v572
    %574 = vmatprep.subr.mxu0 0.0
    %v575 = vand.u32 %v70, 4294901760
    %v576 = vsub.f32 %v70, %v575
    %577 = vmatpush1.msra.mxu0 %v576
    %578 = vmatprep.subr.mxu0 0.0
    %v579 = vand.u32 %v71, 4294901760
    %v580 = vsub.f32 %v71, %v579
    %581 = vmatpush1.msra.mxu0 %v580
    %v582 = vand.u32 %v106, 4294901760
    %v583 = vsub.f32 %v106, %v582
    %584 = vmatprep.mubr.f32.mxu0 %v583
    %v585 = vand.u32 %v38, 4294901760
    %v586 = vsub.f32 %v38, %v585
    %587 = vmatmul.mubr.f32.gmra.mrb[0].mxu0 %v586
    %v588 = vpop.f32.mrb[0].mxu0
    %v589 = vadd.f32 %v451, %v588
    %v590 = vpop.f32.mrb[0].mxu0
    %591 = vdwg.mxu0
    %592 = vmatprep.subr.mxu0 0.0
    %v593 = vand.u32 %v40, 4294901760
    %594 = vmatpush1.msra.mxu0 %v593
    %595 = vmatprep.subr.mxu0 0.0
    %v596 = vand.u32 %v41, 4294901760
    %597 = vmatpush1.msra.mxu0 %v596
    %598 = vmatprep.subr.mxu0 0.0
    %v599 = vand.u32 %v42, 4294901760
    %600 = vmatpush1.msra.mxu0 %v599
    %601 = vmatprep.subr.mxu0 0.0
    %v602 = vand.u32 %v43, 4294901760
    %603 = vmatpush1.msra.mxu0 %v602
    %604 = vmatprep.subr.mxu0 0.0
    %v605 = vand.u32 %v44, 4294901760
    %606 = vmatpush1.msra.mxu0 %v605
    %607 = vmatprep.subr.mxu0 0.0
    %v608 = vand.u32 %v45, 4294901760
    %609 = vmatpush1.msra.mxu0 %v608
    %610 = vmatprep.subr.mxu0 0.0
    %v611 = vand.u32 %v46, 4294901760
    %612 = vmatpush1.msra.mxu0 %v611
    %613 = vmatprep.subr.mxu0 0.0
    %v614 = vand.u32 %v47, 4294901760
    %615 = vmatpush1.msra.mxu0 %v614
    %616 = vmatprep.subr.mxu0 0.0
    %v617 = vand.u32 %v48, 4294901760
    %618 = vmatpush1.msra.mxu0 %v617
    %619 = vmatprep.subr.mxu0 0.0
    %v620 = vand.u32 %v49, 4294901760
    %621 = vmatpush1.msra.mxu0 %v620
    %622 = vmatprep.subr.mxu0 0.0
    %v623 = vand.u32 %v50, 4294901760
    %624 = vmatpush1.msra.mxu0 %v623
    %625 = vmatprep.subr.mxu0 0.0
    %v626 = vand.u32 %v51, 4294901760
    %627 = vmatpush1.msra.mxu0 %v626
    %628 = vmatprep.subr.mxu0 0.0
    %v629 = vand.u32 %v52, 4294901760
    %630 = vmatpush1.msra.mxu0 %v629
    %631 = vmatprep.subr.mxu0 0.0
    %v632 = vand.u32 %v53, 4294901760
    %633 = vmatpush1.msra.mxu0 %v632
    %634 = vmatprep.subr.mxu0 0.0
    %v635 = vand.u32 %v54, 4294901760
    %636 = vmatpush1.msra.mxu0 %v635
    %637 = vmatprep.subr.mxu0 0.0
    %v638 = vand.u32 %v55, 4294901760
    %639 = vmatpush1.msra.mxu0 %v638
    %640 = vmatprep.subr.mxu0 0.0
    %v641 = vand.u32 %v56, 4294901760
    %642 = vmatpush1.msra.mxu0 %v641
    %643 = vmatprep.subr.mxu0 0.0
    %v644 = vand.u32 %v57, 4294901760
    %645 = vmatpush1.msra.mxu0 %v644
    %646 = vmatprep.subr.mxu0 0.0
    %v647 = vand.u32 %v58, 4294901760
    %648 = vmatpush1.msra.mxu0 %v647
    %649 = vmatprep.subr.mxu0 0.0
    %v650 = vand.u32 %v59, 4294901760
    %651 = vmatpush1.msra.mxu0 %v650
    %652 = vmatprep.subr.mxu0 0.0
    %v653 = vand.u32 %v60, 4294901760
    %654 = vmatpush1.msra.mxu0 %v653
    %655 = vmatprep.subr.mxu0 0.0
    %v656 = vand.u32 %v61, 4294901760
    %657 = vmatpush1.msra.mxu0 %v656
    %658 = vmatprep.subr.mxu0 0.0
    %v659 = vand.u32 %v62, 4294901760
    %660 = vmatpush1.msra.mxu0 %v659
    %661 = vmatprep.subr.mxu0 0.0
    %v662 = vand.u32 %v63, 4294901760
    %663 = vmatpush1.msra.mxu0 %v662
    %664 = vmatprep.subr.mxu0 0.0
    %v665 = vand.u32 %v64, 4294901760
    %666 = vmatpush1.msra.mxu0 %v665
    %667 = vmatprep.subr.mxu0 0.0
    %v668 = vand.u32 %v65, 4294901760
    %669 = vmatpush1.msra.mxu0 %v668
    %670 = vmatprep.subr.mxu0 0.0
    %v671 = vand.u32 %v66, 4294901760
    %672 = vmatpush1.msra.mxu0 %v671
    %673 = vmatprep.subr.mxu0 0.0
    %v674 = vand.u32 %v67, 4294901760
    %675 = vmatpush1.msra.mxu0 %v674
    %676 = vmatprep.subr.mxu0 0.0
    %v677 = vand.u32 %v68, 4294901760
    %678 = vmatpush1.msra.mxu0 %v677
    %679 = vmatprep.subr.mxu0 0.0
    %v680 = vand.u32 %v69, 4294901760
    %681 = vmatpush1.msra.mxu0 %v680
    %682 = vmatprep.subr.mxu0 0.0
    %v683 = vand.u32 %v70, 4294901760
    %684 = vmatpush1.msra.mxu0 %v683
    %685 = vmatprep.subr.mxu0 0.0
    %v686 = vand.u32 %v71, 4294901760
    %687 = vmatpush1.msra.mxu0 %v686
    %v688 = vand.u32 %v106, 4294901760
    %v689 = vsub.f32 %v106, %v688
    %v690 = vand.u32 %v689, 4294901760
    %691 = vmatprep.mubr.f32.mxu0 %v690
    %v692 = vand.u32 %v38, 4294901760
    %v693 = vsub.f32 %v38, %v692
    %v694 = vand.u32 %v693, 4294901760
    %695 = vmatmul.mubr.f32.gmra.mrb[0].mxu0 %v694
    %v696 = vpop.f32.mrb[0].mxu0
    %v697 = vadd.f32 %v589, %v696
    %v698 = vpop.f32.mrb[0].mxu0
    %699 = vdwg.mxu0
    %700 = vmatprep.subr.mxu0 0.0
    %v701 = vand.u32 %v40, 4294901760
    %v702 = vsub.f32 %v40, %v701
    %v703 = vand.u32 %v702, 4294901760
    %704 = vmatpush1.msra.mxu0 %v703
    %705 = vmatprep.subr.mxu0 0.0
    %v706 = vand.u32 %v41, 4294901760
    %v707 = vsub.f32 %v41, %v706
    %v708 = vand.u32 %v707, 4294901760
    %709 = vmatpush1.msra.mxu0 %v708
    %710 = vmatprep.subr.mxu0 0.0
    %v711 = vand.u32 %v42, 4294901760
    %v712 = vsub.f32 %v42, %v711
    %v713 = vand.u32 %v712, 4294901760
    %714 = vmatpush1.msra.mxu0 %v713
    %715 = vmatprep.subr.mxu0 0.0
    %v716 = vand.u32 %v43, 4294901760
    %v717 = vsub.f32 %v43, %v716
    %v718 = vand.u32 %v717, 4294901760
    %719 = vmatpush1.msra.mxu0 %v718
    %720 = vmatprep.subr.mxu0 0.0
    %v721 = vand.u32 %v44, 4294901760
    %v722 = vsub.f32 %v44, %v721
    %v723 = vand.u32 %v722, 4294901760
    %724 = vmatpush1.msra.mxu0 %v723
    %725 = vmatprep.subr.mxu0 0.0
    %v726 = vand.u32 %v45, 4294901760
    %v727 = vsub.f32 %v45, %v726
    %v728 = vand.u32 %v727, 4294901760
    %729 = vmatpush1.msra.mxu0 %v728
    %730 = vmatprep.subr.mxu0 0.0
    %v731 = vand.u32 %v46, 4294901760
    %v732 = vsub.f32 %v46, %v731
    %v733 = vand.u32 %v732, 4294901760
    %734 = vmatpush1.msra.mxu0 %v733
    %735 = vmatprep.subr.mxu0 0.0
    %v736 = vand.u32 %v47, 4294901760
    %v737 = vsub.f32 %v47, %v736
    %v738 = vand.u32 %v737, 4294901760
    %739 = vmatpush1.msra.mxu0 %v738
    %740 = vmatprep.subr.mxu0 0.0
    %v741 = vand.u32 %v48, 4294901760
    %v742 = vsub.f32 %v48, %v741
    %v743 = vand.u32 %v742, 4294901760
    %744 = vmatpush1.msra.mxu0 %v743
    %745 = vmatprep.subr.mxu0 0.0
    %v746 = vand.u32 %v49, 4294901760
    %v747 = vsub.f32 %v49, %v746
    %v748 = vand.u32 %v747, 4294901760
    %749 = vmatpush1.msra.mxu0 %v748
    %750 = vmatprep.subr.mxu0 0.0
    %v751 = vand.u32 %v50, 4294901760
    %v752 = vsub.f32 %v50, %v751
    %v753 = vand.u32 %v752, 4294901760
    %754 = vmatpush1.msra.mxu0 %v753
    %755 = vmatprep.subr.mxu0 0.0
    %v756 = vand.u32 %v51, 4294901760
    %v757 = vsub.f32 %v51, %v756
    %v758 = vand.u32 %v757, 4294901760
    %759 = vmatpush1.msra.mxu0 %v758
    %760 = vmatprep.subr.mxu0 0.0
    %v761 = vand.u32 %v52, 4294901760
    %v762 = vsub.f32 %v52, %v761
    %v763 = vand.u32 %v762, 4294901760
    %764 = vmatpush1.msra.mxu0 %v763
    %765 = vmatprep.subr.mxu0 0.0
    %v766 = vand.u32 %v53, 4294901760
    %v767 = vsub.f32 %v53, %v766
    %v768 = vand.u32 %v767, 4294901760
    %769 = vmatpush1.msra.mxu0 %v768
    %770 = vmatprep.subr.mxu0 0.0
    %v771 = vand.u32 %v54, 4294901760
    %v772 = vsub.f32 %v54, %v771
    %v773 = vand.u32 %v772, 4294901760
    %774 = vmatpush1.msra.mxu0 %v773
    %775 = vmatprep.subr.mxu0 0.0
    %v776 = vand.u32 %v55, 4294901760
    %v777 = vsub.f32 %v55, %v776
    %v778 = vand.u32 %v777, 4294901760
    %779 = vmatpush1.msra.mxu0 %v778
    %780 = vmatprep.subr.mxu0 0.0
    %v781 = vand.u32 %v56, 4294901760
    %v782 = vsub.f32 %v56, %v781
    %v783 = vand.u32 %v782, 4294901760
    %784 = vmatpush1.msra.mxu0 %v783
    %785 = vmatprep.subr.mxu0 0.0
    %v786 = vand.u32 %v57, 4294901760
    %v787 = vsub.f32 %v57, %v786
    %v788 = vand.u32 %v787, 4294901760
    %789 = vmatpush1.msra.mxu0 %v788
    %790 = vmatprep.subr.mxu0 0.0
    %v791 = vand.u32 %v58, 4294901760
    %v792 = vsub.f32 %v58, %v791
    %v793 = vand.u32 %v792, 4294901760
    %794 = vmatpush1.msra.mxu0 %v793
    %795 = vmatprep.subr.mxu0 0.0
    %v796 = vand.u32 %v59, 4294901760
    %v797 = vsub.f32 %v59, %v796
    %v798 = vand.u32 %v797, 4294901760
    %799 = vmatpush1.msra.mxu0 %v798
    %800 = vmatprep.subr.mxu0 0.0
    %v801 = vand.u32 %v60, 4294901760
    %v802 = vsub.f32 %v60, %v801
    %v803 = vand.u32 %v802, 4294901760
    %804 = vmatpush1.msra.mxu0 %v803
    %805 = vmatprep.subr.mxu0 0.0
    %v806 = vand.u32 %v61, 4294901760
    %v807 = vsub.f32 %v61, %v806
    %v808 = vand.u32 %v807, 4294901760
    %809 = vmatpush1.msra.mxu0 %v808
    %810 = vmatprep.subr.mxu0 0.0
    %v811 = vand.u32 %v62, 4294901760
    %v812 = vsub.f32 %v62, %v811
    %v813 = vand.u32 %v812, 4294901760
    %814 = vmatpush1.msra.mxu0 %v813
    %815 = vmatprep.subr.mxu0 0.0
    %v816 = vand.u32 %v63, 4294901760
    %v817 = vsub.f32 %v63, %v816
    %v818 = vand.u32 %v817, 4294901760
    %819 = vmatpush1.msra.mxu0 %v818
    %820 = vmatprep.subr.mxu0 0.0
    %v821 = vand.u32 %v64, 4294901760
    %v822 = vsub.f32 %v64, %v821
    %v823 = vand.u32 %v822, 4294901760
    %824 = vmatpush1.msra.mxu0 %v823
    %825 = vmatprep.subr.mxu0 0.0
    %v826 = vand.u32 %v65, 4294901760
    %v827 = vsub.f32 %v65, %v826
    %v828 = vand.u32 %v827, 4294901760
    %829 = vmatpush1.msra.mxu0 %v828
    %830 = vmatprep.subr.mxu0 0.0
    %v831 = vand.u32 %v66, 4294901760
    %v832 = vsub.f32 %v66, %v831
    %v833 = vand.u32 %v832, 4294901760
    %834 = vmatpush1.msra.mxu0 %v833
    %835 = vmatprep.subr.mxu0 0.0
    %v836 = vand.u32 %v67, 4294901760
    %v837 = vsub.f32 %v67, %v836
    %v838 = vand.u32 %v837, 4294901760
    %839 = vmatpush1.msra.mxu0 %v838
    %840 = vmatprep.subr.mxu0 0.0
    %v841 = vand.u32 %v68, 4294901760
    %v842 = vsub.f32 %v68, %v841
    %v843 = vand.u32 %v842, 4294901760
    %844 = vmatpush1.msra.mxu0 %v843
    %845 = vmatprep.subr.mxu0 0.0
    %v846 = vand.u32 %v69, 4294901760
    %v847 = vsub.f32 %v69, %v846
    %v848 = vand.u32 %v847, 4294901760
    %849 = vmatpush1.msra.mxu0 %v848
    %850 = vmatprep.subr.mxu0 0.0
    %v851 = vand.u32 %v70, 4294901760
    %v852 = vsub.f32 %v70, %v851
    %v853 = vand.u32 %v852, 4294901760
    %854 = vmatpush1.msra.mxu0 %v853
    %855 = vmatprep.subr.mxu0 0.0
    %v856 = vand.u32 %v71, 4294901760
    %v857 = vsub.f32 %v71, %v856
    %v858 = vand.u32 %v857, 4294901760
    %859 = vmatpush1.msra.mxu0 %v858
    %v860 = vand.u32 %v106, 4294901760
    %861 = vmatprep.mubr.f32.mxu0 %v860
    %v862 = vand.u32 %v38, 4294901760
    %863 = vmatmul.mubr.f32.gmra.mrb[0].mxu0 %v862
    %v864 = vpop.f32.mrb[0].mxu0
    %v865 = vadd.f32 %v697, %v864
    %v866 = vpop.f32.mrb[0].mxu0
    %867 = vdwg.mxu0
    %868 = vmatprep.subr.mxu0 0.0
    %v869 = vand.u32 %v40, 4294901760
    %870 = vmatpush1.msra.mxu0 %v869
    %871 = vmatprep.subr.mxu0 0.0
    %v872 = vand.u32 %v41, 4294901760
    %873 = vmatpush1.msra.mxu0 %v872
    %874 = vmatprep.subr.mxu0 0.0
    %v875 = vand.u32 %v42, 4294901760
    %876 = vmatpush1.msra.mxu0 %v875
    %877 = vmatprep.subr.mxu0 0.0
    %v878 = vand.u32 %v43, 4294901760
    %879 = vmatpush1.msra.mxu0 %v878
    %880 = vmatprep.subr.mxu0 0.0
    %v881 = vand.u32 %v44, 4294901760
    %882 = vmatpush1.msra.mxu0 %v881
    %883 = vmatprep.subr.mxu0 0.0
    %v884 = vand.u32 %v45, 4294901760
    %885 = vmatpush1.msra.mxu0 %v884
    %886 = vmatprep.subr.mxu0 0.0
    %v887 = vand.u32 %v46, 4294901760
    %888 = vmatpush1.msra.mxu0 %v887
    %889 = vmatprep.subr.mxu0 0.0
    %v890 = vand.u32 %v47, 4294901760
    %891 = vmatpush1.msra.mxu0 %v890
    %892 = vmatprep.subr.mxu0 0.0
    %v893 = vand.u32 %v48, 4294901760
    %894 = vmatpush1.msra.mxu0 %v893
    %895 = vmatprep.subr.mxu0 0.0
    %v896 = vand.u32 %v49, 4294901760
    %897 = vmatpush1.msra.mxu0 %v896
    %898 = vmatprep.subr.mxu0 0.0
    %v899 = vand.u32 %v50, 4294901760
    %900 = vmatpush1.msra.mxu0 %v899
    %901 = vmatprep.subr.mxu0 0.0
    %v902 = vand.u32 %v51, 4294901760
    %903 = vmatpush1.msra.mxu0 %v902
    %904 = vmatprep.subr.mxu0 0.0
    %v905 = vand.u32 %v52, 4294901760
    %906 = vmatpush1.msra.mxu0 %v905
    %907 = vmatprep.subr.mxu0 0.0
    %v908 = vand.u32 %v53, 4294901760
    %909 = vmatpush1.msra.mxu0 %v908
    %910 = vmatprep.subr.mxu0 0.0
    %v911 = vand.u32 %v54, 4294901760
    %912 = vmatpush1.msra.mxu0 %v911
    %913 = vmatprep.subr.mxu0 0.0
    %v914 = vand.u32 %v55, 4294901760
    %915 = vmatpush1.msra.mxu0 %v914
    %916 = vmatprep.subr.mxu0 0.0
    %v917 = vand.u32 %v56, 4294901760
    %918 = vmatpush1.msra.mxu0 %v917
    %919 = vmatprep.subr.mxu0 0.0
    %v920 = vand.u32 %v57, 4294901760
    %921 = vmatpush1.msra.mxu0 %v920
    %922 = vmatprep.subr.mxu0 0.0
    %v923 = vand.u32 %v58, 4294901760
    %924 = vmatpush1.msra.mxu0 %v923
    %925 = vmatprep.subr.mxu0 0.0
    %v926 = vand.u32 %v59, 4294901760
    %927 = vmatpush1.msra.mxu0 %v926
    %928 = vmatprep.subr.mxu0 0.0
    %v929 = vand.u32 %v60, 4294901760
    %930 = vmatpush1.msra.mxu0 %v929
    %931 = vmatprep.subr.mxu0 0.0
    %v932 = vand.u32 %v61, 4294901760
    %933 = vmatpush1.msra.mxu0 %v932
    %934 = vmatprep.subr.mxu0 0.0
    %v935 = vand.u32 %v62, 4294901760
    %936 = vmatpush1.msra.mxu0 %v935
    %937 = vmatprep.subr.mxu0 0.0
    %v938 = vand.u32 %v63, 4294901760
    %939 = vmatpush1.msra.mxu0 %v938
    %940 = vmatprep.subr.mxu0 0.0
    %v941 = vand.u32 %v64, 4294901760
    %942 = vmatpush1.msra.mxu0 %v941
    %943 = vmatprep.subr.mxu0 0.0
    %v944 = vand.u32 %v65, 4294901760
    %945 = vmatpush1.msra.mxu0 %v944
    %946 = vmatprep.subr.mxu0 0.0
    %v947 = vand.u32 %v66, 4294901760
    %948 = vmatpush1.msra.mxu0 %v947
    %949 = vmatprep.subr.mxu0 0.0
    %v950 = vand.u32 %v67, 4294901760
    %951 = vmatpush1.msra.mxu0 %v950
    %952 = vmatprep.subr.mxu0 0.0
    %v953 = vand.u32 %v68, 4294901760
    %954 = vmatpush1.msra.mxu0 %v953
    %955 = vmatprep.subr.mxu0 0.0
    %v956 = vand.u32 %v69, 4294901760
    %957 = vmatpush1.msra.mxu0 %v956
    %958 = vmatprep.subr.mxu0 0.0
    %v959 = vand.u32 %v70, 4294901760
    %960 = vmatpush1.msra.mxu0 %v959
    %961 = vmatprep.subr.mxu0 0.0
    %v962 = vand.u32 %v71, 4294901760
    %963 = vmatpush1.msra.mxu0 %v962
    %v964 = vand.u32 %v106, 4294901760
    %965 = vmatprep.mubr.f32.mxu0 %v964
    %v966 = vand.u32 %v38, 4294901760
    %967 = vmatmul.mubr.f32.gmra.mrb[0].mxu0 %v966
    %v968 = vpop.f32.mrb[0].mxu0
    %v969 = vadd.f32 %v865, %v968
    %v970 = vpop.f32.mrb[0].mxu0
    %971 = vdwg.mxu0
    %972 = vmatprep.subr.mxu0 0.0
    %v973 = vand.u32 %v72, 4294901760
    %974 = vmatpush1.msra.mxu0 %v973
    %975 = vmatprep.subr.mxu0 0.0
    %v976 = vand.u32 %v73, 4294901760
    %977 = vmatpush1.msra.mxu0 %v976
    %978 = vmatprep.subr.mxu0 0.0
    %v979 = vand.u32 %v74, 4294901760
    %980 = vmatpush1.msra.mxu0 %v979
    %981 = vmatprep.subr.mxu0 0.0
    %v982 = vand.u32 %v75, 4294901760
    %983 = vmatpush1.msra.mxu0 %v982
    %984 = vmatprep.subr.mxu0 0.0
    %v985 = vand.u32 %v76, 4294901760
    %986 = vmatpush1.msra.mxu0 %v985
    %987 = vmatprep.subr.mxu0 0.0
    %v988 = vand.u32 %v77, 4294901760
    %989 = vmatpush1.msra.mxu0 %v988
    %990 = vmatprep.subr.mxu0 0.0
    %v991 = vand.u32 %v78, 4294901760
    %992 = vmatpush1.msra.mxu0 %v991
    %993 = vmatprep.subr.mxu0 0.0
    %v994 = vand.u32 %v79, 4294901760
    %995 = vmatpush1.msra.mxu0 %v994
    %996 = vmatprep.subr.mxu0 0.0
    %v997 = vand.u32 %v80, 4294901760
    %998 = vmatpush1.msra.mxu0 %v997
    %999 = vmatprep.subr.mxu0 0.0
    %v1000 = vand.u32 %v81, 4294901760
    %1001 = vmatpush1.msra.mxu0 %v1000
    %1002 = vmatprep.subr.mxu0 0.0
    %v1003 = vand.u32 %v82, 4294901760
    %1004 = vmatpush1.msra.mxu0 %v1003
    %1005 = vmatprep.subr.mxu0 0.0
    %v1006 = vand.u32 %v83, 4294901760
    %1007 = vmatpush1.msra.mxu0 %v1006
    %1008 = vmatprep.subr.mxu0 0.0
    %v1009 = vand.u32 %v84, 4294901760
    %1010 = vmatpush1.msra.mxu0 %v1009
    %1011 = vmatprep.subr.mxu0 0.0
    %v1012 = vand.u32 %v85, 4294901760
    %1013 = vmatpush1.msra.mxu0 %v1012
    %1014 = vmatprep.subr.mxu0 0.0
    %v1015 = vand.u32 %v86, 4294901760
    %1016 = vmatpush1.msra.mxu0 %v1015
    %1017 = vmatprep.subr.mxu0 0.0
    %v1018 = vand.u32 %v87, 4294901760
    %1019 = vmatpush1.msra.mxu0 %v1018
    %1020 = vmatprep.subr.mxu0 0.0
    %v1021 = vand.u32 %v88, 4294901760
    %1022 = vmatpush1.msra.mxu0 %v1021
    %1023 = vmatprep.subr.mxu0 0.0
    %v1024 = vand.u32 %v89, 4294901760
    %1025 = vmatpush1.msra.mxu0 %v1024
    %1026 = vmatprep.subr.mxu0 0.0
    %v1027 = vand.u32 %v90, 4294901760
    %1028 = vmatpush1.msra.mxu0 %v1027
    %1029 = vmatprep.subr.mxu0 0.0
    %v1030 = vand.u32 %v91, 4294901760
    %1031 = vmatpush1.msra.mxu0 %v1030
    %1032 = vmatprep.subr.mxu0 0.0
    %v1033 = vand.u32 %v92, 4294901760
    %1034 = vmatpush1.msra.mxu0 %v1033
    %1035 = vmatprep.subr.mxu0 0.0
    %v1036 = vand.u32 %v93, 4294901760
    %1037 = vmatpush1.msra.mxu0 %v1036
    %1038 = vmatprep.subr.mxu0 0.0
    %v1039 = vand.u32 %v94, 4294901760
    %1040 = vmatpush1.msra.mxu0 %v1039
    %1041 = vmatprep.subr.mxu0 0.0
    %v1042 = vand.u32 %v95, 4294901760
    %1043 = vmatpush1.msra.mxu0 %v1042
    %1044 = vmatprep.subr.mxu0 0.0
    %v1045 = vand.u32 %v96, 4294901760
    %1046 = vmatpush1.msra.mxu0 %v1045
    %1047 = vmatprep.subr.mxu0 0.0
    %v1048 = vand.u32 %v97, 4294901760
    %1049 = vmatpush1.msra.mxu0 %v1048
    %1050 = vmatprep.subr.mxu0 0.0
    %v1051 = vand.u32 %v98, 4294901760
    %1052 = vmatpush1.msra.mxu0 %v1051
    %1053 = vmatprep.subr.mxu0 0.0
    %v1054 = vand.u32 %v99, 4294901760
    %1055 = vmatpush1.msra.mxu0 %v1054
    %1056 = vmatprep.subr.mxu0 0.0
    %v1057 = vand.u32 %v100, 4294901760
    %1058 = vmatpush1.msra.mxu0 %v1057
    %1059 = vmatprep.subr.mxu0 0.0
    %v1060 = vand.u32 %v101, 4294901760
    %1061 = vmatpush1.msra.mxu0 %v1060
    %1062 = vmatprep.subr.mxu0 0.0
    %v1063 = vand.u32 %v102, 4294901760
    %1064 = vmatpush1.msra.mxu0 %v1063
    %1065 = vmatprep.subr.mxu0 0.0
    %v1066 = vand.u32 %v103, 4294901760
    %1067 = vmatpush1.msra.mxu0 %v1066
    %v1068 = vand.u32 %v107, 4294901760
    %v1069 = vsub.f32 %v107, %v1068
    %v1070 = vand.u32 %v1069, 4294901760
    %v1071 = vsub.f32 %v1069, %v1070
    %v1072 = vand.u32 %v1071, 4294901760
    %1073 = vmatprep.mubr.f32.mxu0 %v1072
    %v1074 = vand.u32 %v39, 4294901760
    %v1075 = vsub.f32 %v39, %v1074
    %v1076 = vand.u32 %v1075, 4294901760
    %v1077 = vsub.f32 %v1075, %v1076
    %v1078 = vand.u32 %v1077, 4294901760
    %1079 = vmatmul.mubr.f32.gmra.mrb[0].mxu0 %v1078
    %v1080 = vpop.f32.mrb[0].mxu0
    %v1081 = vadd.f32 %v969, %v1080
    %v1082 = vpop.f32.mrb[0].mxu0
    %1083 = vdwg.mxu0
    %1084 = vmatprep.subr.mxu0 0.0
    %v1085 = vand.u32 %v72, 4294901760
    %v1086 = vsub.f32 %v72, %v1085
    %v1087 = vand.u32 %v1086, 4294901760
    %v1088 = vsub.f32 %v1086, %v1087
    %v1089 = vand.u32 %v1088, 4294901760
    %1090 = vmatpush1.msra.mxu0 %v1089
    %1091 = vmatprep.subr.mxu0 0.0
    %v1092 = vand.u32 %v73, 4294901760
    %v1093 = vsub.f32 %v73, %v1092
    %v1094 = vand.u32 %v1093, 4294901760
    %v1095 = vsub.f32 %v1093, %v1094
    %v1096 = vand.u32 %v1095, 4294901760
    %1097 = vmatpush1.msra.mxu0 %v1096
    %1098 = vmatprep.subr.mxu0 0.0
    %v1099 = vand.u32 %v74, 4294901760
    %v1100 = vsub.f32 %v74, %v1099
    %v1101 = vand.u32 %v1100, 4294901760
    %v1102 = vsub.f32 %v1100, %v1101
    %v1103 = vand.u32 %v1102, 4294901760
    %1104 = vmatpush1.msra.mxu0 %v1103
    %1105 = vmatprep.subr.mxu0 0.0
    %v1106 = vand.u32 %v75, 4294901760
    %v1107 = vsub.f32 %v75, %v1106
    %v1108 = vand.u32 %v1107, 4294901760
    %v1109 = vsub.f32 %v1107, %v1108
    %v1110 = vand.u32 %v1109, 4294901760
    %1111 = vmatpush1.msra.mxu0 %v1110
    %1112 = vmatprep.subr.mxu0 0.0
    %v1113 = vand.u32 %v76, 4294901760
    %v1114 = vsub.f32 %v76, %v1113
    %v1115 = vand.u32 %v1114, 4294901760
    %v1116 = vsub.f32 %v1114, %v1115
    %v1117 = vand.u32 %v1116, 4294901760
    %1118 = vmatpush1.msra.mxu0 %v1117
    %1119 = vmatprep.subr.mxu0 0.0
    %v1120 = vand.u32 %v77, 4294901760
    %v1121 = vsub.f32 %v77, %v1120
    %v1122 = vand.u32 %v1121, 4294901760
    %v1123 = vsub.f32 %v1121, %v1122
    %v1124 = vand.u32 %v1123, 4294901760
    %1125 = vmatpush1.msra.mxu0 %v1124
    %1126 = vmatprep.subr.mxu0 0.0
    %v1127 = vand.u32 %v78, 4294901760
    %v1128 = vsub.f32 %v78, %v1127
    %v1129 = vand.u32 %v1128, 4294901760
    %v1130 = vsub.f32 %v1128, %v1129
    %v1131 = vand.u32 %v1130, 4294901760
    %1132 = vmatpush1.msra.mxu0 %v1131
    %1133 = vmatprep.subr.mxu0 0.0
    %v1134 = vand.u32 %v79, 4294901760
    %v1135 = vsub.f32 %v79, %v1134
    %v1136 = vand.u32 %v1135, 4294901760
    %v1137 = vsub.f32 %v1135, %v1136
    %v1138 = vand.u32 %v1137, 4294901760
    %1139 = vmatpush1.msra.mxu0 %v1138
    %1140 = vmatprep.subr.mxu0 0.0
    %v1141 = vand.u32 %v80, 4294901760
    %v1142 = vsub.f32 %v80, %v1141
    %v1143 = vand.u32 %v1142, 4294901760
    %v1144 = vsub.f32 %v1142, %v1143
    %v1145 = vand.u32 %v1144, 4294901760
    %1146 = vmatpush1.msra.mxu0 %v1145
    %1147 = vmatprep.subr.mxu0 0.0
    %v1148 = vand.u32 %v81, 4294901760
    %v1149 = vsub.f32 %v81, %v1148
    %v1150 = vand.u32 %v1149, 4294901760
    %v1151 = vsub.f32 %v1149, %v1150
    %v1152 = vand.u32 %v1151, 4294901760
    %1153 = vmatpush1.msra.mxu0 %v1152
    %1154 = vmatprep.subr.mxu0 0.0
    %v1155 = vand.u32 %v82, 4294901760
    %v1156 = vsub.f32 %v82, %v1155
    %v1157 = vand.u32 %v1156, 4294901760
    %v1158 = vsub.f32 %v1156, %v1157
    %v1159 = vand.u32 %v1158, 4294901760
    %1160 = vmatpush1.msra.mxu0 %v1159
    %1161 = vmatprep.subr.mxu0 0.0
    %v1162 = vand.u32 %v83, 4294901760
    %v1163 = vsub.f32 %v83, %v1162
    %v1164 = vand.u32 %v1163, 4294901760
    %v1165 = vsub.f32 %v1163, %v1164
    %v1166 = vand.u32 %v1165, 4294901760
    %1167 = vmatpush1.msra.mxu0 %v1166
    %1168 = vmatprep.subr.mxu0 0.0
    %v1169 = vand.u32 %v84, 4294901760
    %v1170 = vsub.f32 %v84, %v1169
    %v1171 = vand.u32 %v1170, 4294901760
    %v1172 = vsub.f32 %v1170, %v1171
    %v1173 = vand.u32 %v1172, 4294901760
    %1174 = vmatpush1.msra.mxu0 %v1173
    %1175 = vmatprep.subr.mxu0 0.0
    %v1176 = vand.u32 %v85, 4294901760
    %v1177 = vsub.f32 %v85, %v1176
    %v1178 = vand.u32 %v1177, 4294901760
    %v1179 = vsub.f32 %v1177, %v1178
    %v1180 = vand.u32 %v1179, 4294901760
    %1181 = vmatpush1.msra.mxu0 %v1180
    %1182 = vmatprep.subr.mxu0 0.0
    %v1183 = vand.u32 %v86, 4294901760
    %v1184 = vsub.f32 %v86, %v1183
    %v1185 = vand.u32 %v1184, 4294901760
    %v1186 = vsub.f32 %v1184, %v1185
    %v1187 = vand.u32 %v1186, 4294901760
    %1188 = vmatpush1.msra.mxu0 %v1187
    %1189 = vmatprep.subr.mxu0 0.0
    %v1190 = vand.u32 %v87, 4294901760
    %v1191 = vsub.f32 %v87, %v1190
    %v1192 = vand.u32 %v1191, 4294901760
    %v1193 = vsub.f32 %v1191, %v1192
    %v1194 = vand.u32 %v1193, 4294901760
    %1195 = vmatpush1.msra.mxu0 %v1194
    %1196 = vmatprep.subr.mxu0 0.0
    %v1197 = vand.u32 %v88, 4294901760
    %v1198 = vsub.f32 %v88, %v1197
    %v1199 = vand.u32 %v1198, 4294901760
    %v1200 = vsub.f32 %v1198, %v1199
    %v1201 = vand.u32 %v1200, 4294901760
    %1202 = vmatpush1.msra.mxu0 %v1201
    %1203 = vmatprep.subr.mxu0 0.0
    %v1204 = vand.u32 %v89, 4294901760
    %v1205 = vsub.f32 %v89, %v1204
    %v1206 = vand.u32 %v1205, 4294901760
    %v1207 = vsub.f32 %v1205, %v1206
    %v1208 = vand.u32 %v1207, 4294901760
    %1209 = vmatpush1.msra.mxu0 %v1208
    %1210 = vmatprep.subr.mxu0 0.0
    %v1211 = vand.u32 %v90, 4294901760
    %v1212 = vsub.f32 %v90, %v1211
    %v1213 = vand.u32 %v1212, 4294901760
    %v1214 = vsub.f32 %v1212, %v1213
    %v1215 = vand.u32 %v1214, 4294901760
    %1216 = vmatpush1.msra.mxu0 %v1215
    %1217 = vmatprep.subr.mxu0 0.0
    %v1218 = vand.u32 %v91, 4294901760
    %v1219 = vsub.f32 %v91, %v1218
    %v1220 = vand.u32 %v1219, 4294901760
    %v1221 = vsub.f32 %v1219, %v1220
    %v1222 = vand.u32 %v1221, 4294901760
    %1223 = vmatpush1.msra.mxu0 %v1222
    %1224 = vmatprep.subr.mxu0 0.0
    %v1225 = vand.u32 %v92, 4294901760
    %v1226 = vsub.f32 %v92, %v1225
    %v1227 = vand.u32 %v1226, 4294901760
    %v1228 = vsub.f32 %v1226, %v1227
    %v1229 = vand.u32 %v1228, 4294901760
    %1230 = vmatpush1.msra.mxu0 %v1229
    %1231 = vmatprep.subr.mxu0 0.0
    %v1232 = vand.u32 %v93, 4294901760
    %v1233 = vsub.f32 %v93, %v1232
    %v1234 = vand.u32 %v1233, 4294901760
    %v1235 = vsub.f32 %v1233, %v1234
    %v1236 = vand.u32 %v1235, 4294901760
    %1237 = vmatpush1.msra.mxu0 %v1236
    %1238 = vmatprep.subr.mxu0 0.0
    %v1239 = vand.u32 %v94, 4294901760
    %v1240 = vsub.f32 %v94, %v1239
    %v1241 = vand.u32 %v1240, 4294901760
    %v1242 = vsub.f32 %v1240, %v1241
    %v1243 = vand.u32 %v1242, 4294901760
    %1244 = vmatpush1.msra.mxu0 %v1243
    %1245 = vmatprep.subr.mxu0 0.0
    %v1246 = vand.u32 %v95, 4294901760
    %v1247 = vsub.f32 %v95, %v1246
    %v1248 = vand.u32 %v1247, 4294901760
    %v1249 = vsub.f32 %v1247, %v1248
    %v1250 = vand.u32 %v1249, 4294901760
    %1251 = vmatpush1.msra.mxu0 %v1250
    %1252 = vmatprep.subr.mxu0 0.0
    %v1253 = vand.u32 %v96, 4294901760
    %v1254 = vsub.f32 %v96, %v1253
    %v1255 = vand.u32 %v1254, 4294901760
    %v1256 = vsub.f32 %v1254, %v1255
    %v1257 = vand.u32 %v1256, 4294901760
    %1258 = vmatpush1.msra.mxu0 %v1257
    %1259 = vmatprep.subr.mxu0 0.0
    %v1260 = vand.u32 %v97, 4294901760
    %v1261 = vsub.f32 %v97, %v1260
    %v1262 = vand.u32 %v1261, 4294901760
    %v1263 = vsub.f32 %v1261, %v1262
    %v1264 = vand.u32 %v1263, 4294901760
    %1265 = vmatpush1.msra.mxu0 %v1264
    %1266 = vmatprep.subr.mxu0 0.0
    %v1267 = vand.u32 %v98, 4294901760
    %v1268 = vsub.f32 %v98, %v1267
    %v1269 = vand.u32 %v1268, 4294901760
    %v1270 = vsub.f32 %v1268, %v1269
    %v1271 = vand.u32 %v1270, 4294901760
    %1272 = vmatpush1.msra.mxu0 %v1271
    %1273 = vmatprep.subr.mxu0 0.0
    %v1274 = vand.u32 %v99, 4294901760
    %v1275 = vsub.f32 %v99, %v1274
    %v1276 = vand.u32 %v1275, 4294901760
    %v1277 = vsub.f32 %v1275, %v1276
    %v1278 = vand.u32 %v1277, 4294901760
    %1279 = vmatpush1.msra.mxu0 %v1278
    %1280 = vmatprep.subr.mxu0 0.0
    %v1281 = vand.u32 %v100, 4294901760
    %v1282 = vsub.f32 %v100, %v1281
    %v1283 = vand.u32 %v1282, 4294901760
    %v1284 = vsub.f32 %v1282, %v1283
    %v1285 = vand.u32 %v1284, 4294901760
    %1286 = vmatpush1.msra.mxu0 %v1285
    %1287 = vmatprep.subr.mxu0 0.0
    %v1288 = vand.u32 %v101, 4294901760
    %v1289 = vsub.f32 %v101, %v1288
    %v1290 = vand.u32 %v1289, 4294901760
    %v1291 = vsub.f32 %v1289, %v1290
    %v1292 = vand.u32 %v1291, 4294901760
    %1293 = vmatpush1.msra.mxu0 %v1292
    %1294 = vmatprep.subr.mxu0 0.0
    %v1295 = vand.u32 %v102, 4294901760
    %v1296 = vsub.f32 %v102, %v1295
    %v1297 = vand.u32 %v1296, 4294901760
    %v1298 = vsub.f32 %v1296, %v1297
    %v1299 = vand.u32 %v1298, 4294901760
    %1300 = vmatpush1.msra.mxu0 %v1299
    %1301 = vmatprep.subr.mxu0 0.0
    %v1302 = vand.u32 %v103, 4294901760
    %v1303 = vsub.f32 %v103, %v1302
    %v1304 = vand.u32 %v1303, 4294901760
    %v1305 = vsub.f32 %v1303, %v1304
    %v1306 = vand.u32 %v1305, 4294901760
    %1307 = vmatpush1.msra.mxu0 %v1306
    %v1308 = vand.u32 %v107, 4294901760
    %1309 = vmatprep.mubr.f32.mxu0 %v1308
    %v1310 = vand.u32 %v39, 4294901760
    %1311 = vmatmul.mubr.f32.gmra.mrb[0].mxu0 %v1310
    %v1312 = vpop.f32.mrb[0].mxu0
    %v1313 = vadd.f32 %v1081, %v1312
    %v1314 = vpop.f32.mrb[0].mxu0
    %1315 = vdwg.mxu0
    %1316 = vmatprep.subr.mxu0 0.0
    %v1317 = vand.u32 %v72, 4294901760
    %v1318 = vsub.f32 %v72, %v1317
    %1319 = vmatpush1.msra.mxu0 %v1318
    %1320 = vmatprep.subr.mxu0 0.0
    %v1321 = vand.u32 %v73, 4294901760
    %v1322 = vsub.f32 %v73, %v1321
    %1323 = vmatpush1.msra.mxu0 %v1322
    %1324 = vmatprep.subr.mxu0 0.0
    %v1325 = vand.u32 %v74, 4294901760
    %v1326 = vsub.f32 %v74, %v1325
    %1327 = vmatpush1.msra.mxu0 %v1326
    %1328 = vmatprep.subr.mxu0 0.0
    %v1329 = vand.u32 %v75, 4294901760
    %v1330 = vsub.f32 %v75, %v1329
    %1331 = vmatpush1.msra.mxu0 %v1330
    %1332 = vmatprep.subr.mxu0 0.0
    %v1333 = vand.u32 %v76, 4294901760
    %v1334 = vsub.f32 %v76, %v1333
    %1335 = vmatpush1.msra.mxu0 %v1334
    %1336 = vmatprep.subr.mxu0 0.0
    %v1337 = vand.u32 %v77, 4294901760
    %v1338 = vsub.f32 %v77, %v1337
    %1339 = vmatpush1.msra.mxu0 %v1338
    %1340 = vmatprep.subr.mxu0 0.0
    %v1341 = vand.u32 %v78, 4294901760
    %v1342 = vsub.f32 %v78, %v1341
    %1343 = vmatpush1.msra.mxu0 %v1342
    %1344 = vmatprep.subr.mxu0 0.0
    %v1345 = vand.u32 %v79, 4294901760
    %v1346 = vsub.f32 %v79, %v1345
    %1347 = vmatpush1.msra.mxu0 %v1346
    %1348 = vmatprep.subr.mxu0 0.0
    %v1349 = vand.u32 %v80, 4294901760
    %v1350 = vsub.f32 %v80, %v1349
    %1351 = vmatpush1.msra.mxu0 %v1350
    %1352 = vmatprep.subr.mxu0 0.0
    %v1353 = vand.u32 %v81, 4294901760
    %v1354 = vsub.f32 %v81, %v1353
    %1355 = vmatpush1.msra.mxu0 %v1354
    %1356 = vmatprep.subr.mxu0 0.0
    %v1357 = vand.u32 %v82, 4294901760
    %v1358 = vsub.f32 %v82, %v1357
    %1359 = vmatpush1.msra.mxu0 %v1358
    %1360 = vmatprep.subr.mxu0 0.0
    %v1361 = vand.u32 %v83, 4294901760
    %v1362 = vsub.f32 %v83, %v1361
    %1363 = vmatpush1.msra.mxu0 %v1362
    %1364 = vmatprep.subr.mxu0 0.0
    %v1365 = vand.u32 %v84, 4294901760
    %v1366 = vsub.f32 %v84, %v1365
    %1367 = vmatpush1.msra.mxu0 %v1366
    %1368 = vmatprep.subr.mxu0 0.0
    %v1369 = vand.u32 %v85, 4294901760
    %v1370 = vsub.f32 %v85, %v1369
    %1371 = vmatpush1.msra.mxu0 %v1370
    %1372 = vmatprep.subr.mxu0 0.0
    %v1373 = vand.u32 %v86, 4294901760
    %v1374 = vsub.f32 %v86, %v1373
    %1375 = vmatpush1.msra.mxu0 %v1374
    %1376 = vmatprep.subr.mxu0 0.0
    %v1377 = vand.u32 %v87, 4294901760
    %v1378 = vsub.f32 %v87, %v1377
    %1379 = vmatpush1.msra.mxu0 %v1378
    %1380 = vmatprep.subr.mxu0 0.0
    %v1381 = vand.u32 %v88, 4294901760
    %v1382 = vsub.f32 %v88, %v1381
    %1383 = vmatpush1.msra.mxu0 %v1382
    %1384 = vmatprep.subr.mxu0 0.0
    %v1385 = vand.u32 %v89, 4294901760
    %v1386 = vsub.f32 %v89, %v1385
    %1387 = vmatpush1.msra.mxu0 %v1386
    %1388 = vmatprep.subr.mxu0 0.0
    %v1389 = vand.u32 %v90, 4294901760
    %v1390 = vsub.f32 %v90, %v1389
    %1391 = vmatpush1.msra.mxu0 %v1390
    %1392 = vmatprep.subr.mxu0 0.0
    %v1393 = vand.u32 %v91, 4294901760
    %v1394 = vsub.f32 %v91, %v1393
    %1395 = vmatpush1.msra.mxu0 %v1394
    %1396 = vmatprep.subr.mxu0 0.0
    %v1397 = vand.u32 %v92, 4294901760
    %v1398 = vsub.f32 %v92, %v1397
    %1399 = vmatpush1.msra.mxu0 %v1398
    %1400 = vmatprep.subr.mxu0 0.0
    %v1401 = vand.u32 %v93, 4294901760
    %v1402 = vsub.f32 %v93, %v1401
    %1403 = vmatpush1.msra.mxu0 %v1402
    %1404 = vmatprep.subr.mxu0 0.0
    %v1405 = vand.u32 %v94, 4294901760
    %v1406 = vsub.f32 %v94, %v1405
    %1407 = vmatpush1.msra.mxu0 %v1406
    %1408 = vmatprep.subr.mxu0 0.0
    %v1409 = vand.u32 %v95, 4294901760
    %v1410 = vsub.f32 %v95, %v1409
    %1411 = vmatpush1.msra.mxu0 %v1410
    %1412 = vmatprep.subr.mxu0 0.0
    %v1413 = vand.u32 %v96, 4294901760
    %v1414 = vsub.f32 %v96, %v1413
    %1415 = vmatpush1.msra.mxu0 %v1414
    %1416 = vmatprep.subr.mxu0 0.0
    %v1417 = vand.u32 %v97, 4294901760
    %v1418 = vsub.f32 %v97, %v1417
    %1419 = vmatpush1.msra.mxu0 %v1418
    %1420 = vmatprep.subr.mxu0 0.0
    %v1421 = vand.u32 %v98, 4294901760
    %v1422 = vsub.f32 %v98, %v1421
    %1423 = vmatpush1.msra.mxu0 %v1422
    %1424 = vmatprep.subr.mxu0 0.0
    %v1425 = vand.u32 %v99, 4294901760
    %v1426 = vsub.f32 %v99, %v1425
    %1427 = vmatpush1.msra.mxu0 %v1426
    %1428 = vmatprep.subr.mxu0 0.0
    %v1429 = vand.u32 %v100, 4294901760
    %v1430 = vsub.f32 %v100, %v1429
    %1431 = vmatpush1.msra.mxu0 %v1430
    %1432 = vmatprep.subr.mxu0 0.0
    %v1433 = vand.u32 %v101, 4294901760
    %v1434 = vsub.f32 %v101, %v1433
    %1435 = vmatpush1.msra.mxu0 %v1434
    %1436 = vmatprep.subr.mxu0 0.0
    %v1437 = vand.u32 %v102, 4294901760
    %v1438 = vsub.f32 %v102, %v1437
    %1439 = vmatpush1.msra.mxu0 %v1438
    %1440 = vmatprep.subr.mxu0 0.0
    %v1441 = vand.u32 %v103, 4294901760
    %v1442 = vsub.f32 %v103, %v1441
    %1443 = vmatpush1.msra.mxu0 %v1442
    %v1444 = vand.u32 %v107, 4294901760
    %v1445 = vsub.f32 %v107, %v1444
    %1446 = vmatprep.mubr.f32.mxu0 %v1445
    %v1447 = vand.u32 %v39, 4294901760
    %v1448 = vsub.f32 %v39, %v1447
    %1449 = vmatmul.mubr.f32.gmra.mrb[0].mxu0 %v1448
    %v1450 = vpop.f32.mrb[0].mxu0
    %v1451 = vadd.f32 %v1313, %v1450
    %v1452 = vpop.f32.mrb[0].mxu0
    %1453 = vdwg.mxu0
    %1454 = vmatprep.subr.mxu0 0.0
    %v1455 = vand.u32 %v72, 4294901760
    %1456 = vmatpush1.msra.mxu0 %v1455
    %1457 = vmatprep.subr.mxu0 0.0
    %v1458 = vand.u32 %v73, 4294901760
    %1459 = vmatpush1.msra.mxu0 %v1458
    %1460 = vmatprep.subr.mxu0 0.0
    %v1461 = vand.u32 %v74, 4294901760
    %1462 = vmatpush1.msra.mxu0 %v1461
    %1463 = vmatprep.subr.mxu0 0.0
    %v1464 = vand.u32 %v75, 4294901760
    %1465 = vmatpush1.msra.mxu0 %v1464
    %1466 = vmatprep.subr.mxu0 0.0
    %v1467 = vand.u32 %v76, 4294901760
    %1468 = vmatpush1.msra.mxu0 %v1467
    %1469 = vmatprep.subr.mxu0 0.0
    %v1470 = vand.u32 %v77, 4294901760
    %1471 = vmatpush1.msra.mxu0 %v1470
    %1472 = vmatprep.subr.mxu0 0.0
    %v1473 = vand.u32 %v78, 4294901760
    %1474 = vmatpush1.msra.mxu0 %v1473
    %1475 = vmatprep.subr.mxu0 0.0
    %v1476 = vand.u32 %v79, 4294901760
    %1477 = vmatpush1.msra.mxu0 %v1476
    %1478 = vmatprep.subr.mxu0 0.0
    %v1479 = vand.u32 %v80, 4294901760
    %1480 = vmatpush1.msra.mxu0 %v1479
    %1481 = vmatprep.subr.mxu0 0.0
    %v1482 = vand.u32 %v81, 4294901760
    %1483 = vmatpush1.msra.mxu0 %v1482
    %1484 = vmatprep.subr.mxu0 0.0
    %v1485 = vand.u32 %v82, 4294901760
    %1486 = vmatpush1.msra.mxu0 %v1485
    %1487 = vmatprep.subr.mxu0 0.0
    %v1488 = vand.u32 %v83, 4294901760
    %1489 = vmatpush1.msra.mxu0 %v1488
    %1490 = vmatprep.subr.mxu0 0.0
    %v1491 = vand.u32 %v84, 4294901760
    %1492 = vmatpush1.msra.mxu0 %v1491
    %1493 = vmatprep.subr.mxu0 0.0
    %v1494 = vand.u32 %v85, 4294901760
    %1495 = vmatpush1.msra.mxu0 %v1494
    %1496 = vmatprep.subr.mxu0 0.0
    %v1497 = vand.u32 %v86, 4294901760
    %1498 = vmatpush1.msra.mxu0 %v1497
    %1499 = vmatprep.subr.mxu0 0.0
    %v1500 = vand.u32 %v87, 4294901760
    %1501 = vmatpush1.msra.mxu0 %v1500
    %1502 = vmatprep.subr.mxu0 0.0
    %v1503 = vand.u32 %v88, 4294901760
    %1504 = vmatpush1.msra.mxu0 %v1503
    %1505 = vmatprep.subr.mxu0 0.0
    %v1506 = vand.u32 %v89, 4294901760
    %1507 = vmatpush1.msra.mxu0 %v1506
    %1508 = vmatprep.subr.mxu0 0.0
    %v1509 = vand.u32 %v90, 4294901760
    %1510 = vmatpush1.msra.mxu0 %v1509
    %1511 = vmatprep.subr.mxu0 0.0
    %v1512 = vand.u32 %v91, 4294901760
    %1513 = vmatpush1.msra.mxu0 %v1512
    %1514 = vmatprep.subr.mxu0 0.0
    %v1515 = vand.u32 %v92, 4294901760
    %1516 = vmatpush1.msra.mxu0 %v1515
    %1517 = vmatprep.subr.mxu0 0.0
    %v1518 = vand.u32 %v93, 4294901760
    %1519 = vmatpush1.msra.mxu0 %v1518
    %1520 = vmatprep.subr.mxu0 0.0
    %v1521 = vand.u32 %v94, 4294901760
    %1522 = vmatpush1.msra.mxu0 %v1521
    %1523 = vmatprep.subr.mxu0 0.0
    %v1524 = vand.u32 %v95, 4294901760
    %1525 = vmatpush1.msra.mxu0 %v1524
    %1526 = vmatprep.subr.mxu0 0.0
    %v1527 = vand.u32 %v96, 4294901760
    %1528 = vmatpush1.msra.mxu0 %v1527
    %1529 = vmatprep.subr.mxu0 0.0
    %v1530 = vand.u32 %v97, 4294901760
    %1531 = vmatpush1.msra.mxu0 %v1530
    %1532 = vmatprep.subr.mxu0 0.0
    %v1533 = vand.u32 %v98, 4294901760
    %1534 = vmatpush1.msra.mxu0 %v1533
    %1535 = vmatprep.subr.mxu0 0.0
    %v1536 = vand.u32 %v99, 4294901760
    %1537 = vmatpush1.msra.mxu0 %v1536
    %1538 = vmatprep.subr.mxu0 0.0
    %v1539 = vand.u32 %v100, 4294901760
    %1540 = vmatpush1.msra.mxu0 %v1539
    %1541 = vmatprep.subr.mxu0 0.0
    %v1542 = vand.u32 %v101, 4294901760
    %1543 = vmatpush1.msra.mxu0 %v1542
    %1544 = vmatprep.subr.mxu0 0.0
    %v1545 = vand.u32 %v102, 4294901760
    %1546 = vmatpush1.msra.mxu0 %v1545
    %1547 = vmatprep.subr.mxu0 0.0
    %v1548 = vand.u32 %v103, 4294901760
    %1549 = vmatpush1.msra.mxu0 %v1548
    %v1550 = vand.u32 %v107, 4294901760
    %v1551 = vsub.f32 %v107, %v1550
    %v1552 = vand.u32 %v1551, 4294901760
    %1553 = vmatprep.mubr.f32.mxu0 %v1552
    %v1554 = vand.u32 %v39, 4294901760
    %v1555 = vsub.f32 %v39, %v1554
    %v1556 = vand.u32 %v1555, 4294901760
    %1557 = vmatmul.mubr.f32.gmra.mrb[0].mxu0 %v1556
    %v1558 = vpop.f32.mrb[0].mxu0
    %v1559 = vadd.f32 %v1451, %v1558
    %v1560 = vpop.f32.mrb[0].mxu0
    %1561 = vdwg.mxu0
    %1562 = vmatprep.subr.mxu0 0.0
    %v1563 = vand.u32 %v72, 4294901760
    %v1564 = vsub.f32 %v72, %v1563
    %v1565 = vand.u32 %v1564, 4294901760
    %1566 = vmatpush1.msra.mxu0 %v1565
    %1567 = vmatprep.subr.mxu0 0.0
    %v1568 = vand.u32 %v73, 4294901760
    %v1569 = vsub.f32 %v73, %v1568
    %v1570 = vand.u32 %v1569, 4294901760
    %1571 = vmatpush1.msra.mxu0 %v1570
    %1572 = vmatprep.subr.mxu0 0.0
    %v1573 = vand.u32 %v74, 4294901760
    %v1574 = vsub.f32 %v74, %v1573
    %v1575 = vand.u32 %v1574, 4294901760
    %1576 = vmatpush1.msra.mxu0 %v1575
    %1577 = vmatprep.subr.mxu0 0.0
    %v1578 = vand.u32 %v75, 4294901760
    %v1579 = vsub.f32 %v75, %v1578
    %v1580 = vand.u32 %v1579, 4294901760
    %1581 = vmatpush1.msra.mxu0 %v1580
    %1582 = vmatprep.subr.mxu0 0.0
    %v1583 = vand.u32 %v76, 4294901760
    %v1584 = vsub.f32 %v76, %v1583
    %v1585 = vand.u32 %v1584, 4294901760
    %1586 = vmatpush1.msra.mxu0 %v1585
    %1587 = vmatprep.subr.mxu0 0.0
    %v1588 = vand.u32 %v77, 4294901760
    %v1589 = vsub.f32 %v77, %v1588
    %v1590 = vand.u32 %v1589, 4294901760
    %1591 = vmatpush1.msra.mxu0 %v1590
    %1592 = vmatprep.subr.mxu0 0.0
    %v1593 = vand.u32 %v78, 4294901760
    %v1594 = vsub.f32 %v78, %v1593
    %v1595 = vand.u32 %v1594, 4294901760
    %1596 = vmatpush1.msra.mxu0 %v1595
    %1597 = vmatprep.subr.mxu0 0.0
    %v1598 = vand.u32 %v79, 4294901760
    %v1599 = vsub.f32 %v79, %v1598
    %v1600 = vand.u32 %v1599, 4294901760
    %1601 = vmatpush1.msra.mxu0 %v1600
    %1602 = vmatprep.subr.mxu0 0.0
    %v1603 = vand.u32 %v80, 4294901760
    %v1604 = vsub.f32 %v80, %v1603
    %v1605 = vand.u32 %v1604, 4294901760
    %1606 = vmatpush1.msra.mxu0 %v1605
    %1607 = vmatprep.subr.mxu0 0.0
    %v1608 = vand.u32 %v81, 4294901760
    %v1609 = vsub.f32 %v81, %v1608
    %v1610 = vand.u32 %v1609, 4294901760
    %1611 = vmatpush1.msra.mxu0 %v1610
    %1612 = vmatprep.subr.mxu0 0.0
    %v1613 = vand.u32 %v82, 4294901760
    %v1614 = vsub.f32 %v82, %v1613
    %v1615 = vand.u32 %v1614, 4294901760
    %1616 = vmatpush1.msra.mxu0 %v1615
    %1617 = vmatprep.subr.mxu0 0.0
    %v1618 = vand.u32 %v83, 4294901760
    %v1619 = vsub.f32 %v83, %v1618
    %v1620 = vand.u32 %v1619, 4294901760
    %1621 = vmatpush1.msra.mxu0 %v1620
    %1622 = vmatprep.subr.mxu0 0.0
    %v1623 = vand.u32 %v84, 4294901760
    %v1624 = vsub.f32 %v84, %v1623
    %v1625 = vand.u32 %v1624, 4294901760
    %1626 = vmatpush1.msra.mxu0 %v1625
    %1627 = vmatprep.subr.mxu0 0.0
    %v1628 = vand.u32 %v85, 4294901760
    %v1629 = vsub.f32 %v85, %v1628
    %v1630 = vand.u32 %v1629, 4294901760
    %1631 = vmatpush1.msra.mxu0 %v1630
    %1632 = vmatprep.subr.mxu0 0.0
    %v1633 = vand.u32 %v86, 4294901760
    %v1634 = vsub.f32 %v86, %v1633
    %v1635 = vand.u32 %v1634, 4294901760
    %1636 = vmatpush1.msra.mxu0 %v1635
    %1637 = vmatprep.subr.mxu0 0.0
    %v1638 = vand.u32 %v87, 4294901760
    %v1639 = vsub.f32 %v87, %v1638
    %v1640 = vand.u32 %v1639, 4294901760
    %1641 = vmatpush1.msra.mxu0 %v1640
    %1642 = vmatprep.subr.mxu0 0.0
    %v1643 = vand.u32 %v88, 4294901760
    %v1644 = vsub.f32 %v88, %v1643
    %v1645 = vand.u32 %v1644, 4294901760
    %1646 = vmatpush1.msra.mxu0 %v1645
    %1647 = vmatprep.subr.mxu0 0.0
    %v1648 = vand.u32 %v89, 4294901760
    %v1649 = vsub.f32 %v89, %v1648
    %v1650 = vand.u32 %v1649, 4294901760
    %1651 = vmatpush1.msra.mxu0 %v1650
    %1652 = vmatprep.subr.mxu0 0.0
    %v1653 = vand.u32 %v90, 4294901760
    %v1654 = vsub.f32 %v90, %v1653
    %v1655 = vand.u32 %v1654, 4294901760
    %1656 = vmatpush1.msra.mxu0 %v1655
    %1657 = vmatprep.subr.mxu0 0.0
    %v1658 = vand.u32 %v91, 4294901760
    %v1659 = vsub.f32 %v91, %v1658
    %v1660 = vand.u32 %v1659, 4294901760
    %1661 = vmatpush1.msra.mxu0 %v1660
    %1662 = vmatprep.subr.mxu0 0.0
    %v1663 = vand.u32 %v92, 4294901760
    %v1664 = vsub.f32 %v92, %v1663
    %v1665 = vand.u32 %v1664, 4294901760
    %1666 = vmatpush1.msra.mxu0 %v1665
    %1667 = vmatprep.subr.mxu0 0.0
    %v1668 = vand.u32 %v93, 4294901760
    %v1669 = vsub.f32 %v93, %v1668
    %v1670 = vand.u32 %v1669, 4294901760
    %1671 = vmatpush1.msra.mxu0 %v1670
    %1672 = vmatprep.subr.mxu0 0.0
    %v1673 = vand.u32 %v94, 4294901760
    %v1674 = vsub.f32 %v94, %v1673
    %v1675 = vand.u32 %v1674, 4294901760
    %1676 = vmatpush1.msra.mxu0 %v1675
    %1677 = vmatprep.subr.mxu0 0.0
    %v1678 = vand.u32 %v95, 4294901760
    %v1679 = vsub.f32 %v95, %v1678
    %v1680 = vand.u32 %v1679, 4294901760
    %1681 = vmatpush1.msra.mxu0 %v1680
    %1682 = vmatprep.subr.mxu0 0.0
    %v1683 = vand.u32 %v96, 4294901760
    %v1684 = vsub.f32 %v96, %v1683
    %v1685 = vand.u32 %v1684, 4294901760
    %1686 = vmatpush1.msra.mxu0 %v1685
    %1687 = vmatprep.subr.mxu0 0.0
    %v1688 = vand.u32 %v97, 4294901760
    %v1689 = vsub.f32 %v97, %v1688
    %v1690 = vand.u32 %v1689, 4294901760
    %1691 = vmatpush1.msra.mxu0 %v1690
    %1692 = vmatprep.subr.mxu0 0.0
    %v1693 = vand.u32 %v98, 4294901760
    %v1694 = vsub.f32 %v98, %v1693
    %v1695 = vand.u32 %v1694, 4294901760
    %1696 = vmatpush1.msra.mxu0 %v1695
    %1697 = vmatprep.subr.mxu0 0.0
    %v1698 = vand.u32 %v99, 4294901760
    %v1699 = vsub.f32 %v99, %v1698
    %v1700 = vand.u32 %v1699, 4294901760
    %1701 = vmatpush1.msra.mxu0 %v1700
    %1702 = vmatprep.subr.mxu0 0.0
    %v1703 = vand.u32 %v100, 4294901760
    %v1704 = vsub.f32 %v100, %v1703
    %v1705 = vand.u32 %v1704, 4294901760
    %1706 = vmatpush1.msra.mxu0 %v1705
    %1707 = vmatprep.subr.mxu0 0.0
    %v1708 = vand.u32 %v101, 4294901760
    %v1709 = vsub.f32 %v101, %v1708
    %v1710 = vand.u32 %v1709, 4294901760
    %1711 = vmatpush1.msra.mxu0 %v1710
    %1712 = vmatprep.subr.mxu0 0.0
    %v1713 = vand.u32 %v102, 4294901760
    %v1714 = vsub.f32 %v102, %v1713
    %v1715 = vand.u32 %v1714, 4294901760
    %1716 = vmatpush1.msra.mxu0 %v1715
    %1717 = vmatprep.subr.mxu0 0.0
    %v1718 = vand.u32 %v103, 4294901760
    %v1719 = vsub.f32 %v103, %v1718
    %v1720 = vand.u32 %v1719, 4294901760
    %1721 = vmatpush1.msra.mxu0 %v1720
    %v1722 = vand.u32 %v107, 4294901760
    %1723 = vmatprep.mubr.f32.mxu0 %v1722
    %v1724 = vand.u32 %v39, 4294901760
    %1725 = vmatmul.mubr.f32.gmra.mrb[0].mxu0 %v1724
    %v1726 = vpop.f32.mrb[0].mxu0
    %v1727 = vadd.f32 %v1559, %v1726
    %v1728 = vpop.f32.mrb[0].mxu0
    %1729 = vdwg.mxu0
    %1730 = vmatprep.subr.mxu0 0.0
    %v1731 = vand.u32 %v72, 4294901760
    %1732 = vmatpush1.msra.mxu0 %v1731
    %1733 = vmatprep.subr.mxu0 0.0
    %v1734 = vand.u32 %v73, 4294901760
    %1735 = vmatpush1.msra.mxu0 %v1734
    %1736 = vmatprep.subr.mxu0 0.0
    %v1737 = vand.u32 %v74, 4294901760
    %1738 = vmatpush1.msra.mxu0 %v1737
    %1739 = vmatprep.subr.mxu0 0.0
    %v1740 = vand.u32 %v75, 4294901760
    %1741 = vmatpush1.msra.mxu0 %v1740
    %1742 = vmatprep.subr.mxu0 0.0
    %v1743 = vand.u32 %v76, 4294901760
    %1744 = vmatpush1.msra.mxu0 %v1743
    %1745 = vmatprep.subr.mxu0 0.0
    %v1746 = vand.u32 %v77, 4294901760
    %1747 = vmatpush1.msra.mxu0 %v1746
    %1748 = vmatprep.subr.mxu0 0.0
    %v1749 = vand.u32 %v78, 4294901760
    %1750 = vmatpush1.msra.mxu0 %v1749
    %1751 = vmatprep.subr.mxu0 0.0
    %v1752 = vand.u32 %v79, 4294901760
    %1753 = vmatpush1.msra.mxu0 %v1752
    %1754 = vmatprep.subr.mxu0 0.0
    %v1755 = vand.u32 %v80, 4294901760
    %1756 = vmatpush1.msra.mxu0 %v1755
    %1757 = vmatprep.subr.mxu0 0.0
    %v1758 = vand.u32 %v81, 4294901760
    %1759 = vmatpush1.msra.mxu0 %v1758
    %1760 = vmatprep.subr.mxu0 0.0
    %v1761 = vand.u32 %v82, 4294901760
    %1762 = vmatpush1.msra.mxu0 %v1761
    %1763 = vmatprep.subr.mxu0 0.0
    %v1764 = vand.u32 %v83, 4294901760
    %1765 = vmatpush1.msra.mxu0 %v1764
    %1766 = vmatprep.subr.mxu0 0.0
    %v1767 = vand.u32 %v84, 4294901760
    %1768 = vmatpush1.msra.mxu0 %v1767
    %1769 = vmatprep.subr.mxu0 0.0
    %v1770 = vand.u32 %v85, 4294901760
    %1771 = vmatpush1.msra.mxu0 %v1770
    %1772 = vmatprep.subr.mxu0 0.0
    %v1773 = vand.u32 %v86, 4294901760
    %1774 = vmatpush1.msra.mxu0 %v1773
    %1775 = vmatprep.subr.mxu0 0.0
    %v1776 = vand.u32 %v87, 4294901760
    %1777 = vmatpush1.msra.mxu0 %v1776
    %1778 = vmatprep.subr.mxu0 0.0
    %v1779 = vand.u32 %v88, 4294901760
    %1780 = vmatpush1.msra.mxu0 %v1779
    %1781 = vmatprep.subr.mxu0 0.0
    %v1782 = vand.u32 %v89, 4294901760
    %1783 = vmatpush1.msra.mxu0 %v1782
    %1784 = vmatprep.subr.mxu0 0.0
    %v1785 = vand.u32 %v90, 4294901760
    %1786 = vmatpush1.msra.mxu0 %v1785
    %1787 = vmatprep.subr.mxu0 0.0
    %v1788 = vand.u32 %v91, 4294901760
    %1789 = vmatpush1.msra.mxu0 %v1788
    %1790 = vmatprep.subr.mxu0 0.0
    %v1791 = vand.u32 %v92, 4294901760
    %1792 = vmatpush1.msra.mxu0 %v1791
    %1793 = vmatprep.subr.mxu0 0.0
    %v1794 = vand.u32 %v93, 4294901760
    %1795 = vmatpush1.msra.mxu0 %v1794
    %1796 = vmatprep.subr.mxu0 0.0
    %v1797 = vand.u32 %v94, 4294901760
    %1798 = vmatpush1.msra.mxu0 %v1797
    %1799 = vmatprep.subr.mxu0 0.0
    %v1800 = vand.u32 %v95, 4294901760
    %1801 = vmatpush1.msra.mxu0 %v1800
    %1802 = vmatprep.subr.mxu0 0.0
    %v1803 = vand.u32 %v96, 4294901760
    %1804 = vmatpush1.msra.mxu0 %v1803
    %1805 = vmatprep.subr.mxu0 0.0
    %v1806 = vand.u32 %v97, 4294901760
    %1807 = vmatpush1.msra.mxu0 %v1806
    %1808 = vmatprep.subr.mxu0 0.0
    %v1809 = vand.u32 %v98, 4294901760
    %1810 = vmatpush1.msra.mxu0 %v1809
    %1811 = vmatprep.subr.mxu0 0.0
    %v1812 = vand.u32 %v99, 4294901760
    %1813 = vmatpush1.msra.mxu0 %v1812
    %1814 = vmatprep.subr.mxu0 0.0
    %v1815 = vand.u32 %v100, 4294901760
    %1816 = vmatpush1.msra.mxu0 %v1815
    %1817 = vmatprep.subr.mxu0 0.0
    %v1818 = vand.u32 %v101, 4294901760
    %1819 = vmatpush1.msra.mxu0 %v1818
    %1820 = vmatprep.subr.mxu0 0.0
    %v1821 = vand.u32 %v102, 4294901760
    %1822 = vmatpush1.msra.mxu0 %v1821
    %1823 = vmatprep.subr.mxu0 0.0
    %v1824 = vand.u32 %v103, 4294901760
    %1825 = vmatpush1.msra.mxu0 %v1824
    %v1826 = vand.u32 %v107, 4294901760
    %1827 = vmatprep.mubr.f32.mxu0 %v1826
    %v1828 = vand.u32 %v39, 4294901760
    %1829 = vmatmul.mubr.f32.gmra.mrb[0].mxu0 %v1828
    %v1830 = vpop.f32.mrb[0].mxu0
    %v1831 = vadd.f32 %v1727, %v1830
    %v1832 = vpop.f32.mrb[0].mxu0
    %1833 = vdwg.mxu0
    %s1834 = scalar_lea.vmem [#allocation5], 512
    %v1835 = vld [vmem:[%s1834] sm:$0xff]
    %v1836 = vld [vmem:[%s1834 + $0x8] sm:$0xff]
    %v1837 = vld [vmem:[%s1834 + $0x10] sm:$0xff]
    %v1838 = vld [vmem:[%s1834 + $0x18] sm:$0xff]
    %v1839 = vld [vmem:[%s1834 + $0x20] sm:$0xff]
    %v1840 = vld [vmem:[%s1834 + $0x28] sm:$0xff]
    %v1841 = vld [vmem:[%s1834 + $0x30] sm:$0xff]
    %v1842 = vld [vmem:[%s1834 + $0x38] sm:$0xff]
    %v1843 = vld [vmem:[%s1834 + $0x40] sm:$0xff]
    %v1844 = vld [vmem:[%s1834 + $0x48] sm:$0xff]
    %v1845 = vld [vmem:[%s1834 + $0x50] sm:$0xff]
    %v1846 = vld [vmem:[%s1834 + $0x58] sm:$0xff]
    %v1847 = vld [vmem:[%s1834 + $0x60] sm:$0xff]
    %v1848 = vld [vmem:[%s1834 + $0x68] sm:$0xff]
    %v1849 = vld [vmem:[%s1834 + $0x70] sm:$0xff]
    %v1850 = vld [vmem:[%s1834 + $0x78] sm:$0xff]
    %v1851 = vld [vmem:[%s1834 + $0x80] sm:$0xff]
    %v1852 = vld [vmem:[%s1834 + $0x88] sm:$0xff]
    %v1853 = vld [vmem:[%s1834 + $0x90] sm:$0xff]
    %v1854 = vld [vmem:[%s1834 + $0x98] sm:$0xff]
    %v1855 = vld [vmem:[%s1834 + $0xa0] sm:$0xff]
    %v1856 = vld [vmem:[%s1834 + $0xa8] sm:$0xff]
    %v1857 = vld [vmem:[%s1834 + $0xb0] sm:$0xff]
    %v1858 = vld [vmem:[%s1834 + $0xb8] sm:$0xff]
    %v1859 = vld [vmem:[%s1834 + $0xc0] sm:$0xff]
    %v1860 = vld [vmem:[%s1834 + $0xc8] sm:$0xff]
    %v1861 = vld [vmem:[%s1834 + $0xd0] sm:$0xff]
    %v1862 = vld [vmem:[%s1834 + $0xd8] sm:$0xff]
    %v1863 = vld [vmem:[%s1834 + $0xe0] sm:$0xff]
    %v1864 = vld [vmem:[%s1834 + $0xe8] sm:$0xff]
    %v1865 = vld [vmem:[%s1834 + $0xf0] sm:$0xff]
    %v1866 = vld [vmem:[%s1834 + $0xf8] sm:$0xff]
    %v1867 = vld [vmem:[%s1834 + $0x100] sm:$0xff]
    %v1868 = vld [vmem:[%s1834 + $0x108] sm:$0xff]
    %v1869 = vld [vmem:[%s1834 + $0x110] sm:$0xff]
    %v1870 = vld [vmem:[%s1834 + $0x118] sm:$0xff]
    %v1871 = vld [vmem:[%s1834 + $0x120] sm:$0xff]
    %v1872 = vld [vmem:[%s1834 + $0x128] sm:$0xff]
    %v1873 = vld [vmem:[%s1834 + $0x130] sm:$0xff]
    %v1874 = vld [vmem:[%s1834 + $0x138] sm:$0xff]
    %v1875 = vld [vmem:[%s1834 + $0x140] sm:$0xff]
    %v1876 = vld [vmem:[%s1834 + $0x148] sm:$0xff]
    %v1877 = vld [vmem:[%s1834 + $0x150] sm:$0xff]
    %v1878 = vld [vmem:[%s1834 + $0x158] sm:$0xff]
    %v1879 = vld [vmem:[%s1834 + $0x160] sm:$0xff]
    %v1880 = vld [vmem:[%s1834 + $0x168] sm:$0xff]
    %v1881 = vld [vmem:[%s1834 + $0x170] sm:$0xff]
    %v1882 = vld [vmem:[%s1834 + $0x178] sm:$0xff]
    %v1883 = vld [vmem:[%s1834 + $0x180] sm:$0xff]
    %v1884 = vld [vmem:[%s1834 + $0x188] sm:$0xff]
    %v1885 = vld [vmem:[%s1834 + $0x190] sm:$0xff]
    %v1886 = vld [vmem:[%s1834 + $0x198] sm:$0xff]
    %v1887 = vld [vmem:[%s1834 + $0x1a0] sm:$0xff]
    %v1888 = vld [vmem:[%s1834 + $0x1a8] sm:$0xff]
    %v1889 = vld [vmem:[%s1834 + $0x1b0] sm:$0xff]
    %v1890 = vld [vmem:[%s1834 + $0x1b8] sm:$0xff]
    %v1891 = vld [vmem:[%s1834 + $0x1c0] sm:$0xff]
    %v1892 = vld [vmem:[%s1834 + $0x1c8] sm:$0xff]
    %v1893 = vld [vmem:[%s1834 + $0x1d0] sm:$0xff]
    %v1894 = vld [vmem:[%s1834 + $0x1d8] sm:$0xff]
    %v1895 = vld [vmem:[%s1834 + $0x1e0] sm:$0xff]
    %v1896 = vld [vmem:[%s1834 + $0x1e8] sm:$0xff]
    %v1897 = vld [vmem:[%s1834 + $0x1f0] sm:$0xff]
    %v1898 = vld [vmem:[%s1834 + $0x1f8] sm:$0xff]
    %1899 = vmatprep.subr.mxu0 0.0
    %v1900 = vand.u32 %v1835, 4294901760
    %1901 = vmatpush1.msra.mxu0 %v1900
    %1902 = vmatprep.subr.mxu0 0.0
    %v1903 = vand.u32 %v1836, 4294901760
    %1904 = vmatpush1.msra.mxu0 %v1903
    %1905 = vmatprep.subr.mxu0 0.0
    %v1906 = vand.u32 %v1837, 4294901760
    %1907 = vmatpush1.msra.mxu0 %v1906
    %1908 = vmatprep.subr.mxu0 0.0
    %v1909 = vand.u32 %v1838, 4294901760
    %1910 = vmatpush1.msra.mxu0 %v1909
    %1911 = vmatprep.subr.mxu0 0.0
    %v1912 = vand.u32 %v1839, 4294901760
    %1913 = vmatpush1.msra.mxu0 %v1912
    %1914 = vmatprep.subr.mxu0 0.0
    %v1915 = vand.u32 %v1840, 4294901760
    %1916 = vmatpush1.msra.mxu0 %v1915
    %1917 = vmatprep.subr.mxu0 0.0
    %v1918 = vand.u32 %v1841, 4294901760
    %1919 = vmatpush1.msra.mxu0 %v1918
    %1920 = vmatprep.subr.mxu0 0.0
    %v1921 = vand.u32 %v1842, 4294901760
    %1922 = vmatpush1.msra.mxu0 %v1921
    %1923 = vmatprep.subr.mxu0 0.0
    %v1924 = vand.u32 %v1843, 4294901760
    %1925 = vmatpush1.msra.mxu0 %v1924
    %1926 = vmatprep.subr.mxu0 0.0
    %v1927 = vand.u32 %v1844, 4294901760
    %1928 = vmatpush1.msra.mxu0 %v1927
    %1929 = vmatprep.subr.mxu0 0.0
    %v1930 = vand.u32 %v1845, 4294901760
    %1931 = vmatpush1.msra.mxu0 %v1930
    %1932 = vmatprep.subr.mxu0 0.0
    %v1933 = vand.u32 %v1846, 4294901760
    %1934 = vmatpush1.msra.mxu0 %v1933
    %1935 = vmatprep.subr.mxu0 0.0
    %v1936 = vand.u32 %v1847, 4294901760
    %1937 = vmatpush1.msra.mxu0 %v1936
    %1938 = vmatprep.subr.mxu0 0.0
    %v1939 = vand.u32 %v1848, 4294901760
    %1940 = vmatpush1.msra.mxu0 %v1939
    %1941 = vmatprep.subr.mxu0 0.0
    %v1942 = vand.u32 %v1849, 4294901760
    %1943 = vmatpush1.msra.mxu0 %v1942
    %1944 = vmatprep.subr.mxu0 0.0
    %v1945 = vand.u32 %v1850, 4294901760
    %1946 = vmatpush1.msra.mxu0 %v1945
    %1947 = vmatprep.subr.mxu0 0.0
    %v1948 = vand.u32 %v1851, 4294901760
    %1949 = vmatpush1.msra.mxu0 %v1948
    %1950 = vmatprep.subr.mxu0 0.0
    %v1951 = vand.u32 %v1852, 4294901760
    %1952 = vmatpush1.msra.mxu0 %v1951
    %1953 = vmatprep.subr.mxu0 0.0
    %v1954 = vand.u32 %v1853, 4294901760
    %1955 = vmatpush1.msra.mxu0 %v1954
    %1956 = vmatprep.subr.mxu0 0.0
    %v1957 = vand.u32 %v1854, 4294901760
    %1958 = vmatpush1.msra.mxu0 %v1957
    %1959 = vmatprep.subr.mxu0 0.0
    %v1960 = vand.u32 %v1855, 4294901760
    %1961 = vmatpush1.msra.mxu0 %v1960
    %1962 = vmatprep.subr.mxu0 0.0
    %v1963 = vand.u32 %v1856, 4294901760
    %1964 = vmatpush1.msra.mxu0 %v1963
    %1965 = vmatprep.subr.mxu0 0.0
    %v1966 = vand.u32 %v1857, 4294901760
    %1967 = vmatpush1.msra.mxu0 %v1966
    %1968 = vmatprep.subr.mxu0 0.0
    %v1969 = vand.u32 %v1858, 4294901760
    %1970 = vmatpush1.msra.mxu0 %v1969
    %1971 = vmatprep.subr.mxu0 0.0
    %v1972 = vand.u32 %v1859, 4294901760
    %1973 = vmatpush1.msra.mxu0 %v1972
    %1974 = vmatprep.subr.mxu0 0.0
    %v1975 = vand.u32 %v1860, 4294901760
    %1976 = vmatpush1.msra.mxu0 %v1975
    %1977 = vmatprep.subr.mxu0 0.0
    %v1978 = vand.u32 %v1861, 4294901760
    %1979 = vmatpush1.msra.mxu0 %v1978
    %1980 = vmatprep.subr.mxu0 0.0
    %v1981 = vand.u32 %v1862, 4294901760
    %1982 = vmatpush1.msra.mxu0 %v1981
    %1983 = vmatprep.subr.mxu0 0.0
    %v1984 = vand.u32 %v1863, 4294901760
    %1985 = vmatpush1.msra.mxu0 %v1984
    %1986 = vmatprep.subr.mxu0 0.0
    %v1987 = vand.u32 %v1864, 4294901760
    %1988 = vmatpush1.msra.mxu0 %v1987
    %1989 = vmatprep.subr.mxu0 0.0
    %v1990 = vand.u32 %v1865, 4294901760
    %1991 = vmatpush1.msra.mxu0 %v1990
    %1992 = vmatprep.subr.mxu0 0.0
    %v1993 = vand.u32 %v1866, 4294901760
    %1994 = vmatpush1.msra.mxu0 %v1993
    %v1995 = vand.u32 %v106, 4294901760
    %v1996 = vsub.f32 %v106, %v1995
    %v1997 = vand.u32 %v1996, 4294901760
    %v1998 = vsub.f32 %v1996, %v1997
    %v1999 = vand.u32 %v1998, 4294901760
    %2000 = vmatprep.mubr.f32.mxu0 %v1999
    %v2001 = vand.u32 %v38, 4294901760
    %v2002 = vsub.f32 %v38, %v2001
    %v2003 = vand.u32 %v2002, 4294901760
    %v2004 = vsub.f32 %v2002, %v2003
    %v2005 = vand.u32 %v2004, 4294901760
    %2006 = vmatmul.mubr.f32.gmra.mrb[0].mxu0 %v2005
    %v2007 = vpop.f32.mrb[0].mxu0
    %v2008 = vadd.f32 0.0, %v2007
    %v2009 = vpop.f32.mrb[0].mxu0
    %2010 = vdwg.mxu0
    %2011 = vmatprep.subr.mxu0 0.0
    %v2012 = vand.u32 %v1835, 4294901760
    %v2013 = vsub.f32 %v1835, %v2012
    %v2014 = vand.u32 %v2013, 4294901760
    %v2015 = vsub.f32 %v2013, %v2014
    %v2016 = vand.u32 %v2015, 4294901760
    %2017 = vmatpush1.msra.mxu0 %v2016
    %2018 = vmatprep.subr.mxu0 0.0
    %v2019 = vand.u32 %v1836, 4294901760
    %v2020 = vsub.f32 %v1836, %v2019
    %v2021 = vand.u32 %v2020, 4294901760
    %v2022 = vsub.f32 %v2020, %v2021
    %v2023 = vand.u32 %v2022, 4294901760
    %2024 = vmatpush1.msra.mxu0 %v2023
    %2025 = vmatprep.subr.mxu0 0.0
    %v2026 = vand.u32 %v1837, 4294901760
    %v2027 = vsub.f32 %v1837, %v2026
    %v2028 = vand.u32 %v2027, 4294901760
    %v2029 = vsub.f32 %v2027, %v2028
    %v2030 = vand.u32 %v2029, 4294901760
    %2031 = vmatpush1.msra.mxu0 %v2030
    %2032 = vmatprep.subr.mxu0 0.0
    %v2033 = vand.u32 %v1838, 4294901760
    %v2034 = vsub.f32 %v1838, %v2033
    %v2035 = vand.u32 %v2034, 4294901760
    %v2036 = vsub.f32 %v2034, %v2035
    %v2037 = vand.u32 %v2036, 4294901760
    %2038 = vmatpush1.msra.mxu0 %v2037
    %2039 = vmatprep.subr.mxu0 0.0
    %v2040 = vand.u32 %v1839, 4294901760
    %v2041 = vsub.f32 %v1839, %v2040
    %v2042 = vand.u32 %v2041, 4294901760
    %v2043 = vsub.f32 %v2041, %v2042
    %v2044 = vand.u32 %v2043, 4294901760
    %2045 = vmatpush1.msra.mxu0 %v2044
    %2046 = vmatprep.subr.mxu0 0.0
    %v2047 = vand.u32 %v1840, 4294901760
    %v2048 = vsub.f32 %v1840, %v2047
    %v2049 = vand.u32 %v2048, 4294901760
    %v2050 = vsub.f32 %v2048, %v2049
    %v2051 = vand.u32 %v2050, 4294901760
    %2052 = vmatpush1.msra.mxu0 %v2051
    %2053 = vmatprep.subr.mxu0 0.0
    %v2054 = vand.u32 %v1841, 4294901760
    %v2055 = vsub.f32 %v1841, %v2054
    %v2056 = vand.u32 %v2055, 4294901760
    %v2057 = vsub.f32 %v2055, %v2056
    %v2058 = vand.u32 %v2057, 4294901760
    %2059 = vmatpush1.msra.mxu0 %v2058
    %2060 = vmatprep.subr.mxu0 0.0
    %v2061 = vand.u32 %v1842, 4294901760
    %v2062 = vsub.f32 %v1842, %v2061
    %v2063 = vand.u32 %v2062, 4294901760
    %v2064 = vsub.f32 %v2062, %v2063
    %v2065 = vand.u32 %v2064, 4294901760
    %2066 = vmatpush1.msra.mxu0 %v2065
    %2067 = vmatprep.subr.mxu0 0.0
    %v2068 = vand.u32 %v1843, 4294901760
    %v2069 = vsub.f32 %v1843, %v2068
    %v2070 = vand.u32 %v2069, 4294901760
    %v2071 = vsub.f32 %v2069, %v2070
    %v2072 = vand.u32 %v2071, 4294901760
    %2073 = vmatpush1.msra.mxu0 %v2072
    %2074 = vmatprep.subr.mxu0 0.0
    %v2075 = vand.u32 %v1844, 4294901760
    %v2076 = vsub.f32 %v1844, %v2075
    %v2077 = vand.u32 %v2076, 4294901760
    %v2078 = vsub.f32 %v2076, %v2077
    %v2079 = vand.u32 %v2078, 4294901760
    %2080 = vmatpush1.msra.mxu0 %v2079
    %2081 = vmatprep.subr.mxu0 0.0
    %v2082 = vand.u32 %v1845, 4294901760
    %v2083 = vsub.f32 %v1845, %v2082
    %v2084 = vand.u32 %v2083, 4294901760
    %v2085 = vsub.f32 %v2083, %v2084
    %v2086 = vand.u32 %v2085, 4294901760
    %2087 = vmatpush1.msra.mxu0 %v2086
    %2088 = vmatprep.subr.mxu0 0.0
    %v2089 = vand.u32 %v1846, 4294901760
    %v2090 = vsub.f32 %v1846, %v2089
    %v2091 = vand.u32 %v2090, 4294901760
    %v2092 = vsub.f32 %v2090, %v2091
    %v2093 = vand.u32 %v2092, 4294901760
    %2094 = vmatpush1.msra.mxu0 %v2093
    %2095 = vmatprep.subr.mxu0 0.0
    %v2096 = vand.u32 %v1847, 4294901760
    %v2097 = vsub.f32 %v1847, %v2096
    %v2098 = vand.u32 %v2097, 4294901760
    %v2099 = vsub.f32 %v2097, %v2098
    %v2100 = vand.u32 %v2099, 4294901760
    %2101 = vmatpush1.msra.mxu0 %v2100
    %2102 = vmatprep.subr.mxu0 0.0
    %v2103 = vand.u32 %v1848, 4294901760
    %v2104 = vsub.f32 %v1848, %v2103
    %v2105 = vand.u32 %v2104, 4294901760
    %v2106 = vsub.f32 %v2104, %v2105
    %v2107 = vand.u32 %v2106, 4294901760
    %2108 = vmatpush1.msra.mxu0 %v2107
    %2109 = vmatprep.subr.mxu0 0.0
    %v2110 = vand.u32 %v1849, 4294901760
    %v2111 = vsub.f32 %v1849, %v2110
    %v2112 = vand.u32 %v2111, 4294901760
    %v2113 = vsub.f32 %v2111, %v2112
    %v2114 = vand.u32 %v2113, 4294901760
    %2115 = vmatpush1.msra.mxu0 %v2114
    %2116 = vmatprep.subr.mxu0 0.0
    %v2117 = vand.u32 %v1850, 4294901760
    %v2118 = vsub.f32 %v1850, %v2117
    %v2119 = vand.u32 %v2118, 4294901760
    %v2120 = vsub.f32 %v2118, %v2119
    %v2121 = vand.u32 %v2120, 4294901760
    %2122 = vmatpush1.msra.mxu0 %v2121
    %2123 = vmatprep.subr.mxu0 0.0
    %v2124 = vand.u32 %v1851, 4294901760
    %v2125 = vsub.f32 %v1851, %v2124
    %v2126 = vand.u32 %v2125, 4294901760
    %v2127 = vsub.f32 %v2125, %v2126
    %v2128 = vand.u32 %v2127, 4294901760
    %2129 = vmatpush1.msra.mxu0 %v2128
    %2130 = vmatprep.subr.mxu0 0.0
    %v2131 = vand.u32 %v1852, 4294901760
    %v2132 = vsub.f32 %v1852, %v2131
    %v2133 = vand.u32 %v2132, 4294901760
    %v2134 = vsub.f32 %v2132, %v2133
    %v2135 = vand.u32 %v2134, 4294901760
    %2136 = vmatpush1.msra.mxu0 %v2135
    %2137 = vmatprep.subr.mxu0 0.0
    %v2138 = vand.u32 %v1853, 4294901760
    %v2139 = vsub.f32 %v1853, %v2138
    %v2140 = vand.u32 %v2139, 4294901760
    %v2141 = vsub.f32 %v2139, %v2140
    %v2142 = vand.u32 %v2141, 4294901760
    %2143 = vmatpush1.msra.mxu0 %v2142
    %2144 = vmatprep.subr.mxu0 0.0
    %v2145 = vand.u32 %v1854, 4294901760
    %v2146 = vsub.f32 %v1854, %v2145
    %v2147 = vand.u32 %v2146, 4294901760
    %v2148 = vsub.f32 %v2146, %v2147
    %v2149 = vand.u32 %v2148, 4294901760
    %2150 = vmatpush1.msra.mxu0 %v2149
    %2151 = vmatprep.subr.mxu0 0.0
    %v2152 = vand.u32 %v1855, 4294901760
    %v2153 = vsub.f32 %v1855, %v2152
    %v2154 = vand.u32 %v2153, 4294901760
    %v2155 = vsub.f32 %v2153, %v2154
    %v2156 = vand.u32 %v2155, 4294901760
    %2157 = vmatpush1.msra.mxu0 %v2156
    %2158 = vmatprep.subr.mxu0 0.0
    %v2159 = vand.u32 %v1856, 4294901760
    %v2160 = vsub.f32 %v1856, %v2159
    %v2161 = vand.u32 %v2160, 4294901760
    %v2162 = vsub.f32 %v2160, %v2161
    %v2163 = vand.u32 %v2162, 4294901760
    %2164 = vmatpush1.msra.mxu0 %v2163
    %2165 = vmatprep.subr.mxu0 0.0
    %v2166 = vand.u32 %v1857, 4294901760
    %v2167 = vsub.f32 %v1857, %v2166
    %v2168 = vand.u32 %v2167, 4294901760
    %v2169 = vsub.f32 %v2167, %v2168
    %v2170 = vand.u32 %v2169, 4294901760
    %2171 = vmatpush1.msra.mxu0 %v2170
    %2172 = vmatprep.subr.mxu0 0.0
    %v2173 = vand.u32 %v1858, 4294901760
    %v2174 = vsub.f32 %v1858, %v2173
    %v2175 = vand.u32 %v2174, 4294901760
    %v2176 = vsub.f32 %v2174, %v2175
    %v2177 = vand.u32 %v2176, 4294901760
    %2178 = vmatpush1.msra.mxu0 %v2177
    %2179 = vmatprep.subr.mxu0 0.0
    %v2180 = vand.u32 %v1859, 4294901760
    %v2181 = vsub.f32 %v1859, %v2180
    %v2182 = vand.u32 %v2181, 4294901760
    %v2183 = vsub.f32 %v2181, %v2182
    %v2184 = vand.u32 %v2183, 4294901760
    %2185 = vmatpush1.msra.mxu0 %v2184
    %2186 = vmatprep.subr.mxu0 0.0
    %v2187 = vand.u32 %v1860, 4294901760
    %v2188 = vsub.f32 %v1860, %v2187
    %v2189 = vand.u32 %v2188, 4294901760
    %v2190 = vsub.f32 %v2188, %v2189
    %v2191 = vand.u32 %v2190, 4294901760
    %2192 = vmatpush1.msra.mxu0 %v2191
    %2193 = vmatprep.subr.mxu0 0.0
    %v2194 = vand.u32 %v1861, 4294901760
    %v2195 = vsub.f32 %v1861, %v2194
    %v2196 = vand.u32 %v2195, 4294901760
    %v2197 = vsub.f32 %v2195, %v2196
    %v2198 = vand.u32 %v2197, 4294901760
    %2199 = vmatpush1.msra.mxu0 %v2198
    %2200 = vmatprep.subr.mxu0 0.0
    %v2201 = vand.u32 %v1862, 4294901760
    %v2202 = vsub.f32 %v1862, %v2201
    %v2203 = vand.u32 %v2202, 4294901760
    %v2204 = vsub.f32 %v2202, %v2203
    %v2205 = vand.u32 %v2204, 4294901760
    %2206 = vmatpush1.msra.mxu0 %v2205
    %2207 = vmatprep.subr.mxu0 0.0
    %v2208 = vand.u32 %v1863, 4294901760
    %v2209 = vsub.f32 %v1863, %v2208
    %v2210 = vand.u32 %v2209, 4294901760
    %v2211 = vsub.f32 %v2209, %v2210
    %v2212 = vand.u32 %v2211, 4294901760
    %2213 = vmatpush1.msra.mxu0 %v2212
    %2214 = vmatprep.subr.mxu0 0.0
    %v2215 = vand.u32 %v1864, 4294901760
    %v2216 = vsub.f32 %v1864, %v2215
    %v2217 = vand.u32 %v2216, 4294901760
    %v2218 = vsub.f32 %v2216, %v2217
    %v2219 = vand.u32 %v2218, 4294901760
    %2220 = vmatpush1.msra.mxu0 %v2219
    %2221 = vmatprep.subr.mxu0 0.0
    %v2222 = vand.u32 %v1865, 4294901760
    %v2223 = vsub.f32 %v1865, %v2222
    %v2224 = vand.u32 %v2223, 4294901760
    %v2225 = vsub.f32 %v2223, %v2224
    %v2226 = vand.u32 %v2225, 4294901760
    %2227 = vmatpush1.msra.mxu0 %v2226
    %2228 = vmatprep.subr.mxu0 0.0
    %v2229 = vand.u32 %v1866, 4294901760
    %v2230 = vsub.f32 %v1866, %v2229
    %v2231 = vand.u32 %v2230, 4294901760
    %v2232 = vsub.f32 %v2230, %v2231
    %v2233 = vand.u32 %v2232, 4294901760
    %2234 = vmatpush1.msra.mxu0 %v2233
    %v2235 = vand.u32 %v106, 4294901760
    %2236 = vmatprep.mubr.f32.mxu0 %v2235
    %v2237 = vand.u32 %v38, 4294901760
    %2238 = vmatmul.mubr.f32.gmra.mrb[0].mxu0 %v2237
    %v2239 = vpop.f32.mrb[0].mxu0
    %v2240 = vadd.f32 %v2008, %v2239
    %v2241 = vpop.f32.mrb[0].mxu0
    %2242 = vdwg.mxu0
    %2243 = vmatprep.subr.mxu0 0.0
    %v2244 = vand.u32 %v1835, 4294901760
    %v2245 = vsub.f32 %v1835, %v2244
    %2246 = vmatpush1.msra.mxu0 %v2245
    %2247 = vmatprep.subr.mxu0 0.0
    %v2248 = vand.u32 %v1836, 4294901760
    %v2249 = vsub.f32 %v1836, %v2248
    %2250 = vmatpush1.msra.mxu0 %v2249
    %2251 = vmatprep.subr.mxu0 0.0
    %v2252 = vand.u32 %v1837, 4294901760
    %v2253 = vsub.f32 %v1837, %v2252
    %2254 = vmatpush1.msra.mxu0 %v2253
    %2255 = vmatprep.subr.mxu0 0.0
    %v2256 = vand.u32 %v1838, 4294901760
    %v2257 = vsub.f32 %v1838, %v2256
    %2258 = vmatpush1.msra.mxu0 %v2257
    %2259 = vmatprep.subr.mxu0 0.0
    %v2260 = vand.u32 %v1839, 4294901760
    %v2261 = vsub.f32 %v1839, %v2260
    %2262 = vmatpush1.msra.mxu0 %v2261
    %2263 = vmatprep.subr.mxu0 0.0
    %v2264 = vand.u32 %v1840, 4294901760
    %v2265 = vsub.f32 %v1840, %v2264
    %2266 = vmatpush1.msra.mxu0 %v2265
    %2267 = vmatprep.subr.mxu0 0.0
    %v2268 = vand.u32 %v1841, 4294901760
    %v2269 = vsub.f32 %v1841, %v2268
    %2270 = vmatpush1.msra.mxu0 %v2269
    %2271 = vmatprep.subr.mxu0 0.0
    %v2272 = vand.u32 %v1842, 4294901760
    %v2273 = vsub.f32 %v1842, %v2272
    %2274 = vmatpush1.msra.mxu0 %v2273
    %2275 = vmatprep.subr.mxu0 0.0
    %v2276 = vand.u32 %v1843, 4294901760
    %v2277 = vsub.f32 %v1843, %v2276
    %2278 = vmatpush1.msra.mxu0 %v2277
    %2279 = vmatprep.subr.mxu0 0.0
    %v2280 = vand.u32 %v1844, 4294901760
    %v2281 = vsub.f32 %v1844, %v2280
    %2282 = vmatpush1.msra.mxu0 %v2281
    %2283 = vmatprep.subr.mxu0 0.0
    %v2284 = vand.u32 %v1845, 4294901760
    %v2285 = vsub.f32 %v1845, %v2284
    %2286 = vmatpush1.msra.mxu0 %v2285
    %2287 = vmatprep.subr.mxu0 0.0
    %v2288 = vand.u32 %v1846, 4294901760
    %v2289 = vsub.f32 %v1846, %v2288
    %2290 = vmatpush1.msra.mxu0 %v2289
    %2291 = vmatprep.subr.mxu0 0.0
    %v2292 = vand.u32 %v1847, 4294901760
    %v2293 = vsub.f32 %v1847, %v2292
    %2294 = vmatpush1.msra.mxu0 %v2293
    %2295 = vmatprep.subr.mxu0 0.0
    %v2296 = vand.u32 %v1848, 4294901760
    %v2297 = vsub.f32 %v1848, %v2296
    %2298 = vmatpush1.msra.mxu0 %v2297
    %2299 = vmatprep.subr.mxu0 0.0
    %v2300 = vand.u32 %v1849, 4294901760
    %v2301 = vsub.f32 %v1849, %v2300
    %2302 = vmatpush1.msra.mxu0 %v2301
    %2303 = vmatprep.subr.mxu0 0.0
    %v2304 = vand.u32 %v1850, 4294901760
    %v2305 = vsub.f32 %v1850, %v2304
    %2306 = vmatpush1.msra.mxu0 %v2305
    %2307 = vmatprep.subr.mxu0 0.0
    %v2308 = vand.u32 %v1851, 4294901760
    %v2309 = vsub.f32 %v1851, %v2308
    %2310 = vmatpush1.msra.mxu0 %v2309
    %2311 = vmatprep.subr.mxu0 0.0
    %v2312 = vand.u32 %v1852, 4294901760
    %v2313 = vsub.f32 %v1852, %v2312
    %2314 = vmatpush1.msra.mxu0 %v2313
    %2315 = vmatprep.subr.mxu0 0.0
    %v2316 = vand.u32 %v1853, 4294901760
    %v2317 = vsub.f32 %v1853, %v2316
    %2318 = vmatpush1.msra.mxu0 %v2317
    %2319 = vmatprep.subr.mxu0 0.0
    %v2320 = vand.u32 %v1854, 4294901760
    %v2321 = vsub.f32 %v1854, %v2320
    %2322 = vmatpush1.msra.mxu0 %v2321
    %2323 = vmatprep.subr.mxu0 0.0
    %v2324 = vand.u32 %v1855, 4294901760
    %v2325 = vsub.f32 %v1855, %v2324
    %2326 = vmatpush1.msra.mxu0 %v2325
    %2327 = vmatprep.subr.mxu0 0.0
    %v2328 = vand.u32 %v1856, 4294901760
    %v2329 = vsub.f32 %v1856, %v2328
    %2330 = vmatpush1.msra.mxu0 %v2329
    %2331 = vmatprep.subr.mxu0 0.0
    %v2332 = vand.u32 %v1857, 4294901760
    %v2333 = vsub.f32 %v1857, %v2332
    %2334 = vmatpush1.msra.mxu0 %v2333
    %2335 = vmatprep.subr.mxu0 0.0
    %v2336 = vand.u32 %v1858, 4294901760
    %v2337 = vsub.f32 %v1858, %v2336
    %2338 = vmatpush1.msra.mxu0 %v2337
    %2339 = vmatprep.subr.mxu0 0.0
    %v2340 = vand.u32 %v1859, 4294901760
    %v2341 = vsub.f32 %v1859, %v2340
    %2342 = vmatpush1.msra.mxu0 %v2341
    %2343 = vmatprep.subr.mxu0 0.0
    %v2344 = vand.u32 %v1860, 4294901760
    %v2345 = vsub.f32 %v1860, %v2344
    %2346 = vmatpush1.msra.mxu0 %v2345
    %2347 = vmatprep.subr.mxu0 0.0
    %v2348 = vand.u32 %v1861, 4294901760
    %v2349 = vsub.f32 %v1861, %v2348
    %2350 = vmatpush1.msra.mxu0 %v2349
    %2351 = vmatprep.subr.mxu0 0.0
    %v2352 = vand.u32 %v1862, 4294901760
    %v2353 = vsub.f32 %v1862, %v2352
    %2354 = vmatpush1.msra.mxu0 %v2353
    %2355 = vmatprep.subr.mxu0 0.0
    %v2356 = vand.u32 %v1863, 4294901760
    %v2357 = vsub.f32 %v1863, %v2356
    %2358 = vmatpush1.msra.mxu0 %v2357
    %2359 = vmatprep.subr.mxu0 0.0
    %v2360 = vand.u32 %v1864, 4294901760
    %v2361 = vsub.f32 %v1864, %v2360
    %2362 = vmatpush1.msra.mxu0 %v2361
    %2363 = vmatprep.subr.mxu0 0.0
    %v2364 = vand.u32 %v1865, 4294901760
    %v2365 = vsub.f32 %v1865, %v2364
    %2366 = vmatpush1.msra.mxu0 %v2365
    %2367 = vmatprep.subr.mxu0 0.0
    %v2368 = vand.u32 %v1866, 4294901760
    %v2369 = vsub.f32 %v1866, %v2368
    %2370 = vmatpush1.msra.mxu0 %v2369
    %v2371 = vand.u32 %v106, 4294901760
    %v2372 = vsub.f32 %v106, %v2371
    %2373 = vmatprep.mubr.f32.mxu0 %v2372
    %v2374 = vand.u32 %v38, 4294901760
    %v2375 = vsub.f32 %v38, %v2374
    %2376 = vmatmul.mubr.f32.gmra.mrb[0].mxu0 %v2375
    %v2377 = vpop.f32.mrb[0].mxu0
    %v2378 = vadd.f32 %v2240, %v2377
    %v2379 = vpop.f32.mrb[0].mxu0
    %2380 = vdwg.mxu0
    %2381 = vmatprep.subr.mxu0 0.0
    %v2382 = vand.u32 %v1835, 4294901760
    %2383 = vmatpush1.msra.mxu0 %v2382
    %2384 = vmatprep.subr.mxu0 0.0
    %v2385 = vand.u32 %v1836, 4294901760
    %2386 = vmatpush1.msra.mxu0 %v2385
    %2387 = vmatprep.subr.mxu0 0.0
    %v2388 = vand.u32 %v1837, 4294901760
    %2389 = vmatpush1.msra.mxu0 %v2388
    %2390 = vmatprep.subr.mxu0 0.0
    %v2391 = vand.u32 %v1838, 4294901760
    %2392 = vmatpush1.msra.mxu0 %v2391
    %2393 = vmatprep.subr.mxu0 0.0
    %v2394 = vand.u32 %v1839, 4294901760
    %2395 = vmatpush1.msra.mxu0 %v2394
    %2396 = vmatprep.subr.mxu0 0.0
    %v2397 = vand.u32 %v1840, 4294901760
    %2398 = vmatpush1.msra.mxu0 %v2397
    %2399 = vmatprep.subr.mxu0 0.0
    %v2400 = vand.u32 %v1841, 4294901760
    %2401 = vmatpush1.msra.mxu0 %v2400
    %2402 = vmatprep.subr.mxu0 0.0
    %v2403 = vand.u32 %v1842, 4294901760
    %2404 = vmatpush1.msra.mxu0 %v2403
    %2405 = vmatprep.subr.mxu0 0.0
    %v2406 = vand.u32 %v1843, 4294901760
    %2407 = vmatpush1.msra.mxu0 %v2406
    %2408 = vmatprep.subr.mxu0 0.0
    %v2409 = vand.u32 %v1844, 4294901760
    %2410 = vmatpush1.msra.mxu0 %v2409
    %2411 = vmatprep.subr.mxu0 0.0
    %v2412 = vand.u32 %v1845, 4294901760
    %2413 = vmatpush1.msra.mxu0 %v2412
    %2414 = vmatprep.subr.mxu0 0.0
    %v2415 = vand.u32 %v1846, 4294901760
    %2416 = vmatpush1.msra.mxu0 %v2415
    %2417 = vmatprep.subr.mxu0 0.0
    %v2418 = vand.u32 %v1847, 4294901760
    %2419 = vmatpush1.msra.mxu0 %v2418
    %2420 = vmatprep.subr.mxu0 0.0
    %v2421 = vand.u32 %v1848, 4294901760
    %2422 = vmatpush1.msra.mxu0 %v2421
    %2423 = vmatprep.subr.mxu0 0.0
    %v2424 = vand.u32 %v1849, 4294901760
    %2425 = vmatpush1.msra.mxu0 %v2424
    %2426 = vmatprep.subr.mxu0 0.0
    %v2427 = vand.u32 %v1850, 4294901760
    %2428 = vmatpush1.msra.mxu0 %v2427
    %2429 = vmatprep.subr.mxu0 0.0
    %v2430 = vand.u32 %v1851, 4294901760
    %2431 = vmatpush1.msra.mxu0 %v2430
    %2432 = vmatprep.subr.mxu0 0.0
    %v2433 = vand.u32 %v1852, 4294901760
    %2434 = vmatpush1.msra.mxu0 %v2433
    %2435 = vmatprep.subr.mxu0 0.0
    %v2436 = vand.u32 %v1853, 4294901760
    %2437 = vmatpush1.msra.mxu0 %v2436
    %2438 = vmatprep.subr.mxu0 0.0
    %v2439 = vand.u32 %v1854, 4294901760
    %2440 = vmatpush1.msra.mxu0 %v2439
    %2441 = vmatprep.subr.mxu0 0.0
    %v2442 = vand.u32 %v1855, 4294901760
    %2443 = vmatpush1.msra.mxu0 %v2442
    %2444 = vmatprep.subr.mxu0 0.0
    %v2445 = vand.u32 %v1856, 4294901760
    %2446 = vmatpush1.msra.mxu0 %v2445
    %2447 = vmatprep.subr.mxu0 0.0
    %v2448 = vand.u32 %v1857, 4294901760
    %2449 = vmatpush1.msra.mxu0 %v2448
    %2450 = vmatprep.subr.mxu0 0.0
    %v2451 = vand.u32 %v1858, 4294901760
    %2452 = vmatpush1.msra.mxu0 %v2451
    %2453 = vmatprep.subr.mxu0 0.0
    %v2454 = vand.u32 %v1859, 4294901760
    %2455 = vmatpush1.msra.mxu0 %v2454
    %2456 = vmatprep.subr.mxu0 0.0
    %v2457 = vand.u32 %v1860, 4294901760
    %2458 = vmatpush1.msra.mxu0 %v2457
    %2459 = vmatprep.subr.mxu0 0.0
    %v2460 = vand.u32 %v1861, 4294901760
    %2461 = vmatpush1.msra.mxu0 %v2460
    %2462 = vmatprep.subr.mxu0 0.0
    %v2463 = vand.u32 %v1862, 4294901760
    %2464 = vmatpush1.msra.mxu0 %v2463
    %2465 = vmatprep.subr.mxu0 0.0
    %v2466 = vand.u32 %v1863, 4294901760
    %2467 = vmatpush1.msra.mxu0 %v2466
    %2468 = vmatprep.subr.mxu0 0.0
    %v2469 = vand.u32 %v1864, 4294901760
    %2470 = vmatpush1.msra.mxu0 %v2469
    %2471 = vmatprep.subr.mxu0 0.0
    %v2472 = vand.u32 %v1865, 4294901760
    %2473 = vmatpush1.msra.mxu0 %v2472
    %2474 = vmatprep.subr.mxu0 0.0
    %v2475 = vand.u32 %v1866, 4294901760
    %2476 = vmatpush1.msra.mxu0 %v2475
    %v2477 = vand.u32 %v106, 4294901760
    %v2478 = vsub.f32 %v106, %v2477
    %v2479 = vand.u32 %v2478, 4294901760
    %2480 = vmatprep.mubr.f32.mxu0 %v2479
    %v2481 = vand.u32 %v38, 4294901760
    %v2482 = vsub.f32 %v38, %v2481
    %v2483 = vand.u32 %v2482, 4294901760
    %2484 = vmatmul.mubr.f32.gmra.mrb[0].mxu0 %v2483
    %v2485 = vpop.f32.mrb[0].mxu0
    %v2486 = vadd.f32 %v2378, %v2485
    %v2487 = vpop.f32.mrb[0].mxu0
    %2488 = vdwg.mxu0
    %2489 = vmatprep.subr.mxu0 0.0
    %v2490 = vand.u32 %v1835, 4294901760
    %v2491 = vsub.f32 %v1835, %v2490
    %v2492 = vand.u32 %v2491, 4294901760
    %2493 = vmatpush1.msra.mxu0 %v2492
    %2494 = vmatprep.subr.mxu0 0.0
    %v2495 = vand.u32 %v1836, 4294901760
    %v2496 = vsub.f32 %v1836, %v2495
    %v2497 = vand.u32 %v2496, 4294901760
    %2498 = vmatpush1.msra.mxu0 %v2497
    %2499 = vmatprep.subr.mxu0 0.0
    %v2500 = vand.u32 %v1837, 4294901760
    %v2501 = vsub.f32 %v1837, %v2500
    %v2502 = vand.u32 %v2501, 4294901760
    %2503 = vmatpush1.msra.mxu0 %v2502
    %2504 = vmatprep.subr.mxu0 0.0
    %v2505 = vand.u32 %v1838, 4294901760
    %v2506 = vsub.f32 %v1838, %v2505
    %v2507 = vand.u32 %v2506, 4294901760
    %2508 = vmatpush1.msra.mxu0 %v2507
    %2509 = vmatprep.subr.mxu0 0.0
    %v2510 = vand.u32 %v1839, 4294901760
    %v2511 = vsub.f32 %v1839, %v2510
    %v2512 = vand.u32 %v2511, 4294901760
    %2513 = vmatpush1.msra.mxu0 %v2512
    %2514 = vmatprep.subr.mxu0 0.0
    %v2515 = vand.u32 %v1840, 4294901760
    %v2516 = vsub.f32 %v1840, %v2515
    %v2517 = vand.u32 %v2516, 4294901760
    %2518 = vmatpush1.msra.mxu0 %v2517
    %2519 = vmatprep.subr.mxu0 0.0
    %v2520 = vand.u32 %v1841, 4294901760
    %v2521 = vsub.f32 %v1841, %v2520
    %v2522 = vand.u32 %v2521, 4294901760
    %2523 = vmatpush1.msra.mxu0 %v2522
    %2524 = vmatprep.subr.mxu0 0.0
    %v2525 = vand.u32 %v1842, 4294901760
    %v2526 = vsub.f32 %v1842, %v2525
    %v2527 = vand.u32 %v2526, 4294901760
    %2528 = vmatpush1.msra.mxu0 %v2527
    %2529 = vmatprep.subr.mxu0 0.0
    %v2530 = vand.u32 %v1843, 4294901760
    %v2531 = vsub.f32 %v1843, %v2530
    %v2532 = vand.u32 %v2531, 4294901760
    %2533 = vmatpush1.msra.mxu0 %v2532
    %2534 = vmatprep.subr.mxu0 0.0
    %v2535 = vand.u32 %v1844, 4294901760
    %v2536 = vsub.f32 %v1844, %v2535
    %v2537 = vand.u32 %v2536, 4294901760
    %2538 = vmatpush1.msra.mxu0 %v2537
    %2539 = vmatprep.subr.mxu0 0.0
    %v2540 = vand.u32 %v1845, 4294901760
    %v2541 = vsub.f32 %v1845, %v2540
    %v2542 = vand.u32 %v2541, 4294901760
    %2543 = vmatpush1.msra.mxu0 %v2542
    %2544 = vmatprep.subr.mxu0 0.0
    %v2545 = vand.u32 %v1846, 4294901760
    %v2546 = vsub.f32 %v1846, %v2545
    %v2547 = vand.u32 %v2546, 4294901760
    %2548 = vmatpush1.msra.mxu0 %v2547
    %2549 = vmatprep.subr.mxu0 0.0
    %v2550 = vand.u32 %v1847, 4294901760
    %v2551 = vsub.f32 %v1847, %v2550
    %v2552 = vand.u32 %v2551, 4294901760
    %2553 = vmatpush1.msra.mxu0 %v2552
    %2554 = vmatprep.subr.mxu0 0.0
    %v2555 = vand.u32 %v1848, 4294901760
    %v2556 = vsub.f32 %v1848, %v2555
    %v2557 = vand.u32 %v2556, 4294901760
    %2558 = vmatpush1.msra.mxu0 %v2557
    %2559 = vmatprep.subr.mxu0 0.0
    %v2560 = vand.u32 %v1849, 4294901760
    %v2561 = vsub.f32 %v1849, %v2560
    %v2562 = vand.u32 %v2561, 4294901760
    %2563 = vmatpush1.msra.mxu0 %v2562
    %2564 = vmatprep.subr.mxu0 0.0
    %v2565 = vand.u32 %v1850, 4294901760
    %v2566 = vsub.f32 %v1850, %v2565
    %v2567 = vand.u32 %v2566, 4294901760
    %2568 = vmatpush1.msra.mxu0 %v2567
    %2569 = vmatprep.subr.mxu0 0.0
    %v2570 = vand.u32 %v1851, 4294901760
    %v2571 = vsub.f32 %v1851, %v2570
    %v2572 = vand.u32 %v2571, 4294901760
    %2573 = vmatpush1.msra.mxu0 %v2572
    %2574 = vmatprep.subr.mxu0 0.0
    %v2575 = vand.u32 %v1852, 4294901760
    %v2576 = vsub.f32 %v1852, %v2575
    %v2577 = vand.u32 %v2576, 4294901760
    %2578 = vmatpush1.msra.mxu0 %v2577
    %2579 = vmatprep.subr.mxu0 0.0
    %v2580 = vand.u32 %v1853, 4294901760
    %v2581 = vsub.f32 %v1853, %v2580
    %v2582 = vand.u32 %v2581, 4294901760
    %2583 = vmatpush1.msra.mxu0 %v2582
    %2584 = vmatprep.subr.mxu0 0.0
    %v2585 = vand.u32 %v1854, 4294901760
    %v2586 = vsub.f32 %v1854, %v2585
    %v2587 = vand.u32 %v2586, 4294901760
    %2588 = vmatpush1.msra.mxu0 %v2587
    %2589 = vmatprep.subr.mxu0 0.0
    %v2590 = vand.u32 %v1855, 4294901760
    %v2591 = vsub.f32 %v1855, %v2590
    %v2592 = vand.u32 %v2591, 4294901760
    %2593 = vmatpush1.msra.mxu0 %v2592
    %2594 = vmatprep.subr.mxu0 0.0
    %v2595 = vand.u32 %v1856, 4294901760
    %v2596 = vsub.f32 %v1856, %v2595
    %v2597 = vand.u32 %v2596, 4294901760
    %2598 = vmatpush1.msra.mxu0 %v2597
    %2599 = vmatprep.subr.mxu0 0.0
    %v2600 = vand.u32 %v1857, 4294901760
    %v2601 = vsub.f32 %v1857, %v2600
    %v2602 = vand.u32 %v2601, 4294901760
    %2603 = vmatpush1.msra.mxu0 %v2602
    %2604 = vmatprep.subr.mxu0 0.0
    %v2605 = vand.u32 %v1858, 4294901760
    %v2606 = vsub.f32 %v1858, %v2605
    %v2607 = vand.u32 %v2606, 4294901760
    %2608 = vmatpush1.msra.mxu0 %v2607
    %2609 = vmatprep.subr.mxu0 0.0
    %v2610 = vand.u32 %v1859, 4294901760
    %v2611 = vsub.f32 %v1859, %v2610
    %v2612 = vand.u32 %v2611, 4294901760
    %2613 = vmatpush1.msra.mxu0 %v2612
    %2614 = vmatprep.subr.mxu0 0.0
    %v2615 = vand.u32 %v1860, 4294901760
    %v2616 = vsub.f32 %v1860, %v2615
    %v2617 = vand.u32 %v2616, 4294901760
    %2618 = vmatpush1.msra.mxu0 %v2617
    %2619 = vmatprep.subr.mxu0 0.0
    %v2620 = vand.u32 %v1861, 4294901760
    %v2621 = vsub.f32 %v1861, %v2620
    %v2622 = vand.u32 %v2621, 4294901760
    %2623 = vmatpush1.msra.mxu0 %v2622
    %2624 = vmatprep.subr.mxu0 0.0
    %v2625 = vand.u32 %v1862, 4294901760
    %v2626 = vsub.f32 %v1862, %v2625
    %v2627 = vand.u32 %v2626, 4294901760
    %2628 = vmatpush1.msra.mxu0 %v2627
    %2629 = vmatprep.subr.mxu0 0.0
    %v2630 = vand.u32 %v1863, 4294901760
    %v2631 = vsub.f32 %v1863, %v2630
    %v2632 = vand.u32 %v2631, 4294901760
    %2633 = vmatpush1.msra.mxu0 %v2632
    %2634 = vmatprep.subr.mxu0 0.0
    %v2635 = vand.u32 %v1864, 4294901760
    %v2636 = vsub.f32 %v1864, %v2635
    %v2637 = vand.u32 %v2636, 4294901760
    %2638 = vmatpush1.msra.mxu0 %v2637
    %2639 = vmatprep.subr.mxu0 0.0
    %v2640 = vand.u32 %v1865, 4294901760
    %v2641 = vsub.f32 %v1865, %v2640
    %v2642 = vand.u32 %v2641, 4294901760
    %2643 = vmatpush1.msra.mxu0 %v2642
    %2644 = vmatprep.subr.mxu0 0.0
    %v2645 = vand.u32 %v1866, 4294901760
    %v2646 = vsub.f32 %v1866, %v2645
    %v2647 = vand.u32 %v2646, 4294901760
    %2648 = vmatpush1.msra.mxu0 %v2647
    %v2649 = vand.u32 %v106, 4294901760
    %2650 = vmatprep.mubr.f32.mxu0 %v2649
    %v2651 = vand.u32 %v38, 4294901760
    %2652 = vmatmul.mubr.f32.gmra.mrb[0].mxu0 %v2651
    %v2653 = vpop.f32.mrb[0].mxu0
    %v2654 = vadd.f32 %v2486, %v2653
    %v2655 = vpop.f32.mrb[0].mxu0
    %2656 = vdwg.mxu0
    %2657 = vmatprep.subr.mxu0 0.0
    %v2658 = vand.u32 %v1835, 4294901760
    %2659 = vmatpush1.msra.mxu0 %v2658
    %2660 = vmatprep.subr.mxu0 0.0
    %v2661 = vand.u32 %v1836, 4294901760
    %2662 = vmatpush1.msra.mxu0 %v2661
    %2663 = vmatprep.subr.mxu0 0.0
    %v2664 = vand.u32 %v1837, 4294901760
    %2665 = vmatpush1.msra.mxu0 %v2664
    %2666 = vmatprep.subr.mxu0 0.0
    %v2667 = vand.u32 %v1838, 4294901760
    %2668 = vmatpush1.msra.mxu0 %v2667
    %2669 = vmatprep.subr.mxu0 0.0
    %v2670 = vand.u32 %v1839, 4294901760
    %2671 = vmatpush1.msra.mxu0 %v2670
    %2672 = vmatprep.subr.mxu0 0.0
    %v2673 = vand.u32 %v1840, 4294901760
    %2674 = vmatpush1.msra.mxu0 %v2673
    %2675 = vmatprep.subr.mxu0 0.0
    %v2676 = vand.u32 %v1841, 4294901760
    %2677 = vmatpush1.msra.mxu0 %v2676
    %2678 = vmatprep.subr.mxu0 0.0
    %v2679 = vand.u32 %v1842, 4294901760
    %2680 = vmatpush1.msra.mxu0 %v2679
    %2681 = vmatprep.subr.mxu0 0.0
    %v2682 = vand.u32 %v1843, 4294901760
    %2683 = vmatpush1.msra.mxu0 %v2682
    %2684 = vmatprep.subr.mxu0 0.0
    %v2685 = vand.u32 %v1844, 4294901760
    %2686 = vmatpush1.msra.mxu0 %v2685
    %2687 = vmatprep.subr.mxu0 0.0
    %v2688 = vand.u32 %v1845, 4294901760
    %2689 = vmatpush1.msra.mxu0 %v2688
    %2690 = vmatprep.subr.mxu0 0.0
    %v2691 = vand.u32 %v1846, 4294901760
    %2692 = vmatpush1.msra.mxu0 %v2691
    %2693 = vmatprep.subr.mxu0 0.0
    %v2694 = vand.u32 %v1847, 4294901760
    %2695 = vmatpush1.msra.mxu0 %v2694
    %2696 = vmatprep.subr.mxu0 0.0
    %v2697 = vand.u32 %v1848, 4294901760
    %2698 = vmatpush1.msra.mxu0 %v2697
    %2699 = vmatprep.subr.mxu0 0.0
    %v2700 = vand.u32 %v1849, 4294901760
    %2701 = vmatpush1.msra.mxu0 %v2700
    %2702 = vmatprep.subr.mxu0 0.0
    %v2703 = vand.u32 %v1850, 4294901760
    %2704 = vmatpush1.msra.mxu0 %v2703
    %2705 = vmatprep.subr.mxu0 0.0
    %v2706 = vand.u32 %v1851, 4294901760
    %2707 = vmatpush1.msra.mxu0 %v2706
    %2708 = vmatprep.subr.mxu0 0.0
    %v2709 = vand.u32 %v1852, 4294901760
    %2710 = vmatpush1.msra.mxu0 %v2709
    %2711 = vmatprep.subr.mxu0 0.0
    %v2712 = vand.u32 %v1853, 4294901760
    %2713 = vmatpush1.msra.mxu0 %v2712
    %2714 = vmatprep.subr.mxu0 0.0
    %v2715 = vand.u32 %v1854, 4294901760
    %2716 = vmatpush1.msra.mxu0 %v2715
    %2717 = vmatprep.subr.mxu0 0.0
    %v2718 = vand.u32 %v1855, 4294901760
    %2719 = vmatpush1.msra.mxu0 %v2718
    %2720 = vmatprep.subr.mxu0 0.0
    %v2721 = vand.u32 %v1856, 4294901760
    %2722 = vmatpush1.msra.mxu0 %v2721
    %2723 = vmatprep.subr.mxu0 0.0
    %v2724 = vand.u32 %v1857, 4294901760
    %2725 = vmatpush1.msra.mxu0 %v2724
    %2726 = vmatprep.subr.mxu0 0.0
    %v2727 = vand.u32 %v1858, 4294901760
    %2728 = vmatpush1.msra.mxu0 %v2727
    %2729 = vmatprep.subr.mxu0 0.0
    %v2730 = vand.u32 %v1859, 4294901760
    %2731 = vmatpush1.msra.mxu0 %v2730
    %2732 = vmatprep.subr.mxu0 0.0
    %v2733 = vand.u32 %v1860, 4294901760
    %2734 = vmatpush1.msra.mxu0 %v2733
    %2735 = vmatprep.subr.mxu0 0.0
    %v2736 = vand.u32 %v1861, 4294901760
    %2737 = vmatpush1.msra.mxu0 %v2736
    %2738 = vmatprep.subr.mxu0 0.0
    %v2739 = vand.u32 %v1862, 4294901760
    %2740 = vmatpush1.msra.mxu0 %v2739
    %2741 = vmatprep.subr.mxu0 0.0
    %v2742 = vand.u32 %v1863, 4294901760
    %2743 = vmatpush1.msra.mxu0 %v2742
    %2744 = vmatprep.subr.mxu0 0.0
    %v2745 = vand.u32 %v1864, 4294901760
    %2746 = vmatpush1.msra.mxu0 %v2745
    %2747 = vmatprep.subr.mxu0 0.0
    %v2748 = vand.u32 %v1865, 4294901760
    %2749 = vmatpush1.msra.mxu0 %v2748
    %2750 = vmatprep.subr.mxu0 0.0
    %v2751 = vand.u32 %v1866, 4294901760
    %2752 = vmatpush1.msra.mxu0 %v2751
    %v2753 = vand.u32 %v106, 4294901760
    %2754 = vmatprep.mubr.f32.mxu0 %v2753
    %v2755 = vand.u32 %v38, 4294901760
    %2756 = vmatmul.mubr.f32.gmra.mrb[0].mxu0 %v2755
    %v2757 = vpop.f32.mrb[0].mxu0
    %v2758 = vadd.f32 %v2654, %v2757
    %v2759 = vpop.f32.mrb[0].mxu0
    %2760 = vdwg.mxu0
    %2761 = vmatprep.subr.mxu0 0.0
    %v2762 = vand.u32 %v1867, 4294901760
    %2763 = vmatpush1.msra.mxu0 %v2762
    %2764 = vmatprep.subr.mxu0 0.0
    %v2765 = vand.u32 %v1868, 4294901760
    %2766 = vmatpush1.msra.mxu0 %v2765
    %2767 = vmatprep.subr.mxu0 0.0
    %v2768 = vand.u32 %v1869, 4294901760
    %2769 = vmatpush1.msra.mxu0 %v2768
    %2770 = vmatprep.subr.mxu0 0.0
    %v2771 = vand.u32 %v1870, 4294901760
    %2772 = vmatpush1.msra.mxu0 %v2771
    %2773 = vmatprep.subr.mxu0 0.0
    %v2774 = vand.u32 %v1871, 4294901760
    %2775 = vmatpush1.msra.mxu0 %v2774
    %2776 = vmatprep.subr.mxu0 0.0
    %v2777 = vand.u32 %v1872, 4294901760
    %2778 = vmatpush1.msra.mxu0 %v2777
    %2779 = vmatprep.subr.mxu0 0.0
    %v2780 = vand.u32 %v1873, 4294901760
    %2781 = vmatpush1.msra.mxu0 %v2780
    %2782 = vmatprep.subr.mxu0 0.0
    %v2783 = vand.u32 %v1874, 4294901760
    %2784 = vmatpush1.msra.mxu0 %v2783
    %2785 = vmatprep.subr.mxu0 0.0
    %v2786 = vand.u32 %v1875, 4294901760
    %2787 = vmatpush1.msra.mxu0 %v2786
    %2788 = vmatprep.subr.mxu0 0.0
    %v2789 = vand.u32 %v1876, 4294901760
    %2790 = vmatpush1.msra.mxu0 %v2789
    %2791 = vmatprep.subr.mxu0 0.0
    %v2792 = vand.u32 %v1877, 4294901760
    %2793 = vmatpush1.msra.mxu0 %v2792
    %2794 = vmatprep.subr.mxu0 0.0
    %v2795 = vand.u32 %v1878, 4294901760
    %2796 = vmatpush1.msra.mxu0 %v2795
    %2797 = vmatprep.subr.mxu0 0.0
    %v2798 = vand.u32 %v1879, 4294901760
    %2799 = vmatpush1.msra.mxu0 %v2798
    %2800 = vmatprep.subr.mxu0 0.0
    %v2801 = vand.u32 %v1880, 4294901760
    %2802 = vmatpush1.msra.mxu0 %v2801
    %2803 = vmatprep.subr.mxu0 0.0
    %v2804 = vand.u32 %v1881, 4294901760
    %2805 = vmatpush1.msra.mxu0 %v2804
    %2806 = vmatprep.subr.mxu0 0.0
    %v2807 = vand.u32 %v1882, 4294901760
    %2808 = vmatpush1.msra.mxu0 %v2807
    %2809 = vmatprep.subr.mxu0 0.0
    %v2810 = vand.u32 %v1883, 4294901760
    %2811 = vmatpush1.msra.mxu0 %v2810
    %2812 = vmatprep.subr.mxu0 0.0
    %v2813 = vand.u32 %v1884, 4294901760
    %2814 = vmatpush1.msra.mxu0 %v2813
    %2815 = vmatprep.subr.mxu0 0.0
    %v2816 = vand.u32 %v1885, 4294901760
    %2817 = vmatpush1.msra.mxu0 %v2816
    %2818 = vmatprep.subr.mxu0 0.0
    %v2819 = vand.u32 %v1886, 4294901760
    %2820 = vmatpush1.msra.mxu0 %v2819
    %2821 = vmatprep.subr.mxu0 0.0
    %v2822 = vand.u32 %v1887, 4294901760
    %2823 = vmatpush1.msra.mxu0 %v2822
    %2824 = vmatprep.subr.mxu0 0.0
    %v2825 = vand.u32 %v1888, 4294901760
    %2826 = vmatpush1.msra.mxu0 %v2825
    %2827 = vmatprep.subr.mxu0 0.0
    %v2828 = vand.u32 %v1889, 4294901760
    %2829 = vmatpush1.msra.mxu0 %v2828
    %2830 = vmatprep.subr.mxu0 0.0
    %v2831 = vand.u32 %v1890, 4294901760
    %2832 = vmatpush1.msra.mxu0 %v2831
    %2833 = vmatprep.subr.mxu0 0.0
    %v2834 = vand.u32 %v1891, 4294901760
    %2835 = vmatpush1.msra.mxu0 %v2834
    %2836 = vmatprep.subr.mxu0 0.0
    %v2837 = vand.u32 %v1892, 4294901760
    %2838 = vmatpush1.msra.mxu0 %v2837
    %2839 = vmatprep.subr.mxu0 0.0
    %v2840 = vand.u32 %v1893, 4294901760
    %2841 = vmatpush1.msra.mxu0 %v2840
    %2842 = vmatprep.subr.mxu0 0.0
    %v2843 = vand.u32 %v1894, 4294901760
    %2844 = vmatpush1.msra.mxu0 %v2843
    %2845 = vmatprep.subr.mxu0 0.0
    %v2846 = vand.u32 %v1895, 4294901760
    %2847 = vmatpush1.msra.mxu0 %v2846
    %2848 = vmatprep.subr.mxu0 0.0
    %v2849 = vand.u32 %v1896, 4294901760
    %2850 = vmatpush1.msra.mxu0 %v2849
    %2851 = vmatprep.subr.mxu0 0.0
    %v2852 = vand.u32 %v1897, 4294901760
    %2853 = vmatpush1.msra.mxu0 %v2852
    %2854 = vmatprep.subr.mxu0 0.0
    %v2855 = vand.u32 %v1898, 4294901760
    %2856 = vmatpush1.msra.mxu0 %v2855
    %v2857 = vand.u32 %v107, 4294901760
    %v2858 = vsub.f32 %v107, %v2857
    %v2859 = vand.u32 %v2858, 4294901760
    %v2860 = vsub.f32 %v2858, %v2859
    %v2861 = vand.u32 %v2860, 4294901760
    %2862 = vmatprep.mubr.f32.mxu0 %v2861
    %v2863 = vand.u32 %v39, 4294901760
    %v2864 = vsub.f32 %v39, %v2863
    %v2865 = vand.u32 %v2864, 4294901760
    %v2866 = vsub.f32 %v2864, %v2865
    %v2867 = vand.u32 %v2866, 4294901760
    %2868 = vmatmul.mubr.f32.gmra.mrb[0].mxu0 %v2867
    %v2869 = vpop.f32.mrb[0].mxu0
    %v2870 = vadd.f32 %v2758, %v2869
    %v2871 = vpop.f32.mrb[0].mxu0
    %2872 = vdwg.mxu0
    %2873 = vmatprep.subr.mxu0 0.0
    %v2874 = vand.u32 %v1867, 4294901760
    %v2875 = vsub.f32 %v1867, %v2874
    %v2876 = vand.u32 %v2875, 4294901760
    %v2877 = vsub.f32 %v2875, %v2876
    %v2878 = vand.u32 %v2877, 4294901760
    %2879 = vmatpush1.msra.mxu0 %v2878
    %2880 = vmatprep.subr.mxu0 0.0
    %v2881 = vand.u32 %v1868, 4294901760
    %v2882 = vsub.f32 %v1868, %v2881
    %v2883 = vand.u32 %v2882, 4294901760
    %v2884 = vsub.f32 %v2882, %v2883
    %v2885 = vand.u32 %v2884, 4294901760
    %2886 = vmatpush1.msra.mxu0 %v2885
    %2887 = vmatprep.subr.mxu0 0.0
    %v2888 = vand.u32 %v1869, 4294901760
    %v2889 = vsub.f32 %v1869, %v2888
    %v2890 = vand.u32 %v2889, 4294901760
    %v2891 = vsub.f32 %v2889, %v2890
    %v2892 = vand.u32 %v2891, 4294901760
    %2893 = vmatpush1.msra.mxu0 %v2892
    %2894 = vmatprep.subr.mxu0 0.0
    %v2895 = vand.u32 %v1870, 4294901760
    %v2896 = vsub.f32 %v1870, %v2895
    %v2897 = vand.u32 %v2896, 4294901760
    %v2898 = vsub.f32 %v2896, %v2897
    %v2899 = vand.u32 %v2898, 4294901760
    %2900 = vmatpush1.msra.mxu0 %v2899
    %2901 = vmatprep.subr.mxu0 0.0
    %v2902 = vand.u32 %v1871, 4294901760
    %v2903 = vsub.f32 %v1871, %v2902
    %v2904 = vand.u32 %v2903, 4294901760
    %v2905 = vsub.f32 %v2903, %v2904
    %v2906 = vand.u32 %v2905, 4294901760
    %2907 = vmatpush1.msra.mxu0 %v2906
    %2908 = vmatprep.subr.mxu0 0.0
    %v2909 = vand.u32 %v1872, 4294901760
    %v2910 = vsub.f32 %v1872, %v2909
    %v2911 = vand.u32 %v2910, 4294901760
    %v2912 = vsub.f32 %v2910, %v2911
    %v2913 = vand.u32 %v2912, 4294901760
    %2914 = vmatpush1.msra.mxu0 %v2913
    %2915 = vmatprep.subr.mxu0 0.0
    %v2916 = vand.u32 %v1873, 4294901760
    %v2917 = vsub.f32 %v1873, %v2916
    %v2918 = vand.u32 %v2917, 4294901760
    %v2919 = vsub.f32 %v2917, %v2918
    %v2920 = vand.u32 %v2919, 4294901760
    %2921 = vmatpush1.msra.mxu0 %v2920
    %2922 = vmatprep.subr.mxu0 0.0
    %v2923 = vand.u32 %v1874, 4294901760
    %v2924 = vsub.f32 %v1874, %v2923
    %v2925 = vand.u32 %v2924, 4294901760
    %v2926 = vsub.f32 %v2924, %v2925
    %v2927 = vand.u32 %v2926, 4294901760
    %2928 = vmatpush1.msra.mxu0 %v2927
    %2929 = vmatprep.subr.mxu0 0.0
    %v2930 = vand.u32 %v1875, 4294901760
    %v2931 = vsub.f32 %v1875, %v2930
    %v2932 = vand.u32 %v2931, 4294901760
    %v2933 = vsub.f32 %v2931, %v2932
    %v2934 = vand.u32 %v2933, 4294901760
    %2935 = vmatpush1.msra.mxu0 %v2934
    %2936 = vmatprep.subr.mxu0 0.0
    %v2937 = vand.u32 %v1876, 4294901760
    %v2938 = vsub.f32 %v1876, %v2937
    %v2939 = vand.u32 %v2938, 4294901760
    %v2940 = vsub.f32 %v2938, %v2939
    %v2941 = vand.u32 %v2940, 4294901760
    %2942 = vmatpush1.msra.mxu0 %v2941
    %2943 = vmatprep.subr.mxu0 0.0
    %v2944 = vand.u32 %v1877, 4294901760
    %v2945 = vsub.f32 %v1877, %v2944
    %v2946 = vand.u32 %v2945, 4294901760
    %v2947 = vsub.f32 %v2945, %v2946
    %v2948 = vand.u32 %v2947, 4294901760
    %2949 = vmatpush1.msra.mxu0 %v2948
    %2950 = vmatprep.subr.mxu0 0.0
    %v2951 = vand.u32 %v1878, 4294901760
    %v2952 = vsub.f32 %v1878, %v2951
    %v2953 = vand.u32 %v2952, 4294901760
    %v2954 = vsub.f32 %v2952, %v2953
    %v2955 = vand.u32 %v2954, 4294901760
    %2956 = vmatpush1.msra.mxu0 %v2955
    %2957 = vmatprep.subr.mxu0 0.0
    %v2958 = vand.u32 %v1879, 4294901760
    %v2959 = vsub.f32 %v1879, %v2958
    %v2960 = vand.u32 %v2959, 4294901760
    %v2961 = vsub.f32 %v2959, %v2960
    %v2962 = vand.u32 %v2961, 4294901760
    %2963 = vmatpush1.msra.mxu0 %v2962
    %2964 = vmatprep.subr.mxu0 0.0
    %v2965 = vand.u32 %v1880, 4294901760
    %v2966 = vsub.f32 %v1880, %v2965
    %v2967 = vand.u32 %v2966, 4294901760
    %v2968 = vsub.f32 %v2966, %v2967
    %v2969 = vand.u32 %v2968, 4294901760
    %2970 = vmatpush1.msra.mxu0 %v2969
    %2971 = vmatprep.subr.mxu0 0.0
    %v2972 = vand.u32 %v1881, 4294901760
    %v2973 = vsub.f32 %v1881, %v2972
    %v2974 = vand.u32 %v2973, 4294901760
    %v2975 = vsub.f32 %v2973, %v2974
    %v2976 = vand.u32 %v2975, 4294901760
    %2977 = vmatpush1.msra.mxu0 %v2976
    %2978 = vmatprep.subr.mxu0 0.0
    %v2979 = vand.u32 %v1882, 4294901760
    %v2980 = vsub.f32 %v1882, %v2979
    %v2981 = vand.u32 %v2980, 4294901760
    %v2982 = vsub.f32 %v2980, %v2981
    %v2983 = vand.u32 %v2982, 4294901760
    %2984 = vmatpush1.msra.mxu0 %v2983
    %2985 = vmatprep.subr.mxu0 0.0
    %v2986 = vand.u32 %v1883, 4294901760
    %v2987 = vsub.f32 %v1883, %v2986
    %v2988 = vand.u32 %v2987, 4294901760
    %v2989 = vsub.f32 %v2987, %v2988
    %v2990 = vand.u32 %v2989, 4294901760
    %2991 = vmatpush1.msra.mxu0 %v2990
    %2992 = vmatprep.subr.mxu0 0.0
    %v2993 = vand.u32 %v1884, 4294901760
    %v2994 = vsub.f32 %v1884, %v2993
    %v2995 = vand.u32 %v2994, 4294901760
    %v2996 = vsub.f32 %v2994, %v2995
    %v2997 = vand.u32 %v2996, 4294901760
    %2998 = vmatpush1.msra.mxu0 %v2997
    %2999 = vmatprep.subr.mxu0 0.0
    %v3000 = vand.u32 %v1885, 4294901760
    %v3001 = vsub.f32 %v1885, %v3000
    %v3002 = vand.u32 %v3001, 4294901760
    %v3003 = vsub.f32 %v3001, %v3002
    %v3004 = vand.u32 %v3003, 4294901760
    %3005 = vmatpush1.msra.mxu0 %v3004
    %3006 = vmatprep.subr.mxu0 0.0
    %v3007 = vand.u32 %v1886, 4294901760
    %v3008 = vsub.f32 %v1886, %v3007
    %v3009 = vand.u32 %v3008, 4294901760
    %v3010 = vsub.f32 %v3008, %v3009
    %v3011 = vand.u32 %v3010, 4294901760
    %3012 = vmatpush1.msra.mxu0 %v3011
    %3013 = vmatprep.subr.mxu0 0.0
    %v3014 = vand.u32 %v1887, 4294901760
    %v3015 = vsub.f32 %v1887, %v3014
    %v3016 = vand.u32 %v3015, 4294901760
    %v3017 = vsub.f32 %v3015, %v3016
    %v3018 = vand.u32 %v3017, 4294901760
    %3019 = vmatpush1.msra.mxu0 %v3018
    %3020 = vmatprep.subr.mxu0 0.0
    %v3021 = vand.u32 %v1888, 4294901760
    %v3022 = vsub.f32 %v1888, %v3021
    %v3023 = vand.u32 %v3022, 4294901760
    %v3024 = vsub.f32 %v3022, %v3023
    %v3025 = vand.u32 %v3024, 4294901760
    %3026 = vmatpush1.msra.mxu0 %v3025
    %3027 = vmatprep.subr.mxu0 0.0
    %v3028 = vand.u32 %v1889, 4294901760
    %v3029 = vsub.f32 %v1889, %v3028
    %v3030 = vand.u32 %v3029, 4294901760
    %v3031 = vsub.f32 %v3029, %v3030
    %v3032 = vand.u32 %v3031, 4294901760
    %3033 = vmatpush1.msra.mxu0 %v3032
    %3034 = vmatprep.subr.mxu0 0.0
    %v3035 = vand.u32 %v1890, 4294901760
    %v3036 = vsub.f32 %v1890, %v3035
    %v3037 = vand.u32 %v3036, 4294901760
    %v3038 = vsub.f32 %v3036, %v3037
    %v3039 = vand.u32 %v3038, 4294901760
    %3040 = vmatpush1.msra.mxu0 %v3039
    %3041 = vmatprep.subr.mxu0 0.0
    %v3042 = vand.u32 %v1891, 4294901760
    %v3043 = vsub.f32 %v1891, %v3042
    %v3044 = vand.u32 %v3043, 4294901760
    %v3045 = vsub.f32 %v3043, %v3044
    %v3046 = vand.u32 %v3045, 4294901760
    %3047 = vmatpush1.msra.mxu0 %v3046
    %3048 = vmatprep.subr.mxu0 0.0
    %v3049 = vand.u32 %v1892, 4294901760
    %v3050 = vsub.f32 %v1892, %v3049
    %v3051 = vand.u32 %v3050, 4294901760
    %v3052 = vsub.f32 %v3050, %v3051
    %v3053 = vand.u32 %v3052, 4294901760
    %3054 = vmatpush1.msra.mxu0 %v3053
    %3055 = vmatprep.subr.mxu0 0.0
    %v3056 = vand.u32 %v1893, 4294901760
    %v3057 = vsub.f32 %v1893, %v3056
    %v3058 = vand.u32 %v3057, 4294901760
    %v3059 = vsub.f32 %v3057, %v3058
    %v3060 = vand.u32 %v3059, 4294901760
    %3061 = vmatpush1.msra.mxu0 %v3060
    %3062 = vmatprep.subr.mxu0 0.0
    %v3063 = vand.u32 %v1894, 4294901760
    %v3064 = vsub.f32 %v1894, %v3063
    %v3065 = vand.u32 %v3064, 4294901760
    %v3066 = vsub.f32 %v3064, %v3065
    %v3067 = vand.u32 %v3066, 4294901760
    %3068 = vmatpush1.msra.mxu0 %v3067
    %3069 = vmatprep.subr.mxu0 0.0
    %v3070 = vand.u32 %v1895, 4294901760
    %v3071 = vsub.f32 %v1895, %v3070
    %v3072 = vand.u32 %v3071, 4294901760
    %v3073 = vsub.f32 %v3071, %v3072
    %v3074 = vand.u32 %v3073, 4294901760
    %3075 = vmatpush1.msra.mxu0 %v3074
    %3076 = vmatprep.subr.mxu0 0.0
    %v3077 = vand.u32 %v1896, 4294901760
    %v3078 = vsub.f32 %v1896, %v3077
    %v3079 = vand.u32 %v3078, 4294901760
    %v3080 = vsub.f32 %v3078, %v3079
    %v3081 = vand.u32 %v3080, 4294901760
    %3082 = vmatpush1.msra.mxu0 %v3081
    %3083 = vmatprep.subr.mxu0 0.0
    %v3084 = vand.u32 %v1897, 4294901760
    %v3085 = vsub.f32 %v1897, %v3084
    %v3086 = vand.u32 %v3085, 4294901760
    %v3087 = vsub.f32 %v3085, %v3086
    %v3088 = vand.u32 %v3087, 4294901760
    %3089 = vmatpush1.msra.mxu0 %v3088
    %3090 = vmatprep.subr.mxu0 0.0
    %v3091 = vand.u32 %v1898, 4294901760
    %v3092 = vsub.f32 %v1898, %v3091
    %v3093 = vand.u32 %v3092, 4294901760
    %v3094 = vsub.f32 %v3092, %v3093
    %v3095 = vand.u32 %v3094, 4294901760
    %3096 = vmatpush1.msra.mxu0 %v3095
    %v3097 = vand.u32 %v107, 4294901760
    %3098 = vmatprep.mubr.f32.mxu0 %v3097
    %v3099 = vand.u32 %v39, 4294901760
    %3100 = vmatmul.mubr.f32.gmra.mrb[0].mxu0 %v3099
    %v3101 = vpop.f32.mrb[0].mxu0
    %v3102 = vadd.f32 %v2870, %v3101
    %v3103 = vpop.f32.mrb[0].mxu0
    %3104 = vdwg.mxu0
    %3105 = vmatprep.subr.mxu0 0.0
    %v3106 = vand.u32 %v1867, 4294901760
    %v3107 = vsub.f32 %v1867, %v3106
    %3108 = vmatpush1.msra.mxu0 %v3107
    %3109 = vmatprep.subr.mxu0 0.0
    %v3110 = vand.u32 %v1868, 4294901760
    %v3111 = vsub.f32 %v1868, %v3110
    %3112 = vmatpush1.msra.mxu0 %v3111
    %3113 = vmatprep.subr.mxu0 0.0
    %v3114 = vand.u32 %v1869, 4294901760
    %v3115 = vsub.f32 %v1869, %v3114
    %3116 = vmatpush1.msra.mxu0 %v3115
    %3117 = vmatprep.subr.mxu0 0.0
    %v3118 = vand.u32 %v1870, 4294901760
    %v3119 = vsub.f32 %v1870, %v3118
    %3120 = vmatpush1.msra.mxu0 %v3119
    %3121 = vmatprep.subr.mxu0 0.0
    %v3122 = vand.u32 %v1871, 4294901760
    %v3123 = vsub.f32 %v1871, %v3122
    %3124 = vmatpush1.msra.mxu0 %v3123
    %3125 = vmatprep.subr.mxu0 0.0
    %v3126 = vand.u32 %v1872, 4294901760
    %v3127 = vsub.f32 %v1872, %v3126
    %3128 = vmatpush1.msra.mxu0 %v3127
    %3129 = vmatprep.subr.mxu0 0.0
    %v3130 = vand.u32 %v1873, 4294901760
    %v3131 = vsub.f32 %v1873, %v3130
    %3132 = vmatpush1.msra.mxu0 %v3131
    %3133 = vmatprep.subr.mxu0 0.0
    %v3134 = vand.u32 %v1874, 4294901760
    %v3135 = vsub.f32 %v1874, %v3134
    %3136 = vmatpush1.msra.mxu0 %v3135
    %3137 = vmatprep.subr.mxu0 0.0
    %v3138 = vand.u32 %v1875, 4294901760
    %v3139 = vsub.f32 %v1875, %v3138
    %3140 = vmatpush1.msra.mxu0 %v3139
    %3141 = vmatprep.subr.mxu0 0.0
    %v3142 = vand.u32 %v1876, 4294901760
    %v3143 = vsub.f32 %v1876, %v3142
    %3144 = vmatpush1.msra.mxu0 %v3143
    %3145 = vmatprep.subr.mxu0 0.0
    %v3146 = vand.u32 %v1877, 4294901760
    %v3147 = vsub.f32 %v1877, %v3146
    %3148 = vmatpush1.msra.mxu0 %v3147
    %3149 = vmatprep.subr.mxu0 0.0
    %v3150 = vand.u32 %v1878, 4294901760
    %v3151 = vsub.f32 %v1878, %v3150
    %3152 = vmatpush1.msra.mxu0 %v3151
    %3153 = vmatprep.subr.mxu0 0.0
    %v3154 = vand.u32 %v1879, 4294901760
    %v3155 = vsub.f32 %v1879, %v3154
    %3156 = vmatpush1.msra.mxu0 %v3155
    %3157 = vmatprep.subr.mxu0 0.0
    %v3158 = vand.u32 %v1880, 4294901760
    %v3159 = vsub.f32 %v1880, %v3158
    %3160 = vmatpush1.msra.mxu0 %v3159
    %3161 = vmatprep.subr.mxu0 0.0
    %v3162 = vand.u32 %v1881, 4294901760
    %v3163 = vsub.f32 %v1881, %v3162
    %3164 = vmatpush1.msra.mxu0 %v3163
    %3165 = vmatprep.subr.mxu0 0.0
    %v3166 = vand.u32 %v1882, 4294901760
    %v3167 = vsub.f32 %v1882, %v3166
    %3168 = vmatpush1.msra.mxu0 %v3167
    %3169 = vmatprep.subr.mxu0 0.0
    %v3170 = vand.u32 %v1883, 4294901760
    %v3171 = vsub.f32 %v1883, %v3170
    %3172 = vmatpush1.msra.mxu0 %v3171
    %3173 = vmatprep.subr.mxu0 0.0
    %v3174 = vand.u32 %v1884, 4294901760
    %v3175 = vsub.f32 %v1884, %v3174
    %3176 = vmatpush1.msra.mxu0 %v3175
    %3177 = vmatprep.subr.mxu0 0.0
    %v3178 = vand.u32 %v1885, 4294901760
    %v3179 = vsub.f32 %v1885, %v3178
    %3180 = vmatpush1.msra.mxu0 %v3179
    %3181 = vmatprep.subr.mxu0 0.0
    %v3182 = vand.u32 %v1886, 4294901760
    %v3183 = vsub.f32 %v1886, %v3182
    %3184 = vmatpush1.msra.mxu0 %v3183
    %3185 = vmatprep.subr.mxu0 0.0
    %v3186 = vand.u32 %v1887, 4294901760
    %v3187 = vsub.f32 %v1887, %v3186
    %3188 = vmatpush1.msra.mxu0 %v3187
    %3189 = vmatprep.subr.mxu0 0.0
    %v3190 = vand.u32 %v1888, 4294901760
    %v3191 = vsub.f32 %v1888, %v3190
    %3192 = vmatpush1.msra.mxu0 %v3191
    %3193 = vmatprep.subr.mxu0 0.0
    %v3194 = vand.u32 %v1889, 4294901760
    %v3195 = vsub.f32 %v1889, %v3194
    %3196 = vmatpush1.msra.mxu0 %v3195
    %3197 = vmatprep.subr.mxu0 0.0
    %v3198 = vand.u32 %v1890, 4294901760
    %v3199 = vsub.f32 %v1890, %v3198
    %3200 = vmatpush1.msra.mxu0 %v3199
    %3201 = vmatprep.subr.mxu0 0.0
    %v3202 = vand.u32 %v1891, 4294901760
    %v3203 = vsub.f32 %v1891, %v3202
    %3204 = vmatpush1.msra.mxu0 %v3203
    %3205 = vmatprep.subr.mxu0 0.0
    %v3206 = vand.u32 %v1892, 4294901760
    %v3207 = vsub.f32 %v1892, %v3206
    %3208 = vmatpush1.msra.mxu0 %v3207
    %3209 = vmatprep.subr.mxu0 0.0
    %v3210 = vand.u32 %v1893, 4294901760
    %v3211 = vsub.f32 %v1893, %v3210
    %3212 = vmatpush1.msra.mxu0 %v3211
    %3213 = vmatprep.subr.mxu0 0.0
    %v3214 = vand.u32 %v1894, 4294901760
    %v3215 = vsub.f32 %v1894, %v3214
    %3216 = vmatpush1.msra.mxu0 %v3215
    %3217 = vmatprep.subr.mxu0 0.0
    %v3218 = vand.u32 %v1895, 4294901760
    %v3219 = vsub.f32 %v1895, %v3218
    %3220 = vmatpush1.msra.mxu0 %v3219
    %3221 = vmatprep.subr.mxu0 0.0
    %v3222 = vand.u32 %v1896, 4294901760
    %v3223 = vsub.f32 %v1896, %v3222
    %3224 = vmatpush1.msra.mxu0 %v3223
    %3225 = vmatprep.subr.mxu0 0.0
    %v3226 = vand.u32 %v1897, 4294901760
    %v3227 = vsub.f32 %v1897, %v3226
    %3228 = vmatpush1.msra.mxu0 %v3227
    %3229 = vmatprep.subr.mxu0 0.0
    %v3230 = vand.u32 %v1898, 4294901760
    %v3231 = vsub.f32 %v1898, %v3230
    %3232 = vmatpush1.msra.mxu0 %v3231
    %v3233 = vand.u32 %v107, 4294901760
    %v3234 = vsub.f32 %v107, %v3233
    %3235 = vmatprep.mubr.f32.mxu0 %v3234
    %v3236 = vand.u32 %v39, 4294901760
    %v3237 = vsub.f32 %v39, %v3236
    %3238 = vmatmul.mubr.f32.gmra.mrb[0].mxu0 %v3237
    %v3239 = vpop.f32.mrb[0].mxu0
    %v3240 = vadd.f32 %v3102, %v3239
    %v3241 = vpop.f32.mrb[0].mxu0
    %3242 = vdwg.mxu0
    %3243 = vmatprep.subr.mxu0 0.0
    %v3244 = vand.u32 %v1867, 4294901760
    %3245 = vmatpush1.msra.mxu0 %v3244
    %3246 = vmatprep.subr.mxu0 0.0
    %v3247 = vand.u32 %v1868, 4294901760
    %3248 = vmatpush1.msra.mxu0 %v3247
    %3249 = vmatprep.subr.mxu0 0.0
    %v3250 = vand.u32 %v1869, 4294901760
    %3251 = vmatpush1.msra.mxu0 %v3250
    %3252 = vmatprep.subr.mxu0 0.0
    %v3253 = vand.u32 %v1870, 4294901760
    %3254 = vmatpush1.msra.mxu0 %v3253
    %3255 = vmatprep.subr.mxu0 0.0
    %v3256 = vand.u32 %v1871, 4294901760
    %3257 = vmatpush1.msra.mxu0 %v3256
    %3258 = vmatprep.subr.mxu0 0.0
    %v3259 = vand.u32 %v1872, 4294901760
    %3260 = vmatpush1.msra.mxu0 %v3259
    %3261 = vmatprep.subr.mxu0 0.0
    %v3262 = vand.u32 %v1873, 4294901760
    %3263 = vmatpush1.msra.mxu0 %v3262
    %3264 = vmatprep.subr.mxu0 0.0
    %v3265 = vand.u32 %v1874, 4294901760
    %3266 = vmatpush1.msra.mxu0 %v3265
    %3267 = vmatprep.subr.mxu0 0.0
    %v3268 = vand.u32 %v1875, 4294901760
    %3269 = vmatpush1.msra.mxu0 %v3268
    %3270 = vmatprep.subr.mxu0 0.0
    %v3271 = vand.u32 %v1876, 4294901760
    %3272 = vmatpush1.msra.mxu0 %v3271
    %3273 = vmatprep.subr.mxu0 0.0
    %v3274 = vand.u32 %v1877, 4294901760
    %3275 = vmatpush1.msra.mxu0 %v3274
    %3276 = vmatprep.subr.mxu0 0.0
    %v3277 = vand.u32 %v1878, 4294901760
    %3278 = vmatpush1.msra.mxu0 %v3277
    %3279 = vmatprep.subr.mxu0 0.0
    %v3280 = vand.u32 %v1879, 4294901760
    %3281 = vmatpush1.msra.mxu0 %v3280
    %3282 = vmatprep.subr.mxu0 0.0
    %v3283 = vand.u32 %v1880, 4294901760
    %3284 = vmatpush1.msra.mxu0 %v3283
    %3285 = vmatprep.subr.mxu0 0.0
    %v3286 = vand.u32 %v1881, 4294901760
    %3287 = vmatpush1.msra.mxu0 %v3286
    %3288 = vmatprep.subr.mxu0 0.0
    %v3289 = vand.u32 %v1882, 4294901760
    %3290 = vmatpush1.msra.mxu0 %v3289
    %3291 = vmatprep.subr.mxu0 0.0
    %v3292 = vand.u32 %v1883, 4294901760
    %3293 = vmatpush1.msra.mxu0 %v3292
    %3294 = vmatprep.subr.mxu0 0.0
    %v3295 = vand.u32 %v1884, 4294901760
    %3296 = vmatpush1.msra.mxu0 %v3295
    %3297 = vmatprep.subr.mxu0 0.0
    %v3298 = vand.u32 %v1885, 4294901760
    %3299 = vmatpush1.msra.mxu0 %v3298
    %3300 = vmatprep.subr.mxu0 0.0
    %v3301 = vand.u32 %v1886, 4294901760
    %3302 = vmatpush1.msra.mxu0 %v3301
    %3303 = vmatprep.subr.mxu0 0.0
    %v3304 = vand.u32 %v1887, 4294901760
    %3305 = vmatpush1.msra.mxu0 %v3304
    %3306 = vmatprep.subr.mxu0 0.0
    %v3307 = vand.u32 %v1888, 4294901760
    %3308 = vmatpush1.msra.mxu0 %v3307
    %3309 = vmatprep.subr.mxu0 0.0
    %v3310 = vand.u32 %v1889, 4294901760
    %3311 = vmatpush1.msra.mxu0 %v3310
    %3312 = vmatprep.subr.mxu0 0.0
    %v3313 = vand.u32 %v1890, 4294901760
    %3314 = vmatpush1.msra.mxu0 %v3313
    %3315 = vmatprep.subr.mxu0 0.0
    %v3316 = vand.u32 %v1891, 4294901760
    %3317 = vmatpush1.msra.mxu0 %v3316
    %3318 = vmatprep.subr.mxu0 0.0
    %v3319 = vand.u32 %v1892, 4294901760
    %3320 = vmatpush1.msra.mxu0 %v3319
    %3321 = vmatprep.subr.mxu0 0.0
    %v3322 = vand.u32 %v1893, 4294901760
    %3323 = vmatpush1.msra.mxu0 %v3322
    %3324 = vmatprep.subr.mxu0 0.0
    %v3325 = vand.u32 %v1894, 4294901760
    %3326 = vmatpush1.msra.mxu0 %v3325
    %3327 = vmatprep.subr.mxu0 0.0
    %v3328 = vand.u32 %v1895, 4294901760
    %3329 = vmatpush1.msra.mxu0 %v3328
    %3330 = vmatprep.subr.mxu0 0.0
    %v3331 = vand.u32 %v1896, 4294901760
    %3332 = vmatpush1.msra.mxu0 %v3331
    %3333 = vmatprep.subr.mxu0 0.0
    %v3334 = vand.u32 %v1897, 4294901760
    %3335 = vmatpush1.msra.mxu0 %v3334
    %3336 = vmatprep.subr.mxu0 0.0
    %v3337 = vand.u32 %v1898, 4294901760
    %3338 = vmatpush1.msra.mxu0 %v3337
    %v3339 = vand.u32 %v107, 4294901760
    %v3340 = vsub.f32 %v107, %v3339
    %v3341 = vand.u32 %v3340, 4294901760
    %3342 = vmatprep.mubr.f32.mxu0 %v3341
    %v3343 = vand.u32 %v39, 4294901760
    %v3344 = vsub.f32 %v39, %v3343
    %v3345 = vand.u32 %v3344, 4294901760
    %3346 = vmatmul.mubr.f32.gmra.mrb[0].mxu0 %v3345
    %v3347 = vpop.f32.mrb[0].mxu0
    %v3348 = vadd.f32 %v3240, %v3347
    %v3349 = vpop.f32.mrb[0].mxu0
    %3350 = vdwg.mxu0
    %3351 = vmatprep.subr.mxu0 0.0
    %v3352 = vand.u32 %v1867, 4294901760
    %v3353 = vsub.f32 %v1867, %v3352
    %v3354 = vand.u32 %v3353, 4294901760
    %3355 = vmatpush1.msra.mxu0 %v3354
    %3356 = vmatprep.subr.mxu0 0.0
    %v3357 = vand.u32 %v1868, 4294901760
    %v3358 = vsub.f32 %v1868, %v3357
    %v3359 = vand.u32 %v3358, 4294901760
    %3360 = vmatpush1.msra.mxu0 %v3359
    %3361 = vmatprep.subr.mxu0 0.0
    %v3362 = vand.u32 %v1869, 4294901760
    %v3363 = vsub.f32 %v1869, %v3362
    %v3364 = vand.u32 %v3363, 4294901760
    %3365 = vmatpush1.msra.mxu0 %v3364
    %3366 = vmatprep.subr.mxu0 0.0
    %v3367 = vand.u32 %v1870, 4294901760
    %v3368 = vsub.f32 %v1870, %v3367
    %v3369 = vand.u32 %v3368, 4294901760
    %3370 = vmatpush1.msra.mxu0 %v3369
    %3371 = vmatprep.subr.mxu0 0.0
    %v3372 = vand.u32 %v1871, 4294901760
    %v3373 = vsub.f32 %v1871, %v3372
    %v3374 = vand.u32 %v3373, 4294901760
    %3375 = vmatpush1.msra.mxu0 %v3374
    %3376 = vmatprep.subr.mxu0 0.0
    %v3377 = vand.u32 %v1872, 4294901760
    %v3378 = vsub.f32 %v1872, %v3377
    %v3379 = vand.u32 %v3378, 4294901760
    %3380 = vmatpush1.msra.mxu0 %v3379
    %3381 = vmatprep.subr.mxu0 0.0
    %v3382 = vand.u32 %v1873, 4294901760
    %v3383 = vsub.f32 %v1873, %v3382
    %v3384 = vand.u32 %v3383, 4294901760
    %3385 = vmatpush1.msra.mxu0 %v3384
    %3386 = vmatprep.subr.mxu0 0.0
    %v3387 = vand.u32 %v1874, 4294901760
    %v3388 = vsub.f32 %v1874, %v3387
    %v3389 = vand.u32 %v3388, 4294901760
    %3390 = vmatpush1.msra.mxu0 %v3389
    %3391 = vmatprep.subr.mxu0 0.0
    %v3392 = vand.u32 %v1875, 4294901760
    %v3393 = vsub.f32 %v1875, %v3392
    %v3394 = vand.u32 %v3393, 4294901760
    %3395 = vmatpush1.msra.mxu0 %v3394
    %3396 = vmatprep.subr.mxu0 0.0
    %v3397 = vand.u32 %v1876, 4294901760
    %v3398 = vsub.f32 %v1876, %v3397
    %v3399 = vand.u32 %v3398, 4294901760
    %3400 = vmatpush1.msra.mxu0 %v3399
    %3401 = vmatprep.subr.mxu0 0.0
    %v3402 = vand.u32 %v1877, 4294901760
    %v3403 = vsub.f32 %v1877, %v3402
    %v3404 = vand.u32 %v3403, 4294901760
    %3405 = vmatpush1.msra.mxu0 %v3404
    %3406 = vmatprep.subr.mxu0 0.0
    %v3407 = vand.u32 %v1878, 4294901760
    %v3408 = vsub.f32 %v1878, %v3407
    %v3409 = vand.u32 %v3408, 4294901760
    %3410 = vmatpush1.msra.mxu0 %v3409
    %3411 = vmatprep.subr.mxu0 0.0
    %v3412 = vand.u32 %v1879, 4294901760
    %v3413 = vsub.f32 %v1879, %v3412
    %v3414 = vand.u32 %v3413, 4294901760
    %3415 = vmatpush1.msra.mxu0 %v3414
    %3416 = vmatprep.subr.mxu0 0.0
    %v3417 = vand.u32 %v1880, 4294901760
    %v3418 = vsub.f32 %v1880, %v3417
    %v3419 = vand.u32 %v3418, 4294901760
    %3420 = vmatpush1.msra.mxu0 %v3419
    %3421 = vmatprep.subr.mxu0 0.0
    %v3422 = vand.u32 %v1881, 4294901760
    %v3423 = vsub.f32 %v1881, %v3422
    %v3424 = vand.u32 %v3423, 4294901760
    %3425 = vmatpush1.msra.mxu0 %v3424
    %3426 = vmatprep.subr.mxu0 0.0
    %v3427 = vand.u32 %v1882, 4294901760
    %v3428 = vsub.f32 %v1882, %v3427
    %v3429 = vand.u32 %v3428, 4294901760
    %3430 = vmatpush1.msra.mxu0 %v3429
    %3431 = vmatprep.subr.mxu0 0.0
    %v3432 = vand.u32 %v1883, 4294901760
    %v3433 = vsub.f32 %v1883, %v3432
    %v3434 = vand.u32 %v3433, 4294901760
    %3435 = vmatpush1.msra.mxu0 %v3434
    %3436 = vmatprep.subr.mxu0 0.0
    %v3437 = vand.u32 %v1884, 4294901760
    %v3438 = vsub.f32 %v1884, %v3437
    %v3439 = vand.u32 %v3438, 4294901760
    %3440 = vmatpush1.msra.mxu0 %v3439
    %3441 = vmatprep.subr.mxu0 0.0
    %v3442 = vand.u32 %v1885, 4294901760
    %v3443 = vsub.f32 %v1885, %v3442
    %v3444 = vand.u32 %v3443, 4294901760
    %3445 = vmatpush1.msra.mxu0 %v3444
    %3446 = vmatprep.subr.mxu0 0.0
    %v3447 = vand.u32 %v1886, 4294901760
    %v3448 = vsub.f32 %v1886, %v3447
    %v3449 = vand.u32 %v3448, 4294901760
    %3450 = vmatpush1.msra.mxu0 %v3449
    %3451 = vmatprep.subr.mxu0 0.0
    %v3452 = vand.u32 %v1887, 4294901760
    %v3453 = vsub.f32 %v1887, %v3452
    %v3454 = vand.u32 %v3453, 4294901760
    %3455 = vmatpush1.msra.mxu0 %v3454
    %3456 = vmatprep.subr.mxu0 0.0
    %v3457 = vand.u32 %v1888, 4294901760
    %v3458 = vsub.f32 %v1888, %v3457
    %v3459 = vand.u32 %v3458, 4294901760
    %3460 = vmatpush1.msra.mxu0 %v3459
    %3461 = vmatprep.subr.mxu0 0.0
    %v3462 = vand.u32 %v1889, 4294901760
    %v3463 = vsub.f32 %v1889, %v3462
    %v3464 = vand.u32 %v3463, 4294901760
    %3465 = vmatpush1.msra.mxu0 %v3464
    %3466 = vmatprep.subr.mxu0 0.0
    %v3467 = vand.u32 %v1890, 4294901760
    %v3468 = vsub.f32 %v1890, %v3467
    %v3469 = vand.u32 %v3468, 4294901760
    %3470 = vmatpush1.msra.mxu0 %v3469
    %3471 = vmatprep.subr.mxu0 0.0
    %v3472 = vand.u32 %v1891, 4294901760
    %v3473 = vsub.f32 %v1891, %v3472
    %v3474 = vand.u32 %v3473, 4294901760
    %3475 = vmatpush1.msra.mxu0 %v3474
    %3476 = vmatprep.subr.mxu0 0.0
    %v3477 = vand.u32 %v1892, 4294901760
    %v3478 = vsub.f32 %v1892, %v3477
    %v3479 = vand.u32 %v3478, 4294901760
    %3480 = vmatpush1.msra.mxu0 %v3479
    %3481 = vmatprep.subr.mxu0 0.0
    %v3482 = vand.u32 %v1893, 4294901760
    %v3483 = vsub.f32 %v1893, %v3482
    %v3484 = vand.u32 %v3483, 4294901760
    %3485 = vmatpush1.msra.mxu0 %v3484
    %3486 = vmatprep.subr.mxu0 0.0
    %v3487 = vand.u32 %v1894, 4294901760
    %v3488 = vsub.f32 %v1894, %v3487
    %v3489 = vand.u32 %v3488, 4294901760
    %3490 = vmatpush1.msra.mxu0 %v3489
    %3491 = vmatprep.subr.mxu0 0.0
    %v3492 = vand.u32 %v1895, 4294901760
    %v3493 = vsub.f32 %v1895, %v3492
    %v3494 = vand.u32 %v3493, 4294901760
    %3495 = vmatpush1.msra.mxu0 %v3494
    %3496 = vmatprep.subr.mxu0 0.0
    %v3497 = vand.u32 %v1896, 4294901760
    %v3498 = vsub.f32 %v1896, %v3497
    %v3499 = vand.u32 %v3498, 4294901760
    %3500 = vmatpush1.msra.mxu0 %v3499
    %3501 = vmatprep.subr.mxu0 0.0
    %v3502 = vand.u32 %v1897, 4294901760
    %v3503 = vsub.f32 %v1897, %v3502
    %v3504 = vand.u32 %v3503, 4294901760
    %3505 = vmatpush1.msra.mxu0 %v3504
    %3506 = vmatprep.subr.mxu0 0.0
    %v3507 = vand.u32 %v1898, 4294901760
    %v3508 = vsub.f32 %v1898, %v3507
    %v3509 = vand.u32 %v3508, 4294901760
    %3510 = vmatpush1.msra.mxu0 %v3509
    %v3511 = vand.u32 %v107, 4294901760
    %3512 = vmatprep.mubr.f32.mxu0 %v3511
    %v3513 = vand.u32 %v39, 4294901760
    %3514 = vmatmul.mubr.f32.gmra.mrb[0].mxu0 %v3513
    %v3515 = vpop.f32.mrb[0].mxu0
    %v3516 = vadd.f32 %v3348, %v3515
    %v3517 = vpop.f32.mrb[0].mxu0
    %3518 = vdwg.mxu0
    %3519 = vmatprep.subr.mxu0 0.0
    %v3520 = vand.u32 %v1867, 4294901760
    %3521 = vmatpush1.msra.mxu0 %v3520
    %3522 = vmatprep.subr.mxu0 0.0
    %v3523 = vand.u32 %v1868, 4294901760
    %3524 = vmatpush1.msra.mxu0 %v3523
    %3525 = vmatprep.subr.mxu0 0.0
    %v3526 = vand.u32 %v1869, 4294901760
    %3527 = vmatpush1.msra.mxu0 %v3526
    %3528 = vmatprep.subr.mxu0 0.0
    %v3529 = vand.u32 %v1870, 4294901760
    %3530 = vmatpush1.msra.mxu0 %v3529
    %3531 = vmatprep.subr.mxu0 0.0
    %v3532 = vand.u32 %v1871, 4294901760
    %3533 = vmatpush1.msra.mxu0 %v3532
    %3534 = vmatprep.subr.mxu0 0.0
    %v3535 = vand.u32 %v1872, 4294901760
    %3536 = vmatpush1.msra.mxu0 %v3535
    %3537 = vmatprep.subr.mxu0 0.0
    %v3538 = vand.u32 %v1873, 4294901760
    %3539 = vmatpush1.msra.mxu0 %v3538
    %3540 = vmatprep.subr.mxu0 0.0
    %v3541 = vand.u32 %v1874, 4294901760
    %3542 = vmatpush1.msra.mxu0 %v3541
    %3543 = vmatprep.subr.mxu0 0.0
    %v3544 = vand.u32 %v1875, 4294901760
    %3545 = vmatpush1.msra.mxu0 %v3544
    %3546 = vmatprep.subr.mxu0 0.0
    %v3547 = vand.u32 %v1876, 4294901760
    %3548 = vmatpush1.msra.mxu0 %v3547
    %3549 = vmatprep.subr.mxu0 0.0
    %v3550 = vand.u32 %v1877, 4294901760
    %3551 = vmatpush1.msra.mxu0 %v3550
    %3552 = vmatprep.subr.mxu0 0.0
    %v3553 = vand.u32 %v1878, 4294901760
    %3554 = vmatpush1.msra.mxu0 %v3553
    %3555 = vmatprep.subr.mxu0 0.0
    %v3556 = vand.u32 %v1879, 4294901760
    %3557 = vmatpush1.msra.mxu0 %v3556
    %3558 = vmatprep.subr.mxu0 0.0
    %v3559 = vand.u32 %v1880, 4294901760
    %3560 = vmatpush1.msra.mxu0 %v3559
    %3561 = vmatprep.subr.mxu0 0.0
    %v3562 = vand.u32 %v1881, 4294901760
    %3563 = vmatpush1.msra.mxu0 %v3562
    %3564 = vmatprep.subr.mxu0 0.0
    %v3565 = vand.u32 %v1882, 4294901760
    %3566 = vmatpush1.msra.mxu0 %v3565
    %3567 = vmatprep.subr.mxu0 0.0
    %v3568 = vand.u32 %v1883, 4294901760
    %3569 = vmatpush1.msra.mxu0 %v3568
    %3570 = vmatprep.subr.mxu0 0.0
    %v3571 = vand.u32 %v1884, 4294901760
    %3572 = vmatpush1.msra.mxu0 %v3571
    %3573 = vmatprep.subr.mxu0 0.0
    %v3574 = vand.u32 %v1885, 4294901760
    %3575 = vmatpush1.msra.mxu0 %v3574
    %3576 = vmatprep.subr.mxu0 0.0
    %v3577 = vand.u32 %v1886, 4294901760
    %3578 = vmatpush1.msra.mxu0 %v3577
    %3579 = vmatprep.subr.mxu0 0.0
    %v3580 = vand.u32 %v1887, 4294901760
    %3581 = vmatpush1.msra.mxu0 %v3580
    %3582 = vmatprep.subr.mxu0 0.0
    %v3583 = vand.u32 %v1888, 4294901760
    %3584 = vmatpush1.msra.mxu0 %v3583
    %3585 = vmatprep.subr.mxu0 0.0
    %v3586 = vand.u32 %v1889, 4294901760
    %3587 = vmatpush1.msra.mxu0 %v3586
    %3588 = vmatprep.subr.mxu0 0.0
    %v3589 = vand.u32 %v1890, 4294901760
    %3590 = vmatpush1.msra.mxu0 %v3589
    %3591 = vmatprep.subr.mxu0 0.0
    %v3592 = vand.u32 %v1891, 4294901760
    %3593 = vmatpush1.msra.mxu0 %v3592
    %3594 = vmatprep.subr.mxu0 0.0
    %v3595 = vand.u32 %v1892, 4294901760
    %3596 = vmatpush1.msra.mxu0 %v3595
    %3597 = vmatprep.subr.mxu0 0.0
    %v3598 = vand.u32 %v1893, 4294901760
    %3599 = vmatpush1.msra.mxu0 %v3598
    %3600 = vmatprep.subr.mxu0 0.0
    %v3601 = vand.u32 %v1894, 4294901760
    %3602 = vmatpush1.msra.mxu0 %v3601
    %3603 = vmatprep.subr.mxu0 0.0
    %v3604 = vand.u32 %v1895, 4294901760
    %3605 = vmatpush1.msra.mxu0 %v3604
    %3606 = vmatprep.subr.mxu0 0.0
    %v3607 = vand.u32 %v1896, 4294901760
    %3608 = vmatpush1.msra.mxu0 %v3607
    %3609 = vmatprep.subr.mxu0 0.0
    %v3610 = vand.u32 %v1897, 4294901760
    %3611 = vmatpush1.msra.mxu0 %v3610
    %3612 = vmatprep.subr.mxu0 0.0
    %v3613 = vand.u32 %v1898, 4294901760
    %3614 = vmatpush1.msra.mxu0 %v3613
    %v3615 = vand.u32 %v107, 4294901760
    %3616 = vmatprep.mubr.f32.mxu0 %v3615
    %v3617 = vand.u32 %v39, 4294901760
    %3618 = vmatmul.mubr.f32.gmra.mrb[0].mxu0 %v3617
    %v3619 = vpop.f32.mrb[0].mxu0
    %v3620 = vadd.f32 %v3516, %v3619
    %v3621 = vpop.f32.mrb[0].mxu0
    %3622 = vdwg.mxu0
    %v3623 = vmax.f32 %v1831, %v3620
    %s3624 = scalar_lea.vmem [#allocation5], 1024
    %v3625 = vld [vmem:[%s3624] sm:$0xff]
    %v3626 = vld [vmem:[%s3624 + $0x8] sm:$0xff]
    %v3627 = vld [vmem:[%s3624 + $0x10] sm:$0xff]
    %v3628 = vld [vmem:[%s3624 + $0x18] sm:$0xff]
    %v3629 = vld [vmem:[%s3624 + $0x20] sm:$0xff]
    %v3630 = vld [vmem:[%s3624 + $0x28] sm:$0xff]
    %v3631 = vld [vmem:[%s3624 + $0x30] sm:$0xff]
    %v3632 = vld [vmem:[%s3624 + $0x38] sm:$0xff]
    %v3633 = vld [vmem:[%s3624 + $0x40] sm:$0xff]
    %v3634 = vld [vmem:[%s3624 + $0x48] sm:$0xff]
    %v3635 = vld [vmem:[%s3624 + $0x50] sm:$0xff]
    %v3636 = vld [vmem:[%s3624 + $0x58] sm:$0xff]
    %v3637 = vld [vmem:[%s3624 + $0x60] sm:$0xff]
    %v3638 = vld [vmem:[%s3624 + $0x68] sm:$0xff]
    %v3639 = vld [vmem:[%s3624 + $0x70] sm:$0xff]
    %v3640 = vld [vmem:[%s3624 + $0x78] sm:$0xff]
    %v3641 = vld [vmem:[%s3624 + $0x80] sm:$0xff]
    %v3642 = vld [vmem:[%s3624 + $0x88] sm:$0xff]
    %v3643 = vld [vmem:[%s3624 + $0x90] sm:$0xff]
    %v3644 = vld [vmem:[%s3624 + $0x98] sm:$0xff]
    %v3645 = vld [vmem:[%s3624 + $0xa0] sm:$0xff]
    %v3646 = vld [vmem:[%s3624 + $0xa8] sm:$0xff]
    %v3647 = vld [vmem:[%s3624 + $0xb0] sm:$0xff]
    %v3648 = vld [vmem:[%s3624 + $0xb8] sm:$0xff]
    %v3649 = vld [vmem:[%s3624 + $0xc0] sm:$0xff]
    %v3650 = vld [vmem:[%s3624 + $0xc8] sm:$0xff]
    %v3651 = vld [vmem:[%s3624 + $0xd0] sm:$0xff]
    %v3652 = vld [vmem:[%s3624 + $0xd8] sm:$0xff]
    %v3653 = vld [vmem:[%s3624 + $0xe0] sm:$0xff]
    %v3654 = vld [vmem:[%s3624 + $0xe8] sm:$0xff]
    %v3655 = vld [vmem:[%s3624 + $0xf0] sm:$0xff]
    %v3656 = vld [vmem:[%s3624 + $0xf8] sm:$0xff]
    %v3657 = vld [vmem:[%s3624 + $0x100] sm:$0xff]
    %v3658 = vld [vmem:[%s3624 + $0x108] sm:$0xff]
    %v3659 = vld [vmem:[%s3624 + $0x110] sm:$0xff]
    %v3660 = vld [vmem:[%s3624 + $0x118] sm:$0xff]
    %v3661 = vld [vmem:[%s3624 + $0x120] sm:$0xff]
    %v3662 = vld [vmem:[%s3624 + $0x128] sm:$0xff]
    %v3663 = vld [vmem:[%s3624 + $0x130] sm:$0xff]
    %v3664 = vld [vmem:[%s3624 + $0x138] sm:$0xff]
    %v3665 = vld [vmem:[%s3624 + $0x140] sm:$0xff]
    %v3666 = vld [vmem:[%s3624 + $0x148] sm:$0xff]
    %v3667 = vld [vmem:[%s3624 + $0x150] sm:$0xff]
    %v3668 = vld [vmem:[%s3624 + $0x158] sm:$0xff]
    %v3669 = vld [vmem:[%s3624 + $0x160] sm:$0xff]
    %v3670 = vld [vmem:[%s3624 + $0x168] sm:$0xff]
    %v3671 = vld [vmem:[%s3624 + $0x170] sm:$0xff]
    %v3672 = vld [vmem:[%s3624 + $0x178] sm:$0xff]
    %v3673 = vld [vmem:[%s3624 + $0x180] sm:$0xff]
    %v3674 = vld [vmem:[%s3624 + $0x188] sm:$0xff]
    %v3675 = vld [vmem:[%s3624 + $0x190] sm:$0xff]
    %v3676 = vld [vmem:[%s3624 + $0x198] sm:$0xff]
    %v3677 = vld [vmem:[%s3624 + $0x1a0] sm:$0xff]
    %v3678 = vld [vmem:[%s3624 + $0x1a8] sm:$0xff]
    %v3679 = vld [vmem:[%s3624 + $0x1b0] sm:$0xff]
    %v3680 = vld [vmem:[%s3624 + $0x1b8] sm:$0xff]
    %v3681 = vld [vmem:[%s3624 + $0x1c0] sm:$0xff]
    %v3682 = vld [vmem:[%s3624 + $0x1c8] sm:$0xff]
    %v3683 = vld [vmem:[%s3624 + $0x1d0] sm:$0xff]
    %v3684 = vld [vmem:[%s3624 + $0x1d8] sm:$0xff]
    %v3685 = vld [vmem:[%s3624 + $0x1e0] sm:$0xff]
    %v3686 = vld [vmem:[%s3624 + $0x1e8] sm:$0xff]
    %v3687 = vld [vmem:[%s3624 + $0x1f0] sm:$0xff]
    %v3688 = vld [vmem:[%s3624 + $0x1f8] sm:$0xff]
    %3689 = vmatprep.subr.mxu0 0.0
    %v3690 = vand.u32 %v3625, 4294901760
    %3691 = vmatpush1.msra.mxu0 %v3690
    %3692 = vmatprep.subr.mxu0 0.0
    %v3693 = vand.u32 %v3626, 4294901760
    %3694 = vmatpush1.msra.mxu0 %v3693
    %3695 = vmatprep.subr.mxu0 0.0
    %v3696 = vand.u32 %v3627, 4294901760
    %3697 = vmatpush1.msra.mxu0 %v3696
    %3698 = vmatprep.subr.mxu0 0.0
    %v3699 = vand.u32 %v3628, 4294901760
    %3700 = vmatpush1.msra.mxu0 %v3699
    %3701 = vmatprep.subr.mxu0 0.0
    %v3702 = vand.u32 %v3629, 4294901760
    %3703 = vmatpush1.msra.mxu0 %v3702
    %3704 = vmatprep.subr.mxu0 0.0
    %v3705 = vand.u32 %v3630, 4294901760
    %3706 = vmatpush1.msra.mxu0 %v3705
    %3707 = vmatprep.subr.mxu0 0.0
    %v3708 = vand.u32 %v3631, 4294901760
    %3709 = vmatpush1.msra.mxu0 %v3708
    %3710 = vmatprep.subr.mxu0 0.0
    %v3711 = vand.u32 %v3632, 4294901760
    %3712 = vmatpush1.msra.mxu0 %v3711
    %3713 = vmatprep.subr.mxu0 0.0
    %v3714 = vand.u32 %v3633, 4294901760
    %3715 = vmatpush1.msra.mxu0 %v3714
    %3716 = vmatprep.subr.mxu0 0.0
    %v3717 = vand.u32 %v3634, 4294901760
    %3718 = vmatpush1.msra.mxu0 %v3717
    %3719 = vmatprep.subr.mxu0 0.0
    %v3720 = vand.u32 %v3635, 4294901760
    %3721 = vmatpush1.msra.mxu0 %v3720
    %3722 = vmatprep.subr.mxu0 0.0
    %v3723 = vand.u32 %v3636, 4294901760
    %3724 = vmatpush1.msra.mxu0 %v3723
    %3725 = vmatprep.subr.mxu0 0.0
    %v3726 = vand.u32 %v3637, 4294901760
    %3727 = vmatpush1.msra.mxu0 %v3726
    %3728 = vmatprep.subr.mxu0 0.0
    %v3729 = vand.u32 %v3638, 4294901760
    %3730 = vmatpush1.msra.mxu0 %v3729
    %3731 = vmatprep.subr.mxu0 0.0
    %v3732 = vand.u32 %v3639, 4294901760
    %3733 = vmatpush1.msra.mxu0 %v3732
    %3734 = vmatprep.subr.mxu0 0.0
    %v3735 = vand.u32 %v3640, 4294901760
    %3736 = vmatpush1.msra.mxu0 %v3735
    %3737 = vmatprep.subr.mxu0 0.0
    %v3738 = vand.u32 %v3641, 4294901760
    %3739 = vmatpush1.msra.mxu0 %v3738
    %3740 = vmatprep.subr.mxu0 0.0
    %v3741 = vand.u32 %v3642, 4294901760
    %3742 = vmatpush1.msra.mxu0 %v3741
    %3743 = vmatprep.subr.mxu0 0.0
    %v3744 = vand.u32 %v3643, 4294901760
    %3745 = vmatpush1.msra.mxu0 %v3744
    %3746 = vmatprep.subr.mxu0 0.0
    %v3747 = vand.u32 %v3644, 4294901760
    %3748 = vmatpush1.msra.mxu0 %v3747
    %3749 = vmatprep.subr.mxu0 0.0
    %v3750 = vand.u32 %v3645, 4294901760
    %3751 = vmatpush1.msra.mxu0 %v3750
    %3752 = vmatprep.subr.mxu0 0.0
    %v3753 = vand.u32 %v3646, 4294901760
    %3754 = vmatpush1.msra.mxu0 %v3753
    %3755 = vmatprep.subr.mxu0 0.0
    %v3756 = vand.u32 %v3647, 4294901760
    %3757 = vmatpush1.msra.mxu0 %v3756
    %3758 = vmatprep.subr.mxu0 0.0
    %v3759 = vand.u32 %v3648, 4294901760
    %3760 = vmatpush1.msra.mxu0 %v3759
    %3761 = vmatprep.subr.mxu0 0.0
    %v3762 = vand.u32 %v3649, 4294901760
    %3763 = vmatpush1.msra.mxu0 %v3762
    %3764 = vmatprep.subr.mxu0 0.0
    %v3765 = vand.u32 %v3650, 4294901760
    %3766 = vmatpush1.msra.mxu0 %v3765
    %3767 = vmatprep.subr.mxu0 0.0
    %v3768 = vand.u32 %v3651, 4294901760
    %3769 = vmatpush1.msra.mxu0 %v3768
    %3770 = vmatprep.subr.mxu0 0.0
    %v3771 = vand.u32 %v3652, 4294901760
    %3772 = vmatpush1.msra.mxu0 %v3771
    %3773 = vmatprep.subr.mxu0 0.0
    %v3774 = vand.u32 %v3653, 4294901760
    %3775 = vmatpush1.msra.mxu0 %v3774
    %3776 = vmatprep.subr.mxu0 0.0
    %v3777 = vand.u32 %v3654, 4294901760
    %3778 = vmatpush1.msra.mxu0 %v3777
    %3779 = vmatprep.subr.mxu0 0.0
    %v3780 = vand.u32 %v3655, 4294901760
    %3781 = vmatpush1.msra.mxu0 %v3780
    %3782 = vmatprep.subr.mxu0 0.0
    %v3783 = vand.u32 %v3656, 4294901760
    %3784 = vmatpush1.msra.mxu0 %v3783
    %v3785 = vand.u32 %v106, 4294901760
    %v3786 = vsub.f32 %v106, %v3785
    %v3787 = vand.u32 %v3786, 4294901760
    %v3788 = vsub.f32 %v3786, %v3787
    %v3789 = vand.u32 %v3788, 4294901760
    %3790 = vmatprep.mubr.f32.mxu0 %v3789
    %v3791 = vand.u32 %v38, 4294901760
    %v3792 = vsub.f32 %v38, %v3791
    %v3793 = vand.u32 %v3792, 4294901760
    %v3794 = vsub.f32 %v3792, %v3793
    %v3795 = vand.u32 %v3794, 4294901760
    %3796 = vmatmul.mubr.f32.gmra.mrb[0].mxu0 %v3795
    %v3797 = vpop.f32.mrb[0].mxu0
    %v3798 = vadd.f32 0.0, %v3797
    %v3799 = vpop.f32.mrb[0].mxu0
    %3800 = vdwg.mxu0
    %3801 = vmatprep.subr.mxu0 0.0
    %v3802 = vand.u32 %v3625, 4294901760
    %v3803 = vsub.f32 %v3625, %v3802
    %v3804 = vand.u32 %v3803, 4294901760
    %v3805 = vsub.f32 %v3803, %v3804
    %v3806 = vand.u32 %v3805, 4294901760
    %3807 = vmatpush1.msra.mxu0 %v3806
    %3808 = vmatprep.subr.mxu0 0.0
    %v3809 = vand.u32 %v3626, 4294901760
    %v3810 = vsub.f32 %v3626, %v3809
    %v3811 = vand.u32 %v3810, 4294901760
    %v3812 = vsub.f32 %v3810, %v3811
    %v3813 = vand.u32 %v3812, 4294901760
    %3814 = vmatpush1.msra.mxu0 %v3813
    %3815 = vmatprep.subr.mxu0 0.0
    %v3816 = vand.u32 %v3627, 4294901760
    %v3817 = vsub.f32 %v3627, %v3816
    %v3818 = vand.u32 %v3817, 4294901760
    %v3819 = vsub.f32 %v3817, %v3818
    %v3820 = vand.u32 %v3819, 4294901760
    %3821 = vmatpush1.msra.mxu0 %v3820
    %3822 = vmatprep.subr.mxu0 0.0
    %v3823 = vand.u32 %v3628, 4294901760
    %v3824 = vsub.f32 %v3628, %v3823
    %v3825 = vand.u32 %v3824, 4294901760
    %v3826 = vsub.f32 %v3824, %v3825
    %v3827 = vand.u32 %v3826, 4294901760
    %3828 = vmatpush1.msra.mxu0 %v3827
    %3829 = vmatprep.subr.mxu0 0.0
    %v3830 = vand.u32 %v3629, 4294901760
    %v3831 = vsub.f32 %v3629, %v3830
    %v3832 = vand.u32 %v3831, 4294901760
    %v3833 = vsub.f32 %v3831, %v3832
    %v3834 = vand.u32 %v3833, 4294901760
    %3835 = vmatpush1.msra.mxu0 %v3834
    %3836 = vmatprep.subr.mxu0 0.0
    %v3837 = vand.u32 %v3630, 4294901760
    %v3838 = vsub.f32 %v3630, %v3837
    %v3839 = vand.u32 %v3838, 4294901760
    %v3840 = vsub.f32 %v3838, %v3839
    %v3841 = vand.u32 %v3840, 4294901760
    %3842 = vmatpush1.msra.mxu0 %v3841
    %3843 = vmatprep.subr.mxu0 0.0
    %v3844 = vand.u32 %v3631, 4294901760
    %v3845 = vsub.f32 %v3631, %v3844
    %v3846 = vand.u32 %v3845, 4294901760
    %v3847 = vsub.f32 %v3845, %v3846
    %v3848 = vand.u32 %v3847, 4294901760
    %3849 = vmatpush1.msra.mxu0 %v3848
    %3850 = vmatprep.subr.mxu0 0.0
    %v3851 = vand.u32 %v3632, 4294901760
    %v3852 = vsub.f32 %v3632, %v3851
    %v3853 = vand.u32 %v3852, 4294901760
    %v3854 = vsub.f32 %v3852, %v3853
    %v3855 = vand.u32 %v3854, 4294901760
    %3856 = vmatpush1.msra.mxu0 %v3855
    %3857 = vmatprep.subr.mxu0 0.0
    %v3858 = vand.u32 %v3633, 4294901760
    %v3859 = vsub.f32 %v3633, %v3858
    %v3860 = vand.u32 %v3859, 4294901760
    %v3861 = vsub.f32 %v3859, %v3860
    %v3862 = vand.u32 %v3861, 4294901760
    %3863 = vmatpush1.msra.mxu0 %v3862
    %3864 = vmatprep.subr.mxu0 0.0
    %v3865 = vand.u32 %v3634, 4294901760
    %v3866 = vsub.f32 %v3634, %v3865
    %v3867 = vand.u32 %v3866, 4294901760
    %v3868 = vsub.f32 %v3866, %v3867
    %v3869 = vand.u32 %v3868, 4294901760
    %3870 = vmatpush1.msra.mxu0 %v3869
    %3871 = vmatprep.subr.mxu0 0.0
    %v3872 = vand.u32 %v3635, 4294901760
    %v3873 = vsub.f32 %v3635, %v3872
    %v3874 = vand.u32 %v3873, 4294901760
    %v3875 = vsub.f32 %v3873, %v3874
    %v3876 = vand.u32 %v3875, 4294901760
    %3877 = vmatpush1.msra.mxu0 %v3876
    %3878 = vmatprep.subr.mxu0 0.0
    %v3879 = vand.u32 %v3636, 4294901760
    %v3880 = vsub.f32 %v3636, %v3879
    %v3881 = vand.u32 %v3880, 4294901760
    %v3882 = vsub.f32 %v3880, %v3881
    %v3883 = vand.u32 %v3882, 4294901760
    %3884 = vmatpush1.msra.mxu0 %v3883
    %3885 = vmatprep.subr.mxu0 0.0
    %v3886 = vand.u32 %v3637, 4294901760
    %v3887 = vsub.f32 %v3637, %v3886
    %v3888 = vand.u32 %v3887, 4294901760
    %v3889 = vsub.f32 %v3887, %v3888
    %v3890 = vand.u32 %v3889, 4294901760
    %3891 = vmatpush1.msra.mxu0 %v3890
    %3892 = vmatprep.subr.mxu0 0.0
    %v3893 = vand.u32 %v3638, 4294901760
    %v3894 = vsub.f32 %v3638, %v3893
    %v3895 = vand.u32 %v3894, 4294901760
    %v3896 = vsub.f32 %v3894, %v3895
    %v3897 = vand.u32 %v3896, 4294901760
    %3898 = vmatpush1.msra.mxu0 %v3897
    %3899 = vmatprep.subr.mxu0 0.0
    %v3900 = vand.u32 %v3639, 4294901760
    %v3901 = vsub.f32 %v3639, %v3900
    %v3902 = vand.u32 %v3901, 4294901760
    %v3903 = vsub.f32 %v3901, %v3902
    %v3904 = vand.u32 %v3903, 4294901760
    %3905 = vmatpush1.msra.mxu0 %v3904
    %3906 = vmatprep.subr.mxu0 0.0
    %v3907 = vand.u32 %v3640, 4294901760
    %v3908 = vsub.f32 %v3640, %v3907
    %v3909 = vand.u32 %v3908, 4294901760
    %v3910 = vsub.f32 %v3908, %v3909
    %v3911 = vand.u32 %v3910, 4294901760
    %3912 = vmatpush1.msra.mxu0 %v3911
    %3913 = vmatprep.subr.mxu0 0.0
    %v3914 = vand.u32 %v3641, 4294901760
    %v3915 = vsub.f32 %v3641, %v3914
    %v3916 = vand.u32 %v3915, 4294901760
    %v3917 = vsub.f32 %v3915, %v3916
    %v3918 = vand.u32 %v3917, 4294901760
    %3919 = vmatpush1.msra.mxu0 %v3918
    %3920 = vmatprep.subr.mxu0 0.0
    %v3921 = vand.u32 %v3642, 4294901760
    %v3922 = vsub.f32 %v3642, %v3921
    %v3923 = vand.u32 %v3922, 4294901760
    %v3924 = vsub.f32 %v3922, %v3923
    %v3925 = vand.u32 %v3924, 4294901760
    %3926 = vmatpush1.msra.mxu0 %v3925
    %3927 = vmatprep.subr.mxu0 0.0
    %v3928 = vand.u32 %v3643, 4294901760
    %v3929 = vsub.f32 %v3643, %v3928
    %v3930 = vand.u32 %v3929, 4294901760
    %v3931 = vsub.f32 %v3929, %v3930
    %v3932 = vand.u32 %v3931, 4294901760
    %3933 = vmatpush1.msra.mxu0 %v3932
    %3934 = vmatprep.subr.mxu0 0.0
    %v3935 = vand.u32 %v3644, 4294901760
    %v3936 = vsub.f32 %v3644, %v3935
    %v3937 = vand.u32 %v3936, 4294901760
    %v3938 = vsub.f32 %v3936, %v3937
    %v3939 = vand.u32 %v3938, 4294901760
    %3940 = vmatpush1.msra.mxu0 %v3939
    %3941 = vmatprep.subr.mxu0 0.0
    %v3942 = vand.u32 %v3645, 4294901760
    %v3943 = vsub.f32 %v3645, %v3942
    %v3944 = vand.u32 %v3943, 4294901760
    %v3945 = vsub.f32 %v3943, %v3944
    %v3946 = vand.u32 %v3945, 4294901760
    %3947 = vmatpush1.msra.mxu0 %v3946
    %3948 = vmatprep.subr.mxu0 0.0
    %v3949 = vand.u32 %v3646, 4294901760
    %v3950 = vsub.f32 %v3646, %v3949
    %v3951 = vand.u32 %v3950, 4294901760
    %v3952 = vsub.f32 %v3950, %v3951
    %v3953 = vand.u32 %v3952, 4294901760
    %3954 = vmatpush1.msra.mxu0 %v3953
    %3955 = vmatprep.subr.mxu0 0.0
    %v3956 = vand.u32 %v3647, 4294901760
    %v3957 = vsub.f32 %v3647, %v3956
    %v3958 = vand.u32 %v3957, 4294901760
    %v3959 = vsub.f32 %v3957, %v3958
    %v3960 = vand.u32 %v3959, 4294901760
    %3961 = vmatpush1.msra.mxu0 %v3960
    %3962 = vmatprep.subr.mxu0 0.0
    %v3963 = vand.u32 %v3648, 4294901760
    %v3964 = vsub.f32 %v3648, %v3963
    %v3965 = vand.u32 %v3964, 4294901760
    %v3966 = vsub.f32 %v3964, %v3965
    %v3967 = vand.u32 %v3966, 4294901760
    %3968 = vmatpush1.msra.mxu0 %v3967
    %3969 = vmatprep.subr.mxu0 0.0
    %v3970 = vand.u32 %v3649, 4294901760
    %v3971 = vsub.f32 %v3649, %v3970
    %v3972 = vand.u32 %v3971, 4294901760
    %v3973 = vsub.f32 %v3971, %v3972
    %v3974 = vand.u32 %v3973, 4294901760
    %3975 = vmatpush1.msra.mxu0 %v3974
    %3976 = vmatprep.subr.mxu0 0.0
    %v3977 = vand.u32 %v3650, 4294901760
    %v3978 = vsub.f32 %v3650, %v3977
    %v3979 = vand.u32 %v3978, 4294901760
    %v3980 = vsub.f32 %v3978, %v3979
    %v3981 = vand.u32 %v3980, 4294901760
    %3982 = vmatpush1.msra.mxu0 %v3981
    %3983 = vmatprep.subr.mxu0 0.0
    %v3984 = vand.u32 %v3651, 4294901760
    %v3985 = vsub.f32 %v3651, %v3984
    %v3986 = vand.u32 %v3985, 4294901760
    %v3987 = vsub.f32 %v3985, %v3986
    %v3988 = vand.u32 %v3987, 4294901760
    %3989 = vmatpush1.msra.mxu0 %v3988
    %3990 = vmatprep.subr.mxu0 0.0
    %v3991 = vand.u32 %v3652, 4294901760
    %v3992 = vsub.f32 %v3652, %v3991
    %v3993 = vand.u32 %v3992, 4294901760
    %v3994 = vsub.f32 %v3992, %v3993
    %v3995 = vand.u32 %v3994, 4294901760
    %3996 = vmatpush1.msra.mxu0 %v3995
    %3997 = vmatprep.subr.mxu0 0.0
    %v3998 = vand.u32 %v3653, 4294901760
    %v3999 = vsub.f32 %v3653, %v3998
    %v4000 = vand.u32 %v3999, 4294901760
    %v4001 = vsub.f32 %v3999, %v4000
    %v4002 = vand.u32 %v4001, 4294901760
    %4003 = vmatpush1.msra.mxu0 %v4002
    %4004 = vmatprep.subr.mxu0 0.0
    %v4005 = vand.u32 %v3654, 4294901760
    %v4006 = vsub.f32 %v3654, %v4005
    %v4007 = vand.u32 %v4006, 4294901760
    %v4008 = vsub.f32 %v4006, %v4007
    %v4009 = vand.u32 %v4008, 4294901760
    %4010 = vmatpush1.msra.mxu0 %v4009
    %4011 = vmatprep.subr.mxu0 0.0
    %v4012 = vand.u32 %v3655, 4294901760
    %v4013 = vsub.f32 %v3655, %v4012
    %v4014 = vand.u32 %v4013, 4294901760
    %v4015 = vsub.f32 %v4013, %v4014
    %v4016 = vand.u32 %v4015, 4294901760
    %4017 = vmatpush1.msra.mxu0 %v4016
    %4018 = vmatprep.subr.mxu0 0.0
    %v4019 = vand.u32 %v3656, 4294901760
    %v4020 = vsub.f32 %v3656, %v4019
    %v4021 = vand.u32 %v4020, 4294901760
    %v4022 = vsub.f32 %v4020, %v4021
    %v4023 = vand.u32 %v4022, 4294901760
    %4024 = vmatpush1.msra.mxu0 %v4023
    %v4025 = vand.u32 %v106, 4294901760
    %4026 = vmatprep.mubr.f32.mxu0 %v4025
    %v4027 = vand.u32 %v38, 4294901760
    %4028 = vmatmul.mubr.f32.gmra.mrb[0].mxu0 %v4027
    %v4029 = vpop.f32.mrb[0].mxu0
    %v4030 = vadd.f32 %v3798, %v4029
    %v4031 = vpop.f32.mrb[0].mxu0
    %4032 = vdwg.mxu0
    %4033 = vmatprep.subr.mxu0 0.0
    %v4034 = vand.u32 %v3625, 4294901760
    %v4035 = vsub.f32 %v3625, %v4034
    %4036 = vmatpush1.msra.mxu0 %v4035
    %4037 = vmatprep.subr.mxu0 0.0
    %v4038 = vand.u32 %v3626, 4294901760
    %v4039 = vsub.f32 %v3626, %v4038
    %4040 = vmatpush1.msra.mxu0 %v4039
    %4041 = vmatprep.subr.mxu0 0.0
    %v4042 = vand.u32 %v3627, 4294901760
    %v4043 = vsub.f32 %v3627, %v4042
    %4044 = vmatpush1.msra.mxu0 %v4043
    %4045 = vmatprep.subr.mxu0 0.0
    %v4046 = vand.u32 %v3628, 4294901760
    %v4047 = vsub.f32 %v3628, %v4046
    %4048 = vmatpush1.msra.mxu0 %v4047
    %4049 = vmatprep.subr.mxu0 0.0
    %v4050 = vand.u32 %v3629, 4294901760
    %v4051 = vsub.f32 %v3629, %v4050
    %4052 = vmatpush1.msra.mxu0 %v4051
    %4053 = vmatprep.subr.mxu0 0.0
    %v4054 = vand.u32 %v3630, 4294901760
    %v4055 = vsub.f32 %v3630, %v4054
    %4056 = vmatpush1.msra.mxu0 %v4055
    %4057 = vmatprep.subr.mxu0 0.0
    %v4058 = vand.u32 %v3631, 4294901760
    %v4059 = vsub.f32 %v3631, %v4058
    %4060 = vmatpush1.msra.mxu0 %v4059
    %4061 = vmatprep.subr.mxu0 0.0
    %v4062 = vand.u32 %v3632, 4294901760
    %v4063 = vsub.f32 %v3632, %v4062
    %4064 = vmatpush1.msra.mxu0 %v4063
    %4065 = vmatprep.subr.mxu0 0.0
    %v4066 = vand.u32 %v3633, 4294901760
    %v4067 = vsub.f32 %v3633, %v4066
    %4068 = vmatpush1.msra.mxu0 %v4067
    %4069 = vmatprep.subr.mxu0 0.0
    %v4070 = vand.u32 %v3634, 4294901760
    %v4071 = vsub.f32 %v3634, %v4070
    %4072 = vmatpush1.msra.mxu0 %v4071
    %4073 = vmatprep.subr.mxu0 0.0
    %v4074 = vand.u32 %v3635, 4294901760
    %v4075 = vsub.f32 %v3635, %v4074
    %4076 = vmatpush1.msra.mxu0 %v4075
    %4077 = vmatprep.subr.mxu0 0.0
    %v4078 = vand.u32 %v3636, 4294901760
    %v4079 = vsub.f32 %v3636, %v4078
    %4080 = vmatpush1.msra.mxu0 %v4079
    %4081 = vmatprep.subr.mxu0 0.0
    %v4082 = vand.u32 %v3637, 4294901760
    %v4083 = vsub.f32 %v3637, %v4082
    %4084 = vmatpush1.msra.mxu0 %v4083
    %4085 = vmatprep.subr.mxu0 0.0
    %v4086 = vand.u32 %v3638, 4294901760
    %v4087 = vsub.f32 %v3638, %v4086
    %4088 = vmatpush1.msra.mxu0 %v4087
    %4089 = vmatprep.subr.mxu0 0.0
    %v4090 = vand.u32 %v3639, 4294901760
    %v4091 = vsub.f32 %v3639, %v4090
    %4092 = vmatpush1.msra.mxu0 %v4091
    %4093 = vmatprep.subr.mxu0 0.0
    %v4094 = vand.u32 %v3640, 4294901760
    %v4095 = vsub.f32 %v3640, %v4094
    %4096 = vmatpush1.msra.mxu0 %v4095
    %4097 = vmatprep.subr.mxu0 0.0
    %v4098 = vand.u32 %v3641, 4294901760
    %v4099 = vsub.f32 %v3641, %v4098
    %4100 = vmatpush1.msra.mxu0 %v4099
    %4101 = vmatprep.subr.mxu0 0.0
    %v4102 = vand.u32 %v3642, 4294901760
    %v4103 = vsub.f32 %v3642, %v4102
    %4104 = vmatpush1.msra.mxu0 %v4103
    %4105 = vmatprep.subr.mxu0 0.0
    %v4106 = vand.u32 %v3643, 4294901760
    %v4107 = vsub.f32 %v3643, %v4106
    %4108 = vmatpush1.msra.mxu0 %v4107
    %4109 = vmatprep.subr.mxu0 0.0
    %v4110 = vand.u32 %v3644, 4294901760
    %v4111 = vsub.f32 %v3644, %v4110
    %4112 = vmatpush1.msra.mxu0 %v4111
    %4113 = vmatprep.subr.mxu0 0.0
    %v4114 = vand.u32 %v3645, 4294901760
    %v4115 = vsub.f32 %v3645, %v4114
    %4116 = vmatpush1.msra.mxu0 %v4115
    %4117 = vmatprep.subr.mxu0 0.0
    %v4118 = vand.u32 %v3646, 4294901760
    %v4119 = vsub.f32 %v3646, %v4118
    %4120 = vmatpush1.msra.mxu0 %v4119
    %4121 = vmatprep.subr.mxu0 0.0
    %v4122 = vand.u32 %v3647, 4294901760
    %v4123 = vsub.f32 %v3647, %v4122
    %4124 = vmatpush1.msra.mxu0 %v4123
    %4125 = vmatprep.subr.mxu0 0.0
    %v4126 = vand.u32 %v3648, 4294901760
    %v4127 = vsub.f32 %v3648, %v4126
    %4128 = vmatpush1.msra.mxu0 %v4127
    %4129 = vmatprep.subr.mxu0 0.0
    %v4130 = vand.u32 %v3649, 4294901760
    %v4131 = vsub.f32 %v3649, %v4130
    %4132 = vmatpush1.msra.mxu0 %v4131
    %4133 = vmatprep.subr.mxu0 0.0
    %v4134 = vand.u32 %v3650, 4294901760
    %v4135 = vsub.f32 %v3650, %v4134
    %4136 = vmatpush1.msra.mxu0 %v4135
    %4137 = vmatprep.subr.mxu0 0.0
    %v4138 = vand.u32 %v3651, 4294901760
    %v4139 = vsub.f32 %v3651, %v4138
    %4140 = vmatpush1.msra.mxu0 %v4139
    %4141 = vmatprep.subr.mxu0 0.0
    %v4142 = vand.u32 %v3652, 4294901760
    %v4143 = vsub.f32 %v3652, %v4142
    %4144 = vmatpush1.msra.mxu0 %v4143
    %4145 = vmatprep.subr.mxu0 0.0
    %v4146 = vand.u32 %v3653, 4294901760
    %v4147 = vsub.f32 %v3653, %v4146
    %4148 = vmatpush1.msra.mxu0 %v4147
    %4149 = vmatprep.subr.mxu0 0.0
    %v4150 = vand.u32 %v3654, 4294901760
    %v4151 = vsub.f32 %v3654, %v4150
    %4152 = vmatpush1.msra.mxu0 %v4151
    %4153 = vmatprep.subr.mxu0 0.0
    %v4154 = vand.u32 %v3655, 4294901760
    %v4155 = vsub.f32 %v3655, %v4154
    %4156 = vmatpush1.msra.mxu0 %v4155
    %4157 = vmatprep.subr.mxu0 0.0
    %v4158 = vand.u32 %v3656, 4294901760
    %v4159 = vsub.f32 %v3656, %v4158
    %4160 = vmatpush1.msra.mxu0 %v4159
    %v4161 = vand.u32 %v106, 4294901760
    %v4162 = vsub.f32 %v106, %v4161
    %4163 = vmatprep.mubr.f32.mxu0 %v4162
    %v4164 = vand.u32 %v38, 4294901760
    %v4165 = vsub.f32 %v38, %v4164
    %4166 = vmatmul.mubr.f32.gmra.mrb[0].mxu0 %v4165
    %v4167 = vpop.f32.mrb[0].mxu0
    %v4168 = vadd.f32 %v4030, %v4167
    %v4169 = vpop.f32.mrb[0].mxu0
    %4170 = vdwg.mxu0
    %4171 = vmatprep.subr.mxu0 0.0
    %v4172 = vand.u32 %v3625, 4294901760
    %4173 = vmatpush1.msra.mxu0 %v4172
    %4174 = vmatprep.subr.mxu0 0.0
    %v4175 = vand.u32 %v3626, 4294901760
    %4176 = vmatpush1.msra.mxu0 %v4175
    %4177 = vmatprep.subr.mxu0 0.0
    %v4178 = vand.u32 %v3627, 4294901760
    %4179 = vmatpush1.msra.mxu0 %v4178
    %4180 = vmatprep.subr.mxu0 0.0
    %v4181 = vand.u32 %v3628, 4294901760
    %4182 = vmatpush1.msra.mxu0 %v4181
    %4183 = vmatprep.subr.mxu0 0.0
    %v4184 = vand.u32 %v3629, 4294901760
    %4185 = vmatpush1.msra.mxu0 %v4184
    %4186 = vmatprep.subr.mxu0 0.0
    %v4187 = vand.u32 %v3630, 4294901760
    %4188 = vmatpush1.msra.mxu0 %v4187
    %4189 = vmatprep.subr.mxu0 0.0
    %v4190 = vand.u32 %v3631, 4294901760
    %4191 = vmatpush1.msra.mxu0 %v4190
    %4192 = vmatprep.subr.mxu0 0.0
    %v4193 = vand.u32 %v3632, 4294901760
    %4194 = vmatpush1.msra.mxu0 %v4193
    %4195 = vmatprep.subr.mxu0 0.0
    %v4196 = vand.u32 %v3633, 4294901760
    %4197 = vmatpush1.msra.mxu0 %v4196
    %4198 = vmatprep.subr.mxu0 0.0
    %v4199 = vand.u32 %v3634, 4294901760
    %4200 = vmatpush1.msra.mxu0 %v4199
    %4201 = vmatprep.subr.mxu0 0.0
    %v4202 = vand.u32 %v3635, 4294901760
    %4203 = vmatpush1.msra.mxu0 %v4202
    %4204 = vmatprep.subr.mxu0 0.0
    %v4205 = vand.u32 %v3636, 4294901760
    %4206 = vmatpush1.msra.mxu0 %v4205
    %4207 = vmatprep.subr.mxu0 0.0
    %v4208 = vand.u32 %v3637, 4294901760
    %4209 = vmatpush1.msra.mxu0 %v4208
    %4210 = vmatprep.subr.mxu0 0.0
    %v4211 = vand.u32 %v3638, 4294901760
    %4212 = vmatpush1.msra.mxu0 %v4211
    %4213 = vmatprep.subr.mxu0 0.0
    %v4214 = vand.u32 %v3639, 4294901760
    %4215 = vmatpush1.msra.mxu0 %v4214
    %4216 = vmatprep.subr.mxu0 0.0
    %v4217 = vand.u32 %v3640, 4294901760
    %4218 = vmatpush1.msra.mxu0 %v4217
    %4219 = vmatprep.subr.mxu0 0.0
    %v4220 = vand.u32 %v3641, 4294901760
    %4221 = vmatpush1.msra.mxu0 %v4220
    %4222 = vmatprep.subr.mxu0 0.0
    %v4223 = vand.u32 %v3642, 4294901760
    %4224 = vmatpush1.msra.mxu0 %v4223
    %4225 = vmatprep.subr.mxu0 0.0
    %v4226 = vand.u32 %v3643, 4294901760
    %4227 = vmatpush1.msra.mxu0 %v4226
    %4228 = vmatprep.subr.mxu0 0.0
    %v4229 = vand.u32 %v3644, 4294901760
    %4230 = vmatpush1.msra.mxu0 %v4229
    %4231 = vmatprep.subr.mxu0 0.0
    %v4232 = vand.u32 %v3645, 4294901760
    %4233 = vmatpush1.msra.mxu0 %v4232
    %4234 = vmatprep.subr.mxu0 0.0
    %v4235 = vand.u32 %v3646, 4294901760
    %4236 = vmatpush1.msra.mxu0 %v4235
    %4237 = vmatprep.subr.mxu0 0.0
    %v4238 = vand.u32 %v3647, 4294901760
    %4239 = vmatpush1.msra.mxu0 %v4238
    %4240 = vmatprep.subr.mxu0 0.0
    %v4241 = vand.u32 %v3648, 4294901760
    %4242 = vmatpush1.msra.mxu0 %v4241
    %4243 = vmatprep.subr.mxu0 0.0
    %v4244 = vand.u32 %v3649, 4294901760
    %4245 = vmatpush1.msra.mxu0 %v4244
    %4246 = vmatprep.subr.mxu0 0.0
    %v4247 = vand.u32 %v3650, 4294901760
    %4248 = vmatpush1.msra.mxu0 %v4247
    %4249 = vmatprep.subr.mxu0 0.0
    %v4250 = vand.u32 %v3651, 4294901760
    %4251 = vmatpush1.msra.mxu0 %v4250
    %4252 = vmatprep.subr.mxu0 0.0
    %v4253 = vand.u32 %v3652, 4294901760
    %4254 = vmatpush1.msra.mxu0 %v4253
    %4255 = vmatprep.subr.mxu0 0.0
    %v4256 = vand.u32 %v3653, 4294901760
    %4257 = vmatpush1.msra.mxu0 %v4256
    %4258 = vmatprep.subr.mxu0 0.0
    %v4259 = vand.u32 %v3654, 4294901760
    %4260 = vmatpush1.msra.mxu0 %v4259
    %4261 = vmatprep.subr.mxu0 0.0
    %v4262 = vand.u32 %v3655, 4294901760
    %4263 = vmatpush1.msra.mxu0 %v4262
    %4264 = vmatprep.subr.mxu0 0.0
    %v4265 = vand.u32 %v3656, 4294901760
    %4266 = vmatpush1.msra.mxu0 %v4265
    %v4267 = vand.u32 %v106, 4294901760
    %v4268 = vsub.f32 %v106, %v4267
    %v4269 = vand.u32 %v4268, 4294901760
    %4270 = vmatprep.mubr.f32.mxu0 %v4269
    %v4271 = vand.u32 %v38, 4294901760
    %v4272 = vsub.f32 %v38, %v4271
    %v4273 = vand.u32 %v4272, 4294901760
    %4274 = vmatmul.mubr.f32.gmra.mrb[0].mxu0 %v4273
    %v4275 = vpop.f32.mrb[0].mxu0
    %v4276 = vadd.f32 %v4168, %v4275
    %v4277 = vpop.f32.mrb[0].mxu0
    %4278 = vdwg.mxu0
    %4279 = vmatprep.subr.mxu0 0.0
    %v4280 = vand.u32 %v3625, 4294901760
    %v4281 = vsub.f32 %v3625, %v4280
    %v4282 = vand.u32 %v4281, 4294901760
    %4283 = vmatpush1.msra.mxu0 %v4282
    %4284 = vmatprep.subr.mxu0 0.0
    %v4285 = vand.u32 %v3626, 4294901760
    %v4286 = vsub.f32 %v3626, %v4285
    %v4287 = vand.u32 %v4286, 4294901760
    %4288 = vmatpush1.msra.mxu0 %v4287
    %4289 = vmatprep.subr.mxu0 0.0
    %v4290 = vand.u32 %v3627, 4294901760
    %v4291 = vsub.f32 %v3627, %v4290
    %v4292 = vand.u32 %v4291, 4294901760
    %4293 = vmatpush1.msra.mxu0 %v4292
    %4294 = vmatprep.subr.mxu0 0.0
    %v4295 = vand.u32 %v3628, 4294901760
    %v4296 = vsub.f32 %v3628, %v4295
    %v4297 = vand.u32 %v4296, 4294901760
    %4298 = vmatpush1.msra.mxu0 %v4297
    %4299 = vmatprep.subr.mxu0 0.0
    %v4300 = vand.u32 %v3629, 4294901760
    %v4301 = vsub.f32 %v3629, %v4300
    %v4302 = vand.u32 %v4301, 4294901760
    %4303 = vmatpush1.msra.mxu0 %v4302
    %4304 = vmatprep.subr.mxu0 0.0
    %v4305 = vand.u32 %v3630, 4294901760
    %v4306 = vsub.f32 %v3630, %v4305
    %v4307 = vand.u32 %v4306, 4294901760
    %4308 = vmatpush1.msra.mxu0 %v4307
    %4309 = vmatprep.subr.mxu0 0.0
    %v4310 = vand.u32 %v3631, 4294901760
    %v4311 = vsub.f32 %v3631, %v4310
    %v4312 = vand.u32 %v4311, 4294901760
    %4313 = vmatpush1.msra.mxu0 %v4312
    %4314 = vmatprep.subr.mxu0 0.0
    %v4315 = vand.u32 %v3632, 4294901760
    %v4316 = vsub.f32 %v3632, %v4315
    %v4317 = vand.u32 %v4316, 4294901760
    %4318 = vmatpush1.msra.mxu0 %v4317
    %4319 = vmatprep.subr.mxu0 0.0
    %v4320 = vand.u32 %v3633, 4294901760
    %v4321 = vsub.f32 %v3633, %v4320
    %v4322 = vand.u32 %v4321, 4294901760
    %4323 = vmatpush1.msra.mxu0 %v4322
    %4324 = vmatprep.subr.mxu0 0.0
    %v4325 = vand.u32 %v3634, 4294901760
    %v4326 = vsub.f32 %v3634, %v4325
    %v4327 = vand.u32 %v4326, 4294901760
    %4328 = vmatpush1.msra.mxu0 %v4327
    %4329 = vmatprep.subr.mxu0 0.0
    %v4330 = vand.u32 %v3635, 4294901760
    %v4331 = vsub.f32 %v3635, %v4330
    %v4332 = vand.u32 %v4331, 4294901760
    %4333 = vmatpush1.msra.mxu0 %v4332
    %4334 = vmatprep.subr.mxu0 0.0
    %v4335 = vand.u32 %v3636, 4294901760
    %v4336 = vsub.f32 %v3636, %v4335
    %v4337 = vand.u32 %v4336, 4294901760
    %4338 = vmatpush1.msra.mxu0 %v4337
    %4339 = vmatprep.subr.mxu0 0.0
    %v4340 = vand.u32 %v3637, 4294901760
    %v4341 = vsub.f32 %v3637, %v4340
    %v4342 = vand.u32 %v4341, 4294901760
    %4343 = vmatpush1.msra.mxu0 %v4342
    %4344 = vmatprep.subr.mxu0 0.0
    %v4345 = vand.u32 %v3638, 4294901760
    %v4346 = vsub.f32 %v3638, %v4345
    %v4347 = vand.u32 %v4346, 4294901760
    %4348 = vmatpush1.msra.mxu0 %v4347
    %4349 = vmatprep.subr.mxu0 0.0
    %v4350 = vand.u32 %v3639, 4294901760
    %v4351 = vsub.f32 %v3639, %v4350
    %v4352 = vand.u32 %v4351, 4294901760
    %4353 = vmatpush1.msra.mxu0 %v4352
    %4354 = vmatprep.subr.mxu0 0.0
    %v4355 = vand.u32 %v3640, 4294901760
    %v4356 = vsub.f32 %v3640, %v4355
    %v4357 = vand.u32 %v4356, 4294901760
    %4358 = vmatpush1.msra.mxu0 %v4357
    %4359 = vmatprep.subr.mxu0 0.0
    %v4360 = vand.u32 %v3641, 4294901760
    %v4361 = vsub.f32 %v3641, %v4360
    %v4362 = vand.u32 %v4361, 4294901760
    %4363 = vmatpush1.msra.mxu0 %v4362
    %4364 = vmatprep.subr.mxu0 0.0
    %v4365 = vand.u32 %v3642, 4294901760
    %v4366 = vsub.f32 %v3642, %v4365
    %v4367 = vand.u32 %v4366, 4294901760
    %4368 = vmatpush1.msra.mxu0 %v4367
    %4369 = vmatprep.subr.mxu0 0.0
    %v4370 = vand.u32 %v3643, 4294901760
    %v4371 = vsub.f32 %v3643, %v4370
    %v4372 = vand.u32 %v4371, 4294901760
    %4373 = vmatpush1.msra.mxu0 %v4372
    %4374 = vmatprep.subr.mxu0 0.0
    %v4375 = vand.u32 %v3644, 4294901760
    %v4376 = vsub.f32 %v3644, %v4375
    %v4377 = vand.u32 %v4376, 4294901760
    %4378 = vmatpush1.msra.mxu0 %v4377
    %4379 = vmatprep.subr.mxu0 0.0
    %v4380 = vand.u32 %v3645, 4294901760
    %v4381 = vsub.f32 %v3645, %v4380
    %v4382 = vand.u32 %v4381, 4294901760
    %4383 = vmatpush1.msra.mxu0 %v4382
    %4384 = vmatprep.subr.mxu0 0.0
    %v4385 = vand.u32 %v3646, 4294901760
    %v4386 = vsub.f32 %v3646, %v4385
    %v4387 = vand.u32 %v4386, 4294901760
    %4388 = vmatpush1.msra.mxu0 %v4387
    %4389 = vmatprep.subr.mxu0 0.0
    %v4390 = vand.u32 %v3647, 4294901760
    %v4391 = vsub.f32 %v3647, %v4390
    %v4392 = vand.u32 %v4391, 4294901760
    %4393 = vmatpush1.msra.mxu0 %v4392
    %4394 = vmatprep.subr.mxu0 0.0
    %v4395 = vand.u32 %v3648, 4294901760
    %v4396 = vsub.f32 %v3648, %v4395
    %v4397 = vand.u32 %v4396, 4294901760
    %4398 = vmatpush1.msra.mxu0 %v4397
    %4399 = vmatprep.subr.mxu0 0.0
    %v4400 = vand.u32 %v3649, 4294901760
    %v4401 = vsub.f32 %v3649, %v4400
    %v4402 = vand.u32 %v4401, 4294901760
    %4403 = vmatpush1.msra.mxu0 %v4402
    %4404 = vmatprep.subr.mxu0 0.0
    %v4405 = vand.u32 %v3650, 4294901760
    %v4406 = vsub.f32 %v3650, %v4405
    %v4407 = vand.u32 %v4406, 4294901760
    %4408 = vmatpush1.msra.mxu0 %v4407
    %4409 = vmatprep.subr.mxu0 0.0
    %v4410 = vand.u32 %v3651, 4294901760
    %v4411 = vsub.f32 %v3651, %v4410
    %v4412 = vand.u32 %v4411, 4294901760
    %4413 = vmatpush1.msra.mxu0 %v4412
    %4414 = vmatprep.subr.mxu0 0.0
    %v4415 = vand.u32 %v3652, 4294901760
    %v4416 = vsub.f32 %v3652, %v4415
    %v4417 = vand.u32 %v4416, 4294901760
    %4418 = vmatpush1.msra.mxu0 %v4417
    %4419 = vmatprep.subr.mxu0 0.0
    %v4420 = vand.u32 %v3653, 4294901760
    %v4421 = vsub.f32 %v3653, %v4420
    %v4422 = vand.u32 %v4421, 4294901760
    %4423 = vmatpush1.msra.mxu0 %v4422
    %4424 = vmatprep.subr.mxu0 0.0
    %v4425 = vand.u32 %v3654, 4294901760
    %v4426 = vsub.f32 %v3654, %v4425
    %v4427 = vand.u32 %v4426, 4294901760
    %4428 = vmatpush1.msra.mxu0 %v4427
    %4429 = vmatprep.subr.mxu0 0.0
    %v4430 = vand.u32 %v3655, 4294901760
    %v4431 = vsub.f32 %v3655, %v4430
    %v4432 = vand.u32 %v4431, 4294901760
    %4433 = vmatpush1.msra.mxu0 %v4432
    %4434 = vmatprep.subr.mxu0 0.0
    %v4435 = vand.u32 %v3656, 4294901760
    %v4436 = vsub.f32 %v3656, %v4435
    %v4437 = vand.u32 %v4436, 4294901760
    %4438 = vmatpush1.msra.mxu0 %v4437
    %v4439 = vand.u32 %v106, 4294901760
    %4440 = vmatprep.mubr.f32.mxu0 %v4439
    %v4441 = vand.u32 %v38, 4294901760
    %4442 = vmatmul.mubr.f32.gmra.mrb[0].mxu0 %v4441
    %v4443 = vpop.f32.mrb[0].mxu0
    %v4444 = vadd.f32 %v4276, %v4443
    %v4445 = vpop.f32.mrb[0].mxu0
    %4446 = vdwg.mxu0
    %4447 = vmatprep.subr.mxu0 0.0
    %v4448 = vand.u32 %v3625, 4294901760
    %4449 = vmatpush1.msra.mxu0 %v4448
    %4450 = vmatprep.subr.mxu0 0.0
    %v4451 = vand.u32 %v3626, 4294901760
    %4452 = vmatpush1.msra.mxu0 %v4451
    %4453 = vmatprep.subr.mxu0 0.0
    %v4454 = vand.u32 %v3627, 4294901760
    %4455 = vmatpush1.msra.mxu0 %v4454
    %4456 = vmatprep.subr.mxu0 0.0
    %v4457 = vand.u32 %v3628, 4294901760
    %4458 = vmatpush1.msra.mxu0 %v4457
    %4459 = vmatprep.subr.mxu0 0.0
    %v4460 = vand.u32 %v3629, 4294901760
    %4461 = vmatpush1.msra.mxu0 %v4460
    %4462 = vmatprep.subr.mxu0 0.0
    %v4463 = vand.u32 %v3630, 4294901760
    %4464 = vmatpush1.msra.mxu0 %v4463
    %4465 = vmatprep.subr.mxu0 0.0
    %v4466 = vand.u32 %v3631, 4294901760
    %4467 = vmatpush1.msra.mxu0 %v4466
    %4468 = vmatprep.subr.mxu0 0.0
    %v4469 = vand.u32 %v3632, 4294901760
    %4470 = vmatpush1.msra.mxu0 %v4469
    %4471 = vmatprep.subr.mxu0 0.0
    %v4472 = vand.u32 %v3633, 4294901760
    %4473 = vmatpush1.msra.mxu0 %v4472
    %4474 = vmatprep.subr.mxu0 0.0
    %v4475 = vand.u32 %v3634, 4294901760
    %4476 = vmatpush1.msra.mxu0 %v4475
    %4477 = vmatprep.subr.mxu0 0.0
    %v4478 = vand.u32 %v3635, 4294901760
    %4479 = vmatpush1.msra.mxu0 %v4478
    %4480 = vmatprep.subr.mxu0 0.0
    %v4481 = vand.u32 %v3636, 4294901760
    %4482 = vmatpush1.msra.mxu0 %v4481
    %4483 = vmatprep.subr.mxu0 0.0
    %v4484 = vand.u32 %v3637, 4294901760
    %4485 = vmatpush1.msra.mxu0 %v4484
    %4486 = vmatprep.subr.mxu0 0.0
    %v4487 = vand.u32 %v3638, 4294901760
    %4488 = vmatpush1.msra.mxu0 %v4487
    %4489 = vmatprep.subr.mxu0 0.0
    %v4490 = vand.u32 %v3639, 4294901760
    %4491 = vmatpush1.msra.mxu0 %v4490
    %4492 = vmatprep.subr.mxu0 0.0
    %v4493 = vand.u32 %v3640, 4294901760
    %4494 = vmatpush1.msra.mxu0 %v4493
    %4495 = vmatprep.subr.mxu0 0.0
    %v4496 = vand.u32 %v3641, 4294901760
    %4497 = vmatpush1.msra.mxu0 %v4496
    %4498 = vmatprep.subr.mxu0 0.0
    %v4499 = vand.u32 %v3642, 4294901760
    %4500 = vmatpush1.msra.mxu0 %v4499
    %4501 = vmatprep.subr.mxu0 0.0
    %v4502 = vand.u32 %v3643, 4294901760
    %4503 = vmatpush1.msra.mxu0 %v4502
    %4504 = vmatprep.subr.mxu0 0.0
    %v4505 = vand.u32 %v3644, 4294901760
    %4506 = vmatpush1.msra.mxu0 %v4505
    %4507 = vmatprep.subr.mxu0 0.0
    %v4508 = vand.u32 %v3645, 4294901760
    %4509 = vmatpush1.msra.mxu0 %v4508
    %4510 = vmatprep.subr.mxu0 0.0
    %v4511 = vand.u32 %v3646, 4294901760
    %4512 = vmatpush1.msra.mxu0 %v4511
    %4513 = vmatprep.subr.mxu0 0.0
    %v4514 = vand.u32 %v3647, 4294901760
    %4515 = vmatpush1.msra.mxu0 %v4514
    %4516 = vmatprep.subr.mxu0 0.0
    %v4517 = vand.u32 %v3648, 4294901760
    %4518 = vmatpush1.msra.mxu0 %v4517
    %4519 = vmatprep.subr.mxu0 0.0
    %v4520 = vand.u32 %v3649, 4294901760
    %4521 = vmatpush1.msra.mxu0 %v4520
    %4522 = vmatprep.subr.mxu0 0.0
    %v4523 = vand.u32 %v3650, 4294901760
    %4524 = vmatpush1.msra.mxu0 %v4523
    %4525 = vmatprep.subr.mxu0 0.0
    %v4526 = vand.u32 %v3651, 4294901760
    %4527 = vmatpush1.msra.mxu0 %v4526
    %4528 = vmatprep.subr.mxu0 0.0
    %v4529 = vand.u32 %v3652, 4294901760
    %4530 = vmatpush1.msra.mxu0 %v4529
    %4531 = vmatprep.subr.mxu0 0.0
    %v4532 = vand.u32 %v3653, 4294901760
    %4533 = vmatpush1.msra.mxu0 %v4532
    %4534 = vmatprep.subr.mxu0 0.0
    %v4535 = vand.u32 %v3654, 4294901760
    %4536 = vmatpush1.msra.mxu0 %v4535
    %4537 = vmatprep.subr.mxu0 0.0
    %v4538 = vand.u32 %v3655, 4294901760
    %4539 = vmatpush1.msra.mxu0 %v4538
    %4540 = vmatprep.subr.mxu0 0.0
    %v4541 = vand.u32 %v3656, 4294901760
    %4542 = vmatpush1.msra.mxu0 %v4541
    %v4543 = vand.u32 %v106, 4294901760
    %4544 = vmatprep.mubr.f32.mxu0 %v4543
    %v4545 = vand.u32 %v38, 4294901760
    %4546 = vmatmul.mubr.f32.gmra.mrb[0].mxu0 %v4545
    %v4547 = vpop.f32.mrb[0].mxu0
    %v4548 = vadd.f32 %v4444, %v4547
    %v4549 = vpop.f32.mrb[0].mxu0
    %4550 = vdwg.mxu0
    %4551 = vmatprep.subr.mxu0 0.0
    %v4552 = vand.u32 %v3657, 4294901760
    %4553 = vmatpush1.msra.mxu0 %v4552
    %4554 = vmatprep.subr.mxu0 0.0
    %v4555 = vand.u32 %v3658, 4294901760
    %4556 = vmatpush1.msra.mxu0 %v4555
    %4557 = vmatprep.subr.mxu0 0.0
    %v4558 = vand.u32 %v3659, 4294901760
    %4559 = vmatpush1.msra.mxu0 %v4558
    %4560 = vmatprep.subr.mxu0 0.0
    %v4561 = vand.u32 %v3660, 4294901760
    %4562 = vmatpush1.msra.mxu0 %v4561
    %4563 = vmatprep.subr.mxu0 0.0
    %v4564 = vand.u32 %v3661, 4294901760
    %4565 = vmatpush1.msra.mxu0 %v4564
    %4566 = vmatprep.subr.mxu0 0.0
    %v4567 = vand.u32 %v3662, 4294901760
    %4568 = vmatpush1.msra.mxu0 %v4567
    %4569 = vmatprep.subr.mxu0 0.0
    %v4570 = vand.u32 %v3663, 4294901760
    %4571 = vmatpush1.msra.mxu0 %v4570
    %4572 = vmatprep.subr.mxu0 0.0
    %v4573 = vand.u32 %v3664, 4294901760
    %4574 = vmatpush1.msra.mxu0 %v4573
    %4575 = vmatprep.subr.mxu0 0.0
    %v4576 = vand.u32 %v3665, 4294901760
    %4577 = vmatpush1.msra.mxu0 %v4576
    %4578 = vmatprep.subr.mxu0 0.0
    %v4579 = vand.u32 %v3666, 4294901760
    %4580 = vmatpush1.msra.mxu0 %v4579
    %4581 = vmatprep.subr.mxu0 0.0
    %v4582 = vand.u32 %v3667, 4294901760
    %4583 = vmatpush1.msra.mxu0 %v4582
    %4584 = vmatprep.subr.mxu0 0.0
    %v4585 = vand.u32 %v3668, 4294901760
    %4586 = vmatpush1.msra.mxu0 %v4585
    %4587 = vmatprep.subr.mxu0 0.0
    %v4588 = vand.u32 %v3669, 4294901760
    %4589 = vmatpush1.msra.mxu0 %v4588
    %4590 = vmatprep.subr.mxu0 0.0
    %v4591 = vand.u32 %v3670, 4294901760
    %4592 = vmatpush1.msra.mxu0 %v4591
    %4593 = vmatprep.subr.mxu0 0.0
    %v4594 = vand.u32 %v3671, 4294901760
    %4595 = vmatpush1.msra.mxu0 %v4594
    %4596 = vmatprep.subr.mxu0 0.0
    %v4597 = vand.u32 %v3672, 4294901760
    %4598 = vmatpush1.msra.mxu0 %v4597
    %4599 = vmatprep.subr.mxu0 0.0
    %v4600 = vand.u32 %v3673, 4294901760
    %4601 = vmatpush1.msra.mxu0 %v4600
    %4602 = vmatprep.subr.mxu0 0.0
    %v4603 = vand.u32 %v3674, 4294901760
    %4604 = vmatpush1.msra.mxu0 %v4603
    %4605 = vmatprep.subr.mxu0 0.0
    %v4606 = vand.u32 %v3675, 4294901760
    %4607 = vmatpush1.msra.mxu0 %v4606
    %4608 = vmatprep.subr.mxu0 0.0
    %v4609 = vand.u32 %v3676, 4294901760
    %4610 = vmatpush1.msra.mxu0 %v4609
    %4611 = vmatprep.subr.mxu0 0.0
    %v4612 = vand.u32 %v3677, 4294901760
    %4613 = vmatpush1.msra.mxu0 %v4612
    %4614 = vmatprep.subr.mxu0 0.0
    %v4615 = vand.u32 %v3678, 4294901760
    %4616 = vmatpush1.msra.mxu0 %v4615
    %4617 = vmatprep.subr.mxu0 0.0
    %v4618 = vand.u32 %v3679, 4294901760
    %4619 = vmatpush1.msra.mxu0 %v4618
    %4620 = vmatprep.subr.mxu0 0.0
    %v4621 = vand.u32 %v3680, 4294901760
    %4622 = vmatpush1.msra.mxu0 %v4621
    %4623 = vmatprep.subr.mxu0 0.0
    %v4624 = vand.u32 %v3681, 4294901760
    %4625 = vmatpush1.msra.mxu0 %v4624
    %4626 = vmatprep.subr.mxu0 0.0
    %v4627 = vand.u32 %v3682, 4294901760
    %4628 = vmatpush1.msra.mxu0 %v4627
    %4629 = vmatprep.subr.mxu0 0.0
    %v4630 = vand.u32 %v3683, 4294901760
    %4631 = vmatpush1.msra.mxu0 %v4630
    %4632 = vmatprep.subr.mxu0 0.0
    %v4633 = vand.u32 %v3684, 4294901760
    %4634 = vmatpush1.msra.mxu0 %v4633
    %4635 = vmatprep.subr.mxu0 0.0
    %v4636 = vand.u32 %v3685, 4294901760
    %4637 = vmatpush1.msra.mxu0 %v4636
    %4638 = vmatprep.subr.mxu0 0.0
    %v4639 = vand.u32 %v3686, 4294901760
    %4640 = vmatpush1.msra.mxu0 %v4639
    %4641 = vmatprep.subr.mxu0 0.0
    %v4642 = vand.u32 %v3687, 4294901760
    %4643 = vmatpush1.msra.mxu0 %v4642
    %4644 = vmatprep.subr.mxu0 0.0
    %v4645 = vand.u32 %v3688, 4294901760
    %4646 = vmatpush1.msra.mxu0 %v4645
    %v4647 = vand.u32 %v107, 4294901760
    %v4648 = vsub.f32 %v107, %v4647
    %v4649 = vand.u32 %v4648, 4294901760
    %v4650 = vsub.f32 %v4648, %v4649
    %v4651 = vand.u32 %v4650, 4294901760
    %4652 = vmatprep.mubr.f32.mxu0 %v4651
    %v4653 = vand.u32 %v39, 4294901760
    %v4654 = vsub.f32 %v39, %v4653
    %v4655 = vand.u32 %v4654, 4294901760
    %v4656 = vsub.f32 %v4654, %v4655
    %v4657 = vand.u32 %v4656, 4294901760
    %4658 = vmatmul.mubr.f32.gmra.mrb[0].mxu0 %v4657
    %v4659 = vpop.f32.mrb[0].mxu0
    %v4660 = vadd.f32 %v4548, %v4659
    %v4661 = vpop.f32.mrb[0].mxu0
    %4662 = vdwg.mxu0
    %4663 = vmatprep.subr.mxu0 0.0
    %v4664 = vand.u32 %v3657, 4294901760
    %v4665 = vsub.f32 %v3657, %v4664
    %v4666 = vand.u32 %v4665, 4294901760
    %v4667 = vsub.f32 %v4665, %v4666
    %v4668 = vand.u32 %v4667, 4294901760
    %4669 = vmatpush1.msra.mxu0 %v4668
    %4670 = vmatprep.subr.mxu0 0.0
    %v4671 = vand.u32 %v3658, 4294901760
    %v4672 = vsub.f32 %v3658, %v4671
    %v4673 = vand.u32 %v4672, 4294901760
    %v4674 = vsub.f32 %v4672, %v4673
    %v4675 = vand.u32 %v4674, 4294901760
    %4676 = vmatpush1.msra.mxu0 %v4675
    %4677 = vmatprep.subr.mxu0 0.0
    %v4678 = vand.u32 %v3659, 4294901760
    %v4679 = vsub.f32 %v3659, %v4678
    %v4680 = vand.u32 %v4679, 4294901760
    %v4681 = vsub.f32 %v4679, %v4680
    %v4682 = vand.u32 %v4681, 4294901760
    %4683 = vmatpush1.msra.mxu0 %v4682
    %4684 = vmatprep.subr.mxu0 0.0
    %v4685 = vand.u32 %v3660, 4294901760
    %v4686 = vsub.f32 %v3660, %v4685
    %v4687 = vand.u32 %v4686, 4294901760
    %v4688 = vsub.f32 %v4686, %v4687
    %v4689 = vand.u32 %v4688, 4294901760
    %4690 = vmatpush1.msra.mxu0 %v4689
    %4691 = vmatprep.subr.mxu0 0.0
    %v4692 = vand.u32 %v3661, 4294901760
    %v4693 = vsub.f32 %v3661, %v4692
    %v4694 = vand.u32 %v4693, 4294901760
    %v4695 = vsub.f32 %v4693, %v4694
    %v4696 = vand.u32 %v4695, 4294901760
    %4697 = vmatpush1.msra.mxu0 %v4696
    %4698 = vmatprep.subr.mxu0 0.0
    %v4699 = vand.u32 %v3662, 4294901760
    %v4700 = vsub.f32 %v3662, %v4699
    %v4701 = vand.u32 %v4700, 4294901760
    %v4702 = vsub.f32 %v4700, %v4701
    %v4703 = vand.u32 %v4702, 4294901760
    %4704 = vmatpush1.msra.mxu0 %v4703
    %4705 = vmatprep.subr.mxu0 0.0
    %v4706 = vand.u32 %v3663, 4294901760
    %v4707 = vsub.f32 %v3663, %v4706
    %v4708 = vand.u32 %v4707, 4294901760
    %v4709 = vsub.f32 %v4707, %v4708
    %v4710 = vand.u32 %v4709, 4294901760
    %4711 = vmatpush1.msra.mxu0 %v4710
    %4712 = vmatprep.subr.mxu0 0.0
    %v4713 = vand.u32 %v3664, 4294901760
    %v4714 = vsub.f32 %v3664, %v4713
    %v4715 = vand.u32 %v4714, 4294901760
    %v4716 = vsub.f32 %v4714, %v4715
    %v4717 = vand.u32 %v4716, 4294901760
    %4718 = vmatpush1.msra.mxu0 %v4717
    %4719 = vmatprep.subr.mxu0 0.0
    %v4720 = vand.u32 %v3665, 4294901760
    %v4721 = vsub.f32 %v3665, %v4720
    %v4722 = vand.u32 %v4721, 4294901760
    %v4723 = vsub.f32 %v4721, %v4722
    %v4724 = vand.u32 %v4723, 4294901760
    %4725 = vmatpush1.msra.mxu0 %v4724
    %4726 = vmatprep.subr.mxu0 0.0
    %v4727 = vand.u32 %v3666, 4294901760
    %v4728 = vsub.f32 %v3666, %v4727
    %v4729 = vand.u32 %v4728, 4294901760
    %v4730 = vsub.f32 %v4728, %v4729
    %v4731 = vand.u32 %v4730, 4294901760
    %4732 = vmatpush1.msra.mxu0 %v4731
    %4733 = vmatprep.subr.mxu0 0.0
    %v4734 = vand.u32 %v3667, 4294901760
    %v4735 = vsub.f32 %v3667, %v4734
    %v4736 = vand.u32 %v4735, 4294901760
    %v4737 = vsub.f32 %v4735, %v4736
    %v4738 = vand.u32 %v4737, 4294901760
    %4739 = vmatpush1.msra.mxu0 %v4738
    %4740 = vmatprep.subr.mxu0 0.0
    %v4741 = vand.u32 %v3668, 4294901760
    %v4742 = vsub.f32 %v3668, %v4741
    %v4743 = vand.u32 %v4742, 4294901760
    %v4744 = vsub.f32 %v4742, %v4743
    %v4745 = vand.u32 %v4744, 4294901760
    %4746 = vmatpush1.msra.mxu0 %v4745
    %4747 = vmatprep.subr.mxu0 0.0
    %v4748 = vand.u32 %v3669, 4294901760
    %v4749 = vsub.f32 %v3669, %v4748
    %v4750 = vand.u32 %v4749, 4294901760
    %v4751 = vsub.f32 %v4749, %v4750
    %v4752 = vand.u32 %v4751, 4294901760
    %4753 = vmatpush1.msra.mxu0 %v4752
    %4754 = vmatprep.subr.mxu0 0.0
    %v4755 = vand.u32 %v3670, 4294901760
    %v4756 = vsub.f32 %v3670, %v4755
    %v4757 = vand.u32 %v4756, 4294901760
    %v4758 = vsub.f32 %v4756, %v4757
    %v4759 = vand.u32 %v4758, 4294901760
    %4760 = vmatpush1.msra.mxu0 %v4759
    %4761 = vmatprep.subr.mxu0 0.0
    %v4762 = vand.u32 %v3671, 4294901760
    %v4763 = vsub.f32 %v3671, %v4762
    %v4764 = vand.u32 %v4763, 4294901760
    %v4765 = vsub.f32 %v4763, %v4764
    %v4766 = vand.u32 %v4765, 4294901760
    %4767 = vmatpush1.msra.mxu0 %v4766
    %4768 = vmatprep.subr.mxu0 0.0
    %v4769 = vand.u32 %v3672, 4294901760
    %v4770 = vsub.f32 %v3672, %v4769
    %v4771 = vand.u32 %v4770, 4294901760
    %v4772 = vsub.f32 %v4770, %v4771
    %v4773 = vand.u32 %v4772, 4294901760
    %4774 = vmatpush1.msra.mxu0 %v4773
    %4775 = vmatprep.subr.mxu0 0.0
    %v4776 = vand.u32 %v3673, 4294901760
    %v4777 = vsub.f32 %v3673, %v4776
    %v4778 = vand.u32 %v4777, 4294901760
    %v4779 = vsub.f32 %v4777, %v4778
    %v4780 = vand.u32 %v4779, 4294901760
    %4781 = vmatpush1.msra.mxu0 %v4780
    %4782 = vmatprep.subr.mxu0 0.0
    %v4783 = vand.u32 %v3674, 4294901760
    %v4784 = vsub.f32 %v3674, %v4783
    %v4785 = vand.u32 %v4784, 4294901760
    %v4786 = vsub.f32 %v4784, %v4785
    %v4787 = vand.u32 %v4786, 4294901760
    %4788 = vmatpush1.msra.mxu0 %v4787
    %4789 = vmatprep.subr.mxu0 0.0
    %v4790 = vand.u32 %v3675, 4294901760
    %v4791 = vsub.f32 %v3675, %v4790
    %v4792 = vand.u32 %v4791, 4294901760
    %v4793 = vsub.f32 %v4791, %v4792
    %v4794 = vand.u32 %v4793, 4294901760
    %4795 = vmatpush1.msra.mxu0 %v4794
    %4796 = vmatprep.subr.mxu0 0.0
    %v4797 = vand.u32 %v3676, 4294901760
    %v4798 = vsub.f32 %v3676, %v4797
    %v4799 = vand.u32 %v4798, 4294901760
    %v4800 = vsub.f32 %v4798, %v4799
    %v4801 = vand.u32 %v4800, 4294901760
    %4802 = vmatpush1.msra.mxu0 %v4801
    %4803 = vmatprep.subr.mxu0 0.0
    %v4804 = vand.u32 %v3677, 4294901760
    %v4805 = vsub.f32 %v3677, %v4804
    %v4806 = vand.u32 %v4805, 4294901760
    %v4807 = vsub.f32 %v4805, %v4806
    %v4808 = vand.u32 %v4807, 4294901760
    %4809 = vmatpush1.msra.mxu0 %v4808
    %4810 = vmatprep.subr.mxu0 0.0
    %v4811 = vand.u32 %v3678, 4294901760
    %v4812 = vsub.f32 %v3678, %v4811
    %v4813 = vand.u32 %v4812, 4294901760
    %v4814 = vsub.f32 %v4812, %v4813
    %v4815 = vand.u32 %v4814, 4294901760
    %4816 = vmatpush1.msra.mxu0 %v4815
    %4817 = vmatprep.subr.mxu0 0.0
    %v4818 = vand.u32 %v3679, 4294901760
    %v4819 = vsub.f32 %v3679, %v4818
    %v4820 = vand.u32 %v4819, 4294901760
    %v4821 = vsub.f32 %v4819, %v4820
    %v4822 = vand.u32 %v4821, 4294901760
    %4823 = vmatpush1.msra.mxu0 %v4822
    %4824 = vmatprep.subr.mxu0 0.0
    %v4825 = vand.u32 %v3680, 4294901760
    %v4826 = vsub.f32 %v3680, %v4825
    %v4827 = vand.u32 %v4826, 4294901760
    %v4828 = vsub.f32 %v4826, %v4827
    %v4829 = vand.u32 %v4828, 4294901760
    %4830 = vmatpush1.msra.mxu0 %v4829
    %4831 = vmatprep.subr.mxu0 0.0
    %v4832 = vand.u32 %v3681, 4294901760
    %v4833 = vsub.f32 %v3681, %v4832
    %v4834 = vand.u32 %v4833, 4294901760
    %v4835 = vsub.f32 %v4833, %v4834
    %v4836 = vand.u32 %v4835, 4294901760
    %4837 = vmatpush1.msra.mxu0 %v4836
    %4838 = vmatprep.subr.mxu0 0.0
    %v4839 = vand.u32 %v3682, 4294901760
    %v4840 = vsub.f32 %v3682, %v4839
    %v4841 = vand.u32 %v4840, 4294901760
    %v4842 = vsub.f32 %v4840, %v4841
    %v4843 = vand.u32 %v4842, 4294901760
    %4844 = vmatpush1.msra.mxu0 %v4843
    %4845 = vmatprep.subr.mxu0 0.0
    %v4846 = vand.u32 %v3683, 4294901760
    %v4847 = vsub.f32 %v3683, %v4846
    %v4848 = vand.u32 %v4847, 4294901760
    %v4849 = vsub.f32 %v4847, %v4848
    %v4850 = vand.u32 %v4849, 4294901760
    %4851 = vmatpush1.msra.mxu0 %v4850
    %4852 = vmatprep.subr.mxu0 0.0
    %v4853 = vand.u32 %v3684, 4294901760
    %v4854 = vsub.f32 %v3684, %v4853
    %v4855 = vand.u32 %v4854, 4294901760
    %v4856 = vsub.f32 %v4854, %v4855
    %v4857 = vand.u32 %v4856, 4294901760
    %4858 = vmatpush1.msra.mxu0 %v4857
    %4859 = vmatprep.subr.mxu0 0.0
    %v4860 = vand.u32 %v3685, 4294901760
    %v4861 = vsub.f32 %v3685, %v4860
    %v4862 = vand.u32 %v4861, 4294901760
    %v4863 = vsub.f32 %v4861, %v4862
    %v4864 = vand.u32 %v4863, 4294901760
    %4865 = vmatpush1.msra.mxu0 %v4864
    %4866 = vmatprep.subr.mxu0 0.0
    %v4867 = vand.u32 %v3686, 4294901760
    %v4868 = vsub.f32 %v3686, %v4867
    %v4869 = vand.u32 %v4868, 4294901760
    %v4870 = vsub.f32 %v4868, %v4869
    %v4871 = vand.u32 %v4870, 4294901760
    %4872 = vmatpush1.msra.mxu0 %v4871
    %4873 = vmatprep.subr.mxu0 0.0
    %v4874 = vand.u32 %v3687, 4294901760
    %v4875 = vsub.f32 %v3687, %v4874
    %v4876 = vand.u32 %v4875, 4294901760
    %v4877 = vsub.f32 %v4875, %v4876
    %v4878 = vand.u32 %v4877, 4294901760
    %4879 = vmatpush1.msra.mxu0 %v4878
    %4880 = vmatprep.subr.mxu0 0.0
    %v4881 = vand.u32 %v3688, 4294901760
    %v4882 = vsub.f32 %v3688, %v4881
    %v4883 = vand.u32 %v4882, 4294901760
    %v4884 = vsub.f32 %v4882, %v4883
    %v4885 = vand.u32 %v4884, 4294901760
    %4886 = vmatpush1.msra.mxu0 %v4885
    %v4887 = vand.u32 %v107, 4294901760
    %4888 = vmatprep.mubr.f32.mxu0 %v4887
    %v4889 = vand.u32 %v39, 4294901760
    %4890 = vmatmul.mubr.f32.gmra.mrb[0].mxu0 %v4889
    %v4891 = vpop.f32.mrb[0].mxu0
    %v4892 = vadd.f32 %v4660, %v4891
    %v4893 = vpop.f32.mrb[0].mxu0
    %4894 = vdwg.mxu0
    %4895 = vmatprep.subr.mxu0 0.0
    %v4896 = vand.u32 %v3657, 4294901760
    %v4897 = vsub.f32 %v3657, %v4896
    %4898 = vmatpush1.msra.mxu0 %v4897
    %4899 = vmatprep.subr.mxu0 0.0
    %v4900 = vand.u32 %v3658, 4294901760
    %v4901 = vsub.f32 %v3658, %v4900
    %4902 = vmatpush1.msra.mxu0 %v4901
    %4903 = vmatprep.subr.mxu0 0.0
    %v4904 = vand.u32 %v3659, 4294901760
    %v4905 = vsub.f32 %v3659, %v4904
    %4906 = vmatpush1.msra.mxu0 %v4905
    %4907 = vmatprep.subr.mxu0 0.0
    %v4908 = vand.u32 %v3660, 4294901760
    %v4909 = vsub.f32 %v3660, %v4908
    %4910 = vmatpush1.msra.mxu0 %v4909
    %4911 = vmatprep.subr.mxu0 0.0
    %v4912 = vand.u32 %v3661, 4294901760
    %v4913 = vsub.f32 %v3661, %v4912
    %4914 = vmatpush1.msra.mxu0 %v4913
    %4915 = vmatprep.subr.mxu0 0.0
    %v4916 = vand.u32 %v3662, 4294901760
    %v4917 = vsub.f32 %v3662, %v4916
    %4918 = vmatpush1.msra.mxu0 %v4917
    %4919 = vmatprep.subr.mxu0 0.0
    %v4920 = vand.u32 %v3663, 4294901760
    %v4921 = vsub.f32 %v3663, %v4920
    %4922 = vmatpush1.msra.mxu0 %v4921
    %4923 = vmatprep.subr.mxu0 0.0
    %v4924 = vand.u32 %v3664, 4294901760
    %v4925 = vsub.f32 %v3664, %v4924
    %4926 = vmatpush1.msra.mxu0 %v4925
    %4927 = vmatprep.subr.mxu0 0.0
    %v4928 = vand.u32 %v3665, 4294901760
    %v4929 = vsub.f32 %v3665, %v4928
    %4930 = vmatpush1.msra.mxu0 %v4929
    %4931 = vmatprep.subr.mxu0 0.0
    %v4932 = vand.u32 %v3666, 4294901760
    %v4933 = vsub.f32 %v3666, %v4932
    %4934 = vmatpush1.msra.mxu0 %v4933
    %4935 = vmatprep.subr.mxu0 0.0
    %v4936 = vand.u32 %v3667, 4294901760
    %v4937 = vsub.f32 %v3667, %v4936
    %4938 = vmatpush1.msra.mxu0 %v4937
    %4939 = vmatprep.subr.mxu0 0.0
    %v4940 = vand.u32 %v3668, 4294901760
    %v4941 = vsub.f32 %v3668, %v4940
    %4942 = vmatpush1.msra.mxu0 %v4941
    %4943 = vmatprep.subr.mxu0 0.0
    %v4944 = vand.u32 %v3669, 4294901760
    %v4945 = vsub.f32 %v3669, %v4944
    %4946 = vmatpush1.msra.mxu0 %v4945
    %4947 = vmatprep.subr.mxu0 0.0
    %v4948 = vand.u32 %v3670, 4294901760
    %v4949 = vsub.f32 %v3670, %v4948
    %4950 = vmatpush1.msra.mxu0 %v4949
    %4951 = vmatprep.subr.mxu0 0.0
    %v4952 = vand.u32 %v3671, 4294901760
    %v4953 = vsub.f32 %v3671, %v4952
    %4954 = vmatpush1.msra.mxu0 %v4953
    %4955 = vmatprep.subr.mxu0 0.0
    %v4956 = vand.u32 %v3672, 4294901760
    %v4957 = vsub.f32 %v3672, %v4956
    %4958 = vmatpush1.msra.mxu0 %v4957
    %4959 = vmatprep.subr.mxu0 0.0
    %v4960 = vand.u32 %v3673, 4294901760
    %v4961 = vsub.f32 %v3673, %v4960
    %4962 = vmatpush1.msra.mxu0 %v4961
    %4963 = vmatprep.subr.mxu0 0.0
    %v4964 = vand.u32 %v3674, 4294901760
    %v4965 = vsub.f32 %v3674, %v4964
    %4966 = vmatpush1.msra.mxu0 %v4965
    %4967 = vmatprep.subr.mxu0 0.0
    %v4968 = vand.u32 %v3675, 4294901760
    %v4969 = vsub.f32 %v3675, %v4968
    %4970 = vmatpush1.msra.mxu0 %v4969
    %4971 = vmatprep.subr.mxu0 0.0
    %v4972 = vand.u32 %v3676, 4294901760
    %v4973 = vsub.f32 %v3676, %v4972
    %4974 = vmatpush1.msra.mxu0 %v4973
    %4975 = vmatprep.subr.mxu0 0.0
    %v4976 = vand.u32 %v3677, 4294901760
    %v4977 = vsub.f32 %v3677, %v4976
    %4978 = vmatpush1.msra.mxu0 %v4977
    %4979 = vmatprep.subr.mxu0 0.0
    %v4980 = vand.u32 %v3678, 4294901760
    %v4981 = vsub.f32 %v3678, %v4980
    %4982 = vmatpush1.msra.mxu0 %v4981
    %4983 = vmatprep.subr.mxu0 0.0
    %v4984 = vand.u32 %v3679, 4294901760
    %v4985 = vsub.f32 %v3679, %v4984
    %4986 = vmatpush1.msra.mxu0 %v4985
    %4987 = vmatprep.subr.mxu0 0.0
    %v4988 = vand.u32 %v3680, 4294901760
    %v4989 = vsub.f32 %v3680, %v4988
    %4990 = vmatpush1.msra.mxu0 %v4989
    %4991 = vmatprep.subr.mxu0 0.0
    %v4992 = vand.u32 %v3681, 4294901760
    %v4993 = vsub.f32 %v3681, %v4992
    %4994 = vmatpush1.msra.mxu0 %v4993
    %4995 = vmatprep.subr.mxu0 0.0
    %v4996 = vand.u32 %v3682, 4294901760
    %v4997 = vsub.f32 %v3682, %v4996
    %4998 = vmatpush1.msra.mxu0 %v4997
    %4999 = vmatprep.subr.mxu0 0.0
    %v5000 = vand.u32 %v3683, 4294901760
    %v5001 = vsub.f32 %v3683, %v5000
    %5002 = vmatpush1.msra.mxu0 %v5001
    %5003 = vmatprep.subr.mxu0 0.0
    %v5004 = vand.u32 %v3684, 4294901760
    %v5005 = vsub.f32 %v3684, %v5004
    %5006 = vmatpush1.msra.mxu0 %v5005
    %5007 = vmatprep.subr.mxu0 0.0
    %v5008 = vand.u32 %v3685, 4294901760
    %v5009 = vsub.f32 %v3685, %v5008
    %5010 = vmatpush1.msra.mxu0 %v5009
    %5011 = vmatprep.subr.mxu0 0.0
    %v5012 = vand.u32 %v3686, 4294901760
    %v5013 = vsub.f32 %v3686, %v5012
    %5014 = vmatpush1.msra.mxu0 %v5013
    %5015 = vmatprep.subr.mxu0 0.0
    %v5016 = vand.u32 %v3687, 4294901760
    %v5017 = vsub.f32 %v3687, %v5016
    %5018 = vmatpush1.msra.mxu0 %v5017
    %5019 = vmatprep.subr.mxu0 0.0
    %v5020 = vand.u32 %v3688, 4294901760
    %v5021 = vsub.f32 %v3688, %v5020
    %5022 = vmatpush1.msra.mxu0 %v5021
    %v5023 = vand.u32 %v107, 4294901760
    %v5024 = vsub.f32 %v107, %v5023
    %5025 = vmatprep.mubr.f32.mxu0 %v5024
    %v5026 = vand.u32 %v39, 4294901760
    %v5027 = vsub.f32 %v39, %v5026
    %5028 = vmatmul.mubr.f32.gmra.mrb[0].mxu0 %v5027
    %v5029 = vpop.f32.mrb[0].mxu0
    %v5030 = vadd.f32 %v4892, %v5029
    %v5031 = vpop.f32.mrb[0].mxu0
    %5032 = vdwg.mxu0
    %5033 = vmatprep.subr.mxu0 0.0
    %v5034 = vand.u32 %v3657, 4294901760
    %5035 = vmatpush1.msra.mxu0 %v5034
    %5036 = vmatprep.subr.mxu0 0.0
    %v5037 = vand.u32 %v3658, 4294901760
    %5038 = vmatpush1.msra.mxu0 %v5037
    %5039 = vmatprep.subr.mxu0 0.0
    %v5040 = vand.u32 %v3659, 4294901760
    %5041 = vmatpush1.msra.mxu0 %v5040
    %5042 = vmatprep.subr.mxu0 0.0
    %v5043 = vand.u32 %v3660, 4294901760
    %5044 = vmatpush1.msra.mxu0 %v5043
    %5045 = vmatprep.subr.mxu0 0.0
    %v5046 = vand.u32 %v3661, 4294901760
    %5047 = vmatpush1.msra.mxu0 %v5046
    %5048 = vmatprep.subr.mxu0 0.0
    %v5049 = vand.u32 %v3662, 4294901760
    %5050 = vmatpush1.msra.mxu0 %v5049
    %5051 = vmatprep.subr.mxu0 0.0
    %v5052 = vand.u32 %v3663, 4294901760
    %5053 = vmatpush1.msra.mxu0 %v5052
    %5054 = vmatprep.subr.mxu0 0.0
    %v5055 = vand.u32 %v3664, 4294901760
    %5056 = vmatpush1.msra.mxu0 %v5055
    %5057 = vmatprep.subr.mxu0 0.0
    %v5058 = vand.u32 %v3665, 4294901760
    %5059 = vmatpush1.msra.mxu0 %v5058
    %5060 = vmatprep.subr.mxu0 0.0
    %v5061 = vand.u32 %v3666, 4294901760
    %5062 = vmatpush1.msra.mxu0 %v5061
    %5063 = vmatprep.subr.mxu0 0.0
    %v5064 = vand.u32 %v3667, 4294901760
    %5065 = vmatpush1.msra.mxu0 %v5064
    %5066 = vmatprep.subr.mxu0 0.0
    %v5067 = vand.u32 %v3668, 4294901760
    %5068 = vmatpush1.msra.mxu0 %v5067
    %5069 = vmatprep.subr.mxu0 0.0
    %v5070 = vand.u32 %v3669, 4294901760
    %5071 = vmatpush1.msra.mxu0 %v5070
    %5072 = vmatprep.subr.mxu0 0.0
    %v5073 = vand.u32 %v3670, 4294901760
    %5074 = vmatpush1.msra.mxu0 %v5073
    %5075 = vmatprep.subr.mxu0 0.0
    %v5076 = vand.u32 %v3671, 4294901760
    %5077 = vmatpush1.msra.mxu0 %v5076
    %5078 = vmatprep.subr.mxu0 0.0
    %v5079 = vand.u32 %v3672, 4294901760
    %5080 = vmatpush1.msra.mxu0 %v5079
    %5081 = vmatprep.subr.mxu0 0.0
    %v5082 = vand.u32 %v3673, 4294901760
    %5083 = vmatpush1.msra.mxu0 %v5082
    %5084 = vmatprep.subr.mxu0 0.0
    %v5085 = vand.u32 %v3674, 4294901760
    %5086 = vmatpush1.msra.mxu0 %v5085
    %5087 = vmatprep.subr.mxu0 0.0
    %v5088 = vand.u32 %v3675, 4294901760
    %5089 = vmatpush1.msra.mxu0 %v5088
    %5090 = vmatprep.subr.mxu0 0.0
    %v5091 = vand.u32 %v3676, 4294901760
    %5092 = vmatpush1.msra.mxu0 %v5091
    %5093 = vmatprep.subr.mxu0 0.0
    %v5094 = vand.u32 %v3677, 4294901760
    %5095 = vmatpush1.msra.mxu0 %v5094
    %5096 = vmatprep.subr.mxu0 0.0
    %v5097 = vand.u32 %v3678, 4294901760
    %5098 = vmatpush1.msra.mxu0 %v5097
    %5099 = vmatprep.subr.mxu0 0.0
    %v5100 = vand.u32 %v3679, 4294901760
    %5101 = vmatpush1.msra.mxu0 %v5100
    %5102 = vmatprep.subr.mxu0 0.0
    %v5103 = vand.u32 %v3680, 4294901760
    %5104 = vmatpush1.msra.mxu0 %v5103
    %5105 = vmatprep.subr.mxu0 0.0
    %v5106 = vand.u32 %v3681, 4294901760
    %5107 = vmatpush1.msra.mxu0 %v5106
    %5108 = vmatprep.subr.mxu0 0.0
    %v5109 = vand.u32 %v3682, 4294901760
    %5110 = vmatpush1.msra.mxu0 %v5109
    %5111 = vmatprep.subr.mxu0 0.0
    %v5112 = vand.u32 %v3683, 4294901760
    %5113 = vmatpush1.msra.mxu0 %v5112
    %5114 = vmatprep.subr.mxu0 0.0
    %v5115 = vand.u32 %v3684, 4294901760
    %5116 = vmatpush1.msra.mxu0 %v5115
    %5117 = vmatprep.subr.mxu0 0.0
    %v5118 = vand.u32 %v3685, 4294901760
    %5119 = vmatpush1.msra.mxu0 %v5118
    %5120 = vmatprep.subr.mxu0 0.0
    %v5121 = vand.u32 %v3686, 4294901760
    %5122 = vmatpush1.msra.mxu0 %v5121
    %5123 = vmatprep.subr.mxu0 0.0
    %v5124 = vand.u32 %v3687, 4294901760
    %5125 = vmatpush1.msra.mxu0 %v5124
    %5126 = vmatprep.subr.mxu0 0.0
    %v5127 = vand.u32 %v3688, 4294901760
    %5128 = vmatpush1.msra.mxu0 %v5127
    %v5129 = vand.u32 %v107, 4294901760
    %v5130 = vsub.f32 %v107, %v5129
    %v5131 = vand.u32 %v5130, 4294901760
    %5132 = vmatprep.mubr.f32.mxu0 %v5131
    %v5133 = vand.u32 %v39, 4294901760
    %v5134 = vsub.f32 %v39, %v5133
    %v5135 = vand.u32 %v5134, 4294901760
    %5136 = vmatmul.mubr.f32.gmra.mrb[0].mxu0 %v5135
    %v5137 = vpop.f32.mrb[0].mxu0
    %v5138 = vadd.f32 %v5030, %v5137
    %v5139 = vpop.f32.mrb[0].mxu0
    %5140 = vdwg.mxu0
    %5141 = vmatprep.subr.mxu0 0.0
    %v5142 = vand.u32 %v3657, 4294901760
    %v5143 = vsub.f32 %v3657, %v5142
    %v5144 = vand.u32 %v5143, 4294901760
    %5145 = vmatpush1.msra.mxu0 %v5144
    %5146 = vmatprep.subr.mxu0 0.0
    %v5147 = vand.u32 %v3658, 4294901760
    %v5148 = vsub.f32 %v3658, %v5147
    %v5149 = vand.u32 %v5148, 4294901760
    %5150 = vmatpush1.msra.mxu0 %v5149
    %5151 = vmatprep.subr.mxu0 0.0
    %v5152 = vand.u32 %v3659, 4294901760
    %v5153 = vsub.f32 %v3659, %v5152
    %v5154 = vand.u32 %v5153, 4294901760
    %5155 = vmatpush1.msra.mxu0 %v5154
    %5156 = vmatprep.subr.mxu0 0.0
    %v5157 = vand.u32 %v3660, 4294901760
    %v5158 = vsub.f32 %v3660, %v5157
    %v5159 = vand.u32 %v5158, 4294901760
    %5160 = vmatpush1.msra.mxu0 %v5159
    %5161 = vmatprep.subr.mxu0 0.0
    %v5162 = vand.u32 %v3661, 4294901760
    %v5163 = vsub.f32 %v3661, %v5162
    %v5164 = vand.u32 %v5163, 4294901760
    %5165 = vmatpush1.msra.mxu0 %v5164
    %5166 = vmatprep.subr.mxu0 0.0
    %v5167 = vand.u32 %v3662, 4294901760
    %v5168 = vsub.f32 %v3662, %v5167
    %v5169 = vand.u32 %v5168, 4294901760
    %5170 = vmatpush1.msra.mxu0 %v5169
    %5171 = vmatprep.subr.mxu0 0.0
    %v5172 = vand.u32 %v3663, 4294901760
    %v5173 = vsub.f32 %v3663, %v5172
    %v5174 = vand.u32 %v5173, 4294901760
    %5175 = vmatpush1.msra.mxu0 %v5174
    %5176 = vmatprep.subr.mxu0 0.0
    %v5177 = vand.u32 %v3664, 4294901760
    %v5178 = vsub.f32 %v3664, %v5177
    %v5179 = vand.u32 %v5178, 4294901760
    %5180 = vmatpush1.msra.mxu0 %v5179
    %5181 = vmatprep.subr.mxu0 0.0
    %v5182 = vand.u32 %v3665, 4294901760
    %v5183 = vsub.f32 %v3665, %v5182
    %v5184 = vand.u32 %v5183, 4294901760
    %5185 = vmatpush1.msra.mxu0 %v5184
    %5186 = vmatprep.subr.mxu0 0.0
    %v5187 = vand.u32 %v3666, 4294901760
    %v5188 = vsub.f32 %v3666, %v5187
    %v5189 = vand.u32 %v5188, 4294901760
    %5190 = vmatpush1.msra.mxu0 %v5189
    %5191 = vmatprep.subr.mxu0 0.0
    %v5192 = vand.u32 %v3667, 4294901760
    %v5193 = vsub.f32 %v3667, %v5192
    %v5194 = vand.u32 %v5193, 4294901760
    %5195 = vmatpush1.msra.mxu0 %v5194
    %5196 = vmatprep.subr.mxu0 0.0
    %v5197 = vand.u32 %v3668, 4294901760
    %v5198 = vsub.f32 %v3668, %v5197
    %v5199 = vand.u32 %v5198, 4294901760
    %5200 = vmatpush1.msra.mxu0 %v5199
    %5201 = vmatprep.subr.mxu0 0.0
    %v5202 = vand.u32 %v3669, 4294901760
    %v5203 = vsub.f32 %v3669, %v5202
    %v5204 = vand.u32 %v5203, 4294901760
    %5205 = vmatpush1.msra.mxu0 %v5204
    %5206 = vmatprep.subr.mxu0 0.0
    %v5207 = vand.u32 %v3670, 4294901760
    %v5208 = vsub.f32 %v3670, %v5207
    %v5209 = vand.u32 %v5208, 4294901760
    %5210 = vmatpush1.msra.mxu0 %v5209
    %5211 = vmatprep.subr.mxu0 0.0
    %v5212 = vand.u32 %v3671, 4294901760
    %v5213 = vsub.f32 %v3671, %v5212
    %v5214 = vand.u32 %v5213, 4294901760
    %5215 = vmatpush1.msra.mxu0 %v5214
    %5216 = vmatprep.subr.mxu0 0.0
    %v5217 = vand.u32 %v3672, 4294901760
    %v5218 = vsub.f32 %v3672, %v5217
    %v5219 = vand.u32 %v5218, 4294901760
    %5220 = vmatpush1.msra.mxu0 %v5219
    %5221 = vmatprep.subr.mxu0 0.0
    %v5222 = vand.u32 %v3673, 4294901760
    %v5223 = vsub.f32 %v3673, %v5222
    %v5224 = vand.u32 %v5223, 4294901760
    %5225 = vmatpush1.msra.mxu0 %v5224
    %5226 = vmatprep.subr.mxu0 0.0
    %v5227 = vand.u32 %v3674, 4294901760
    %v5228 = vsub.f32 %v3674, %v5227
    %v5229 = vand.u32 %v5228, 4294901760
    %5230 = vmatpush1.msra.mxu0 %v5229
    %5231 = vmatprep.subr.mxu0 0.0
    %v5232 = vand.u32 %v3675, 4294901760
    %v5233 = vsub.f32 %v3675, %v5232
    %v5234 = vand.u32 %v5233, 4294901760
    %5235 = vmatpush1.msra.mxu0 %v5234
    %5236 = vmatprep.subr.mxu0 0.0
    %v5237 = vand.u32 %v3676, 4294901760
    %v5238 = vsub.f32 %v3676, %v5237
    %v5239 = vand.u32 %v5238, 4294901760
    %5240 = vmatpush1.msra.mxu0 %v5239
    %5241 = vmatprep.subr.mxu0 0.0
    %v5242 = vand.u32 %v3677, 4294901760
    %v5243 = vsub.f32 %v3677, %v5242
    %v5244 = vand.u32 %v5243, 4294901760
    %5245 = vmatpush1.msra.mxu0 %v5244
    %5246 = vmatprep.subr.mxu0 0.0
    %v5247 = vand.u32 %v3678, 4294901760
    %v5248 = vsub.f32 %v3678, %v5247
    %v5249 = vand.u32 %v5248, 4294901760
    %5250 = vmatpush1.msra.mxu0 %v5249
    %5251 = vmatprep.subr.mxu0 0.0
    %v5252 = vand.u32 %v3679, 4294901760
    %v5253 = vsub.f32 %v3679, %v5252
    %v5254 = vand.u32 %v5253, 4294901760
    %5255 = vmatpush1.msra.mxu0 %v5254
    %5256 = vmatprep.subr.mxu0 0.0
    %v5257 = vand.u32 %v3680, 4294901760
    %v5258 = vsub.f32 %v3680, %v5257
    %v5259 = vand.u32 %v5258, 4294901760
    %5260 = vmatpush1.msra.mxu0 %v5259
    %5261 = vmatprep.subr.mxu0 0.0
    %v5262 = vand.u32 %v3681, 4294901760
    %v5263 = vsub.f32 %v3681, %v5262
    %v5264 = vand.u32 %v5263, 4294901760
    %5265 = vmatpush1.msra.mxu0 %v5264
    %5266 = vmatprep.subr.mxu0 0.0
    %v5267 = vand.u32 %v3682, 4294901760
    %v5268 = vsub.f32 %v3682, %v5267
    %v5269 = vand.u32 %v5268, 4294901760
    %5270 = vmatpush1.msra.mxu0 %v5269
    %5271 = vmatprep.subr.mxu0 0.0
    %v5272 = vand.u32 %v3683, 4294901760
    %v5273 = vsub.f32 %v3683, %v5272
    %v5274 = vand.u32 %v5273, 4294901760
    %5275 = vmatpush1.msra.mxu0 %v5274
    %5276 = vmatprep.subr.mxu0 0.0
    %v5277 = vand.u32 %v3684, 4294901760
    %v5278 = vsub.f32 %v3684, %v5277
    %v5279 = vand.u32 %v5278, 4294901760
    %5280 = vmatpush1.msra.mxu0 %v5279
    %5281 = vmatprep.subr.mxu0 0.0
    %v5282 = vand.u32 %v3685, 4294901760
    %v5283 = vsub.f32 %v3685, %v5282
    %v5284 = vand.u32 %v5283, 4294901760
    %5285 = vmatpush1.msra.mxu0 %v5284
    %5286 = vmatprep.subr.mxu0 0.0
    %v5287 = vand.u32 %v3686, 4294901760
    %v5288 = vsub.f32 %v3686, %v5287
    %v5289 = vand.u32 %v5288, 4294901760
    %5290 = vmatpush1.msra.mxu0 %v5289
    %5291 = vmatprep.subr.mxu0 0.0
    %v5292 = vand.u32 %v3687, 4294901760
    %v5293 = vsub.f32 %v3687, %v5292
    %v5294 = vand.u32 %v5293, 4294901760
    %5295 = vmatpush1.msra.mxu0 %v5294
    %5296 = vmatprep.subr.mxu0 0.0
    %v5297 = vand.u32 %v3688, 4294901760
    %v5298 = vsub.f32 %v3688, %v5297
    %v5299 = vand.u32 %v5298, 4294901760
    %5300 = vmatpush1.msra.mxu0 %v5299
    %v5301 = vand.u32 %v107, 4294901760
    %5302 = vmatprep.mubr.f32.mxu0 %v5301
    %v5303 = vand.u32 %v39, 4294901760
    %5304 = vmatmul.mubr.f32.gmra.mrb[0].mxu0 %v5303
    %v5305 = vpop.f32.mrb[0].mxu0
    %v5306 = vadd.f32 %v5138, %v5305
    %v5307 = vpop.f32.mrb[0].mxu0
    %5308 = vdwg.mxu0
    %5309 = vmatprep.subr.mxu0 0.0
    %v5310 = vand.u32 %v3657, 4294901760
    %5311 = vmatpush1.msra.mxu0 %v5310
    %5312 = vmatprep.subr.mxu0 0.0
    %v5313 = vand.u32 %v3658, 4294901760
    %5314 = vmatpush1.msra.mxu0 %v5313
    %5315 = vmatprep.subr.mxu0 0.0
    %v5316 = vand.u32 %v3659, 4294901760
    %5317 = vmatpush1.msra.mxu0 %v5316
    %5318 = vmatprep.subr.mxu0 0.0
    %v5319 = vand.u32 %v3660, 4294901760
    %5320 = vmatpush1.msra.mxu0 %v5319
    %5321 = vmatprep.subr.mxu0 0.0
    %v5322 = vand.u32 %v3661, 4294901760
    %5323 = vmatpush1.msra.mxu0 %v5322
    %5324 = vmatprep.subr.mxu0 0.0
    %v5325 = vand.u32 %v3662, 4294901760
    %5326 = vmatpush1.msra.mxu0 %v5325
    %5327 = vmatprep.subr.mxu0 0.0
    %v5328 = vand.u32 %v3663, 4294901760
    %5329 = vmatpush1.msra.mxu0 %v5328
    %5330 = vmatprep.subr.mxu0 0.0
    %v5331 = vand.u32 %v3664, 4294901760
    %5332 = vmatpush1.msra.mxu0 %v5331
    %5333 = vmatprep.subr.mxu0 0.0
    %v5334 = vand.u32 %v3665, 4294901760
    %5335 = vmatpush1.msra.mxu0 %v5334
    %5336 = vmatprep.subr.mxu0 0.0
    %v5337 = vand.u32 %v3666, 4294901760
    %5338 = vmatpush1.msra.mxu0 %v5337
    %5339 = vmatprep.subr.mxu0 0.0
    %v5340 = vand.u32 %v3667, 4294901760
    %5341 = vmatpush1.msra.mxu0 %v5340
    %5342 = vmatprep.subr.mxu0 0.0
    %v5343 = vand.u32 %v3668, 4294901760
    %5344 = vmatpush1.msra.mxu0 %v5343
    %5345 = vmatprep.subr.mxu0 0.0
    %v5346 = vand.u32 %v3669, 4294901760
    %5347 = vmatpush1.msra.mxu0 %v5346
    %5348 = vmatprep.subr.mxu0 0.0
    %v5349 = vand.u32 %v3670, 4294901760
    %5350 = vmatpush1.msra.mxu0 %v5349
    %5351 = vmatprep.subr.mxu0 0.0
    %v5352 = vand.u32 %v3671, 4294901760
    %5353 = vmatpush1.msra.mxu0 %v5352
    %5354 = vmatprep.subr.mxu0 0.0
    %v5355 = vand.u32 %v3672, 4294901760
    %5356 = vmatpush1.msra.mxu0 %v5355
    %5357 = vmatprep.subr.mxu0 0.0
    %v5358 = vand.u32 %v3673, 4294901760
    %5359 = vmatpush1.msra.mxu0 %v5358
    %5360 = vmatprep.subr.mxu0 0.0
    %v5361 = vand.u32 %v3674, 4294901760
    %5362 = vmatpush1.msra.mxu0 %v5361
    %5363 = vmatprep.subr.mxu0 0.0
    %v5364 = vand.u32 %v3675, 4294901760
    %5365 = vmatpush1.msra.mxu0 %v5364
    %5366 = vmatprep.subr.mxu0 0.0
    %v5367 = vand.u32 %v3676, 4294901760
    %5368 = vmatpush1.msra.mxu0 %v5367
    %5369 = vmatprep.subr.mxu0 0.0
    %v5370 = vand.u32 %v3677, 4294901760
    %5371 = vmatpush1.msra.mxu0 %v5370
    %5372 = vmatprep.subr.mxu0 0.0
    %v5373 = vand.u32 %v3678, 4294901760
    %5374 = vmatpush1.msra.mxu0 %v5373
    %5375 = vmatprep.subr.mxu0 0.0
    %v5376 = vand.u32 %v3679, 4294901760
    %5377 = vmatpush1.msra.mxu0 %v5376
    %5378 = vmatprep.subr.mxu0 0.0
    %v5379 = vand.u32 %v3680, 4294901760
    %5380 = vmatpush1.msra.mxu0 %v5379
    %5381 = vmatprep.subr.mxu0 0.0
    %v5382 = vand.u32 %v3681, 4294901760
    %5383 = vmatpush1.msra.mxu0 %v5382
    %5384 = vmatprep.subr.mxu0 0.0
    %v5385 = vand.u32 %v3682, 4294901760
    %5386 = vmatpush1.msra.mxu0 %v5385
    %5387 = vmatprep.subr.mxu0 0.0
    %v5388 = vand.u32 %v3683, 4294901760
    %5389 = vmatpush1.msra.mxu0 %v5388
    %5390 = vmatprep.subr.mxu0 0.0
    %v5391 = vand.u32 %v3684, 4294901760
    %5392 = vmatpush1.msra.mxu0 %v5391
    %5393 = vmatprep.subr.mxu0 0.0
    %v5394 = vand.u32 %v3685, 4294901760
    %5395 = vmatpush1.msra.mxu0 %v5394
    %5396 = vmatprep.subr.mxu0 0.0
    %v5397 = vand.u32 %v3686, 4294901760
    %5398 = vmatpush1.msra.mxu0 %v5397
    %5399 = vmatprep.subr.mxu0 0.0
    %v5400 = vand.u32 %v3687, 4294901760
    %5401 = vmatpush1.msra.mxu0 %v5400
    %5402 = vmatprep.subr.mxu0 0.0
    %v5403 = vand.u32 %v3688, 4294901760
    %5404 = vmatpush1.msra.mxu0 %v5403
    %v5405 = vand.u32 %v107, 4294901760
    %5406 = vmatprep.mubr.f32.mxu0 %v5405
    %v5407 = vand.u32 %v39, 4294901760
    %5408 = vmatmul.mubr.f32.gmra.mrb[0].mxu0 %v5407
    %v5409 = vpop.f32.mrb[0].mxu0
    %v5410 = vadd.f32 %v5306, %v5409
    %v5411 = vpop.f32.mrb[0].mxu0
    %5412 = vdwg.mxu0
    %v5413 = vmax.f32 %v3623, %v5410
    %s5414 = scalar_lea.vmem [#allocation5], 1536
    %v5415 = vld [vmem:[%s5414] sm:$0xff]
    %v5416 = vld [vmem:[%s5414 + $0x8] sm:$0xff]
    %v5417 = vld [vmem:[%s5414 + $0x10] sm:$0xff]
    %v5418 = vld [vmem:[%s5414 + $0x18] sm:$0xff]
    %v5419 = vld [vmem:[%s5414 + $0x20] sm:$0xff]
    %v5420 = vld [vmem:[%s5414 + $0x28] sm:$0xff]
    %v5421 = vld [vmem:[%s5414 + $0x30] sm:$0xff]
    %v5422 = vld [vmem:[%s5414 + $0x38] sm:$0xff]
    %v5423 = vld [vmem:[%s5414 + $0x40] sm:$0xff]
    %v5424 = vld [vmem:[%s5414 + $0x48] sm:$0xff]
    %v5425 = vld [vmem:[%s5414 + $0x50] sm:$0xff]
    %v5426 = vld [vmem:[%s5414 + $0x58] sm:$0xff]
    %v5427 = vld [vmem:[%s5414 + $0x60] sm:$0xff]
    %v5428 = vld [vmem:[%s5414 + $0x68] sm:$0xff]
    %v5429 = vld [vmem:[%s5414 + $0x70] sm:$0xff]
    %v5430 = vld [vmem:[%s5414 + $0x78] sm:$0xff]
    %v5431 = vld [vmem:[%s5414 + $0x80] sm:$0xff]
    %v5432 = vld [vmem:[%s5414 + $0x88] sm:$0xff]
    %v5433 = vld [vmem:[%s5414 + $0x90] sm:$0xff]
    %v5434 = vld [vmem:[%s5414 + $0x98] sm:$0xff]
    %v5435 = vld [vmem:[%s5414 + $0xa0] sm:$0xff]
    %v5436 = vld [vmem:[%s5414 + $0xa8] sm:$0xff]
    %v5437 = vld [vmem:[%s5414 + $0xb0] sm:$0xff]
    %v5438 = vld [vmem:[%s5414 + $0xb8] sm:$0xff]
    %v5439 = vld [vmem:[%s5414 + $0xc0] sm:$0xff]
    %v5440 = vld [vmem:[%s5414 + $0xc8] sm:$0xff]
    %v5441 = vld [vmem:[%s5414 + $0xd0] sm:$0xff]
    %v5442 = vld [vmem:[%s5414 + $0xd8] sm:$0xff]
    %v5443 = vld [vmem:[%s5414 + $0xe0] sm:$0xff]
    %v5444 = vld [vmem:[%s5414 + $0xe8] sm:$0xff]
    %v5445 = vld [vmem:[%s5414 + $0xf0] sm:$0xff]
    %v5446 = vld [vmem:[%s5414 + $0xf8] sm:$0xff]
    %v5447 = vld [vmem:[%s5414 + $0x100] sm:$0xff]
    %v5448 = vld [vmem:[%s5414 + $0x108] sm:$0xff]
    %v5449 = vld [vmem:[%s5414 + $0x110] sm:$0xff]
    %v5450 = vld [vmem:[%s5414 + $0x118] sm:$0xff]
    %v5451 = vld [vmem:[%s5414 + $0x120] sm:$0xff]
    %v5452 = vld [vmem:[%s5414 + $0x128] sm:$0xff]
    %v5453 = vld [vmem:[%s5414 + $0x130] sm:$0xff]
    %v5454 = vld [vmem:[%s5414 + $0x138] sm:$0xff]
    %v5455 = vld [vmem:[%s5414 + $0x140] sm:$0xff]
    %v5456 = vld [vmem:[%s5414 + $0x148] sm:$0xff]
    %v5457 = vld [vmem:[%s5414 + $0x150] sm:$0xff]
    %v5458 = vld [vmem:[%s5414 + $0x158] sm:$0xff]
    %v5459 = vld [vmem:[%s5414 + $0x160] sm:$0xff]
    %v5460 = vld [vmem:[%s5414 + $0x168] sm:$0xff]
    %v5461 = vld [vmem:[%s5414 + $0x170] sm:$0xff]
    %v5462 = vld [vmem:[%s5414 + $0x178] sm:$0xff]
    %v5463 = vld [vmem:[%s5414 + $0x180] sm:$0xff]
    %v5464 = vld [vmem:[%s5414 + $0x188] sm:$0xff]
    %v5465 = vld [vmem:[%s5414 + $0x190] sm:$0xff]
    %v5466 = vld [vmem:[%s5414 + $0x198] sm:$0xff]
    %v5467 = vld [vmem:[%s5414 + $0x1a0] sm:$0xff]
    %v5468 = vld [vmem:[%s5414 + $0x1a8] sm:$0xff]
    %v5469 = vld [vmem:[%s5414 + $0x1b0] sm:$0xff]
    %v5470 = vld [vmem:[%s5414 + $0x1b8] sm:$0xff]
    %v5471 = vld [vmem:[%s5414 + $0x1c0] sm:$0xff]
    %v5472 = vld [vmem:[%s5414 + $0x1c8] sm:$0xff]
    %v5473 = vld [vmem:[%s5414 + $0x1d0] sm:$0xff]
    %v5474 = vld [vmem:[%s5414 + $0x1d8] sm:$0xff]
    %v5475 = vld [vmem:[%s5414 + $0x1e0] sm:$0xff]
    %v5476 = vld [vmem:[%s5414 + $0x1e8] sm:$0xff]
    %v5477 = vld [vmem:[%s5414 + $0x1f0] sm:$0xff]
    %v5478 = vld [vmem:[%s5414 + $0x1f8] sm:$0xff]
    %5479 = vmatprep.subr.mxu0 0.0
    %v5480 = vand.u32 %v5415, 4294901760
    %5481 = vmatpush1.msra.mxu0 %v5480
    %5482 = vmatprep.subr.mxu0 0.0
    %v5483 = vand.u32 %v5416, 4294901760
    %5484 = vmatpush1.msra.mxu0 %v5483
    %5485 = vmatprep.subr.mxu0 0.0
    %v5486 = vand.u32 %v5417, 4294901760
    %5487 = vmatpush1.msra.mxu0 %v5486
    %5488 = vmatprep.subr.mxu0 0.0
    %v5489 = vand.u32 %v5418, 4294901760
    %5490 = vmatpush1.msra.mxu0 %v5489
    %5491 = vmatprep.subr.mxu0 0.0
    %v5492 = vand.u32 %v5419, 4294901760
    %5493 = vmatpush1.msra.mxu0 %v5492
    %5494 = vmatprep.subr.mxu0 0.0
    %v5495 = vand.u32 %v5420, 4294901760
    %5496 = vmatpush1.msra.mxu0 %v5495
    %5497 = vmatprep.subr.mxu0 0.0
    %v5498 = vand.u32 %v5421, 4294901760
    %5499 = vmatpush1.msra.mxu0 %v5498
    %5500 = vmatprep.subr.mxu0 0.0
    %v5501 = vand.u32 %v5422, 4294901760
    %5502 = vmatpush1.msra.mxu0 %v5501
    %5503 = vmatprep.subr.mxu0 0.0
    %v5504 = vand.u32 %v5423, 4294901760
    %5505 = vmatpush1.msra.mxu0 %v5504
    %5506 = vmatprep.subr.mxu0 0.0
    %v5507 = vand.u32 %v5424, 4294901760
    %5508 = vmatpush1.msra.mxu0 %v5507
    %5509 = vmatprep.subr.mxu0 0.0
    %v5510 = vand.u32 %v5425, 4294901760
    %5511 = vmatpush1.msra.mxu0 %v5510
    %5512 = vmatprep.subr.mxu0 0.0
    %v5513 = vand.u32 %v5426, 4294901760
    %5514 = vmatpush1.msra.mxu0 %v5513
    %5515 = vmatprep.subr.mxu0 0.0
    %v5516 = vand.u32 %v5427, 4294901760
    %5517 = vmatpush1.msra.mxu0 %v5516
    %5518 = vmatprep.subr.mxu0 0.0
    %v5519 = vand.u32 %v5428, 4294901760
    %5520 = vmatpush1.msra.mxu0 %v5519
    %5521 = vmatprep.subr.mxu0 0.0
    %v5522 = vand.u32 %v5429, 4294901760
    %5523 = vmatpush1.msra.mxu0 %v5522
    %5524 = vmatprep.subr.mxu0 0.0
    %v5525 = vand.u32 %v5430, 4294901760
    %5526 = vmatpush1.msra.mxu0 %v5525
    %5527 = vmatprep.subr.mxu0 0.0
    %v5528 = vand.u32 %v5431, 4294901760
    %5529 = vmatpush1.msra.mxu0 %v5528
    %5530 = vmatprep.subr.mxu0 0.0
    %v5531 = vand.u32 %v5432, 4294901760
    %5532 = vmatpush1.msra.mxu0 %v5531
    %5533 = vmatprep.subr.mxu0 0.0
    %v5534 = vand.u32 %v5433, 4294901760
    %5535 = vmatpush1.msra.mxu0 %v5534
    %5536 = vmatprep.subr.mxu0 0.0
    %v5537 = vand.u32 %v5434, 4294901760
    %5538 = vmatpush1.msra.mxu0 %v5537
    %5539 = vmatprep.subr.mxu0 0.0
    %v5540 = vand.u32 %v5435, 4294901760
    %5541 = vmatpush1.msra.mxu0 %v5540
    %5542 = vmatprep.subr.mxu0 0.0
    %v5543 = vand.u32 %v5436, 4294901760
    %5544 = vmatpush1.msra.mxu0 %v5543
    %5545 = vmatprep.subr.mxu0 0.0
    %v5546 = vand.u32 %v5437, 4294901760
    %5547 = vmatpush1.msra.mxu0 %v5546
    %5548 = vmatprep.subr.mxu0 0.0
    %v5549 = vand.u32 %v5438, 4294901760
    %5550 = vmatpush1.msra.mxu0 %v5549
    %5551 = vmatprep.subr.mxu0 0.0
    %v5552 = vand.u32 %v5439, 4294901760
    %5553 = vmatpush1.msra.mxu0 %v5552
    %5554 = vmatprep.subr.mxu0 0.0
    %v5555 = vand.u32 %v5440, 4294901760
    %5556 = vmatpush1.msra.mxu0 %v5555
    %5557 = vmatprep.subr.mxu0 0.0
    %v5558 = vand.u32 %v5441, 4294901760
    %5559 = vmatpush1.msra.mxu0 %v5558
    %5560 = vmatprep.subr.mxu0 0.0
    %v5561 = vand.u32 %v5442, 4294901760
    %5562 = vmatpush1.msra.mxu0 %v5561
    %5563 = vmatprep.subr.mxu0 0.0
    %v5564 = vand.u32 %v5443, 4294901760
    %5565 = vmatpush1.msra.mxu0 %v5564
    %5566 = vmatprep.subr.mxu0 0.0
    %v5567 = vand.u32 %v5444, 4294901760
    %5568 = vmatpush1.msra.mxu0 %v5567
    %5569 = vmatprep.subr.mxu0 0.0
    %v5570 = vand.u32 %v5445, 4294901760
    %5571 = vmatpush1.msra.mxu0 %v5570
    %5572 = vmatprep.subr.mxu0 0.0
    %v5573 = vand.u32 %v5446, 4294901760
    %5574 = vmatpush1.msra.mxu0 %v5573
    %v5575 = vand.u32 %v106, 4294901760
    %v5576 = vsub.f32 %v106, %v5575
    %v5577 = vand.u32 %v5576, 4294901760
    %v5578 = vsub.f32 %v5576, %v5577
    %v5579 = vand.u32 %v5578, 4294901760
    %5580 = vmatprep.mubr.f32.mxu0 %v5579
    %v5581 = vand.u32 %v38, 4294901760
    %v5582 = vsub.f32 %v38, %v5581
    %v5583 = vand.u32 %v5582, 4294901760
    %v5584 = vsub.f32 %v5582, %v5583
    %v5585 = vand.u32 %v5584, 4294901760
    %5586 = vmatmul.mubr.f32.gmra.mrb[0].mxu0 %v5585
    %v5587 = vpop.f32.mrb[0].mxu0
    %v5588 = vadd.f32 0.0, %v5587
    %v5589 = vpop.f32.mrb[0].mxu0
    %5590 = vdwg.mxu0
    %5591 = vmatprep.subr.mxu0 0.0
    %v5592 = vand.u32 %v5415, 4294901760
    %v5593 = vsub.f32 %v5415, %v5592
    %v5594 = vand.u32 %v5593, 4294901760
    %v5595 = vsub.f32 %v5593, %v5594
    %v5596 = vand.u32 %v5595, 4294901760
    %5597 = vmatpush1.msra.mxu0 %v5596
    %5598 = vmatprep.subr.mxu0 0.0
    %v5599 = vand.u32 %v5416, 4294901760
    %v5600 = vsub.f32 %v5416, %v5599
    %v5601 = vand.u32 %v5600, 4294901760
    %v5602 = vsub.f32 %v5600, %v5601
    %v5603 = vand.u32 %v5602, 4294901760
    %5604 = vmatpush1.msra.mxu0 %v5603
    %5605 = vmatprep.subr.mxu0 0.0
    %v5606 = vand.u32 %v5417, 4294901760
    %v5607 = vsub.f32 %v5417, %v5606
    %v5608 = vand.u32 %v5607, 4294901760
    %v5609 = vsub.f32 %v5607, %v5608
    %v5610 = vand.u32 %v5609, 4294901760
    %5611 = vmatpush1.msra.mxu0 %v5610
    %5612 = vmatprep.subr.mxu0 0.0
    %v5613 = vand.u32 %v5418, 4294901760
    %v5614 = vsub.f32 %v5418, %v5613
    %v5615 = vand.u32 %v5614, 4294901760
    %v5616 = vsub.f32 %v5614, %v5615
    %v5617 = vand.u32 %v5616, 4294901760
    %5618 = vmatpush1.msra.mxu0 %v5617
    %5619 = vmatprep.subr.mxu0 0.0
    %v5620 = vand.u32 %v5419, 4294901760
    %v5621 = vsub.f32 %v5419, %v5620
    %v5622 = vand.u32 %v5621, 4294901760
    %v5623 = vsub.f32 %v5621, %v5622
    %v5624 = vand.u32 %v5623, 4294901760
    %5625 = vmatpush1.msra.mxu0 %v5624
    %5626 = vmatprep.subr.mxu0 0.0
    %v5627 = vand.u32 %v5420, 4294901760
    %v5628 = vsub.f32 %v5420, %v5627
    %v5629 = vand.u32 %v5628, 4294901760
    %v5630 = vsub.f32 %v5628, %v5629
    %v5631 = vand.u32 %v5630, 4294901760
    %5632 = vmatpush1.msra.mxu0 %v5631
    %5633 = vmatprep.subr.mxu0 0.0
    %v5634 = vand.u32 %v5421, 4294901760
    %v5635 = vsub.f32 %v5421, %v5634
    %v5636 = vand.u32 %v5635, 4294901760
    %v5637 = vsub.f32 %v5635, %v5636
    %v5638 = vand.u32 %v5637, 4294901760
    %5639 = vmatpush1.msra.mxu0 %v5638
    %5640 = vmatprep.subr.mxu0 0.0
    %v5641 = vand.u32 %v5422, 4294901760
    %v5642 = vsub.f32 %v5422, %v5641
    %v5643 = vand.u32 %v5642, 4294901760
    %v5644 = vsub.f32 %v5642, %v5643
    %v5645 = vand.u32 %v5644, 4294901760
    %5646 = vmatpush1.msra.mxu0 %v5645
    %5647 = vmatprep.subr.mxu0 0.0
    %v5648 = vand.u32 %v5423, 4294901760
    %v5649 = vsub.f32 %v5423, %v5648
    %v5650 = vand.u32 %v5649, 4294901760
    %v5651 = vsub.f32 %v5649, %v5650
    %v5652 = vand.u32 %v5651, 4294901760
    %5653 = vmatpush1.msra.mxu0 %v5652
    %5654 = vmatprep.subr.mxu0 0.0
    %v5655 = vand.u32 %v5424, 4294901760
    %v5656 = vsub.f32 %v5424, %v5655
    %v5657 = vand.u32 %v5656, 4294901760
    %v5658 = vsub.f32 %v5656, %v5657
    %v5659 = vand.u32 %v5658, 4294901760
    %5660 = vmatpush1.msra.mxu0 %v5659
    %5661 = vmatprep.subr.mxu0 0.0
    %v5662 = vand.u32 %v5425, 4294901760
    %v5663 = vsub.f32 %v5425, %v5662
    %v5664 = vand.u32 %v5663, 4294901760
    %v5665 = vsub.f32 %v5663, %v5664
    %v5666 = vand.u32 %v5665, 4294901760
    %5667 = vmatpush1.msra.mxu0 %v5666
    %5668 = vmatprep.subr.mxu0 0.0
    %v5669 = vand.u32 %v5426, 4294901760
    %v5670 = vsub.f32 %v5426, %v5669
    %v5671 = vand.u32 %v5670, 4294901760
    %v5672 = vsub.f32 %v5670, %v5671
    %v5673 = vand.u32 %v5672, 4294901760
    %5674 = vmatpush1.msra.mxu0 %v5673
    %5675 = vmatprep.subr.mxu0 0.0
    %v5676 = vand.u32 %v5427, 4294901760
    %v5677 = vsub.f32 %v5427, %v5676
    %v5678 = vand.u32 %v5677, 4294901760
    %v5679 = vsub.f32 %v5677, %v5678
    %v5680 = vand.u32 %v5679, 4294901760
    %5681 = vmatpush1.msra.mxu0 %v5680
    %5682 = vmatprep.subr.mxu0 0.0
    %v5683 = vand.u32 %v5428, 4294901760
    %v5684 = vsub.f32 %v5428, %v5683
    %v5685 = vand.u32 %v5684, 4294901760
    %v5686 = vsub.f32 %v5684, %v5685
    %v5687 = vand.u32 %v5686, 4294901760
    %5688 = vmatpush1.msra.mxu0 %v5687
    %5689 = vmatprep.subr.mxu0 0.0
    %v5690 = vand.u32 %v5429, 4294901760
    %v5691 = vsub.f32 %v5429, %v5690
    %v5692 = vand.u32 %v5691, 4294901760
    %v5693 = vsub.f32 %v5691, %v5692
    %v5694 = vand.u32 %v5693, 4294901760
    %5695 = vmatpush1.msra.mxu0 %v5694
    %5696 = vmatprep.subr.mxu0 0.0
    %v5697 = vand.u32 %v5430, 4294901760
    %v5698 = vsub.f32 %v5430, %v5697
    %v5699 = vand.u32 %v5698, 4294901760
    %v5700 = vsub.f32 %v5698, %v5699
    %v5701 = vand.u32 %v5700, 4294901760
    %5702 = vmatpush1.msra.mxu0 %v5701
    %5703 = vmatprep.subr.mxu0 0.0
    %v5704 = vand.u32 %v5431, 4294901760
    %v5705 = vsub.f32 %v5431, %v5704
    %v5706 = vand.u32 %v5705, 4294901760
    %v5707 = vsub.f32 %v5705, %v5706
    %v5708 = vand.u32 %v5707, 4294901760
    %5709 = vmatpush1.msra.mxu0 %v5708
    %5710 = vmatprep.subr.mxu0 0.0
    %v5711 = vand.u32 %v5432, 4294901760
    %v5712 = vsub.f32 %v5432, %v5711
    %v5713 = vand.u32 %v5712, 4294901760
    %v5714 = vsub.f32 %v5712, %v5713
    %v5715 = vand.u32 %v5714, 4294901760
    %5716 = vmatpush1.msra.mxu0 %v5715
    %5717 = vmatprep.subr.mxu0 0.0
    %v5718 = vand.u32 %v5433, 4294901760
    %v5719 = vsub.f32 %v5433, %v5718
    %v5720 = vand.u32 %v5719, 4294901760
    %v5721 = vsub.f32 %v5719, %v5720
    %v5722 = vand.u32 %v5721, 4294901760
    %5723 = vmatpush1.msra.mxu0 %v5722
    %5724 = vmatprep.subr.mxu0 0.0
    %v5725 = vand.u32 %v5434, 4294901760
    %v5726 = vsub.f32 %v5434, %v5725
    %v5727 = vand.u32 %v5726, 4294901760
    %v5728 = vsub.f32 %v5726, %v5727
    %v5729 = vand.u32 %v5728, 4294901760
    %5730 = vmatpush1.msra.mxu0 %v5729
    %5731 = vmatprep.subr.mxu0 0.0
    %v5732 = vand.u32 %v5435, 4294901760
    %v5733 = vsub.f32 %v5435, %v5732
    %v5734 = vand.u32 %v5733, 4294901760
    %v5735 = vsub.f32 %v5733, %v5734
    %v5736 = vand.u32 %v5735, 4294901760
    %5737 = vmatpush1.msra.mxu0 %v5736
    %5738 = vmatprep.subr.mxu0 0.0
    %v5739 = vand.u32 %v5436, 4294901760
    %v5740 = vsub.f32 %v5436, %v5739
    %v5741 = vand.u32 %v5740, 4294901760
    %v5742 = vsub.f32 %v5740, %v5741
    %v5743 = vand.u32 %v5742, 4294901760
    %5744 = vmatpush1.msra.mxu0 %v5743
    %5745 = vmatprep.subr.mxu0 0.0
    %v5746 = vand.u32 %v5437, 4294901760
    %v5747 = vsub.f32 %v5437, %v5746
    %v5748 = vand.u32 %v5747, 4294901760
    %v5749 = vsub.f32 %v5747, %v5748
    %v5750 = vand.u32 %v5749, 4294901760
    %5751 = vmatpush1.msra.mxu0 %v5750
    %5752 = vmatprep.subr.mxu0 0.0
    %v5753 = vand.u32 %v5438, 4294901760
    %v5754 = vsub.f32 %v5438, %v5753
    %v5755 = vand.u32 %v5754, 4294901760
    %v5756 = vsub.f32 %v5754, %v5755
    %v5757 = vand.u32 %v5756, 4294901760
    %5758 = vmatpush1.msra.mxu0 %v5757
    %5759 = vmatprep.subr.mxu0 0.0
    %v5760 = vand.u32 %v5439, 4294901760
    %v5761 = vsub.f32 %v5439, %v5760
    %v5762 = vand.u32 %v5761, 4294901760
    %v5763 = vsub.f32 %v5761, %v5762
    %v5764 = vand.u32 %v5763, 4294901760
    %5765 = vmatpush1.msra.mxu0 %v5764
    %5766 = vmatprep.subr.mxu0 0.0
    %v5767 = vand.u32 %v5440, 4294901760
    %v5768 = vsub.f32 %v5440, %v5767
    %v5769 = vand.u32 %v5768, 4294901760
    %v5770 = vsub.f32 %v5768, %v5769
    %v5771 = vand.u32 %v5770, 4294901760
    %5772 = vmatpush1.msra.mxu0 %v5771
    %5773 = vmatprep.subr.mxu0 0.0
    %v5774 = vand.u32 %v5441, 4294901760
    %v5775 = vsub.f32 %v5441, %v5774
    %v5776 = vand.u32 %v5775, 4294901760
    %v5777 = vsub.f32 %v5775, %v5776
    %v5778 = vand.u32 %v5777, 4294901760
    %5779 = vmatpush1.msra.mxu0 %v5778
    %5780 = vmatprep.subr.mxu0 0.0
    %v5781 = vand.u32 %v5442, 4294901760
    %v5782 = vsub.f32 %v5442, %v5781
    %v5783 = vand.u32 %v5782, 4294901760
    %v5784 = vsub.f32 %v5782, %v5783
    %v5785 = vand.u32 %v5784, 4294901760
    %5786 = vmatpush1.msra.mxu0 %v5785
    %5787 = vmatprep.subr.mxu0 0.0
    %v5788 = vand.u32 %v5443, 4294901760
    %v5789 = vsub.f32 %v5443, %v5788
    %v5790 = vand.u32 %v5789, 4294901760
    %v5791 = vsub.f32 %v5789, %v5790
    %v5792 = vand.u32 %v5791, 4294901760
    %5793 = vmatpush1.msra.mxu0 %v5792
    %5794 = vmatprep.subr.mxu0 0.0
    %v5795 = vand.u32 %v5444, 4294901760
    %v5796 = vsub.f32 %v5444, %v5795
    %v5797 = vand.u32 %v5796, 4294901760
    %v5798 = vsub.f32 %v5796, %v5797
    %v5799 = vand.u32 %v5798, 4294901760
    %5800 = vmatpush1.msra.mxu0 %v5799
    %5801 = vmatprep.subr.mxu0 0.0
    %v5802 = vand.u32 %v5445, 4294901760
    %v5803 = vsub.f32 %v5445, %v5802
    %v5804 = vand.u32 %v5803, 4294901760
    %v5805 = vsub.f32 %v5803, %v5804
    %v5806 = vand.u32 %v5805, 4294901760
    %5807 = vmatpush1.msra.mxu0 %v5806
    %5808 = vmatprep.subr.mxu0 0.0
    %v5809 = vand.u32 %v5446, 4294901760
    %v5810 = vsub.f32 %v5446, %v5809
    %v5811 = vand.u32 %v5810, 4294901760
    %v5812 = vsub.f32 %v5810, %v5811
    %v5813 = vand.u32 %v5812, 4294901760
    %5814 = vmatpush1.msra.mxu0 %v5813
    %v5815 = vand.u32 %v106, 4294901760
    %5816 = vmatprep.mubr.f32.mxu0 %v5815
    %v5817 = vand.u32 %v38, 4294901760
    %5818 = vmatmul.mubr.f32.gmra.mrb[0].mxu0 %v5817
    %v5819 = vpop.f32.mrb[0].mxu0
    %v5820 = vadd.f32 %v5588, %v5819
    %v5821 = vpop.f32.mrb[0].mxu0
    %5822 = vdwg.mxu0
    %5823 = vmatprep.subr.mxu0 0.0
    %v5824 = vand.u32 %v5415, 4294901760
    %v5825 = vsub.f32 %v5415, %v5824
    %5826 = vmatpush1.msra.mxu0 %v5825
    %5827 = vmatprep.subr.mxu0 0.0
    %v5828 = vand.u32 %v5416, 4294901760
    %v5829 = vsub.f32 %v5416, %v5828
    %5830 = vmatpush1.msra.mxu0 %v5829
    %5831 = vmatprep.subr.mxu0 0.0
    %v5832 = vand.u32 %v5417, 4294901760
    %v5833 = vsub.f32 %v5417, %v5832
    %5834 = vmatpush1.msra.mxu0 %v5833
    %5835 = vmatprep.subr.mxu0 0.0
    %v5836 = vand.u32 %v5418, 4294901760
    %v5837 = vsub.f32 %v5418, %v5836
    %5838 = vmatpush1.msra.mxu0 %v5837
    %5839 = vmatprep.subr.mxu0 0.0
    %v5840 = vand.u32 %v5419, 4294901760
    %v5841 = vsub.f32 %v5419, %v5840
    %5842 = vmatpush1.msra.mxu0 %v5841
    %5843 = vmatprep.subr.mxu0 0.0
    %v5844 = vand.u32 %v5420, 4294901760
    %v5845 = vsub.f32 %v5420, %v5844
    %5846 = vmatpush1.msra.mxu0 %v5845
    %5847 = vmatprep.subr.mxu0 0.0
    %v5848 = vand.u32 %v5421, 4294901760
    %v5849 = vsub.f32 %v5421, %v5848
    %5850 = vmatpush1.msra.mxu0 %v5849
    %5851 = vmatprep.subr.mxu0 0.0
    %v5852 = vand.u32 %v5422, 4294901760
    %v5853 = vsub.f32 %v5422, %v5852
    %5854 = vmatpush1.msra.mxu0 %v5853
    %5855 = vmatprep.subr.mxu0 0.0
    %v5856 = vand.u32 %v5423, 4294901760
    %v5857 = vsub.f32 %v5423, %v5856
    %5858 = vmatpush1.msra.mxu0 %v5857
    %5859 = vmatprep.subr.mxu0 0.0
    %v5860 = vand.u32 %v5424, 4294901760
    %v5861 = vsub.f32 %v5424, %v5860
    %5862 = vmatpush1.msra.mxu0 %v5861
    %5863 = vmatprep.subr.mxu0 0.0
    %v5864 = vand.u32 %v5425, 4294901760
    %v5865 = vsub.f32 %v5425, %v5864
    %5866 = vmatpush1.msra.mxu0 %v5865
    %5867 = vmatprep.subr.mxu0 0.0
    %v5868 = vand.u32 %v5426, 4294901760
    %v5869 = vsub.f32 %v5426, %v5868
    %5870 = vmatpush1.msra.mxu0 %v5869
    %5871 = vmatprep.subr.mxu0 0.0
    %v5872 = vand.u32 %v5427, 4294901760
    %v5873 = vsub.f32 %v5427, %v5872
    %5874 = vmatpush1.msra.mxu0 %v5873
    %5875 = vmatprep.subr.mxu0 0.0
    %v5876 = vand.u32 %v5428, 4294901760
    %v5877 = vsub.f32 %v5428, %v5876
    %5878 = vmatpush1.msra.mxu0 %v5877
    %5879 = vmatprep.subr.mxu0 0.0
    %v5880 = vand.u32 %v5429, 4294901760
    %v5881 = vsub.f32 %v5429, %v5880
    %5882 = vmatpush1.msra.mxu0 %v5881
    %5883 = vmatprep.subr.mxu0 0.0
    %v5884 = vand.u32 %v5430, 4294901760
    %v5885 = vsub.f32 %v5430, %v5884
    %5886 = vmatpush1.msra.mxu0 %v5885
    %5887 = vmatprep.subr.mxu0 0.0
    %v5888 = vand.u32 %v5431, 4294901760
    %v5889 = vsub.f32 %v5431, %v5888
    %5890 = vmatpush1.msra.mxu0 %v5889
    %5891 = vmatprep.subr.mxu0 0.0
    %v5892 = vand.u32 %v5432, 4294901760
    %v5893 = vsub.f32 %v5432, %v5892
    %5894 = vmatpush1.msra.mxu0 %v5893
    %5895 = vmatprep.subr.mxu0 0.0
    %v5896 = vand.u32 %v5433, 4294901760
    %v5897 = vsub.f32 %v5433, %v5896
    %5898 = vmatpush1.msra.mxu0 %v5897
    %5899 = vmatprep.subr.mxu0 0.0
    %v5900 = vand.u32 %v5434, 4294901760
    %v5901 = vsub.f32 %v5434, %v5900
    %5902 = vmatpush1.msra.mxu0 %v5901
    %5903 = vmatprep.subr.mxu0 0.0
    %v5904 = vand.u32 %v5435, 4294901760
    %v5905 = vsub.f32 %v5435, %v5904
    %5906 = vmatpush1.msra.mxu0 %v5905
    %5907 = vmatprep.subr.mxu0 0.0
    %v5908 = vand.u32 %v5436, 4294901760
    %v5909 = vsub.f32 %v5436, %v5908
    %5910 = vmatpush1.msra.mxu0 %v5909
    %5911 = vmatprep.subr.mxu0 0.0
    %v5912 = vand.u32 %v5437, 4294901760
    %v5913 = vsub.f32 %v5437, %v5912
    %5914 = vmatpush1.msra.mxu0 %v5913
    %5915 = vmatprep.subr.mxu0 0.0
    %v5916 = vand.u32 %v5438, 4294901760
    %v5917 = vsub.f32 %v5438, %v5916
    %5918 = vmatpush1.msra.mxu0 %v5917
    %5919 = vmatprep.subr.mxu0 0.0
    %v5920 = vand.u32 %v5439, 4294901760
    %v5921 = vsub.f32 %v5439, %v5920
    %5922 = vmatpush1.msra.mxu0 %v5921
    %5923 = vmatprep.subr.mxu0 0.0
    %v5924 = vand.u32 %v5440, 4294901760
    %v5925 = vsub.f32 %v5440, %v5924
    %5926 = vmatpush1.msra.mxu0 %v5925
    %5927 = vmatprep.subr.mxu0 0.0
    %v5928 = vand.u32 %v5441, 4294901760
    %v5929 = vsub.f32 %v5441, %v5928
    %5930 = vmatpush1.msra.mxu0 %v5929
    %5931 = vmatprep.subr.mxu0 0.0
    %v5932 = vand.u32 %v5442, 4294901760
    %v5933 = vsub.f32 %v5442, %v5932
    %5934 = vmatpush1.msra.mxu0 %v5933
    %5935 = vmatprep.subr.mxu0 0.0
    %v5936 = vand.u32 %v5443, 4294901760
    %v5937 = vsub.f32 %v5443, %v5936
    %5938 = vmatpush1.msra.mxu0 %v5937
    %5939 = vmatprep.subr.mxu0 0.0
    %v5940 = vand.u32 %v5444, 4294901760
    %v5941 = vsub.f32 %v5444, %v5940
    %5942 = vmatpush1.msra.mxu0 %v5941
    %5943 = vmatprep.subr.mxu0 0.0
    %v5944 = vand.u32 %v5445, 4294901760
    %v5945 = vsub.f32 %v5445, %v5944
    %5946 = vmatpush1.msra.mxu0 %v5945
    %5947 = vmatprep.subr.mxu0 0.0
    %v5948 = vand.u32 %v5446, 4294901760
    %v5949 = vsub.f32 %v5446, %v5948
    %5950 = vmatpush1.msra.mxu0 %v5949
    %v5951 = vand.u32 %v106, 4294901760
    %v5952 = vsub.f32 %v106, %v5951
    %5953 = vmatprep.mubr.f32.mxu0 %v5952
    %v5954 = vand.u32 %v38, 4294901760
    %v5955 = vsub.f32 %v38, %v5954
    %5956 = vmatmul.mubr.f32.gmra.mrb[0].mxu0 %v5955
    %v5957 = vpop.f32.mrb[0].mxu0
    %v5958 = vadd.f32 %v5820, %v5957
    %v5959 = vpop.f32.mrb[0].mxu0
    %5960 = vdwg.mxu0
    %5961 = vmatprep.subr.mxu0 0.0
    %v5962 = vand.u32 %v5415, 4294901760
    %5963 = vmatpush1.msra.mxu0 %v5962
    %5964 = vmatprep.subr.mxu0 0.0
    %v5965 = vand.u32 %v5416, 4294901760
    %5966 = vmatpush1.msra.mxu0 %v5965
    %5967 = vmatprep.subr.mxu0 0.0
    %v5968 = vand.u32 %v5417, 4294901760
    %5969 = vmatpush1.msra.mxu0 %v5968
    %5970 = vmatprep.subr.mxu0 0.0
    %v5971 = vand.u32 %v5418, 4294901760
    %5972 = vmatpush1.msra.mxu0 %v5971
    %5973 = vmatprep.subr.mxu0 0.0
    %v5974 = vand.u32 %v5419, 4294901760
    %5975 = vmatpush1.msra.mxu0 %v5974
    %5976 = vmatprep.subr.mxu0 0.0
    %v5977 = vand.u32 %v5420, 4294901760
    %5978 = vmatpush1.msra.mxu0 %v5977
    %5979 = vmatprep.subr.mxu0 0.0
    %v5980 = vand.u32 %v5421, 4294901760
    %5981 = vmatpush1.msra.mxu0 %v5980
    %5982 = vmatprep.subr.mxu0 0.0
    %v5983 = vand.u32 %v5422, 4294901760
    %5984 = vmatpush1.msra.mxu0 %v5983
    %5985 = vmatprep.subr.mxu0 0.0
    %v5986 = vand.u32 %v5423, 4294901760
    %5987 = vmatpush1.msra.mxu0 %v5986
    %5988 = vmatprep.subr.mxu0 0.0
    %v5989 = vand.u32 %v5424, 4294901760
    %5990 = vmatpush1.msra.mxu0 %v5989
    %5991 = vmatprep.subr.mxu0 0.0
    %v5992 = vand.u32 %v5425, 4294901760
    %5993 = vmatpush1.msra.mxu0 %v5992
    %5994 = vmatprep.subr.mxu0 0.0
    %v5995 = vand.u32 %v5426, 4294901760
    %5996 = vmatpush1.msra.mxu0 %v5995
    %5997 = vmatprep.subr.mxu0 0.0
    %v5998 = vand.u32 %v5427, 4294901760
    %5999 = vmatpush1.msra.mxu0 %v5998
    %6000 = vmatprep.subr.mxu0 0.0
    %v6001 = vand.u32 %v5428, 4294901760
    %6002 = vmatpush1.msra.mxu0 %v6001
    %6003 = vmatprep.subr.mxu0 0.0
    %v6004 = vand.u32 %v5429, 4294901760
    %6005 = vmatpush1.msra.mxu0 %v6004
    %6006 = vmatprep.subr.mxu0 0.0
    %v6007 = vand.u32 %v5430, 4294901760
    %6008 = vmatpush1.msra.mxu0 %v6007
    %6009 = vmatprep.subr.mxu0 0.0
    %v6010 = vand.u32 %v5431, 4294901760
    %6011 = vmatpush1.msra.mxu0 %v6010
    %6012 = vmatprep.subr.mxu0 0.0
    %v6013 = vand.u32 %v5432, 4294901760
    %6014 = vmatpush1.msra.mxu0 %v6013
    %6015 = vmatprep.subr.mxu0 0.0
    %v6016 = vand.u32 %v5433, 4294901760
    %6017 = vmatpush1.msra.mxu0 %v6016
    %6018 = vmatprep.subr.mxu0 0.0
    %v6019 = vand.u32 %v5434, 4294901760
    %6020 = vmatpush1.msra.mxu0 %v6019
    %6021 = vmatprep.subr.mxu0 0.0
    %v6022 = vand.u32 %v5435, 4294901760
    %6023 = vmatpush1.msra.mxu0 %v6022
    %6024 = vmatprep.subr.mxu0 0.0
    %v6025 = vand.u32 %v5436, 4294901760
    %6026 = vmatpush1.msra.mxu0 %v6025
    %6027 = vmatprep.subr.mxu0 0.0
    %v6028 = vand.u32 %v5437, 4294901760
    %6029 = vmatpush1.msra.mxu0 %v6028
    %6030 = vmatprep.subr.mxu0 0.0
    %v6031 = vand.u32 %v5438, 4294901760
    %6032 = vmatpush1.msra.mxu0 %v6031
    %6033 = vmatprep.subr.mxu0 0.0
    %v6034 = vand.u32 %v5439, 4294901760
    %6035 = vmatpush1.msra.mxu0 %v6034
    %6036 = vmatprep.subr.mxu0 0.0
    %v6037 = vand.u32 %v5440, 4294901760
    %6038 = vmatpush1.msra.mxu0 %v6037
    %6039 = vmatprep.subr.mxu0 0.0
    %v6040 = vand.u32 %v5441, 4294901760
    %6041 = vmatpush1.msra.mxu0 %v6040
    %6042 = vmatprep.subr.mxu0 0.0
    %v6043 = vand.u32 %v5442, 4294901760
    %6044 = vmatpush1.msra.mxu0 %v6043
    %6045 = vmatprep.subr.mxu0 0.0
    %v6046 = vand.u32 %v5443, 4294901760
    %6047 = vmatpush1.msra.mxu0 %v6046
    %6048 = vmatprep.subr.mxu0 0.0
    %v6049 = vand.u32 %v5444, 4294901760
    %6050 = vmatpush1.msra.mxu0 %v6049
    %6051 = vmatprep.subr.mxu0 0.0
    %v6052 = vand.u32 %v5445, 4294901760
    %6053 = vmatpush1.msra.mxu0 %v6052
    %6054 = vmatprep.subr.mxu0 0.0
    %v6055 = vand.u32 %v5446, 4294901760
    %6056 = vmatpush1.msra.mxu0 %v6055
    %v6057 = vand.u32 %v106, 4294901760
    %v6058 = vsub.f32 %v106, %v6057
    %v6059 = vand.u32 %v6058, 4294901760
    %6060 = vmatprep.mubr.f32.mxu0 %v6059
    %v6061 = vand.u32 %v38, 4294901760
    %v6062 = vsub.f32 %v38, %v6061
    %v6063 = vand.u32 %v6062, 4294901760
    %6064 = vmatmul.mubr.f32.gmra.mrb[0].mxu0 %v6063
    %v6065 = vpop.f32.mrb[0].mxu0
    %v6066 = vadd.f32 %v5958, %v6065
    %v6067 = vpop.f32.mrb[0].mxu0
    %6068 = vdwg.mxu0
    %6069 = vmatprep.subr.mxu0 0.0
    %v6070 = vand.u32 %v5415, 4294901760
    %v6071 = vsub.f32 %v5415, %v6070
    %v6072 = vand.u32 %v6071, 4294901760
    %6073 = vmatpush1.msra.mxu0 %v6072
    %6074 = vmatprep.subr.mxu0 0.0
    %v6075 = vand.u32 %v5416, 4294901760
    %v6076 = vsub.f32 %v5416, %v6075
    %v6077 = vand.u32 %v6076, 4294901760
    %6078 = vmatpush1.msra.mxu0 %v6077
    %6079 = vmatprep.subr.mxu0 0.0
    %v6080 = vand.u32 %v5417, 4294901760
    %v6081 = vsub.f32 %v5417, %v6080
    %v6082 = vand.u32 %v6081, 4294901760
    %6083 = vmatpush1.msra.mxu0 %v6082
    %6084 = vmatprep.subr.mxu0 0.0
    %v6085 = vand.u32 %v5418, 4294901760
    %v6086 = vsub.f32 %v5418, %v6085
    %v6087 = vand.u32 %v6086, 4294901760
    %6088 = vmatpush1.msra.mxu0 %v6087
    %6089 = vmatprep.subr.mxu0 0.0
    %v6090 = vand.u32 %v5419, 4294901760
    %v6091 = vsub.f32 %v5419, %v6090
    %v6092 = vand.u32 %v6091, 4294901760
    %6093 = vmatpush1.msra.mxu0 %v6092
    %6094 = vmatprep.subr.mxu0 0.0
    %v6095 = vand.u32 %v5420, 4294901760
    %v6096 = vsub.f32 %v5420, %v6095
    %v6097 = vand.u32 %v6096, 4294901760
    %6098 = vmatpush1.msra.mxu0 %v6097
    %6099 = vmatprep.subr.mxu0 0.0
    %v6100 = vand.u32 %v5421, 4294901760
    %v6101 = vsub.f32 %v5421, %v6100
    %v6102 = vand.u32 %v6101, 4294901760
    %6103 = vmatpush1.msra.mxu0 %v6102
    %6104 = vmatprep.subr.mxu0 0.0
    %v6105 = vand.u32 %v5422, 4294901760
    %v6106 = vsub.f32 %v5422, %v6105
    %v6107 = vand.u32 %v6106, 4294901760
    %6108 = vmatpush1.msra.mxu0 %v6107
    %6109 = vmatprep.subr.mxu0 0.0
    %v6110 = vand.u32 %v5423, 4294901760
    %v6111 = vsub.f32 %v5423, %v6110
    %v6112 = vand.u32 %v6111, 4294901760
    %6113 = vmatpush1.msra.mxu0 %v6112
    %6114 = vmatprep.subr.mxu0 0.0
    %v6115 = vand.u32 %v5424, 4294901760
    %v6116 = vsub.f32 %v5424, %v6115
    %v6117 = vand.u32 %v6116, 4294901760
    %6118 = vmatpush1.msra.mxu0 %v6117
    %6119 = vmatprep.subr.mxu0 0.0
    %v6120 = vand.u32 %v5425, 4294901760
    %v6121 = vsub.f32 %v5425, %v6120
    %v6122 = vand.u32 %v6121, 4294901760
    %6123 = vmatpush1.msra.mxu0 %v6122
    %6124 = vmatprep.subr.mxu0 0.0
    %v6125 = vand.u32 %v5426, 4294901760
    %v6126 = vsub.f32 %v5426, %v6125
    %v6127 = vand.u32 %v6126, 4294901760
    %6128 = vmatpush1.msra.mxu0 %v6127
    %6129 = vmatprep.subr.mxu0 0.0
    %v6130 = vand.u32 %v5427, 4294901760
    %v6131 = vsub.f32 %v5427, %v6130
    %v6132 = vand.u32 %v6131, 4294901760
    %6133 = vmatpush1.msra.mxu0 %v6132
    %6134 = vmatprep.subr.mxu0 0.0
    %v6135 = vand.u32 %v5428, 4294901760
    %v6136 = vsub.f32 %v5428, %v6135
    %v6137 = vand.u32 %v6136, 4294901760
    %6138 = vmatpush1.msra.mxu0 %v6137
    %6139 = vmatprep.subr.mxu0 0.0
    %v6140 = vand.u32 %v5429, 4294901760
    %v6141 = vsub.f32 %v5429, %v6140
    %v6142 = vand.u32 %v6141, 4294901760
    %6143 = vmatpush1.msra.mxu0 %v6142
    %6144 = vmatprep.subr.mxu0 0.0
    %v6145 = vand.u32 %v5430, 4294901760
    %v6146 = vsub.f32 %v5430, %v6145
    %v6147 = vand.u32 %v6146, 4294901760
    %6148 = vmatpush1.msra.mxu0 %v6147
    %6149 = vmatprep.subr.mxu0 0.0
    %v6150 = vand.u32 %v5431, 4294901760
    %v6151 = vsub.f32 %v5431, %v6150
    %v6152 = vand.u32 %v6151, 4294901760
    %6153 = vmatpush1.msra.mxu0 %v6152
    %6154 = vmatprep.subr.mxu0 0.0
    %v6155 = vand.u32 %v5432, 4294901760
    %v6156 = vsub.f32 %v5432, %v6155
    %v6157 = vand.u32 %v6156, 4294901760
    %6158 = vmatpush1.msra.mxu0 %v6157
    %6159 = vmatprep.subr.mxu0 0.0
    %v6160 = vand.u32 %v5433, 4294901760
    %v6161 = vsub.f32 %v5433, %v6160
    %v6162 = vand.u32 %v6161, 4294901760
    %6163 = vmatpush1.msra.mxu0 %v6162
    %6164 = vmatprep.subr.mxu0 0.0
    %v6165 = vand.u32 %v5434, 4294901760
    %v6166 = vsub.f32 %v5434, %v6165
    %v6167 = vand.u32 %v6166, 4294901760
    %6168 = vmatpush1.msra.mxu0 %v6167
    %6169 = vmatprep.subr.mxu0 0.0
    %v6170 = vand.u32 %v5435, 4294901760
    %v6171 = vsub.f32 %v5435, %v6170
    %v6172 = vand.u32 %v6171, 4294901760
    %6173 = vmatpush1.msra.mxu0 %v6172
    %6174 = vmatprep.subr.mxu0 0.0
    %v6175 = vand.u32 %v5436, 4294901760
    %v6176 = vsub.f32 %v5436, %v6175
    %v6177 = vand.u32 %v6176, 4294901760
    %6178 = vmatpush1.msra.mxu0 %v6177
    %6179 = vmatprep.subr.mxu0 0.0
    %v6180 = vand.u32 %v5437, 4294901760
    %v6181 = vsub.f32 %v5437, %v6180
    %v6182 = vand.u32 %v6181, 4294901760
    %6183 = vmatpush1.msra.mxu0 %v6182
    %6184 = vmatprep.subr.mxu0 0.0
    %v6185 = vand.u32 %v5438, 4294901760
    %v6186 = vsub.f32 %v5438, %v6185
    %v6187 = vand.u32 %v6186, 4294901760
    %6188 = vmatpush1.msra.mxu0 %v6187
    %6189 = vmatprep.subr.mxu0 0.0
    %v6190 = vand.u32 %v5439, 4294901760
    %v6191 = vsub.f32 %v5439, %v6190
    %v6192 = vand.u32 %v6191, 4294901760
    %6193 = vmatpush1.msra.mxu0 %v6192
    %6194 = vmatprep.subr.mxu0 0.0
    %v6195 = vand.u32 %v5440, 4294901760
    %v6196 = vsub.f32 %v5440, %v6195
    %v6197 = vand.u32 %v6196, 4294901760
    %6198 = vmatpush1.msra.mxu0 %v6197
    %6199 = vmatprep.subr.mxu0 0.0
    %v6200 = vand.u32 %v5441, 4294901760
    %v6201 = vsub.f32 %v5441, %v6200
    %v6202 = vand.u32 %v6201, 4294901760
    %6203 = vmatpush1.msra.mxu0 %v6202
    %6204 = vmatprep.subr.mxu0 0.0
    %v6205 = vand.u32 %v5442, 4294901760
    %v6206 = vsub.f32 %v5442, %v6205
    %v6207 = vand.u32 %v6206, 4294901760
    %6208 = vmatpush1.msra.mxu0 %v6207
    %6209 = vmatprep.subr.mxu0 0.0
    %v6210 = vand.u32 %v5443, 4294901760
    %v6211 = vsub.f32 %v5443, %v6210
    %v6212 = vand.u32 %v6211, 4294901760
    %6213 = vmatpush1.msra.mxu0 %v6212
    %6214 = vmatprep.subr.mxu0 0.0
    %v6215 = vand.u32 %v5444, 4294901760
    %v6216 = vsub.f32 %v5444, %v6215
    %v6217 = vand.u32 %v6216, 4294901760
    %6218 = vmatpush1.msra.mxu0 %v6217
    %6219 = vmatprep.subr.mxu0 0.0
    %v6220 = vand.u32 %v5445, 4294901760
    %v6221 = vsub.f32 %v5445, %v6220
    %v6222 = vand.u32 %v6221, 4294901760
    %6223 = vmatpush1.msra.mxu0 %v6222
    %6224 = vmatprep.subr.mxu0 0.0
    %v6225 = vand.u32 %v5446, 4294901760
    %v6226 = vsub.f32 %v5446, %v6225
    %v6227 = vand.u32 %v6226, 4294901760
    %6228 = vmatpush1.msra.mxu0 %v6227
    %v6229 = vand.u32 %v106, 4294901760
    %6230 = vmatprep.mubr.f32.mxu0 %v6229
    %v6231 = vand.u32 %v38, 4294901760
    %6232 = vmatmul.mubr.f32.gmra.mrb[0].mxu0 %v6231
    %v6233 = vpop.f32.mrb[0].mxu0
    %v6234 = vadd.f32 %v6066, %v6233
    %v6235 = vpop.f32.mrb[0].mxu0
    %6236 = vdwg.mxu0
    %6237 = vmatprep.subr.mxu0 0.0
    %v6238 = vand.u32 %v5415, 4294901760
    %6239 = vmatpush1.msra.mxu0 %v6238
    %6240 = vmatprep.subr.mxu0 0.0
    %v6241 = vand.u32 %v5416, 4294901760
    %6242 = vmatpush1.msra.mxu0 %v6241
    %6243 = vmatprep.subr.mxu0 0.0
    %v6244 = vand.u32 %v5417, 4294901760
    %6245 = vmatpush1.msra.mxu0 %v6244
    %6246 = vmatprep.subr.mxu0 0.0
    %v6247 = vand.u32 %v5418, 4294901760
    %6248 = vmatpush1.msra.mxu0 %v6247
    %6249 = vmatprep.subr.mxu0 0.0
    %v6250 = vand.u32 %v5419, 4294901760
    %6251 = vmatpush1.msra.mxu0 %v6250
    %6252 = vmatprep.subr.mxu0 0.0
    %v6253 = vand.u32 %v5420, 4294901760
    %6254 = vmatpush1.msra.mxu0 %v6253
    %6255 = vmatprep.subr.mxu0 0.0
    %v6256 = vand.u32 %v5421, 4294901760
    %6257 = vmatpush1.msra.mxu0 %v6256
    %6258 = vmatprep.subr.mxu0 0.0
    %v6259 = vand.u32 %v5422, 4294901760
    %6260 = vmatpush1.msra.mxu0 %v6259
    %6261 = vmatprep.subr.mxu0 0.0
    %v6262 = vand.u32 %v5423, 4294901760
    %6263 = vmatpush1.msra.mxu0 %v6262
    %6264 = vmatprep.subr.mxu0 0.0
    %v6265 = vand.u32 %v5424, 4294901760
    %6266 = vmatpush1.msra.mxu0 %v6265
    %6267 = vmatprep.subr.mxu0 0.0
    %v6268 = vand.u32 %v5425, 4294901760
    %6269 = vmatpush1.msra.mxu0 %v6268
    %6270 = vmatprep.subr.mxu0 0.0
    %v6271 = vand.u32 %v5426, 4294901760
    %6272 = vmatpush1.msra.mxu0 %v6271
    %6273 = vmatprep.subr.mxu0 0.0
    %v6274 = vand.u32 %v5427, 4294901760
    %6275 = vmatpush1.msra.mxu0 %v6274
    %6276 = vmatprep.subr.mxu0 0.0
    %v6277 = vand.u32 %v5428, 4294901760
    %6278 = vmatpush1.msra.mxu0 %v6277
    %6279 = vmatprep.subr.mxu0 0.0
    %v6280 = vand.u32 %v5429, 4294901760
    %6281 = vmatpush1.msra.mxu0 %v6280
    %6282 = vmatprep.subr.mxu0 0.0
    %v6283 = vand.u32 %v5430, 4294901760
    %6284 = vmatpush1.msra.mxu0 %v6283
    %6285 = vmatprep.subr.mxu0 0.0
    %v6286 = vand.u32 %v5431, 4294901760
    %6287 = vmatpush1.msra.mxu0 %v6286
    %6288 = vmatprep.subr.mxu0 0.0
    %v6289 = vand.u32 %v5432, 4294901760
    %6290 = vmatpush1.msra.mxu0 %v6289
    %6291 = vmatprep.subr.mxu0 0.0
    %v6292 = vand.u32 %v5433, 4294901760
    %6293 = vmatpush1.msra.mxu0 %v6292
    %6294 = vmatprep.subr.mxu0 0.0
    %v6295 = vand.u32 %v5434, 4294901760
    %6296 = vmatpush1.msra.mxu0 %v6295
    %6297 = vmatprep.subr.mxu0 0.0
    %v6298 = vand.u32 %v5435, 4294901760
    %6299 = vmatpush1.msra.mxu0 %v6298
    %6300 = vmatprep.subr.mxu0 0.0
    %v6301 = vand.u32 %v5436, 4294901760
    %6302 = vmatpush1.msra.mxu0 %v6301
    %6303 = vmatprep.subr.mxu0 0.0
    %v6304 = vand.u32 %v5437, 4294901760
    %6305 = vmatpush1.msra.mxu0 %v6304
    %6306 = vmatprep.subr.mxu0 0.0
    %v6307 = vand.u32 %v5438, 4294901760
    %6308 = vmatpush1.msra.mxu0 %v6307
    %6309 = vmatprep.subr.mxu0 0.0
    %v6310 = vand.u32 %v5439, 4294901760
    %6311 = vmatpush1.msra.mxu0 %v6310
    %6312 = vmatprep.subr.mxu0 0.0
    %v6313 = vand.u32 %v5440, 4294901760
    %6314 = vmatpush1.msra.mxu0 %v6313
    %6315 = vmatprep.subr.mxu0 0.0
    %v6316 = vand.u32 %v5441, 4294901760
    %6317 = vmatpush1.msra.mxu0 %v6316
    %6318 = vmatprep.subr.mxu0 0.0
    %v6319 = vand.u32 %v5442, 4294901760
    %6320 = vmatpush1.msra.mxu0 %v6319
    %6321 = vmatprep.subr.mxu0 0.0
    %v6322 = vand.u32 %v5443, 4294901760
    %6323 = vmatpush1.msra.mxu0 %v6322
    %6324 = vmatprep.subr.mxu0 0.0
    %v6325 = vand.u32 %v5444, 4294901760
    %6326 = vmatpush1.msra.mxu0 %v6325
    %6327 = vmatprep.subr.mxu0 0.0
    %v6328 = vand.u32 %v5445, 4294901760
    %6329 = vmatpush1.msra.mxu0 %v6328
    %6330 = vmatprep.subr.mxu0 0.0
    %v6331 = vand.u32 %v5446, 4294901760
    %6332 = vmatpush1.msra.mxu0 %v6331
    %v6333 = vand.u32 %v106, 4294901760
    %6334 = vmatprep.mubr.f32.mxu0 %v6333
    %v6335 = vand.u32 %v38, 4294901760
    %6336 = vmatmul.mubr.f32.gmra.mrb[0].mxu0 %v6335
    %v6337 = vpop.f32.mrb[0].mxu0
    %v6338 = vadd.f32 %v6234, %v6337
    %v6339 = vpop.f32.mrb[0].mxu0
    %6340 = vdwg.mxu0
    %6341 = vmatprep.subr.mxu0 0.0
    %v6342 = vand.u32 %v5447, 4294901760
    %6343 = vmatpush1.msra.mxu0 %v6342
    %6344 = vmatprep.subr.mxu0 0.0
    %v6345 = vand.u32 %v5448, 4294901760
    %6346 = vmatpush1.msra.mxu0 %v6345
    %6347 = vmatprep.subr.mxu0 0.0
    %v6348 = vand.u32 %v5449, 4294901760
    %6349 = vmatpush1.msra.mxu0 %v6348
    %6350 = vmatprep.subr.mxu0 0.0
    %v6351 = vand.u32 %v5450, 4294901760
    %6352 = vmatpush1.msra.mxu0 %v6351
    %6353 = vmatprep.subr.mxu0 0.0
    %v6354 = vand.u32 %v5451, 4294901760
    %6355 = vmatpush1.msra.mxu0 %v6354
    %6356 = vmatprep.subr.mxu0 0.0
    %v6357 = vand.u32 %v5452, 4294901760
    %6358 = vmatpush1.msra.mxu0 %v6357
    %6359 = vmatprep.subr.mxu0 0.0
    %v6360 = vand.u32 %v5453, 4294901760
    %6361 = vmatpush1.msra.mxu0 %v6360
    %6362 = vmatprep.subr.mxu0 0.0
    %v6363 = vand.u32 %v5454, 4294901760
    %6364 = vmatpush1.msra.mxu0 %v6363
    %6365 = vmatprep.subr.mxu0 0.0
    %v6366 = vand.u32 %v5455, 4294901760
    %6367 = vmatpush1.msra.mxu0 %v6366
    %6368 = vmatprep.subr.mxu0 0.0
    %v6369 = vand.u32 %v5456, 4294901760
    %6370 = vmatpush1.msra.mxu0 %v6369
    %6371 = vmatprep.subr.mxu0 0.0
    %v6372 = vand.u32 %v5457, 4294901760
    %6373 = vmatpush1.msra.mxu0 %v6372
    %6374 = vmatprep.subr.mxu0 0.0
    %v6375 = vand.u32 %v5458, 4294901760
    %6376 = vmatpush1.msra.mxu0 %v6375
    %6377 = vmatprep.subr.mxu0 0.0
    %v6378 = vand.u32 %v5459, 4294901760
    %6379 = vmatpush1.msra.mxu0 %v6378
    %6380 = vmatprep.subr.mxu0 0.0
    %v6381 = vand.u32 %v5460, 4294901760
    %6382 = vmatpush1.msra.mxu0 %v6381
    %6383 = vmatprep.subr.mxu0 0.0
    %v6384 = vand.u32 %v5461, 4294901760
    %6385 = vmatpush1.msra.mxu0 %v6384
    %6386 = vmatprep.subr.mxu0 0.0
    %v6387 = vand.u32 %v5462, 4294901760
    %6388 = vmatpush1.msra.mxu0 %v6387
    %6389 = vmatprep.subr.mxu0 0.0
    %v6390 = vand.u32 %v5463, 4294901760
    %6391 = vmatpush1.msra.mxu0 %v6390
    %6392 = vmatprep.subr.mxu0 0.0
    %v6393 = vand.u32 %v5464, 4294901760
    %6394 = vmatpush1.msra.mxu0 %v6393
    %6395 = vmatprep.subr.mxu0 0.0
    %v6396 = vand.u32 %v5465, 4294901760
    %6397 = vmatpush1.msra.mxu0 %v6396
    %6398 = vmatprep.subr.mxu0 0.0
    %v6399 = vand.u32 %v5466, 4294901760
    %6400 = vmatpush1.msra.mxu0 %v6399
    %6401 = vmatprep.subr.mxu0 0.0
    %v6402 = vand.u32 %v5467, 4294901760
    %6403 = vmatpush1.msra.mxu0 %v6402
    %6404 = vmatprep.subr.mxu0 0.0
    %v6405 = vand.u32 %v5468, 4294901760
    %6406 = vmatpush1.msra.mxu0 %v6405
    %6407 = vmatprep.subr.mxu0 0.0
    %v6408 = vand.u32 %v5469, 4294901760
    %6409 = vmatpush1.msra.mxu0 %v6408
    %6410 = vmatprep.subr.mxu0 0.0
    %v6411 = vand.u32 %v5470, 4294901760
    %6412 = vmatpush1.msra.mxu0 %v6411
    %6413 = vmatprep.subr.mxu0 0.0
    %v6414 = vand.u32 %v5471, 4294901760
    %6415 = vmatpush1.msra.mxu0 %v6414
    %6416 = vmatprep.subr.mxu0 0.0
    %v6417 = vand.u32 %v5472, 4294901760
    %6418 = vmatpush1.msra.mxu0 %v6417
    %6419 = vmatprep.subr.mxu0 0.0
    %v6420 = vand.u32 %v5473, 4294901760
    %6421 = vmatpush1.msra.mxu0 %v6420
    %6422 = vmatprep.subr.mxu0 0.0
    %v6423 = vand.u32 %v5474, 4294901760
    %6424 = vmatpush1.msra.mxu0 %v6423
    %6425 = vmatprep.subr.mxu0 0.0
    %v6426 = vand.u32 %v5475, 4294901760
    %6427 = vmatpush1.msra.mxu0 %v6426
    %6428 = vmatprep.subr.mxu0 0.0
    %v6429 = vand.u32 %v5476, 4294901760
    %6430 = vmatpush1.msra.mxu0 %v6429
    %6431 = vmatprep.subr.mxu0 0.0
    %v6432 = vand.u32 %v5477, 4294901760
    %6433 = vmatpush1.msra.mxu0 %v6432
    %6434 = vmatprep.subr.mxu0 0.0
    %v6435 = vand.u32 %v5478, 4294901760
    %6436 = vmatpush1.msra.mxu0 %v6435
    %v6437 = vand.u32 %v107, 4294901760
    %v6438 = vsub.f32 %v107, %v6437
    %v6439 = vand.u32 %v6438, 4294901760
    %v6440 = vsub.f32 %v6438, %v6439
    %v6441 = vand.u32 %v6440, 4294901760
    %6442 = vmatprep.mubr.f32.mxu0 %v6441
    %v6443 = vand.u32 %v39, 4294901760
    %v6444 = vsub.f32 %v39, %v6443
    %v6445 = vand.u32 %v6444, 4294901760
    %v6446 = vsub.f32 %v6444, %v6445
    %v6447 = vand.u32 %v6446, 4294901760
    %6448 = vmatmul.mubr.f32.gmra.mrb[0].mxu0 %v6447
    %v6449 = vpop.f32.mrb[0].mxu0
    %v6450 = vadd.f32 %v6338, %v6449
    %v6451 = vpop.f32.mrb[0].mxu0
    %6452 = vdwg.mxu0
    %6453 = vmatprep.subr.mxu0 0.0
    %v6454 = vand.u32 %v5447, 4294901760
    %v6455 = vsub.f32 %v5447, %v6454
    %v6456 = vand.u32 %v6455, 4294901760
    %v6457 = vsub.f32 %v6455, %v6456
    %v6458 = vand.u32 %v6457, 4294901760
    %6459 = vmatpush1.msra.mxu0 %v6458
    %6460 = vmatprep.subr.mxu0 0.0
    %v6461 = vand.u32 %v5448, 4294901760
    %v6462 = vsub.f32 %v5448, %v6461
    %v6463 = vand.u32 %v6462, 4294901760
    %v6464 = vsub.f32 %v6462, %v6463
    %v6465 = vand.u32 %v6464, 4294901760
    %6466 = vmatpush1.msra.mxu0 %v6465
    %6467 = vmatprep.subr.mxu0 0.0
    %v6468 = vand.u32 %v5449, 4294901760
    %v6469 = vsub.f32 %v5449, %v6468
    %v6470 = vand.u32 %v6469, 4294901760
    %v6471 = vsub.f32 %v6469, %v6470
    %v6472 = vand.u32 %v6471, 4294901760
    %6473 = vmatpush1.msra.mxu0 %v6472
    %6474 = vmatprep.subr.mxu0 0.0
    %v6475 = vand.u32 %v5450, 4294901760
    %v6476 = vsub.f32 %v5450, %v6475
    %v6477 = vand.u32 %v6476, 4294901760
    %v6478 = vsub.f32 %v6476, %v6477
    %v6479 = vand.u32 %v6478, 4294901760
    %6480 = vmatpush1.msra.mxu0 %v6479
    %6481 = vmatprep.subr.mxu0 0.0
    %v6482 = vand.u32 %v5451, 4294901760
    %v6483 = vsub.f32 %v5451, %v6482
    %v6484 = vand.u32 %v6483, 4294901760
    %v6485 = vsub.f32 %v6483, %v6484
    %v6486 = vand.u32 %v6485, 4294901760
    %6487 = vmatpush1.msra.mxu0 %v6486
    %6488 = vmatprep.subr.mxu0 0.0
    %v6489 = vand.u32 %v5452, 4294901760
    %v6490 = vsub.f32 %v5452, %v6489
    %v6491 = vand.u32 %v6490, 4294901760
    %v6492 = vsub.f32 %v6490, %v6491
    %v6493 = vand.u32 %v6492, 4294901760
    %6494 = vmatpush1.msra.mxu0 %v6493
    %6495 = vmatprep.subr.mxu0 0.0
    %v6496 = vand.u32 %v5453, 4294901760
    %v6497 = vsub.f32 %v5453, %v6496
    %v6498 = vand.u32 %v6497, 4294901760
    %v6499 = vsub.f32 %v6497, %v6498
    %v6500 = vand.u32 %v6499, 4294901760
    %6501 = vmatpush1.msra.mxu0 %v6500
    %6502 = vmatprep.subr.mxu0 0.0
    %v6503 = vand.u32 %v5454, 4294901760
    %v6504 = vsub.f32 %v5454, %v6503
    %v6505 = vand.u32 %v6504, 4294901760
    %v6506 = vsub.f32 %v6504, %v6505
    %v6507 = vand.u32 %v6506, 4294901760
    %6508 = vmatpush1.msra.mxu0 %v6507
    %6509 = vmatprep.subr.mxu0 0.0
    %v6510 = vand.u32 %v5455, 4294901760
    %v6511 = vsub.f32 %v5455, %v6510
    %v6512 = vand.u32 %v6511, 4294901760
    %v6513 = vsub.f32 %v6511, %v6512
    %v6514 = vand.u32 %v6513, 4294901760
    %6515 = vmatpush1.msra.mxu0 %v6514
    %6516 = vmatprep.subr.mxu0 0.0
    %v6517 = vand.u32 %v5456, 4294901760
    %v6518 = vsub.f32 %v5456, %v6517
    %v6519 = vand.u32 %v6518, 4294901760
    %v6520 = vsub.f32 %v6518, %v6519
    %v6521 = vand.u32 %v6520, 4294901760
    %6522 = vmatpush1.msra.mxu0 %v6521
    %6523 = vmatprep.subr.mxu0 0.0
    %v6524 = vand.u32 %v5457, 4294901760
    %v6525 = vsub.f32 %v5457, %v6524
    %v6526 = vand.u32 %v6525, 4294901760
    %v6527 = vsub.f32 %v6525, %v6526
    %v6528 = vand.u32 %v6527, 4294901760
    %6529 = vmatpush1.msra.mxu0 %v6528
    %6530 = vmatprep.subr.mxu0 0.0
    %v6531 = vand.u32 %v5458, 4294901760
    %v6532 = vsub.f32 %v5458, %v6531
    %v6533 = vand.u32 %v6532, 4294901760
    %v6534 = vsub.f32 %v6532, %v6533
    %v6535 = vand.u32 %v6534, 4294901760
    %6536 = vmatpush1.msra.mxu0 %v6535
    %6537 = vmatprep.subr.mxu0 0.0
    %v6538 = vand.u32 %v5459, 4294901760
    %v6539 = vsub.f32 %v5459, %v6538
    %v6540 = vand.u32 %v6539, 4294901760
    %v6541 = vsub.f32 %v6539, %v6540
    %v6542 = vand.u32 %v6541, 4294901760
    %6543 = vmatpush1.msra.mxu0 %v6542
    %6544 = vmatprep.subr.mxu0 0.0
    %v6545 = vand.u32 %v5460, 4294901760
    %v6546 = vsub.f32 %v5460, %v6545
    %v6547 = vand.u32 %v6546, 4294901760
    %v6548 = vsub.f32 %v6546, %v6547
    %v6549 = vand.u32 %v6548, 4294901760
    %6550 = vmatpush1.msra.mxu0 %v6549
    %6551 = vmatprep.subr.mxu0 0.0
    %v6552 = vand.u32 %v5461, 4294901760
    %v6553 = vsub.f32 %v5461, %v6552
    %v6554 = vand.u32 %v6553, 4294901760
    %v6555 = vsub.f32 %v6553, %v6554
    %v6556 = vand.u32 %v6555, 4294901760
    %6557 = vmatpush1.msra.mxu0 %v6556
    %6558 = vmatprep.subr.mxu0 0.0
    %v6559 = vand.u32 %v5462, 4294901760
    %v6560 = vsub.f32 %v5462, %v6559
    %v6561 = vand.u32 %v6560, 4294901760
    %v6562 = vsub.f32 %v6560, %v6561
    %v6563 = vand.u32 %v6562, 4294901760
    %6564 = vmatpush1.msra.mxu0 %v6563
    %6565 = vmatprep.subr.mxu0 0.0
    %v6566 = vand.u32 %v5463, 4294901760
    %v6567 = vsub.f32 %v5463, %v6566
    %v6568 = vand.u32 %v6567, 4294901760
    %v6569 = vsub.f32 %v6567, %v6568
    %v6570 = vand.u32 %v6569, 4294901760
    %6571 = vmatpush1.msra.mxu0 %v6570
    %6572 = vmatprep.subr.mxu0 0.0
    %v6573 = vand.u32 %v5464, 4294901760
    %v6574 = vsub.f32 %v5464, %v6573
    %v6575 = vand.u32 %v6574, 4294901760
    %v6576 = vsub.f32 %v6574, %v6575
    %v6577 = vand.u32 %v6576, 4294901760
    %6578 = vmatpush1.msra.mxu0 %v6577
    %6579 = vmatprep.subr.mxu0 0.0
    %v6580 = vand.u32 %v5465, 4294901760
    %v6581 = vsub.f32 %v5465, %v6580
    %v6582 = vand.u32 %v6581, 4294901760
    %v6583 = vsub.f32 %v6581, %v6582
    %v6584 = vand.u32 %v6583, 4294901760
    %6585 = vmatpush1.msra.mxu0 %v6584
    %6586 = vmatprep.subr.mxu0 0.0
    %v6587 = vand.u32 %v5466, 4294901760
    %v6588 = vsub.f32 %v5466, %v6587
    %v6589 = vand.u32 %v6588, 4294901760
    %v6590 = vsub.f32 %v6588, %v6589
    %v6591 = vand.u32 %v6590, 4294901760
    %6592 = vmatpush1.msra.mxu0 %v6591
    %6593 = vmatprep.subr.mxu0 0.0
    %v6594 = vand.u32 %v5467, 4294901760
    %v6595 = vsub.f32 %v5467, %v6594
    %v6596 = vand.u32 %v6595, 4294901760
    %v6597 = vsub.f32 %v6595, %v6596
    %v6598 = vand.u32 %v6597, 4294901760
    %6599 = vmatpush1.msra.mxu0 %v6598
    %6600 = vmatprep.subr.mxu0 0.0
    %v6601 = vand.u32 %v5468, 4294901760
    %v6602 = vsub.f32 %v5468, %v6601
    %v6603 = vand.u32 %v6602, 4294901760
    %v6604 = vsub.f32 %v6602, %v6603
    %v6605 = vand.u32 %v6604, 4294901760
    %6606 = vmatpush1.msra.mxu0 %v6605
    %6607 = vmatprep.subr.mxu0 0.0
    %v6608 = vand.u32 %v5469, 4294901760
    %v6609 = vsub.f32 %v5469, %v6608
    %v6610 = vand.u32 %v6609, 4294901760
    %v6611 = vsub.f32 %v6609, %v6610
    %v6612 = vand.u32 %v6611, 4294901760
    %6613 = vmatpush1.msra.mxu0 %v6612
    %6614 = vmatprep.subr.mxu0 0.0
    %v6615 = vand.u32 %v5470, 4294901760
    %v6616 = vsub.f32 %v5470, %v6615
    %v6617 = vand.u32 %v6616, 4294901760
    %v6618 = vsub.f32 %v6616, %v6617
    %v6619 = vand.u32 %v6618, 4294901760
    %6620 = vmatpush1.msra.mxu0 %v6619
    %6621 = vmatprep.subr.mxu0 0.0
    %v6622 = vand.u32 %v5471, 4294901760
    %v6623 = vsub.f32 %v5471, %v6622
    %v6624 = vand.u32 %v6623, 4294901760
    %v6625 = vsub.f32 %v6623, %v6624
    %v6626 = vand.u32 %v6625, 4294901760
    %6627 = vmatpush1.msra.mxu0 %v6626
    %6628 = vmatprep.subr.mxu0 0.0
    %v6629 = vand.u32 %v5472, 4294901760
    %v6630 = vsub.f32 %v5472, %v6629
    %v6631 = vand.u32 %v6630, 4294901760
    %v6632 = vsub.f32 %v6630, %v6631
    %v6633 = vand.u32 %v6632, 4294901760
    %6634 = vmatpush1.msra.mxu0 %v6633
    %6635 = vmatprep.subr.mxu0 0.0
    %v6636 = vand.u32 %v5473, 4294901760
    %v6637 = vsub.f32 %v5473, %v6636
    %v6638 = vand.u32 %v6637, 4294901760
    %v6639 = vsub.f32 %v6637, %v6638
    %v6640 = vand.u32 %v6639, 4294901760
    %6641 = vmatpush1.msra.mxu0 %v6640
    %6642 = vmatprep.subr.mxu0 0.0
    %v6643 = vand.u32 %v5474, 4294901760
    %v6644 = vsub.f32 %v5474, %v6643
    %v6645 = vand.u32 %v6644, 4294901760
    %v6646 = vsub.f32 %v6644, %v6645
    %v6647 = vand.u32 %v6646, 4294901760
    %6648 = vmatpush1.msra.mxu0 %v6647
    %6649 = vmatprep.subr.mxu0 0.0
    %v6650 = vand.u32 %v5475, 4294901760
    %v6651 = vsub.f32 %v5475, %v6650
    %v6652 = vand.u32 %v6651, 4294901760
    %v6653 = vsub.f32 %v6651, %v6652
    %v6654 = vand.u32 %v6653, 4294901760
    %6655 = vmatpush1.msra.mxu0 %v6654
    %6656 = vmatprep.subr.mxu0 0.0
    %v6657 = vand.u32 %v5476, 4294901760
    %v6658 = vsub.f32 %v5476, %v6657
    %v6659 = vand.u32 %v6658, 4294901760
    %v6660 = vsub.f32 %v6658, %v6659
    %v6661 = vand.u32 %v6660, 4294901760
    %6662 = vmatpush1.msra.mxu0 %v6661
    %6663 = vmatprep.subr.mxu0 0.0
    %v6664 = vand.u32 %v5477, 4294901760
    %v6665 = vsub.f32 %v5477, %v6664
    %v6666 = vand.u32 %v6665, 4294901760
    %v6667 = vsub.f32 %v6665, %v6666
    %v6668 = vand.u32 %v6667, 4294901760
    %6669 = vmatpush1.msra.mxu0 %v6668
    %6670 = vmatprep.subr.mxu0 0.0
    %v6671 = vand.u32 %v5478, 4294901760
    %v6672 = vsub.f32 %v5478, %v6671
    %v6673 = vand.u32 %v6672, 4294901760
    %v6674 = vsub.f32 %v6672, %v6673
    %v6675 = vand.u32 %v6674, 4294901760
    %6676 = vmatpush1.msra.mxu0 %v6675
    %v6677 = vand.u32 %v107, 4294901760
    %6678 = vmatprep.mubr.f32.mxu0 %v6677
    %v6679 = vand.u32 %v39, 4294901760
    %6680 = vmatmul.mubr.f32.gmra.mrb[0].mxu0 %v6679
    %v6681 = vpop.f32.mrb[0].mxu0
    %v6682 = vadd.f32 %v6450, %v6681
    %v6683 = vpop.f32.mrb[0].mxu0
    %6684 = vdwg.mxu0
    %6685 = vmatprep.subr.mxu0 0.0
    %v6686 = vand.u32 %v5447, 4294901760
    %v6687 = vsub.f32 %v5447, %v6686
    %6688 = vmatpush1.msra.mxu0 %v6687
    %6689 = vmatprep.subr.mxu0 0.0
    %v6690 = vand.u32 %v5448, 4294901760
    %v6691 = vsub.f32 %v5448, %v6690
    %6692 = vmatpush1.msra.mxu0 %v6691
    %6693 = vmatprep.subr.mxu0 0.0
    %v6694 = vand.u32 %v5449, 4294901760
    %v6695 = vsub.f32 %v5449, %v6694
    %6696 = vmatpush1.msra.mxu0 %v6695
    %6697 = vmatprep.subr.mxu0 0.0
    %v6698 = vand.u32 %v5450, 4294901760
    %v6699 = vsub.f32 %v5450, %v6698
    %6700 = vmatpush1.msra.mxu0 %v6699
    %6701 = vmatprep.subr.mxu0 0.0
    %v6702 = vand.u32 %v5451, 4294901760
    %v6703 = vsub.f32 %v5451, %v6702
    %6704 = vmatpush1.msra.mxu0 %v6703
    %6705 = vmatprep.subr.mxu0 0.0
    %v6706 = vand.u32 %v5452, 4294901760
    %v6707 = vsub.f32 %v5452, %v6706
    %6708 = vmatpush1.msra.mxu0 %v6707
    %6709 = vmatprep.subr.mxu0 0.0
    %v6710 = vand.u32 %v5453, 4294901760
    %v6711 = vsub.f32 %v5453, %v6710
    %6712 = vmatpush1.msra.mxu0 %v6711
    %6713 = vmatprep.subr.mxu0 0.0
    %v6714 = vand.u32 %v5454, 4294901760
    %v6715 = vsub.f32 %v5454, %v6714
    %6716 = vmatpush1.msra.mxu0 %v6715
    %6717 = vmatprep.subr.mxu0 0.0
    %v6718 = vand.u32 %v5455, 4294901760
    %v6719 = vsub.f32 %v5455, %v6718
    %6720 = vmatpush1.msra.mxu0 %v6719
    %6721 = vmatprep.subr.mxu0 0.0
    %v6722 = vand.u32 %v5456, 4294901760
    %v6723 = vsub.f32 %v5456, %v6722
    %6724 = vmatpush1.msra.mxu0 %v6723
    %6725 = vmatprep.subr.mxu0 0.0
    %v6726 = vand.u32 %v5457, 4294901760
    %v6727 = vsub.f32 %v5457, %v6726
    %6728 = vmatpush1.msra.mxu0 %v6727
    %6729 = vmatprep.subr.mxu0 0.0
    %v6730 = vand.u32 %v5458, 4294901760
    %v6731 = vsub.f32 %v5458, %v6730
    %6732 = vmatpush1.msra.mxu0 %v6731
    %6733 = vmatprep.subr.mxu0 0.0
    %v6734 = vand.u32 %v5459, 4294901760
    %v6735 = vsub.f32 %v5459, %v6734
    %6736 = vmatpush1.msra.mxu0 %v6735
    %6737 = vmatprep.subr.mxu0 0.0
    %v6738 = vand.u32 %v5460, 4294901760
    %v6739 = vsub.f32 %v5460, %v6738
    %6740 = vmatpush1.msra.mxu0 %v6739
    %6741 = vmatprep.subr.mxu0 0.0
    %v6742 = vand.u32 %v5461, 4294901760
    %v6743 = vsub.f32 %v5461, %v6742
    %6744 = vmatpush1.msra.mxu0 %v6743
    %6745 = vmatprep.subr.mxu0 0.0
    %v6746 = vand.u32 %v5462, 4294901760
    %v6747 = vsub.f32 %v5462, %v6746
    %6748 = vmatpush1.msra.mxu0 %v6747
    %6749 = vmatprep.subr.mxu0 0.0
    %v6750 = vand.u32 %v5463, 4294901760
    %v6751 = vsub.f32 %v5463, %v6750
    %6752 = vmatpush1.msra.mxu0 %v6751
    %6753 = vmatprep.subr.mxu0 0.0
    %v6754 = vand.u32 %v5464, 4294901760
    %v6755 = vsub.f32 %v5464, %v6754
    %6756 = vmatpush1.msra.mxu0 %v6755
    %6757 = vmatprep.subr.mxu0 0.0
    %v6758 = vand.u32 %v5465, 4294901760
    %v6759 = vsub.f32 %v5465, %v6758
    %6760 = vmatpush1.msra.mxu0 %v6759
    %6761 = vmatprep.subr.mxu0 0.0
    %v6762 = vand.u32 %v5466, 4294901760
    %v6763 = vsub.f32 %v5466, %v6762
    %6764 = vmatpush1.msra.mxu0 %v6763
    %6765 = vmatprep.subr.mxu0 0.0
    %v6766 = vand.u32 %v5467, 4294901760
    %v6767 = vsub.f32 %v5467, %v6766
    %6768 = vmatpush1.msra.mxu0 %v6767
    %6769 = vmatprep.subr.mxu0 0.0
    %v6770 = vand.u32 %v5468, 4294901760
    %v6771 = vsub.f32 %v5468, %v6770
    %6772 = vmatpush1.msra.mxu0 %v6771
    %6773 = vmatprep.subr.mxu0 0.0
    %v6774 = vand.u32 %v5469, 4294901760
    %v6775 = vsub.f32 %v5469, %v6774
    %6776 = vmatpush1.msra.mxu0 %v6775
    %6777 = vmatprep.subr.mxu0 0.0
    %v6778 = vand.u32 %v5470, 4294901760
    %v6779 = vsub.f32 %v5470, %v6778
    %6780 = vmatpush1.msra.mxu0 %v6779
    %6781 = vmatprep.subr.mxu0 0.0
    %v6782 = vand.u32 %v5471, 4294901760
    %v6783 = vsub.f32 %v5471, %v6782
    %6784 = vmatpush1.msra.mxu0 %v6783
    %6785 = vmatprep.subr.mxu0 0.0
    %v6786 = vand.u32 %v5472, 4294901760
    %v6787 = vsub.f32 %v5472, %v6786
    %6788 = vmatpush1.msra.mxu0 %v6787
    %6789 = vmatprep.subr.mxu0 0.0
    %v6790 = vand.u32 %v5473, 4294901760
    %v6791 = vsub.f32 %v5473, %v6790
    %6792 = vmatpush1.msra.mxu0 %v6791
    %6793 = vmatprep.subr.mxu0 0.0
    %v6794 = vand.u32 %v5474, 4294901760
    %v6795 = vsub.f32 %v5474, %v6794
    %6796 = vmatpush1.msra.mxu0 %v6795
    %6797 = vmatprep.subr.mxu0 0.0
    %v6798 = vand.u32 %v5475, 4294901760
    %v6799 = vsub.f32 %v5475, %v6798
    %6800 = vmatpush1.msra.mxu0 %v6799
    %6801 = vmatprep.subr.mxu0 0.0
    %v6802 = vand.u32 %v5476, 4294901760
    %v6803 = vsub.f32 %v5476, %v6802
    %6804 = vmatpush1.msra.mxu0 %v6803
    %6805 = vmatprep.subr.mxu0 0.0
    %v6806 = vand.u32 %v5477, 4294901760
    %v6807 = vsub.f32 %v5477, %v6806
    %6808 = vmatpush1.msra.mxu0 %v6807
    %6809 = vmatprep.subr.mxu0 0.0
    %v6810 = vand.u32 %v5478, 4294901760
    %v6811 = vsub.f32 %v5478, %v6810
    %6812 = vmatpush1.msra.mxu0 %v6811
    %v6813 = vand.u32 %v107, 4294901760
    %v6814 = vsub.f32 %v107, %v6813
    %6815 = vmatprep.mubr.f32.mxu0 %v6814
    %v6816 = vand.u32 %v39, 4294901760
    %v6817 = vsub.f32 %v39, %v6816
    %6818 = vmatmul.mubr.f32.gmra.mrb[0].mxu0 %v6817
    %v6819 = vpop.f32.mrb[0].mxu0
    %v6820 = vadd.f32 %v6682, %v6819
    %v6821 = vpop.f32.mrb[0].mxu0
    %6822 = vdwg.mxu0
    %6823 = vmatprep.subr.mxu0 0.0
    %v6824 = vand.u32 %v5447, 4294901760
    %6825 = vmatpush1.msra.mxu0 %v6824
    %6826 = vmatprep.subr.mxu0 0.0
    %v6827 = vand.u32 %v5448, 4294901760
    %6828 = vmatpush1.msra.mxu0 %v6827
    %6829 = vmatprep.subr.mxu0 0.0
    %v6830 = vand.u32 %v5449, 4294901760
    %6831 = vmatpush1.msra.mxu0 %v6830
    %6832 = vmatprep.subr.mxu0 0.0
    %v6833 = vand.u32 %v5450, 4294901760
    %6834 = vmatpush1.msra.mxu0 %v6833
    %6835 = vmatprep.subr.mxu0 0.0
    %v6836 = vand.u32 %v5451, 4294901760
    %6837 = vmatpush1.msra.mxu0 %v6836
    %6838 = vmatprep.subr.mxu0 0.0
    %v6839 = vand.u32 %v5452, 4294901760
    %6840 = vmatpush1.msra.mxu0 %v6839
    %6841 = vmatprep.subr.mxu0 0.0
    %v6842 = vand.u32 %v5453, 4294901760
    %6843 = vmatpush1.msra.mxu0 %v6842
    %6844 = vmatprep.subr.mxu0 0.0
    %v6845 = vand.u32 %v5454, 4294901760
    %6846 = vmatpush1.msra.mxu0 %v6845
    %6847 = vmatprep.subr.mxu0 0.0
    %v6848 = vand.u32 %v5455, 4294901760
    %6849 = vmatpush1.msra.mxu0 %v6848
    %6850 = vmatprep.subr.mxu0 0.0
    %v6851 = vand.u32 %v5456, 4294901760
    %6852 = vmatpush1.msra.mxu0 %v6851
    %6853 = vmatprep.subr.mxu0 0.0
    %v6854 = vand.u32 %v5457, 4294901760
    %6855 = vmatpush1.msra.mxu0 %v6854
    %6856 = vmatprep.subr.mxu0 0.0
    %v6857 = vand.u32 %v5458, 4294901760
    %6858 = vmatpush1.msra.mxu0 %v6857
    %6859 = vmatprep.subr.mxu0 0.0
    %v6860 = vand.u32 %v5459, 4294901760
    %6861 = vmatpush1.msra.mxu0 %v6860
    %6862 = vmatprep.subr.mxu0 0.0
    %v6863 = vand.u32 %v5460, 4294901760
    %6864 = vmatpush1.msra.mxu0 %v6863
    %6865 = vmatprep.subr.mxu0 0.0
    %v6866 = vand.u32 %v5461, 4294901760
    %6867 = vmatpush1.msra.mxu0 %v6866
    %6868 = vmatprep.subr.mxu0 0.0
    %v6869 = vand.u32 %v5462, 4294901760
    %6870 = vmatpush1.msra.mxu0 %v6869
    %6871 = vmatprep.subr.mxu0 0.0
    %v6872 = vand.u32 %v5463, 4294901760
    %6873 = vmatpush1.msra.mxu0 %v6872
    %6874 = vmatprep.subr.mxu0 0.0
    %v6875 = vand.u32 %v5464, 4294901760
    %6876 = vmatpush1.msra.mxu0 %v6875
    %6877 = vmatprep.subr.mxu0 0.0
    %v6878 = vand.u32 %v5465, 4294901760
    %6879 = vmatpush1.msra.mxu0 %v6878
    %6880 = vmatprep.subr.mxu0 0.0
    %v6881 = vand.u32 %v5466, 4294901760
    %6882 = vmatpush1.msra.mxu0 %v6881
    %6883 = vmatprep.subr.mxu0 0.0
    %v6884 = vand.u32 %v5467, 4294901760
    %6885 = vmatpush1.msra.mxu0 %v6884
    %6886 = vmatprep.subr.mxu0 0.0
    %v6887 = vand.u32 %v5468, 4294901760
    %6888 = vmatpush1.msra.mxu0 %v6887
    %6889 = vmatprep.subr.mxu0 0.0
    %v6890 = vand.u32 %v5469, 4294901760
    %6891 = vmatpush1.msra.mxu0 %v6890
    %6892 = vmatprep.subr.mxu0 0.0
    %v6893 = vand.u32 %v5470, 4294901760
    %6894 = vmatpush1.msra.mxu0 %v6893
    %6895 = vmatprep.subr.mxu0 0.0
    %v6896 = vand.u32 %v5471, 4294901760
    %6897 = vmatpush1.msra.mxu0 %v6896
    %6898 = vmatprep.subr.mxu0 0.0
    %v6899 = vand.u32 %v5472, 4294901760
    %6900 = vmatpush1.msra.mxu0 %v6899
    %6901 = vmatprep.subr.mxu0 0.0
    %v6902 = vand.u32 %v5473, 4294901760
    %6903 = vmatpush1.msra.mxu0 %v6902
    %6904 = vmatprep.subr.mxu0 0.0
    %v6905 = vand.u32 %v5474, 4294901760
    %6906 = vmatpush1.msra.mxu0 %v6905
    %6907 = vmatprep.subr.mxu0 0.0
    %v6908 = vand.u32 %v5475, 4294901760
    %6909 = vmatpush1.msra.mxu0 %v6908
    %6910 = vmatprep.subr.mxu0 0.0
    %v6911 = vand.u32 %v5476, 4294901760
    %6912 = vmatpush1.msra.mxu0 %v6911
    %6913 = vmatprep.subr.mxu0 0.0
    %v6914 = vand.u32 %v5477, 4294901760
    %6915 = vmatpush1.msra.mxu0 %v6914
    %6916 = vmatprep.subr.mxu0 0.0
    %v6917 = vand.u32 %v5478, 4294901760
    %6918 = vmatpush1.msra.mxu0 %v6917
    %v6919 = vand.u32 %v107, 4294901760
    %v6920 = vsub.f32 %v107, %v6919
    %v6921 = vand.u32 %v6920, 4294901760
    %6922 = vmatprep.mubr.f32.mxu0 %v6921
    %v6923 = vand.u32 %v39, 4294901760
    %v6924 = vsub.f32 %v39, %v6923
    %v6925 = vand.u32 %v6924, 4294901760
    %6926 = vmatmul.mubr.f32.gmra.mrb[0].mxu0 %v6925
    %v6927 = vpop.f32.mrb[0].mxu0
    %v6928 = vadd.f32 %v6820, %v6927
    %v6929 = vpop.f32.mrb[0].mxu0
    %6930 = vdwg.mxu0
    %6931 = vmatprep.subr.mxu0 0.0
    %v6932 = vand.u32 %v5447, 4294901760
    %v6933 = vsub.f32 %v5447, %v6932
    %v6934 = vand.u32 %v6933, 4294901760
    %6935 = vmatpush1.msra.mxu0 %v6934
    %6936 = vmatprep.subr.mxu0 0.0
    %v6937 = vand.u32 %v5448, 4294901760
    %v6938 = vsub.f32 %v5448, %v6937
    %v6939 = vand.u32 %v6938, 4294901760
    %6940 = vmatpush1.msra.mxu0 %v6939
    %6941 = vmatprep.subr.mxu0 0.0
    %v6942 = vand.u32 %v5449, 4294901760
    %v6943 = vsub.f32 %v5449, %v6942
    %v6944 = vand.u32 %v6943, 4294901760
    %6945 = vmatpush1.msra.mxu0 %v6944
    %6946 = vmatprep.subr.mxu0 0.0
    %v6947 = vand.u32 %v5450, 4294901760
    %v6948 = vsub.f32 %v5450, %v6947
    %v6949 = vand.u32 %v6948, 4294901760
    %6950 = vmatpush1.msra.mxu0 %v6949
    %6951 = vmatprep.subr.mxu0 0.0
    %v6952 = vand.u32 %v5451, 4294901760
    %v6953 = vsub.f32 %v5451, %v6952
    %v6954 = vand.u32 %v6953, 4294901760
    %6955 = vmatpush1.msra.mxu0 %v6954
    %6956 = vmatprep.subr.mxu0 0.0
    %v6957 = vand.u32 %v5452, 4294901760
    %v6958 = vsub.f32 %v5452, %v6957
    %v6959 = vand.u32 %v6958, 4294901760
    %6960 = vmatpush1.msra.mxu0 %v6959
    %6961 = vmatprep.subr.mxu0 0.0
    %v6962 = vand.u32 %v5453, 4294901760
    %v6963 = vsub.f32 %v5453, %v6962
    %v6964 = vand.u32 %v6963, 4294901760
    %6965 = vmatpush1.msra.mxu0 %v6964
    %6966 = vmatprep.subr.mxu0 0.0
    %v6967 = vand.u32 %v5454, 4294901760
    %v6968 = vsub.f32 %v5454, %v6967
    %v6969 = vand.u32 %v6968, 4294901760
    %6970 = vmatpush1.msra.mxu0 %v6969
    %6971 = vmatprep.subr.mxu0 0.0
    %v6972 = vand.u32 %v5455, 4294901760
    %v6973 = vsub.f32 %v5455, %v6972
    %v6974 = vand.u32 %v6973, 4294901760
    %6975 = vmatpush1.msra.mxu0 %v6974
    %6976 = vmatprep.subr.mxu0 0.0
    %v6977 = vand.u32 %v5456, 4294901760
    %v6978 = vsub.f32 %v5456, %v6977
    %v6979 = vand.u32 %v6978, 4294901760
    %6980 = vmatpush1.msra.mxu0 %v6979
    %6981 = vmatprep.subr.mxu0 0.0
    %v6982 = vand.u32 %v5457, 4294901760
    %v6983 = vsub.f32 %v5457, %v6982
    %v6984 = vand.u32 %v6983, 4294901760
    %6985 = vmatpush1.msra.mxu0 %v6984
    %6986 = vmatprep.subr.mxu0 0.0
    %v6987 = vand.u32 %v5458, 4294901760
    %v6988 = vsub.f32 %v5458, %v6987
    %v6989 = vand.u32 %v6988, 4294901760
    %6990 = vmatpush1.msra.mxu0 %v6989
    %6991 = vmatprep.subr.mxu0 0.0
    %v6992 = vand.u32 %v5459, 4294901760
    %v6993 = vsub.f32 %v5459, %v6992
    %v6994 = vand.u32 %v6993, 4294901760
    %6995 = vmatpush1.msra.mxu0 %v6994
    %6996 = vmatprep.subr.mxu0 0.0
    %v6997 = vand.u32 %v5460, 4294901760
    %v6998 = vsub.f32 %v5460, %v6997
    %v6999 = vand.u32 %v6998, 4294901760
    %7000 = vmatpush1.msra.mxu0 %v6999
    %7001 = vmatprep.subr.mxu0 0.0
    %v7002 = vand.u32 %v5461, 4294901760
    %v7003 = vsub.f32 %v5461, %v7002
    %v7004 = vand.u32 %v7003, 4294901760
    %7005 = vmatpush1.msra.mxu0 %v7004
    %7006 = vmatprep.subr.mxu0 0.0
    %v7007 = vand.u32 %v5462, 4294901760
    %v7008 = vsub.f32 %v5462, %v7007
    %v7009 = vand.u32 %v7008, 4294901760
    %7010 = vmatpush1.msra.mxu0 %v7009
    %7011 = vmatprep.subr.mxu0 0.0
    %v7012 = vand.u32 %v5463, 4294901760
    %v7013 = vsub.f32 %v5463, %v7012
    %v7014 = vand.u32 %v7013, 4294901760
    %7015 = vmatpush1.msra.mxu0 %v7014
    %7016 = vmatprep.subr.mxu0 0.0
    %v7017 = vand.u32 %v5464, 4294901760
    %v7018 = vsub.f32 %v5464, %v7017
    %v7019 = vand.u32 %v7018, 4294901760
    %7020 = vmatpush1.msra.mxu0 %v7019
    %7021 = vmatprep.subr.mxu0 0.0
    %v7022 = vand.u32 %v5465, 4294901760
    %v7023 = vsub.f32 %v5465, %v7022
    %v7024 = vand.u32 %v7023, 4294901760
    %7025 = vmatpush1.msra.mxu0 %v7024
    %7026 = vmatprep.subr.mxu0 0.0
    %v7027 = vand.u32 %v5466, 4294901760
    %v7028 = vsub.f32 %v5466, %v7027
    %v7029 = vand.u32 %v7028, 4294901760
    %7030 = vmatpush1.msra.mxu0 %v7029
    %7031 = vmatprep.subr.mxu0 0.0
    %v7032 = vand.u32 %v5467, 4294901760
    %v7033 = vsub.f32 %v5467, %v7032
    %v7034 = vand.u32 %v7033, 4294901760
    %7035 = vmatpush1.msra.mxu0 %v7034
    %7036 = vmatprep.subr.mxu0 0.0
    %v7037 = vand.u32 %v5468, 4294901760
    %v7038 = vsub.f32 %v5468, %v7037
    %v7039 = vand.u32 %v7038, 4294901760
    %7040 = vmatpush1.msra.mxu0 %v7039
    %7041 = vmatprep.subr.mxu0 0.0
    %v7042 = vand.u32 %v5469, 4294901760
    %v7043 = vsub.f32 %v5469, %v7042
    %v7044 = vand.u32 %v7043, 4294901760
    %7045 = vmatpush1.msra.mxu0 %v7044
    %7046 = vmatprep.subr.mxu0 0.0
    %v7047 = vand.u32 %v5470, 4294901760
    %v7048 = vsub.f32 %v5470, %v7047
    %v7049 = vand.u32 %v7048, 4294901760
    %7050 = vmatpush1.msra.mxu0 %v7049
    %7051 = vmatprep.subr.mxu0 0.0
    %v7052 = vand.u32 %v5471, 4294901760
    %v7053 = vsub.f32 %v5471, %v7052
    %v7054 = vand.u32 %v7053, 4294901760
    %7055 = vmatpush1.msra.mxu0 %v7054
    %7056 = vmatprep.subr.mxu0 0.0
    %v7057 = vand.u32 %v5472, 4294901760
    %v7058 = vsub.f32 %v5472, %v7057
    %v7059 = vand.u32 %v7058, 4294901760
    %7060 = vmatpush1.msra.mxu0 %v7059
    %7061 = vmatprep.subr.mxu0 0.0
    %v7062 = vand.u32 %v5473, 4294901760
    %v7063 = vsub.f32 %v5473, %v7062
    %v7064 = vand.u32 %v7063, 4294901760
    %7065 = vmatpush1.msra.mxu0 %v7064
    %7066 = vmatprep.subr.mxu0 0.0
    %v7067 = vand.u32 %v5474, 4294901760
    %v7068 = vsub.f32 %v5474, %v7067
    %v7069 = vand.u32 %v7068, 4294901760
    %7070 = vmatpush1.msra.mxu0 %v7069
    %7071 = vmatprep.subr.mxu0 0.0
    %v7072 = vand.u32 %v5475, 4294901760
    %v7073 = vsub.f32 %v5475, %v7072
    %v7074 = vand.u32 %v7073, 4294901760
    %7075 = vmatpush1.msra.mxu0 %v7074
    %7076 = vmatprep.subr.mxu0 0.0
    %v7077 = vand.u32 %v5476, 4294901760
    %v7078 = vsub.f32 %v5476, %v7077
    %v7079 = vand.u32 %v7078, 4294901760
    %7080 = vmatpush1.msra.mxu0 %v7079
    %7081 = vmatprep.subr.mxu0 0.0
    %v7082 = vand.u32 %v5477, 4294901760
    %v7083 = vsub.f32 %v5477, %v7082
    %v7084 = vand.u32 %v7083, 4294901760
    %7085 = vmatpush1.msra.mxu0 %v7084
    %7086 = vmatprep.subr.mxu0 0.0
    %v7087 = vand.u32 %v5478, 4294901760
    %v7088 = vsub.f32 %v5478, %v7087
    %v7089 = vand.u32 %v7088, 4294901760
    %7090 = vmatpush1.msra.mxu0 %v7089
    %v7091 = vand.u32 %v107, 4294901760
    %7092 = vmatprep.mubr.f32.mxu0 %v7091
    %v7093 = vand.u32 %v39, 4294901760
    %7094 = vmatmul.mubr.f32.gmra.mrb[0].mxu0 %v7093
    %v7095 = vpop.f32.mrb[0].mxu0
    %v7096 = vadd.f32 %v6928, %v7095
    %v7097 = vpop.f32.mrb[0].mxu0
    %7098 = vdwg.mxu0
    %7099 = vmatprep.subr.mxu0 0.0
    %v7100 = vand.u32 %v5447, 4294901760
    %7101 = vmatpush1.msra.mxu0 %v7100
    %7102 = vmatprep.subr.mxu0 0.0
    %v7103 = vand.u32 %v5448, 4294901760
    %7104 = vmatpush1.msra.mxu0 %v7103
    %7105 = vmatprep.subr.mxu0 0.0
    %v7106 = vand.u32 %v5449, 4294901760
    %7107 = vmatpush1.msra.mxu0 %v7106
    %7108 = vmatprep.subr.mxu0 0.0
    %v7109 = vand.u32 %v5450, 4294901760
    %7110 = vmatpush1.msra.mxu0 %v7109
    %7111 = vmatprep.subr.mxu0 0.0
    %v7112 = vand.u32 %v5451, 4294901760
    %7113 = vmatpush1.msra.mxu0 %v7112
    %7114 = vmatprep.subr.mxu0 0.0
    %v7115 = vand.u32 %v5452, 4294901760
    %7116 = vmatpush1.msra.mxu0 %v7115
    %7117 = vmatprep.subr.mxu0 0.0
    %v7118 = vand.u32 %v5453, 4294901760
    %7119 = vmatpush1.msra.mxu0 %v7118
    %7120 = vmatprep.subr.mxu0 0.0
    %v7121 = vand.u32 %v5454, 4294901760
    %7122 = vmatpush1.msra.mxu0 %v7121
    %7123 = vmatprep.subr.mxu0 0.0
    %v7124 = vand.u32 %v5455, 4294901760
    %7125 = vmatpush1.msra.mxu0 %v7124
    %7126 = vmatprep.subr.mxu0 0.0
    %v7127 = vand.u32 %v5456, 4294901760
    %7128 = vmatpush1.msra.mxu0 %v7127
    %7129 = vmatprep.subr.mxu0 0.0
    %v7130 = vand.u32 %v5457, 4294901760
    %7131 = vmatpush1.msra.mxu0 %v7130
    %7132 = vmatprep.subr.mxu0 0.0
    %v7133 = vand.u32 %v5458, 4294901760
    %7134 = vmatpush1.msra.mxu0 %v7133
    %7135 = vmatprep.subr.mxu0 0.0
    %v7136 = vand.u32 %v5459, 4294901760
    %7137 = vmatpush1.msra.mxu0 %v7136
    %7138 = vmatprep.subr.mxu0 0.0
    %v7139 = vand.u32 %v5460, 4294901760
    %7140 = vmatpush1.msra.mxu0 %v7139
    %7141 = vmatprep.subr.mxu0 0.0
    %v7142 = vand.u32 %v5461, 4294901760
    %7143 = vmatpush1.msra.mxu0 %v7142
    %7144 = vmatprep.subr.mxu0 0.0
    %v7145 = vand.u32 %v5462, 4294901760
    %7146 = vmatpush1.msra.mxu0 %v7145
    %7147 = vmatprep.subr.mxu0 0.0
    %v7148 = vand.u32 %v5463, 4294901760
    %7149 = vmatpush1.msra.mxu0 %v7148
    %7150 = vmatprep.subr.mxu0 0.0
    %v7151 = vand.u32 %v5464, 4294901760
    %7152 = vmatpush1.msra.mxu0 %v7151
    %7153 = vmatprep.subr.mxu0 0.0
    %v7154 = vand.u32 %v5465, 4294901760
    %7155 = vmatpush1.msra.mxu0 %v7154
    %7156 = vmatprep.subr.mxu0 0.0
    %v7157 = vand.u32 %v5466, 4294901760
    %7158 = vmatpush1.msra.mxu0 %v7157
    %7159 = vmatprep.subr.mxu0 0.0
    %v7160 = vand.u32 %v5467, 4294901760
    %7161 = vmatpush1.msra.mxu0 %v7160
    %7162 = vmatprep.subr.mxu0 0.0
    %v7163 = vand.u32 %v5468, 4294901760
    %7164 = vmatpush1.msra.mxu0 %v7163
    %7165 = vmatprep.subr.mxu0 0.0
    %v7166 = vand.u32 %v5469, 4294901760
    %7167 = vmatpush1.msra.mxu0 %v7166
    %7168 = vmatprep.subr.mxu0 0.0
    %v7169 = vand.u32 %v5470, 4294901760
    %7170 = vmatpush1.msra.mxu0 %v7169
    %7171 = vmatprep.subr.mxu0 0.0
    %v7172 = vand.u32 %v5471, 4294901760
    %7173 = vmatpush1.msra.mxu0 %v7172
    %7174 = vmatprep.subr.mxu0 0.0
    %v7175 = vand.u32 %v5472, 4294901760
    %7176 = vmatpush1.msra.mxu0 %v7175
    %7177 = vmatprep.subr.mxu0 0.0
    %v7178 = vand.u32 %v5473, 4294901760
    %7179 = vmatpush1.msra.mxu0 %v7178
    %7180 = vmatprep.subr.mxu0 0.0
    %v7181 = vand.u32 %v5474, 4294901760
    %7182 = vmatpush1.msra.mxu0 %v7181
    %7183 = vmatprep.subr.mxu0 0.0
    %v7184 = vand.u32 %v5475, 4294901760
    %7185 = vmatpush1.msra.mxu0 %v7184
    %7186 = vmatprep.subr.mxu0 0.0
    %v7187 = vand.u32 %v5476, 4294901760
    %7188 = vmatpush1.msra.mxu0 %v7187
    %7189 = vmatprep.subr.mxu0 0.0
    %v7190 = vand.u32 %v5477, 4294901760
    %7191 = vmatpush1.msra.mxu0 %v7190
    %7192 = vmatprep.subr.mxu0 0.0
    %v7193 = vand.u32 %v5478, 4294901760
    %7194 = vmatpush1.msra.mxu0 %v7193
    %v7195 = vand.u32 %v107, 4294901760
    %7196 = vmatprep.mubr.f32.mxu0 %v7195
    %v7197 = vand.u32 %v39, 4294901760
    %7198 = vmatmul.mubr.f32.gmra.mrb[0].mxu0 %v7197
    %v7199 = vpop.f32.mrb[0].mxu0
    %v7200 = vadd.f32 %v7096, %v7199
    %v7201 = vpop.f32.mrb[0].mxu0
    %7202 = vdwg.mxu0
    %v7203 = vmax.f32 %v5413, %v7200
    %7204 = vst [vmem:[#allocation7] sm:$0xf] %v7203
    // Predicated region
    $region18: #{tpu_custom_call.1} parent=1 // pred_check
      _
    $region19: #{tpu_custom_call.1} parent=1 // pred_check_branch
      %7206 = sbr.rel (0) target = $region21
    $region20: #{tpu_custom_call.1} parent=1 // pred_region
      %s7208 = ssub.s32 64, 64
      %7209 = vsyncadd [#allocation4], %s7208
      %s7211 = sshll.u32 [#allocation7], 4
      %s7212 = int_to_ptr.vmem [resolvable:$true] %s7211
      %7214 = dma.vmem_to_hbm [thread:$0]  %s7212, 64, %s2, [#allocation4]
    $region21: #{tpu_custom_call.1} parent=1 // pred_fallthru
      _
    // Predicated region
    $region22: #{tpu_custom_call.1} parent=1 // pred_check
      _
    $region23: #{tpu_custom_call.1} parent=1 // pred_check_branch
      %7216 = sbr.rel (0) target = $region25
    $region24: #{tpu_custom_call.1} parent=1 // pred_region
      %7217 = dma.done [#allocation4], 64
    $region25: #{tpu_custom_call.1} parent=1 // pred_fallthru
      _
    %7218 = vsyncpa [#allocation3], 1
    %7219 = vsyncpa [#allocation6], 1
    %7220 = vsyncpa [#allocation4], 1

</llo_original>
